<compile_context>
chip_gen: v7x
topology: tpu7x:2x2x1
jax: 0.10.0
libtpu: 0.0.40
codegen_flags: <defaults>
</compile_context>

<pallas_src>
import functools

import jax
import jax.numpy as jnp
from jax.experimental import pallas as pl
from jax.experimental.pallas import tpu as pltpu


def _round_up(x, m):
    return ((x + m - 1) // m) * m


def _pick_tile(dim, candidates):
    d = _round_up(dim, 128)
    for c in candidates:
        if d % c == 0:
            return c
    return 128


# ---------------------------------------------------------------------------
# Pallas kernels
# ---------------------------------------------------------------------------

def _conv_mm_kernel(x_ref, w_ref, b_ref, o_ref, acc_ref, *, relu):
    """(TM,TK)bf16 @ (TK,TN)bf16 accumulated in f32; fused bias + optional ReLU."""
    @pl.when(pl.program_id(2) == 0)
    def _init():
        acc_ref[...] = jnp.zeros_like(acc_ref)

    acc_ref[...] += jnp.dot(x_ref[...], w_ref[...],
                            preferred_element_type=jnp.float32)

    @pl.when(pl.program_id(2) == pl.num_programs(2) - 1)
    def _finish():
        out = acc_ref[...] + b_ref[...]
        if relu:
            out = jnp.maximum(out, 0.0)
        o_ref[...] = out.astype(o_ref.dtype)


@functools.lru_cache(maxsize=None)
def _build_conv_mm(m, k, n, tm, tk, tn, relu):
    kernel = functools.partial(_conv_mm_kernel, relu=relu)
    return pl.pallas_call(
        kernel,
        out_shape=jax.ShapeDtypeStruct((m, n), jnp.float32),
        grid=(m // tm, n // tn, k // tk),
        in_specs=[
            pl.BlockSpec((tm, tk), lambda i, j, kk: (i, kk)),
            pl.BlockSpec((tk, tn), lambda i, j, kk: (kk, j)),
            pl.BlockSpec((1, tn), lambda i, j, kk: (0, j)),
        ],
        out_specs=pl.BlockSpec((tm, tn), lambda i, j, kk: (i, j)),
        scratch_shapes=[pltpu.VMEM((tm, tn), jnp.float32)],
        compiler_params=pltpu.CompilerParams(
            dimension_semantics=("parallel", "parallel", "arbitrary")),
    )


def conv_mm(x2d, w2d, b, relu):
    m, k = x2d.shape
    n = w2d.shape[1]
    tm = min(256, _round_up(m, 8))
    tn = _pick_tile(n, (256, 128))
    tk = _pick_tile(k, (512, 384, 256, 128))
    m_pad, k_pad, n_pad = _round_up(m, tm), _round_up(k, tk), _round_up(n, tn)
    if (m_pad, k_pad) != (m, k):
        x2d = jnp.pad(x2d, ((0, m_pad - m), (0, k_pad - k)))
    if (k_pad, n_pad) != (k, n):
        w2d = jnp.pad(w2d, ((0, k_pad - k), (0, n_pad - n)))
    if n_pad != n:
        b = jnp.pad(b, (0, n_pad - n))
    out = _build_conv_mm(m_pad, k_pad, n_pad, tm, tk, tn, bool(relu))(
        x2d, w2d, b.reshape(1, n_pad))
    return out[:m, :n]


def _add_relu_kernel(a_ref, b_ref, o_ref):
    o_ref[...] = jnp.maximum(a_ref[...] + b_ref[...], 0.0)


@functools.lru_cache(maxsize=None)
def _build_add_relu(m, c, tr):
    return pl.pallas_call(
        _add_relu_kernel,
        out_shape=jax.ShapeDtypeStruct((m, c), jnp.float32),
        grid=(m // tr,),
        in_specs=[pl.BlockSpec((tr, c), lambda i: (i, 0)),
                  pl.BlockSpec((tr, c), lambda i: (i, 0))],
        out_specs=pl.BlockSpec((tr, c), lambda i: (i, 0)),
        compiler_params=pltpu.CompilerParams(dimension_semantics=("parallel",)),
    )


def _row_tiles(m):
    tr = min(512, _round_up(m, 8))
    return tr, _round_up(m, tr)


def add_relu(a, b):
    shp = a.shape
    c = shp[-1]
    a2 = a.reshape(-1, c)
    b2 = b.reshape(-1, c)
    m = a2.shape[0]
    tr, m_pad = _row_tiles(m)
    if m_pad != m:
        a2 = jnp.pad(a2, ((0, m_pad - m), (0, 0)))
        b2 = jnp.pad(b2, ((0, m_pad - m), (0, 0)))
    out = _build_add_relu(m_pad, c, tr)(a2, b2)
    return out[:m].reshape(shp)


def _add_relu_mean_kernel(a_ref, b_ref, o_ref, *, inv_c):
    x = jnp.maximum(a_ref[...] + b_ref[...], 0.0)
    o_ref[...] = jnp.sum(x, axis=-1, keepdims=True) * inv_c


@functools.lru_cache(maxsize=None)
def _build_add_relu_mean(m, c, tr, inv_c):
    kernel = functools.partial(_add_relu_mean_kernel, inv_c=inv_c)
    return pl.pallas_call(
        kernel,
        out_shape=jax.ShapeDtypeStruct((m, 1), jnp.float32),
        grid=(m // tr,),
        in_specs=[pl.BlockSpec((tr, c), lambda i: (i, 0)),
                  pl.BlockSpec((tr, c), lambda i: (i, 0))],
        out_specs=pl.BlockSpec((tr, 1), lambda i: (i, 0)),
        compiler_params=pltpu.CompilerParams(dimension_semantics=("parallel",)),
    )


def add_relu_mean(a, b, c_real):
    # Fused final residual add + ReLU + channel-mean: the last feature map is
    # never written to HBM.  Padded channels are exactly zero by construction,
    # so sum over the padded width / c_real equals the mean over real channels.
    n, oh, ow, c = a.shape
    a2 = a.reshape(-1, c)
    b2 = b.reshape(-1, c)
    m = a2.shape[0]
    tr, m_pad = _row_tiles(m)
    if m_pad != m:
        a2 = jnp.pad(a2, ((0, m_pad - m), (0, 0)))
        b2 = jnp.pad(b2, ((0, m_pad - m), (0, 0)))
    out = _build_add_relu_mean(m_pad, c, tr, float(1.0 / c_real))(a2, b2)
    return out[:m, 0].reshape(n, oh, ow)


# ---------------------------------------------------------------------------
# Glue: im2col (bf16 patches), maxpool, bottleneck blocks
# ---------------------------------------------------------------------------

def im2col(x, kh, kw, stride, padding):
    # Patches are produced in bf16 (half the HBM traffic) and fed straight to the MXU.
    # TODO(synk): a fully implicit im2col (in-kernel tap accumulation via manual DMA)
    # would avoid the 9x patch materialization for the 3x3 convs entirely.
    if padding:
        x = jnp.pad(x, ((0, 0), (padding, padding), (padding, padding), (0, 0)))
    n, h, w, c = x.shape
    oh = (h - kh) // stride + 1
    ow = (w - kw) // stride + 1
    if kh == 1 and kw == 1:
        xs = x[:, ::stride, ::stride, :]
        return xs.reshape(n * oh * ow, c).astype(jnp.bfloat16), (n, oh, ow)
    cols = [x[:, i:i + stride * oh:stride, j:j + stride * ow:stride, :]
            for i in range(kh) for j in range(kw)]
    patches = jnp.stack(cols, axis=3)            # (N, OH, OW, KH*KW, C)
    return patches.reshape(n * oh * ow, kh * kw * c).astype(jnp.bfloat16), (n, oh, ow)


def conv_bn_act(x, p, stride, padding, relu):
    patches, (n, oh, ow) = im2col(x, p["kh"], p["kw"], stride, padding)
    out = conv_mm(patches, p["w"], p["b"], relu)
    return out.reshape(n, oh, ow, -1)


def maxpool_3x3_s2(x):
    # Fused jnp.maximum tree over the 9 strided views: one VPU pass under jit,
    # no 9x patch materialization, no cross-sublane reduce kernel.
    # TODO(synk): overlapping 3x3/stride-2 windows are not expressible with
    # non-overlapping BlockSpecs; a dedicated Pallas pooling kernel needs manual DMA.
    xp = jnp.pad(x, ((0, 0), (1, 1), (1, 1), (0, 0)), constant_values=-jnp.inf)
    n, h, w, c = xp.shape
    oh = (h - 3) // 2 + 1
    ow = (w - 3) // 2 + 1
    out = None
    for i in range(3):
        for j in range(3):
            v = xp[:, i:i + 2 * oh:2, j:j + 2 * ow:2, :]
            out = v if out is None else jnp.maximum(out, v)
    return out


def bottleneck(x, blk, fuse_mean=False, c_real=None):
    identity = x
    out = conv_bn_act(x, blk["conv1"], stride=1, padding=0, relu=True)
    out = conv_bn_act(out, blk["conv2"], stride=blk["stride"], padding=1, relu=True)
    out = conv_bn_act(out, blk["conv3"], stride=1, padding=0, relu=False)
    if blk["down"] is not None:
        identity = conv_bn_act(x, blk["down"], stride=blk["stride"], padding=0, relu=False)
    if fuse_mean:
        return add_relu_mean(out, identity, c_real)
    return add_relu(out, identity)


# ---------------------------------------------------------------------------
# Deterministic parameter construction (scaled-down ResNet50, BN + normalize folded)
# ---------------------------------------------------------------------------

IMAGENET_MEAN = jnp.array([0.485, 0.456, 0.406], jnp.float32)
IMAGENET_INV_STD = 1.0 / jnp.array([0.229, 0.224, 0.225], jnp.float32)


def _fold_bn(w, gamma, beta, mean, var, eps=1e-5):
    scale = gamma / jnp.sqrt(var + eps)
    return w * scale[None, :], beta - mean * scale


class ParamGen:
    def __init__(self, seed=0):
        self.key = jax.random.PRNGKey(seed)
        self.count = 0

    def _next(self):
        self.count += 1
        return jax.random.fold_in(self.key, self.count)

    def conv_bn(self, kh, kw, cin, cout, cin_pad=None, cout_pad=None,
                in_scale=None, in_shift=None):
        cin_pad = cin if cin_pad is None else cin_pad
        cout_pad = cout if cout_pad is None else cout_pad
        fan_in = kh * kw * cin
        w = jax.random.normal(self._next(), (fan_in, cout), jnp.float32) * jnp.sqrt(2.0 / fan_in)
        gamma = 1.0 + 0.01 * jax.random.normal(self._next(), (cout,), jnp.float32)
        beta = 0.01 * jax.random.normal(self._next(), (cout,), jnp.float32)
        mean = 0.01 * jax.random.normal(self._next(), (cout,), jnp.float32)
        var = jnp.ones((cout,), jnp.float32)
        wf, bf = _fold_bn(w, gamma, beta, mean, var)
        if in_scale is not None:
            # Fold per-input-channel affine x' = (x - shift) * scale (ImageNet
            # normalization) into the conv: W' = W*scale, b' = b - sum_k W'[k]*shift[k].
            sc = jnp.tile(in_scale, kh * kw)[:, None]
            sh = jnp.tile(in_shift, kh * kw)[:, None]
            wf = wf * sc
            bf = bf - jnp.sum(wf * sh, axis=0)
        # Zero-pad input channels (per tap) and output channels to lane-dense widths.
        wf = wf.reshape(kh * kw, cin, cout)
        wf = jnp.pad(wf, ((0, 0), (0, cin_pad - cin), (0, cout_pad - cout)))
        wf = wf.reshape(kh * kw * cin_pad, cout_pad)
        bf = jnp.pad(bf, (0, cout_pad - cout))
        return {"w": wf.astype(jnp.bfloat16), "b": bf.astype(jnp.float32),
                "kh": kh, "kw": kw}


def build_resnet_params(pg, base=8):
    # ResNet50 topology (stem + [3,4,6,3] bottlenecks) at reduced width (base=8
    # instead of 64) so the synthetic example stays small; structure is identical.
    def cpad(c):
        return _round_up(c, 128)

    params = {"stem": pg.conv_bn(7, 7, 3, base, cin_pad=3, cout_pad=cpad(base),
                                 in_scale=IMAGENET_INV_STD, in_shift=IMAGENET_MEAN)}
    layers = []
    in_ch, in_pad = base, cpad(base)
    cfg = [(base, 3, 1), (base * 2, 4, 2), (base * 4, 6, 2), (base * 8, 3, 2)]
    for width, nblocks, stride in cfg:
        blocks = []
        for bi in range(nblocks):
            s = stride if bi == 0 else 1
            out_ch = width * 4
            blk = {
                "conv1": pg.conv_bn(1, 1, in_ch, width, cin_pad=in_pad, cout_pad=cpad(width)),
                "conv2": pg.conv_bn(3, 3, width, width, cin_pad=cpad(width), cout_pad=cpad(width)),
                "conv3": pg.conv_bn(1, 1, width, out_ch, cin_pad=cpad(width), cout_pad=cpad(out_ch)),
                "stride": s,
                "down": (pg.conv_bn(1, 1, in_ch, out_ch, cin_pad=in_pad, cout_pad=cpad(out_ch))
                         if (s != 1 or in_ch != out_ch) else None),
            }
            blocks.append(blk)
            in_ch, in_pad = out_ch, cpad(out_ch)
        layers.append(blocks)
    params["layers"] = layers
    params["out_channels"] = in_ch   # real (unpadded) channel count of the final features
    return params


# ---------------------------------------------------------------------------
# VideoFeatures forward
# ---------------------------------------------------------------------------

def backbone_and_mean(params, x_nhwc, c_real):
    x = conv_bn_act(x_nhwc, params["stem"], stride=2, padding=3, relu=True)
    x = maxpool_3x3_s2(x)
    layers = params["layers"]
    for li, blocks in enumerate(layers):
        for bi, blk in enumerate(blocks):
            last = (li == len(layers) - 1) and (bi == len(blocks) - 1)
            x = bottleneck(x, blk, fuse_mean=last, c_real=c_real)
    return x   # (N, H', W') == channel-mean of backbone features


def video_features_forward(params, images_nchw):
    # TODO(synk): torchvision's resize-to-256 + center-crop-224 are not implemented;
    # inputs are assumed already sized and scaled to [0, 1].  The normalize step is
    # folded into the stem conv weights, so preprocessing is just NCHW -> NHWC.
    x = jnp.transpose(images_nchw, (0, 2, 3, 1)).astype(jnp.float32)
    c_real = params["out_channels"]
    max_batch_size = 1000
    n = x.shape[0]
    iters = (n - 1) // max_batch_size + 1
    parts = []
    for i in range(iters):
        part = x[i * max_batch_size:(i + 1) * max_batch_size]
        parts.append(backbone_and_mean(params, part, c_real))
    # matches torch.mean(backbone(x), dim=1) on NCHW -> (N, H', W')
    return jnp.concatenate(parts, axis=0)


if __name__ == "__main__":
    key = jax.random.PRNGKey(0)
    # small "video frames": 2 RGB images, 64x64, values in [0, 1], NCHW like PyTorch
    images = jax.random.uniform(key, (2, 3, 64, 64), dtype=jnp.float32)

    pg = ParamGen(seed=0)
    params = build_resnet_params(pg, base=8)

    fwd = jax.jit(functools.partial(video_features_forward, params))
    out = jax.block_until_ready(fwd(images))
    assert out.shape == (2, 2, 2), out.shape      # (N, H/32, W/32)
    assert out.dtype == jnp.float32
    print("KERNEL_OK")
</pallas_src>

<mosaic_0001>
module attributes {stable_mosaic.version = 11 : i64} {
  func.func @_conv_mm_kernel(%arg0: i32, %arg1: i32, %arg2: i32, %arg3: memref<256x256xbf16, #tpu.memory_space<vmem>>, %arg4: memref<256x128xbf16, #tpu.memory_space<vmem>>, %arg5: memref<1x128xf32, #tpu.memory_space<vmem>>, %arg6: memref<256x128xf32, #tpu.memory_space<vmem>>, %arg7: memref<256x128xf32, #tpu.memory_space<vmem>>) attributes {dimension_semantics = [#tpu.dimension_semantics<parallel>, #tpu.dimension_semantics<parallel>, #tpu.dimension_semantics<arbitrary>], iteration_bounds = array<i64: 8, 1, 1>, scalar_prefetch = 0 : i64, scratch_operands = 1 : i64, tpu.core_type = #tpu.core_type<tc>, window_params = [{transform_indices = @transform_0, window_bounds = array<i64: 256, 256>}, {transform_indices = @transform_1, window_bounds = array<i64: 256, 128>}, {transform_indices = @transform_2, window_bounds = array<i64: 1, 128>}, {transform_indices = @transform_3, window_bounds = array<i64: 256, 128>}]} {
    %c0_i32 = arith.constant 0 : i32
    %0 = arith.cmpi eq, %arg2, %c0_i32 : i32
    %1 = arith.extui %0 : i1 to i32
    %c0_i32_0 = arith.constant 0 : i32
    %2 = arith.cmpi ne, %1, %c0_i32_0 : i32
    scf.if %2 {
      %cst_10 = arith.constant 0.000000e+00 : f32
      %12 = vector.broadcast %cst_10 : f32 to vector<256x128xf32>
      %c0_11 = arith.constant 0 : index
      %c0_12 = arith.constant 0 : index
      %13 = vector.load %arg7[%c0_11, %c0_12] : memref<256x128xf32, #tpu.memory_space<vmem>>, vector<256x128xf32>
      tpu.vector_store %arg7[%c0_11, %c0_12], %12 {strides = array<i32>} : memref<256x128xf32, #tpu.memory_space<vmem>>, vector<256x128xf32>,
    } else {
    }
    %c0 = arith.constant 0 : index
    %c0_1 = arith.constant 0 : index
    %3 = vector.load %arg7[%c0, %c0_1] : memref<256x128xf32, #tpu.memory_space<vmem>>, vector<256x128xf32>
    %c0_2 = arith.constant 0 : index
    %c0_3 = arith.constant 0 : index
    %4 = vector.load %arg3[%c0_2, %c0_3] : memref<256x256xbf16, #tpu.memory_space<vmem>>, vector<256x256xbf16>
    %c0_4 = arith.constant 0 : index
    %c0_5 = arith.constant 0 : index
    %5 = vector.load %arg4[%c0_4, %c0_5] : memref<256x128xbf16, #tpu.memory_space<vmem>>, vector<256x128xbf16>
    %cst = arith.constant dense<0.000000e+00> : vector<256x128xf32>
    %6 = tpu.matmul %4, %5, %cst {dimension_numbers = #tpu.dot_dimension_numbers<[1], [0], [0], [1], [0, 0, 1, 1], [], []>} : vector<256x256xbf16>, vector<256x128xbf16>, vector<256x128xf32> -> vector<256x128xf32>
    %7 = arith.addf %3, %6 : vector<256x128xf32>
    %c0_6 = arith.constant 0 : index
    %c0_7 = arith.constant 0 : index
    %8 = vector.load %arg7[%c0_6, %c0_7] : memref<256x128xf32, #tpu.memory_space<vmem>>, vector<256x128xf32>
    tpu.vector_store %arg7[%c0_6, %c0_7], %7 {strides = array<i32>} : memref<256x128xf32, #tpu.memory_space<vmem>>, vector<256x128xf32>,
    %c0_i32_8 = arith.constant 0 : i32
    %9 = arith.cmpi eq, %arg2, %c0_i32_8 : i32
    %10 = arith.extui %9 : i1 to i32
    %c0_i32_9 = arith.constant 0 : i32
    %11 = arith.cmpi ne, %10, %c0_i32_9 : i32
    scf.if %11 {
      %c0_10 = arith.constant 0 : index
      %c0_11 = arith.constant 0 : index
      %12 = vector.load %arg7[%c0_10, %c0_11] : memref<256x128xf32, #tpu.memory_space<vmem>>, vector<256x128xf32>
      %c0_12 = arith.constant 0 : index
      %c0_13 = arith.constant 0 : index
      %13 = vector.load %arg5[%c0_12, %c0_13] : memref<1x128xf32, #tpu.memory_space<vmem>>, vector<1x128xf32>
      %14 = vector.broadcast %13 : vector<1x128xf32> to vector<256x128xf32>
      %15 = arith.addf %12, %14 : vector<256x128xf32>
      %cst_14 = arith.constant 0.000000e+00 : f32
      %16 = vector.broadcast %cst_14 : f32 to vector<256x128xf32>
      %17 = arith.maximumf %15, %16 : vector<256x128xf32>
      %c0_15 = arith.constant 0 : index
      %c0_16 = arith.constant 0 : index
      %18 = vector.load %arg6[%c0_15, %c0_16] : memref<256x128xf32, #tpu.memory_space<vmem>>, vector<256x128xf32>
      tpu.vector_store %arg6[%c0_15, %c0_16], %17 {strides = array<i32>} : memref<256x128xf32, #tpu.memory_space<vmem>>, vector<256x128xf32>,
    } else {
    }
    return
  }
  func.func @transform_0(%arg0: i32, %arg1: i32, %arg2: i32) -> (i32, i32) {
    %c0_i32 = arith.constant 0 : i32
    return %arg0, %arg2 : i32, i32
  }
  func.func @transform_1(%arg0: i32, %arg1: i32, %arg2: i32) -> (i32, i32) {
    %c0_i32 = arith.constant 0 : i32
    return %arg2, %arg1 : i32, i32
  }
  func.func @transform_2(%arg0: i32, %arg1: i32, %arg2: i32) -> (i32, i32) {
    %c0_i32 = arith.constant 0 : i32
    %c0_i32_0 = arith.constant 0 : i32
    return %c0_i32, %arg1 : i32, i32
  }
  func.func @transform_3(%arg0: i32, %arg1: i32, %arg2: i32) -> (i32, i32) {
    %c0_i32 = arith.constant 0 : i32
    return %arg0, %arg1 : i32, i32
  }
}

module attributes {stable_mosaic.version = 11 : i64} {
  func.func @_conv_mm_kernel(%arg0: i32, %arg1: i32, %arg2: i32, %arg3: memref<256x128xbf16, #tpu.memory_space<vmem>>, %arg4: memref<128x128xbf16, #tpu.memory_space<vmem>>, %arg5: memref<1x128xf32, #tpu.memory_space<vmem>>, %arg6: memref<256x128xf32, #tpu.memory_space<vmem>>, %arg7: memref<256x128xf32, #tpu.memory_space<vmem>>) attributes {dimension_semantics = [#tpu.dimension_semantics<parallel>, #tpu.dimension_semantics<parallel>, #tpu.dimension_semantics<arbitrary>], iteration_bounds = array<i64: 2, 1, 1>, scalar_prefetch = 0 : i64, scratch_operands = 1 : i64, tpu.core_type = #tpu.core_type<tc>, window_params = [{transform_indices = @transform_0, window_bounds = array<i64: 256, 128>}, {transform_indices = @transform_1, window_bounds = array<i64: 128, 128>}, {transform_indices = @transform_2, window_bounds = array<i64: 1, 128>}, {transform_indices = @transform_3, window_bounds = array<i64: 256, 128>}]} {
    %c0_i32 = arith.constant 0 : i32
    %0 = arith.cmpi eq, %arg2, %c0_i32 : i32
    %1 = arith.extui %0 : i1 to i32
    %c0_i32_0 = arith.constant 0 : i32
    %2 = arith.cmpi ne, %1, %c0_i32_0 : i32
    scf.if %2 {
      %cst_10 = arith.constant 0.000000e+00 : f32
      %12 = vector.broadcast %cst_10 : f32 to vector<256x128xf32>
      %c0_11 = arith.constant 0 : index
      %c0_12 = arith.constant 0 : index
      %13 = vector.load %arg7[%c0_11, %c0_12] : memref<256x128xf32, #tpu.memory_space<vmem>>, vector<256x128xf32>
      tpu.vector_store %arg7[%c0_11, %c0_12], %12 {strides = array<i32>} : memref<256x128xf32, #tpu.memory_space<vmem>>, vector<256x128xf32>,
    } else {
    }
    %c0 = arith.constant 0 : index
    %c0_1 = arith.constant 0 : index
    %3 = vector.load %arg7[%c0, %c0_1] : memref<256x128xf32, #tpu.memory_space<vmem>>, vector<256x128xf32>
    %c0_2 = arith.constant 0 : index
    %c0_3 = arith.constant 0 : index
    %4 = vector.load %arg3[%c0_2, %c0_3] : memref<256x128xbf16, #tpu.memory_space<vmem>>, vector<256x128xbf16>
    %c0_4 = arith.constant 0 : index
    %c0_5 = arith.constant 0 : index
    %5 = vector.load %arg4[%c0_4, %c0_5] : memref<128x128xbf16, #tpu.memory_space<vmem>>, vector<128x128xbf16>
    %cst = arith.constant dense<0.000000e+00> : vector<256x128xf32>
    %6 = tpu.matmul %4, %5, %cst {dimension_numbers = #tpu.dot_dimension_numbers<[1], [0], [0], [1], [0, 0, 1, 1], [], []>} : vector<256x128xbf16>, vector<128x128xbf16>, vector<256x128xf32> -> vector<256x128xf32>
    %7 = arith.addf %3, %6 : vector<256x128xf32>
    %c0_6 = arith.constant 0 : index
    %c0_7 = arith.constant 0 : index
    %8 = vector.load %arg7[%c0_6, %c0_7] : memref<256x128xf32, #tpu.memory_space<vmem>>, vector<256x128xf32>
    tpu.vector_store %arg7[%c0_6, %c0_7], %7 {strides = array<i32>} : memref<256x128xf32, #tpu.memory_space<vmem>>, vector<256x128xf32>,
    %c0_i32_8 = arith.constant 0 : i32
    %9 = arith.cmpi eq, %arg2, %c0_i32_8 : i32
    %10 = arith.extui %9 : i1 to i32
    %c0_i32_9 = arith.constant 0 : i32
    %11 = arith.cmpi ne, %10, %c0_i32_9 : i32
    scf.if %11 {
      %c0_10 = arith.constant 0 : index
      %c0_11 = arith.constant 0 : index
      %12 = vector.load %arg7[%c0_10, %c0_11] : memref<256x128xf32, #tpu.memory_space<vmem>>, vector<256x128xf32>
      %c0_12 = arith.constant 0 : index
      %c0_13 = arith.constant 0 : index
      %13 = vector.load %arg5[%c0_12, %c0_13] : memref<1x128xf32, #tpu.memory_space<vmem>>, vector<1x128xf32>
      %14 = vector.broadcast %13 : vector<1x128xf32> to vector<256x128xf32>
      %15 = arith.addf %12, %14 : vector<256x128xf32>
      %cst_14 = arith.constant 0.000000e+00 : f32
      %16 = vector.broadcast %cst_14 : f32 to vector<256x128xf32>
      %17 = arith.maximumf %15, %16 : vector<256x128xf32>
      %c0_15 = arith.constant 0 : index
      %c0_16 = arith.constant 0 : index
      %18 = vector.load %arg6[%c0_15, %c0_16] : memref<256x128xf32, #tpu.memory_space<vmem>>, vector<256x128xf32>
      tpu.vector_store %arg6[%c0_15, %c0_16], %17 {strides = array<i32>} : memref<256x128xf32, #tpu.memory_space<vmem>>, vector<256x128xf32>,
    } else {
    }
    return
  }
  func.func @transform_0(%arg0: i32, %arg1: i32, %arg2: i32) -> (i32, i32) {
    %c0_i32 = arith.constant 0 : i32
    return %arg0, %arg2 : i32, i32
  }
  func.func @transform_1(%arg0: i32, %arg1: i32, %arg2: i32) -> (i32, i32) {
    %c0_i32 = arith.constant 0 : i32
    return %arg2, %arg1 : i32, i32
  }
  func.func @transform_2(%arg0: i32, %arg1: i32, %arg2: i32) -> (i32, i32) {
    %c0_i32 = arith.constant 0 : i32
    %c0_i32_0 = arith.constant 0 : i32
    return %c0_i32, %arg1 : i32, i32
  }
  func.func @transform_3(%arg0: i32, %arg1: i32, %arg2: i32) -> (i32, i32) {
    %c0_i32 = arith.constant 0 : i32
    return %arg0, %arg1 : i32, i32
  }
}

module attributes {stable_mosaic.version = 11 : i64} {
  func.func @_conv_mm_kernel(%arg0: i32, %arg1: i32, %arg2: i32, %arg3: memref<256x384xbf16, #tpu.memory_space<vmem>>, %arg4: memref<384x128xbf16, #tpu.memory_space<vmem>>, %arg5: memref<1x128xf32, #tpu.memory_space<vmem>>, %arg6: memref<256x128xf32, #tpu.memory_space<vmem>>, %arg7: memref<256x128xf32, #tpu.memory_space<vmem>>) attributes {dimension_semantics = [#tpu.dimension_semantics<parallel>, #tpu.dimension_semantics<parallel>, #tpu.dimension_semantics<arbitrary>], iteration_bounds = array<i64: 2, 1, 3>, scalar_prefetch = 0 : i64, scratch_operands = 1 : i64, tpu.core_type = #tpu.core_type<tc>, window_params = [{transform_indices = @transform_0, window_bounds = array<i64: 256, 384>}, {transform_indices = @transform_1, window_bounds = array<i64: 384, 128>}, {transform_indices = @transform_2, window_bounds = array<i64: 1, 128>}, {transform_indices = @transform_3, window_bounds = array<i64: 256, 128>}]} {
    %c0_i32 = arith.constant 0 : i32
    %0 = arith.cmpi eq, %arg2, %c0_i32 : i32
    %1 = arith.extui %0 : i1 to i32
    %c0_i32_0 = arith.constant 0 : i32
    %2 = arith.cmpi ne, %1, %c0_i32_0 : i32
    scf.if %2 {
      %cst_9 = arith.constant 0.000000e+00 : f32
      %12 = vector.broadcast %cst_9 : f32 to vector<256x128xf32>
      %c0_10 = arith.constant 0 : index
      %c0_11 = arith.constant 0 : index
      %13 = vector.load %arg7[%c0_10, %c0_11] : memref<256x128xf32, #tpu.memory_space<vmem>>, vector<256x128xf32>
      tpu.vector_store %arg7[%c0_10, %c0_11], %12 {strides = array<i32>} : memref<256x128xf32, #tpu.memory_space<vmem>>, vector<256x128xf32>,
    } else {
    }
    %c0 = arith.constant 0 : index
    %c0_1 = arith.constant 0 : index
    %3 = vector.load %arg7[%c0, %c0_1] : memref<256x128xf32, #tpu.memory_space<vmem>>, vector<256x128xf32>
    %c0_2 = arith.constant 0 : index
    %c0_3 = arith.constant 0 : index
    %4 = vector.load %arg3[%c0_2, %c0_3] : memref<256x384xbf16, #tpu.memory_space<vmem>>, vector<256x384xbf16>
    %c0_4 = arith.constant 0 : index
    %c0_5 = arith.constant 0 : index
    %5 = vector.load %arg4[%c0_4, %c0_5] : memref<384x128xbf16, #tpu.memory_space<vmem>>, vector<384x128xbf16>
    %cst = arith.constant dense<0.000000e+00> : vector<256x128xf32>
    %6 = tpu.matmul %4, %5, %cst {dimension_numbers = #tpu.dot_dimension_numbers<[1], [0], [0], [1], [0, 0, 1, 1], [], []>} : vector<256x384xbf16>, vector<384x128xbf16>, vector<256x128xf32> -> vector<256x128xf32>
    %7 = arith.addf %3, %6 : vector<256x128xf32>
    %c0_6 = arith.constant 0 : index
    %c0_7 = arith.constant 0 : index
    %8 = vector.load %arg7[%c0_6, %c0_7] : memref<256x128xf32, #tpu.memory_space<vmem>>, vector<256x128xf32>
    tpu.vector_store %arg7[%c0_6, %c0_7], %7 {strides = array<i32>} : memref<256x128xf32, #tpu.memory_space<vmem>>, vector<256x128xf32>,
    %c2_i32 = arith.constant 2 : i32
    %9 = arith.cmpi eq, %arg2, %c2_i32 : i32
    %10 = arith.extui %9 : i1 to i32
    %c0_i32_8 = arith.constant 0 : i32
    %11 = arith.cmpi ne, %10, %c0_i32_8 : i32
    scf.if %11 {
      %c0_9 = arith.constant 0 : index
      %c0_10 = arith.constant 0 : index
      %12 = vector.load %arg7[%c0_9, %c0_10] : memref<256x128xf32, #tpu.memory_space<vmem>>, vector<256x128xf32>
      %c0_11 = arith.constant 0 : index
      %c0_12 = arith.constant 0 : index
      %13 = vector.load %arg5[%c0_11, %c0_12] : memref<1x128xf32, #tpu.memory_space<vmem>>, vector<1x128xf32>
      %14 = vector.broadcast %13 : vector<1x128xf32> to vector<256x128xf32>
      %15 = arith.addf %12, %14 : vector<256x128xf32>
      %cst_13 = arith.constant 0.000000e+00 : f32
      %16 = vector.broadcast %cst_13 : f32 to vector<256x128xf32>
      %17 = arith.maximumf %15, %16 : vector<256x128xf32>
      %c0_14 = arith.constant 0 : index
      %c0_15 = arith.constant 0 : index
      %18 = vector.load %arg6[%c0_14, %c0_15] : memref<256x128xf32, #tpu.memory_space<vmem>>, vector<256x128xf32>
      tpu.vector_store %arg6[%c0_14, %c0_15], %17 {strides = array<i32>} : memref<256x128xf32, #tpu.memory_space<vmem>>, vector<256x128xf32>,
    } else {
    }
    return
  }
  func.func @transform_0(%arg0: i32, %arg1: i32, %arg2: i32) -> (i32, i32) {
    %c0_i32 = arith.constant 0 : i32
    return %arg0, %arg2 : i32, i32
  }
  func.func @transform_1(%arg0: i32, %arg1: i32, %arg2: i32) -> (i32, i32) {
    %c0_i32 = arith.constant 0 : i32
    return %arg2, %arg1 : i32, i32
  }
  func.func @transform_2(%arg0: i32, %arg1: i32, %arg2: i32) -> (i32, i32) {
    %c0_i32 = arith.constant 0 : i32
    %c0_i32_0 = arith.constant 0 : i32
    return %c0_i32, %arg1 : i32, i32
  }
  func.func @transform_3(%arg0: i32, %arg1: i32, %arg2: i32) -> (i32, i32) {
    %c0_i32 = arith.constant 0 : i32
    return %arg0, %arg1 : i32, i32
  }
}

module attributes {stable_mosaic.version = 11 : i64} {
  func.func @_conv_mm_kernel(%arg0: i32, %arg1: i32, %arg2: i32, %arg3: memref<256x128xbf16, #tpu.memory_space<vmem>>, %arg4: memref<128x128xbf16, #tpu.memory_space<vmem>>, %arg5: memref<1x128xf32, #tpu.memory_space<vmem>>, %arg6: memref<256x128xf32, #tpu.memory_space<vmem>>, %arg7: memref<256x128xf32, #tpu.memory_space<vmem>>) attributes {dimension_semantics = [#tpu.dimension_semantics<parallel>, #tpu.dimension_semantics<parallel>, #tpu.dimension_semantics<arbitrary>], iteration_bounds = array<i64: 2, 1, 1>, scalar_prefetch = 0 : i64, scratch_operands = 1 : i64, tpu.core_type = #tpu.core_type<tc>, window_params = [{transform_indices = @transform_0, window_bounds = array<i64: 256, 128>}, {transform_indices = @transform_1, window_bounds = array<i64: 128, 128>}, {transform_indices = @transform_2, window_bounds = array<i64: 1, 128>}, {transform_indices = @transform_3, window_bounds = array<i64: 256, 128>}]} {
    %c0_i32 = arith.constant 0 : i32
    %0 = arith.cmpi eq, %arg2, %c0_i32 : i32
    %1 = arith.extui %0 : i1 to i32
    %c0_i32_0 = arith.constant 0 : i32
    %2 = arith.cmpi ne, %1, %c0_i32_0 : i32
    scf.if %2 {
      %cst_10 = arith.constant 0.000000e+00 : f32
      %12 = vector.broadcast %cst_10 : f32 to vector<256x128xf32>
      %c0_11 = arith.constant 0 : index
      %c0_12 = arith.constant 0 : index
      %13 = vector.load %arg7[%c0_11, %c0_12] : memref<256x128xf32, #tpu.memory_space<vmem>>, vector<256x128xf32>
      tpu.vector_store %arg7[%c0_11, %c0_12], %12 {strides = array<i32>} : memref<256x128xf32, #tpu.memory_space<vmem>>, vector<256x128xf32>,
    } else {
    }
    %c0 = arith.constant 0 : index
    %c0_1 = arith.constant 0 : index
    %3 = vector.load %arg7[%c0, %c0_1] : memref<256x128xf32, #tpu.memory_space<vmem>>, vector<256x128xf32>
    %c0_2 = arith.constant 0 : index
    %c0_3 = arith.constant 0 : index
    %4 = vector.load %arg3[%c0_2, %c0_3] : memref<256x128xbf16, #tpu.memory_space<vmem>>, vector<256x128xbf16>
    %c0_4 = arith.constant 0 : index
    %c0_5 = arith.constant 0 : index
    %5 = vector.load %arg4[%c0_4, %c0_5] : memref<128x128xbf16, #tpu.memory_space<vmem>>, vector<128x128xbf16>
    %cst = arith.constant dense<0.000000e+00> : vector<256x128xf32>
    %6 = tpu.matmul %4, %5, %cst {dimension_numbers = #tpu.dot_dimension_numbers<[1], [0], [0], [1], [0, 0, 1, 1], [], []>} : vector<256x128xbf16>, vector<128x128xbf16>, vector<256x128xf32> -> vector<256x128xf32>
    %7 = arith.addf %3, %6 : vector<256x128xf32>
    %c0_6 = arith.constant 0 : index
    %c0_7 = arith.constant 0 : index
    %8 = vector.load %arg7[%c0_6, %c0_7] : memref<256x128xf32, #tpu.memory_space<vmem>>, vector<256x128xf32>
    tpu.vector_store %arg7[%c0_6, %c0_7], %7 {strides = array<i32>} : memref<256x128xf32, #tpu.memory_space<vmem>>, vector<256x128xf32>,
    %c0_i32_8 = arith.constant 0 : i32
    %9 = arith.cmpi eq, %arg2, %c0_i32_8 : i32
    %10 = arith.extui %9 : i1 to i32
    %c0_i32_9 = arith.constant 0 : i32
    %11 = arith.cmpi ne, %10, %c0_i32_9 : i32
    scf.if %11 {
      %c0_10 = arith.constant 0 : index
      %c0_11 = arith.constant 0 : index
      %12 = vector.load %arg7[%c0_10, %c0_11] : memref<256x128xf32, #tpu.memory_space<vmem>>, vector<256x128xf32>
      %c0_12 = arith.constant 0 : index
      %c0_13 = arith.constant 0 : index
      %13 = vector.load %arg5[%c0_12, %c0_13] : memref<1x128xf32, #tpu.memory_space<vmem>>, vector<1x128xf32>
      %14 = vector.broadcast %13 : vector<1x128xf32> to vector<256x128xf32>
      %15 = arith.addf %12, %14 : vector<256x128xf32>
      %c0_14 = arith.constant 0 : index
      %c0_15 = arith.constant 0 : index
      %16 = vector.load %arg6[%c0_14, %c0_15] : memref<256x128xf32, #tpu.memory_space<vmem>>, vector<256x128xf32>
      tpu.vector_store %arg6[%c0_14, %c0_15], %15 {strides = array<i32>} : memref<256x128xf32, #tpu.memory_space<vmem>>, vector<256x128xf32>,
    } else {
    }
    return
  }
  func.func @transform_0(%arg0: i32, %arg1: i32, %arg2: i32) -> (i32, i32) {
    %c0_i32 = arith.constant 0 : i32
    return %arg0, %arg2 : i32, i32
  }
  func.func @transform_1(%arg0: i32, %arg1: i32, %arg2: i32) -> (i32, i32) {
    %c0_i32 = arith.constant 0 : i32
    return %arg2, %arg1 : i32, i32
  }
  func.func @transform_2(%arg0: i32, %arg1: i32, %arg2: i32) -> (i32, i32) {
    %c0_i32 = arith.constant 0 : i32
    %c0_i32_0 = arith.constant 0 : i32
    return %c0_i32, %arg1 : i32, i32
  }
  func.func @transform_3(%arg0: i32, %arg1: i32, %arg2: i32) -> (i32, i32) {
    %c0_i32 = arith.constant 0 : i32
    return %arg0, %arg1 : i32, i32
  }
}

module attributes {stable_mosaic.version = 11 : i64} {
  func.func @_add_relu_kernel(%arg0: i32, %arg1: memref<512x128xf32, #tpu.memory_space<vmem>>, %arg2: memref<512x128xf32, #tpu.memory_space<vmem>>, %arg3: memref<512x128xf32, #tpu.memory_space<vmem>>) attributes {dimension_semantics = [#tpu.dimension_semantics<parallel>], iteration_bounds = array<i64: 1>, scalar_prefetch = 0 : i64, scratch_operands = 0 : i64, tpu.core_type = #tpu.core_type<tc>, window_params = [{transform_indices = @transform_0, window_bounds = array<i64: 512, 128>}, {transform_indices = @transform_1, window_bounds = array<i64: 512, 128>}, {transform_indices = @transform_2, window_bounds = array<i64: 512, 128>}]} {
    %c0 = arith.constant 0 : index
    %c0_0 = arith.constant 0 : index
    %0 = vector.load %arg1[%c0, %c0_0] : memref<512x128xf32, #tpu.memory_space<vmem>>, vector<512x128xf32>
    %c0_1 = arith.constant 0 : index
    %c0_2 = arith.constant 0 : index
    %1 = vector.load %arg2[%c0_1, %c0_2] : memref<512x128xf32, #tpu.memory_space<vmem>>, vector<512x128xf32>
    %2 = arith.addf %0, %1 : vector<512x128xf32>
    %cst = arith.constant 0.000000e+00 : f32
    %3 = vector.broadcast %cst : f32 to vector<512x128xf32>
    %4 = arith.maximumf %2, %3 : vector<512x128xf32>
    %c0_3 = arith.constant 0 : index
    %c0_4 = arith.constant 0 : index
    %5 = vector.load %arg3[%c0_3, %c0_4] : memref<512x128xf32, #tpu.memory_space<vmem>>, vector<512x128xf32>
    tpu.vector_store %arg3[%c0_3, %c0_4], %4 {strides = array<i32>} : memref<512x128xf32, #tpu.memory_space<vmem>>, vector<512x128xf32>,
    return
  }
  func.func @transform_0(%arg0: i32) -> (i32, i32) {
    %c0_i32 = arith.constant 0 : i32
    %c0_i32_0 = arith.constant 0 : i32
    return %arg0, %c0_i32 : i32, i32
  }
  func.func @transform_1(%arg0: i32) -> (i32, i32) {
    %c0_i32 = arith.constant 0 : i32
    %c0_i32_0 = arith.constant 0 : i32
    return %arg0, %c0_i32 : i32, i32
  }
  func.func @transform_2(%arg0: i32) -> (i32, i32) {
    %c0_i32 = arith.constant 0 : i32
    %c0_i32_0 = arith.constant 0 : i32
    return %arg0, %c0_i32 : i32, i32
  }
}

module attributes {stable_mosaic.version = 11 : i64} {
  func.func @_conv_mm_kernel(%arg0: i32, %arg1: i32, %arg2: i32, %arg3: memref<128x384xbf16, #tpu.memory_space<vmem>>, %arg4: memref<384x128xbf16, #tpu.memory_space<vmem>>, %arg5: memref<1x128xf32, #tpu.memory_space<vmem>>, %arg6: memref<128x128xf32, #tpu.memory_space<vmem>>, %arg7: memref<128x128xf32, #tpu.memory_space<vmem>>) attributes {dimension_semantics = [#tpu.dimension_semantics<parallel>, #tpu.dimension_semantics<parallel>, #tpu.dimension_semantics<arbitrary>], iteration_bounds = array<i64: 1, 1, 3>, scalar_prefetch = 0 : i64, scratch_operands = 1 : i64, tpu.core_type = #tpu.core_type<tc>, window_params = [{transform_indices = @transform_0, window_bounds = array<i64: 128, 384>}, {transform_indices = @transform_1, window_bounds = array<i64: 384, 128>}, {transform_indices = @transform_2, window_bounds = array<i64: 1, 128>}, {transform_indices = @transform_3, window_bounds = array<i64: 128, 128>}]} {
    %c0_i32 = arith.constant 0 : i32
    %0 = arith.cmpi eq, %arg2, %c0_i32 : i32
    %1 = arith.extui %0 : i1 to i32
    %c0_i32_0 = arith.constant 0 : i32
    %2 = arith.cmpi ne, %1, %c0_i32_0 : i32
    scf.if %2 {
      %cst_9 = arith.constant 0.000000e+00 : f32
      %12 = vector.broadcast %cst_9 : f32 to vector<128x128xf32>
      %c0_10 = arith.constant 0 : index
      %c0_11 = arith.constant 0 : index
      %13 = vector.load %arg7[%c0_10, %c0_11] : memref<128x128xf32, #tpu.memory_space<vmem>>, vector<128x128xf32>
      tpu.vector_store %arg7[%c0_10, %c0_11], %12 {strides = array<i32>} : memref<128x128xf32, #tpu.memory_space<vmem>>, vector<128x128xf32>,
    } else {
    }
    %c0 = arith.constant 0 : index
    %c0_1 = arith.constant 0 : index
    %3 = vector.load %arg7[%c0, %c0_1] : memref<128x128xf32, #tpu.memory_space<vmem>>, vector<128x128xf32>
    %c0_2 = arith.constant 0 : index
    %c0_3 = arith.constant 0 : index
    %4 = vector.load %arg3[%c0_2, %c0_3] : memref<128x384xbf16, #tpu.memory_space<vmem>>, vector<128x384xbf16>
    %c0_4 = arith.constant 0 : index
    %c0_5 = arith.constant 0 : index
    %5 = vector.load %arg4[%c0_4, %c0_5] : memref<384x128xbf16, #tpu.memory_space<vmem>>, vector<384x128xbf16>
    %cst = arith.constant dense<0.000000e+00> : vector<128x128xf32>
    %6 = tpu.matmul %4, %5, %cst {dimension_numbers = #tpu.dot_dimension_numbers<[1], [0], [0], [1], [0, 0, 1, 1], [], []>} : vector<128x384xbf16>, vector<384x128xbf16>, vector<128x128xf32> -> vector<128x128xf32>
    %7 = arith.addf %3, %6 : vector<128x128xf32>
    %c0_6 = arith.constant 0 : index
    %c0_7 = arith.constant 0 : index
    %8 = vector.load %arg7[%c0_6, %c0_7] : memref<128x128xf32, #tpu.memory_space<vmem>>, vector<128x128xf32>
    tpu.vector_store %arg7[%c0_6, %c0_7], %7 {strides = array<i32>} : memref<128x128xf32, #tpu.memory_space<vmem>>, vector<128x128xf32>,
    %c2_i32 = arith.constant 2 : i32
    %9 = arith.cmpi eq, %arg2, %c2_i32 : i32
    %10 = arith.extui %9 : i1 to i32
    %c0_i32_8 = arith.constant 0 : i32
    %11 = arith.cmpi ne, %10, %c0_i32_8 : i32
    scf.if %11 {
      %c0_9 = arith.constant 0 : index
      %c0_10 = arith.constant 0 : index
      %12 = vector.load %arg7[%c0_9, %c0_10] : memref<128x128xf32, #tpu.memory_space<vmem>>, vector<128x128xf32>
      %c0_11 = arith.constant 0 : index
      %c0_12 = arith.constant 0 : index
      %13 = vector.load %arg5[%c0_11, %c0_12] : memref<1x128xf32, #tpu.memory_space<vmem>>, vector<1x128xf32>
      %14 = vector.broadcast %13 : vector<1x128xf32> to vector<128x128xf32>
      %15 = arith.addf %12, %14 : vector<128x128xf32>
      %cst_13 = arith.constant 0.000000e+00 : f32
      %16 = vector.broadcast %cst_13 : f32 to vector<128x128xf32>
      %17 = arith.maximumf %15, %16 : vector<128x128xf32>
      %c0_14 = arith.constant 0 : index
      %c0_15 = arith.constant 0 : index
      %18 = vector.load %arg6[%c0_14, %c0_15] : memref<128x128xf32, #tpu.memory_space<vmem>>, vector<128x128xf32>
      tpu.vector_store %arg6[%c0_14, %c0_15], %17 {strides = array<i32>} : memref<128x128xf32, #tpu.memory_space<vmem>>, vector<128x128xf32>,
    } else {
    }
    return
  }
  func.func @transform_0(%arg0: i32, %arg1: i32, %arg2: i32) -> (i32, i32) {
    %c0_i32 = arith.constant 0 : i32
    return %arg0, %arg2 : i32, i32
  }
  func.func @transform_1(%arg0: i32, %arg1: i32, %arg2: i32) -> (i32, i32) {
    %c0_i32 = arith.constant 0 : i32
    return %arg2, %arg1 : i32, i32
  }
  func.func @transform_2(%arg0: i32, %arg1: i32, %arg2: i32) -> (i32, i32) {
    %c0_i32 = arith.constant 0 : i32
    %c0_i32_0 = arith.constant 0 : i32
    return %c0_i32, %arg1 : i32, i32
  }
  func.func @transform_3(%arg0: i32, %arg1: i32, %arg2: i32) -> (i32, i32) {
    %c0_i32 = arith.constant 0 : i32
    return %arg0, %arg1 : i32, i32
  }
}

module attributes {stable_mosaic.version = 11 : i64} {
  func.func @_conv_mm_kernel(%arg0: i32, %arg1: i32, %arg2: i32, %arg3: memref<128x128xbf16, #tpu.memory_space<vmem>>, %arg4: memref<128x128xbf16, #tpu.memory_space<vmem>>, %arg5: memref<1x128xf32, #tpu.memory_space<vmem>>, %arg6: memref<128x128xf32, #tpu.memory_space<vmem>>, %arg7: memref<128x128xf32, #tpu.memory_space<vmem>>) attributes {dimension_semantics = [#tpu.dimension_semantics<parallel>, #tpu.dimension_semantics<parallel>, #tpu.dimension_semantics<arbitrary>], iteration_bounds = array<i64: 1, 1, 1>, scalar_prefetch = 0 : i64, scratch_operands = 1 : i64, tpu.core_type = #tpu.core_type<tc>, window_params = [{transform_indices = @transform_0, window_bounds = array<i64: 128, 128>}, {transform_indices = @transform_1, window_bounds = array<i64: 128, 128>}, {transform_indices = @transform_2, window_bounds = array<i64: 1, 128>}, {transform_indices = @transform_3, window_bounds = array<i64: 128, 128>}]} {
    %c0_i32 = arith.constant 0 : i32
    %0 = arith.cmpi eq, %arg2, %c0_i32 : i32
    %1 = arith.extui %0 : i1 to i32
    %c0_i32_0 = arith.constant 0 : i32
    %2 = arith.cmpi ne, %1, %c0_i32_0 : i32
    scf.if %2 {
      %cst_10 = arith.constant 0.000000e+00 : f32
      %12 = vector.broadcast %cst_10 : f32 to vector<128x128xf32>
      %c0_11 = arith.constant 0 : index
      %c0_12 = arith.constant 0 : index
      %13 = vector.load %arg7[%c0_11, %c0_12] : memref<128x128xf32, #tpu.memory_space<vmem>>, vector<128x128xf32>
      tpu.vector_store %arg7[%c0_11, %c0_12], %12 {strides = array<i32>} : memref<128x128xf32, #tpu.memory_space<vmem>>, vector<128x128xf32>,
    } else {
    }
    %c0 = arith.constant 0 : index
    %c0_1 = arith.constant 0 : index
    %3 = vector.load %arg7[%c0, %c0_1] : memref<128x128xf32, #tpu.memory_space<vmem>>, vector<128x128xf32>
    %c0_2 = arith.constant 0 : index
    %c0_3 = arith.constant 0 : index
    %4 = vector.load %arg3[%c0_2, %c0_3] : memref<128x128xbf16, #tpu.memory_space<vmem>>, vector<128x128xbf16>
    %c0_4 = arith.constant 0 : index
    %c0_5 = arith.constant 0 : index
    %5 = vector.load %arg4[%c0_4, %c0_5] : memref<128x128xbf16, #tpu.memory_space<vmem>>, vector<128x128xbf16>
    %cst = arith.constant dense<0.000000e+00> : vector<128x128xf32>
    %6 = tpu.matmul %4, %5, %cst {dimension_numbers = #tpu.dot_dimension_numbers<[1], [0], [0], [1], [0, 0, 1, 1], [], []>} : vector<128x128xbf16>, vector<128x128xbf16>, vector<128x128xf32> -> vector<128x128xf32>
    %7 = arith.addf %3, %6 : vector<128x128xf32>
    %c0_6 = arith.constant 0 : index
    %c0_7 = arith.constant 0 : index
    %8 = vector.load %arg7[%c0_6, %c0_7] : memref<128x128xf32, #tpu.memory_space<vmem>>, vector<128x128xf32>
    tpu.vector_store %arg7[%c0_6, %c0_7], %7 {strides = array<i32>} : memref<128x128xf32, #tpu.memory_space<vmem>>, vector<128x128xf32>,
    %c0_i32_8 = arith.constant 0 : i32
    %9 = arith.cmpi eq, %arg2, %c0_i32_8 : i32
    %10 = arith.extui %9 : i1 to i32
    %c0_i32_9 = arith.constant 0 : i32
    %11 = arith.cmpi ne, %10, %c0_i32_9 : i32
    scf.if %11 {
      %c0_10 = arith.constant 0 : index
      %c0_11 = arith.constant 0 : index
      %12 = vector.load %arg7[%c0_10, %c0_11] : memref<128x128xf32, #tpu.memory_space<vmem>>, vector<128x128xf32>
      %c0_12 = arith.constant 0 : index
      %c0_13 = arith.constant 0 : index
      %13 = vector.load %arg5[%c0_12, %c0_13] : memref<1x128xf32, #tpu.memory_space<vmem>>, vector<1x128xf32>
      %14 = vector.broadcast %13 : vector<1x128xf32> to vector<128x128xf32>
      %15 = arith.addf %12, %14 : vector<128x128xf32>
      %c0_14 = arith.constant 0 : index
      %c0_15 = arith.constant 0 : index
      %16 = vector.load %arg6[%c0_14, %c0_15] : memref<128x128xf32, #tpu.memory_space<vmem>>, vector<128x128xf32>
      tpu.vector_store %arg6[%c0_14, %c0_15], %15 {strides = array<i32>} : memref<128x128xf32, #tpu.memory_space<vmem>>, vector<128x128xf32>,
    } else {
    }
    return
  }
  func.func @transform_0(%arg0: i32, %arg1: i32, %arg2: i32) -> (i32, i32) {
    %c0_i32 = arith.constant 0 : i32
    return %arg0, %arg2 : i32, i32
  }
  func.func @transform_1(%arg0: i32, %arg1: i32, %arg2: i32) -> (i32, i32) {
    %c0_i32 = arith.constant 0 : i32
    return %arg2, %arg1 : i32, i32
  }
  func.func @transform_2(%arg0: i32, %arg1: i32, %arg2: i32) -> (i32, i32) {
    %c0_i32 = arith.constant 0 : i32
    %c0_i32_0 = arith.constant 0 : i32
    return %c0_i32, %arg1 : i32, i32
  }
  func.func @transform_3(%arg0: i32, %arg1: i32, %arg2: i32) -> (i32, i32) {
    %c0_i32 = arith.constant 0 : i32
    return %arg0, %arg1 : i32, i32
  }
}

module attributes {stable_mosaic.version = 11 : i64} {
  func.func @_add_relu_kernel(%arg0: i32, %arg1: memref<128x128xf32, #tpu.memory_space<vmem>>, %arg2: memref<128x128xf32, #tpu.memory_space<vmem>>, %arg3: memref<128x128xf32, #tpu.memory_space<vmem>>) attributes {dimension_semantics = [#tpu.dimension_semantics<parallel>], iteration_bounds = array<i64: 1>, scalar_prefetch = 0 : i64, scratch_operands = 0 : i64, tpu.core_type = #tpu.core_type<tc>, window_params = [{transform_indices = @transform_0, window_bounds = array<i64: 128, 128>}, {transform_indices = @transform_1, window_bounds = array<i64: 128, 128>}, {transform_indices = @transform_2, window_bounds = array<i64: 128, 128>}]} {
    %c0 = arith.constant 0 : index
    %c0_0 = arith.constant 0 : index
    %0 = vector.load %arg1[%c0, %c0_0] : memref<128x128xf32, #tpu.memory_space<vmem>>, vector<128x128xf32>
    %c0_1 = arith.constant 0 : index
    %c0_2 = arith.constant 0 : index
    %1 = vector.load %arg2[%c0_1, %c0_2] : memref<128x128xf32, #tpu.memory_space<vmem>>, vector<128x128xf32>
    %2 = arith.addf %0, %1 : vector<128x128xf32>
    %cst = arith.constant 0.000000e+00 : f32
    %3 = vector.broadcast %cst : f32 to vector<128x128xf32>
    %4 = arith.maximumf %2, %3 : vector<128x128xf32>
    %c0_3 = arith.constant 0 : index
    %c0_4 = arith.constant 0 : index
    %5 = vector.load %arg3[%c0_3, %c0_4] : memref<128x128xf32, #tpu.memory_space<vmem>>, vector<128x128xf32>
    tpu.vector_store %arg3[%c0_3, %c0_4], %4 {strides = array<i32>} : memref<128x128xf32, #tpu.memory_space<vmem>>, vector<128x128xf32>,
    return
  }
  func.func @transform_0(%arg0: i32) -> (i32, i32) {
    %c0_i32 = arith.constant 0 : i32
    %c0_i32_0 = arith.constant 0 : i32
    return %arg0, %c0_i32 : i32, i32
  }
  func.func @transform_1(%arg0: i32) -> (i32, i32) {
    %c0_i32 = arith.constant 0 : i32
    %c0_i32_0 = arith.constant 0 : i32
    return %arg0, %c0_i32 : i32, i32
  }
  func.func @transform_2(%arg0: i32) -> (i32, i32) {
    %c0_i32 = arith.constant 0 : i32
    %c0_i32_0 = arith.constant 0 : i32
    return %arg0, %c0_i32 : i32, i32
  }
}

module attributes {stable_mosaic.version = 11 : i64} {
  func.func @_conv_mm_kernel(%arg0: i32, %arg1: i32, %arg2: i32, %arg3: memref<128x128xbf16, #tpu.memory_space<vmem>>, %arg4: memref<128x128xbf16, #tpu.memory_space<vmem>>, %arg5: memref<1x128xf32, #tpu.memory_space<vmem>>, %arg6: memref<128x128xf32, #tpu.memory_space<vmem>>, %arg7: memref<128x128xf32, #tpu.memory_space<vmem>>) attributes {dimension_semantics = [#tpu.dimension_semantics<parallel>, #tpu.dimension_semantics<parallel>, #tpu.dimension_semantics<arbitrary>], iteration_bounds = array<i64: 1, 1, 1>, scalar_prefetch = 0 : i64, scratch_operands = 1 : i64, tpu.core_type = #tpu.core_type<tc>, window_params = [{transform_indices = @transform_0, window_bounds = array<i64: 128, 128>}, {transform_indices = @transform_1, window_bounds = array<i64: 128, 128>}, {transform_indices = @transform_2, window_bounds = array<i64: 1, 128>}, {transform_indices = @transform_3, window_bounds = array<i64: 128, 128>}]} {
    %c0_i32 = arith.constant 0 : i32
    %0 = arith.cmpi eq, %arg2, %c0_i32 : i32
    %1 = arith.extui %0 : i1 to i32
    %c0_i32_0 = arith.constant 0 : i32
    %2 = arith.cmpi ne, %1, %c0_i32_0 : i32
    scf.if %2 {
      %cst_10 = arith.constant 0.000000e+00 : f32
      %12 = vector.broadcast %cst_10 : f32 to vector<128x128xf32>
      %c0_11 = arith.constant 0 : index
      %c0_12 = arith.constant 0 : index
      %13 = vector.load %arg7[%c0_11, %c0_12] : memref<128x128xf32, #tpu.memory_space<vmem>>, vector<128x128xf32>
      tpu.vector_store %arg7[%c0_11, %c0_12], %12 {strides = array<i32>} : memref<128x128xf32, #tpu.memory_space<vmem>>, vector<128x128xf32>,
    } else {
    }
    %c0 = arith.constant 0 : index
    %c0_1 = arith.constant 0 : index
    %3 = vector.load %arg7[%c0, %c0_1] : memref<128x128xf32, #tpu.memory_space<vmem>>, vector<128x128xf32>
    %c0_2 = arith.constant 0 : index
    %c0_3 = arith.constant 0 : index
    %4 = vector.load %arg3[%c0_2, %c0_3] : memref<128x128xbf16, #tpu.memory_space<vmem>>, vector<128x128xbf16>
    %c0_4 = arith.constant 0 : index
    %c0_5 = arith.constant 0 : index
    %5 = vector.load %arg4[%c0_4, %c0_5] : memref<128x128xbf16, #tpu.memory_space<vmem>>, vector<128x128xbf16>
    %cst = arith.constant dense<0.000000e+00> : vector<128x128xf32>
    %6 = tpu.matmul %4, %5, %cst {dimension_numbers = #tpu.dot_dimension_numbers<[1], [0], [0], [1], [0, 0, 1, 1], [], []>} : vector<128x128xbf16>, vector<128x128xbf16>, vector<128x128xf32> -> vector<128x128xf32>
    %7 = arith.addf %3, %6 : vector<128x128xf32>
    %c0_6 = arith.constant 0 : index
    %c0_7 = arith.constant 0 : index
    %8 = vector.load %arg7[%c0_6, %c0_7] : memref<128x128xf32, #tpu.memory_space<vmem>>, vector<128x128xf32>
    tpu.vector_store %arg7[%c0_6, %c0_7], %7 {strides = array<i32>} : memref<128x128xf32, #tpu.memory_space<vmem>>, vector<128x128xf32>,
    %c0_i32_8 = arith.constant 0 : i32
    %9 = arith.cmpi eq, %arg2, %c0_i32_8 : i32
    %10 = arith.extui %9 : i1 to i32
    %c0_i32_9 = arith.constant 0 : i32
    %11 = arith.cmpi ne, %10, %c0_i32_9 : i32
    scf.if %11 {
      %c0_10 = arith.constant 0 : index
      %c0_11 = arith.constant 0 : index
      %12 = vector.load %arg7[%c0_10, %c0_11] : memref<128x128xf32, #tpu.memory_space<vmem>>, vector<128x128xf32>
      %c0_12 = arith.constant 0 : index
      %c0_13 = arith.constant 0 : index
      %13 = vector.load %arg5[%c0_12, %c0_13] : memref<1x128xf32, #tpu.memory_space<vmem>>, vector<1x128xf32>
      %14 = vector.broadcast %13 : vector<1x128xf32> to vector<128x128xf32>
      %15 = arith.addf %12, %14 : vector<128x128xf32>
      %cst_14 = arith.constant 0.000000e+00 : f32
      %16 = vector.broadcast %cst_14 : f32 to vector<128x128xf32>
      %17 = arith.maximumf %15, %16 : vector<128x128xf32>
      %c0_15 = arith.constant 0 : index
      %c0_16 = arith.constant 0 : index
      %18 = vector.load %arg6[%c0_15, %c0_16] : memref<128x128xf32, #tpu.memory_space<vmem>>, vector<128x128xf32>
      tpu.vector_store %arg6[%c0_15, %c0_16], %17 {strides = array<i32>} : memref<128x128xf32, #tpu.memory_space<vmem>>, vector<128x128xf32>,
    } else {
    }
    return
  }
  func.func @transform_0(%arg0: i32, %arg1: i32, %arg2: i32) -> (i32, i32) {
    %c0_i32 = arith.constant 0 : i32
    return %arg0, %arg2 : i32, i32
  }
  func.func @transform_1(%arg0: i32, %arg1: i32, %arg2: i32) -> (i32, i32) {
    %c0_i32 = arith.constant 0 : i32
    return %arg2, %arg1 : i32, i32
  }
  func.func @transform_2(%arg0: i32, %arg1: i32, %arg2: i32) -> (i32, i32) {
    %c0_i32 = arith.constant 0 : i32
    %c0_i32_0 = arith.constant 0 : i32
    return %c0_i32, %arg1 : i32, i32
  }
  func.func @transform_3(%arg0: i32, %arg1: i32, %arg2: i32) -> (i32, i32) {
    %c0_i32 = arith.constant 0 : i32
    return %arg0, %arg1 : i32, i32
  }
}

module attributes {stable_mosaic.version = 11 : i64} {
  func.func @_conv_mm_kernel(%arg0: i32, %arg1: i32, %arg2: i32, %arg3: memref<32x384xbf16, #tpu.memory_space<vmem>>, %arg4: memref<384x128xbf16, #tpu.memory_space<vmem>>, %arg5: memref<1x128xf32, #tpu.memory_space<vmem>>, %arg6: memref<32x128xf32, #tpu.memory_space<vmem>>, %arg7: memref<32x128xf32, #tpu.memory_space<vmem>>) attributes {dimension_semantics = [#tpu.dimension_semantics<parallel>, #tpu.dimension_semantics<parallel>, #tpu.dimension_semantics<arbitrary>], iteration_bounds = array<i64: 1, 1, 3>, scalar_prefetch = 0 : i64, scratch_operands = 1 : i64, tpu.core_type = #tpu.core_type<tc>, window_params = [{transform_indices = @transform_0, window_bounds = array<i64: 32, 384>}, {transform_indices = @transform_1, window_bounds = array<i64: 384, 128>}, {transform_indices = @transform_2, window_bounds = array<i64: 1, 128>}, {transform_indices = @transform_3, window_bounds = array<i64: 32, 128>}]} {
    %c0_i32 = arith.constant 0 : i32
    %0 = arith.cmpi eq, %arg2, %c0_i32 : i32
    %1 = arith.extui %0 : i1 to i32
    %c0_i32_0 = arith.constant 0 : i32
    %2 = arith.cmpi ne, %1, %c0_i32_0 : i32
    scf.if %2 {
      %cst_9 = arith.constant 0.000000e+00 : f32
      %12 = vector.broadcast %cst_9 : f32 to vector<32x128xf32>
      %c0_10 = arith.constant 0 : index
      %c0_11 = arith.constant 0 : index
      %13 = vector.load %arg7[%c0_10, %c0_11] : memref<32x128xf32, #tpu.memory_space<vmem>>, vector<32x128xf32>
      tpu.vector_store %arg7[%c0_10, %c0_11], %12 {strides = array<i32>} : memref<32x128xf32, #tpu.memory_space<vmem>>, vector<32x128xf32>,
    } else {
    }
    %c0 = arith.constant 0 : index
    %c0_1 = arith.constant 0 : index
    %3 = vector.load %arg7[%c0, %c0_1] : memref<32x128xf32, #tpu.memory_space<vmem>>, vector<32x128xf32>
    %c0_2 = arith.constant 0 : index
    %c0_3 = arith.constant 0 : index
    %4 = vector.load %arg3[%c0_2, %c0_3] : memref<32x384xbf16, #tpu.memory_space<vmem>>, vector<32x384xbf16>
    %c0_4 = arith.constant 0 : index
    %c0_5 = arith.constant 0 : index
    %5 = vector.load %arg4[%c0_4, %c0_5] : memref<384x128xbf16, #tpu.memory_space<vmem>>, vector<384x128xbf16>
    %cst = arith.constant dense<0.000000e+00> : vector<32x128xf32>
    %6 = tpu.matmul %4, %5, %cst {dimension_numbers = #tpu.dot_dimension_numbers<[1], [0], [0], [1], [0, 0, 1, 1], [], []>} : vector<32x384xbf16>, vector<384x128xbf16>, vector<32x128xf32> -> vector<32x128xf32>
    %7 = arith.addf %3, %6 : vector<32x128xf32>
    %c0_6 = arith.constant 0 : index
    %c0_7 = arith.constant 0 : index
    %8 = vector.load %arg7[%c0_6, %c0_7] : memref<32x128xf32, #tpu.memory_space<vmem>>, vector<32x128xf32>
    tpu.vector_store %arg7[%c0_6, %c0_7], %7 {strides = array<i32>} : memref<32x128xf32, #tpu.memory_space<vmem>>, vector<32x128xf32>,
    %c2_i32 = arith.constant 2 : i32
    %9 = arith.cmpi eq, %arg2, %c2_i32 : i32
    %10 = arith.extui %9 : i1 to i32
    %c0_i32_8 = arith.constant 0 : i32
    %11 = arith.cmpi ne, %10, %c0_i32_8 : i32
    scf.if %11 {
      %c0_9 = arith.constant 0 : index
      %c0_10 = arith.constant 0 : index
      %12 = vector.load %arg7[%c0_9, %c0_10] : memref<32x128xf32, #tpu.memory_space<vmem>>, vector<32x128xf32>
      %c0_11 = arith.constant 0 : index
      %c0_12 = arith.constant 0 : index
      %13 = vector.load %arg5[%c0_11, %c0_12] : memref<1x128xf32, #tpu.memory_space<vmem>>, vector<1x128xf32>
      %14 = vector.broadcast %13 : vector<1x128xf32> to vector<32x128xf32>
      %15 = arith.addf %12, %14 : vector<32x128xf32>
      %cst_13 = arith.constant 0.000000e+00 : f32
      %16 = vector.broadcast %cst_13 : f32 to vector<32x128xf32>
      %17 = arith.maximumf %15, %16 : vector<32x128xf32>
      %c0_14 = arith.constant 0 : index
      %c0_15 = arith.constant 0 : index
      %18 = vector.load %arg6[%c0_14, %c0_15] : memref<32x128xf32, #tpu.memory_space<vmem>>, vector<32x128xf32>
      tpu.vector_store %arg6[%c0_14, %c0_15], %17 {strides = array<i32>} : memref<32x128xf32, #tpu.memory_space<vmem>>, vector<32x128xf32>,
    } else {
    }
    return
  }
  func.func @transform_0(%arg0: i32, %arg1: i32, %arg2: i32) -> (i32, i32) {
    %c0_i32 = arith.constant 0 : i32
    return %arg0, %arg2 : i32, i32
  }
  func.func @transform_1(%arg0: i32, %arg1: i32, %arg2: i32) -> (i32, i32) {
    %c0_i32 = arith.constant 0 : i32
    return %arg2, %arg1 : i32, i32
  }
  func.func @transform_2(%arg0: i32, %arg1: i32, %arg2: i32) -> (i32, i32) {
    %c0_i32 = arith.constant 0 : i32
    %c0_i32_0 = arith.constant 0 : i32
    return %c0_i32, %arg1 : i32, i32
  }
  func.func @transform_3(%arg0: i32, %arg1: i32, %arg2: i32) -> (i32, i32) {
    %c0_i32 = arith.constant 0 : i32
    return %arg0, %arg1 : i32, i32
  }
}

module attributes {stable_mosaic.version = 11 : i64} {
  func.func @_conv_mm_kernel(%arg0: i32, %arg1: i32, %arg2: i32, %arg3: memref<32x128xbf16, #tpu.memory_space<vmem>>, %arg4: memref<128x128xbf16, #tpu.memory_space<vmem>>, %arg5: memref<1x128xf32, #tpu.memory_space<vmem>>, %arg6: memref<32x128xf32, #tpu.memory_space<vmem>>, %arg7: memref<32x128xf32, #tpu.memory_space<vmem>>) attributes {dimension_semantics = [#tpu.dimension_semantics<parallel>, #tpu.dimension_semantics<parallel>, #tpu.dimension_semantics<arbitrary>], iteration_bounds = array<i64: 1, 1, 1>, scalar_prefetch = 0 : i64, scratch_operands = 1 : i64, tpu.core_type = #tpu.core_type<tc>, window_params = [{transform_indices = @transform_0, window_bounds = array<i64: 32, 128>}, {transform_indices = @transform_1, window_bounds = array<i64: 128, 128>}, {transform_indices = @transform_2, window_bounds = array<i64: 1, 128>}, {transform_indices = @transform_3, window_bounds = array<i64: 32, 128>}]} {
    %c0_i32 = arith.constant 0 : i32
    %0 = arith.cmpi eq, %arg2, %c0_i32 : i32
    %1 = arith.extui %0 : i1 to i32
    %c0_i32_0 = arith.constant 0 : i32
    %2 = arith.cmpi ne, %1, %c0_i32_0 : i32
    scf.if %2 {
      %cst_10 = arith.constant 0.000000e+00 : f32
      %12 = vector.broadcast %cst_10 : f32 to vector<32x128xf32>
      %c0_11 = arith.constant 0 : index
      %c0_12 = arith.constant 0 : index
      %13 = vector.load %arg7[%c0_11, %c0_12] : memref<32x128xf32, #tpu.memory_space<vmem>>, vector<32x128xf32>
      tpu.vector_store %arg7[%c0_11, %c0_12], %12 {strides = array<i32>} : memref<32x128xf32, #tpu.memory_space<vmem>>, vector<32x128xf32>,
    } else {
    }
    %c0 = arith.constant 0 : index
    %c0_1 = arith.constant 0 : index
    %3 = vector.load %arg7[%c0, %c0_1] : memref<32x128xf32, #tpu.memory_space<vmem>>, vector<32x128xf32>
    %c0_2 = arith.constant 0 : index
    %c0_3 = arith.constant 0 : index
    %4 = vector.load %arg3[%c0_2, %c0_3] : memref<32x128xbf16, #tpu.memory_space<vmem>>, vector<32x128xbf16>
    %c0_4 = arith.constant 0 : index
    %c0_5 = arith.constant 0 : index
    %5 = vector.load %arg4[%c0_4, %c0_5] : memref<128x128xbf16, #tpu.memory_space<vmem>>, vector<128x128xbf16>
    %cst = arith.constant dense<0.000000e+00> : vector<32x128xf32>
    %6 = tpu.matmul %4, %5, %cst {dimension_numbers = #tpu.dot_dimension_numbers<[1], [0], [0], [1], [0, 0, 1, 1], [], []>} : vector<32x128xbf16>, vector<128x128xbf16>, vector<32x128xf32> -> vector<32x128xf32>
    %7 = arith.addf %3, %6 : vector<32x128xf32>
    %c0_6 = arith.constant 0 : index
    %c0_7 = arith.constant 0 : index
    %8 = vector.load %arg7[%c0_6, %c0_7] : memref<32x128xf32, #tpu.memory_space<vmem>>, vector<32x128xf32>
    tpu.vector_store %arg7[%c0_6, %c0_7], %7 {strides = array<i32>} : memref<32x128xf32, #tpu.memory_space<vmem>>, vector<32x128xf32>,
    %c0_i32_8 = arith.constant 0 : i32
    %9 = arith.cmpi eq, %arg2, %c0_i32_8 : i32
    %10 = arith.extui %9 : i1 to i32
    %c0_i32_9 = arith.constant 0 : i32
    %11 = arith.cmpi ne, %10, %c0_i32_9 : i32
    scf.if %11 {
      %c0_10 = arith.constant 0 : index
      %c0_11 = arith.constant 0 : index
      %12 = vector.load %arg7[%c0_10, %c0_11] : memref<32x128xf32, #tpu.memory_space<vmem>>, vector<32x128xf32>
      %c0_12 = arith.constant 0 : index
      %c0_13 = arith.constant 0 : index
      %13 = vector.load %arg5[%c0_12, %c0_13] : memref<1x128xf32, #tpu.memory_space<vmem>>, vector<1x128xf32>
      %14 = vector.broadcast %13 : vector<1x128xf32> to vector<32x128xf32>
      %15 = arith.addf %12, %14 : vector<32x128xf32>
      %c0_14 = arith.constant 0 : index
      %c0_15 = arith.constant 0 : index
      %16 = vector.load %arg6[%c0_14, %c0_15] : memref<32x128xf32, #tpu.memory_space<vmem>>, vector<32x128xf32>
      tpu.vector_store %arg6[%c0_14, %c0_15], %15 {strides = array<i32>} : memref<32x128xf32, #tpu.memory_space<vmem>>, vector<32x128xf32>,
    } else {
    }
    return
  }
  func.func @transform_0(%arg0: i32, %arg1: i32, %arg2: i32) -> (i32, i32) {
    %c0_i32 = arith.constant 0 : i32
    return %arg0, %arg2 : i32, i32
  }
  func.func @transform_1(%arg0: i32, %arg1: i32, %arg2: i32) -> (i32, i32) {
    %c0_i32 = arith.constant 0 : i32
    return %arg2, %arg1 : i32, i32
  }
  func.func @transform_2(%arg0: i32, %arg1: i32, %arg2: i32) -> (i32, i32) {
    %c0_i32 = arith.constant 0 : i32
    %c0_i32_0 = arith.constant 0 : i32
    return %c0_i32, %arg1 : i32, i32
  }
  func.func @transform_3(%arg0: i32, %arg1: i32, %arg2: i32) -> (i32, i32) {
    %c0_i32 = arith.constant 0 : i32
    return %arg0, %arg1 : i32, i32
  }
}

module attributes {stable_mosaic.version = 11 : i64} {
  func.func @_add_relu_kernel(%arg0: i32, %arg1: memref<32x128xf32, #tpu.memory_space<vmem>>, %arg2: memref<32x128xf32, #tpu.memory_space<vmem>>, %arg3: memref<32x128xf32, #tpu.memory_space<vmem>>) attributes {dimension_semantics = [#tpu.dimension_semantics<parallel>], iteration_bounds = array<i64: 1>, scalar_prefetch = 0 : i64, scratch_operands = 0 : i64, tpu.core_type = #tpu.core_type<tc>, window_params = [{transform_indices = @transform_0, window_bounds = array<i64: 32, 128>}, {transform_indices = @transform_1, window_bounds = array<i64: 32, 128>}, {transform_indices = @transform_2, window_bounds = array<i64: 32, 128>}]} {
    %c0 = arith.constant 0 : index
    %c0_0 = arith.constant 0 : index
    %0 = vector.load %arg1[%c0, %c0_0] : memref<32x128xf32, #tpu.memory_space<vmem>>, vector<32x128xf32>
    %c0_1 = arith.constant 0 : index
    %c0_2 = arith.constant 0 : index
    %1 = vector.load %arg2[%c0_1, %c0_2] : memref<32x128xf32, #tpu.memory_space<vmem>>, vector<32x128xf32>
    %2 = arith.addf %0, %1 : vector<32x128xf32>
    %cst = arith.constant 0.000000e+00 : f32
    %3 = vector.broadcast %cst : f32 to vector<32x128xf32>
    %4 = arith.maximumf %2, %3 : vector<32x128xf32>
    %c0_3 = arith.constant 0 : index
    %c0_4 = arith.constant 0 : index
    %5 = vector.load %arg3[%c0_3, %c0_4] : memref<32x128xf32, #tpu.memory_space<vmem>>, vector<32x128xf32>
    tpu.vector_store %arg3[%c0_3, %c0_4], %4 {strides = array<i32>} : memref<32x128xf32, #tpu.memory_space<vmem>>, vector<32x128xf32>,
    return
  }
  func.func @transform_0(%arg0: i32) -> (i32, i32) {
    %c0_i32 = arith.constant 0 : i32
    %c0_i32_0 = arith.constant 0 : i32
    return %arg0, %c0_i32 : i32, i32
  }
  func.func @transform_1(%arg0: i32) -> (i32, i32) {
    %c0_i32 = arith.constant 0 : i32
    %c0_i32_0 = arith.constant 0 : i32
    return %arg0, %c0_i32 : i32, i32
  }
  func.func @transform_2(%arg0: i32) -> (i32, i32) {
    %c0_i32 = arith.constant 0 : i32
    %c0_i32_0 = arith.constant 0 : i32
    return %arg0, %c0_i32 : i32, i32
  }
}

module attributes {stable_mosaic.version = 11 : i64} {
  func.func @_conv_mm_kernel(%arg0: i32, %arg1: i32, %arg2: i32, %arg3: memref<32x128xbf16, #tpu.memory_space<vmem>>, %arg4: memref<128x128xbf16, #tpu.memory_space<vmem>>, %arg5: memref<1x128xf32, #tpu.memory_space<vmem>>, %arg6: memref<32x128xf32, #tpu.memory_space<vmem>>, %arg7: memref<32x128xf32, #tpu.memory_space<vmem>>) attributes {dimension_semantics = [#tpu.dimension_semantics<parallel>, #tpu.dimension_semantics<parallel>, #tpu.dimension_semantics<arbitrary>], iteration_bounds = array<i64: 1, 1, 1>, scalar_prefetch = 0 : i64, scratch_operands = 1 : i64, tpu.core_type = #tpu.core_type<tc>, window_params = [{transform_indices = @transform_0, window_bounds = array<i64: 32, 128>}, {transform_indices = @transform_1, window_bounds = array<i64: 128, 128>}, {transform_indices = @transform_2, window_bounds = array<i64: 1, 128>}, {transform_indices = @transform_3, window_bounds = array<i64: 32, 128>}]} {
    %c0_i32 = arith.constant 0 : i32
    %0 = arith.cmpi eq, %arg2, %c0_i32 : i32
    %1 = arith.extui %0 : i1 to i32
    %c0_i32_0 = arith.constant 0 : i32
    %2 = arith.cmpi ne, %1, %c0_i32_0 : i32
    scf.if %2 {
      %cst_10 = arith.constant 0.000000e+00 : f32
      %12 = vector.broadcast %cst_10 : f32 to vector<32x128xf32>
      %c0_11 = arith.constant 0 : index
      %c0_12 = arith.constant 0 : index
      %13 = vector.load %arg7[%c0_11, %c0_12] : memref<32x128xf32, #tpu.memory_space<vmem>>, vector<32x128xf32>
      tpu.vector_store %arg7[%c0_11, %c0_12], %12 {strides = array<i32>} : memref<32x128xf32, #tpu.memory_space<vmem>>, vector<32x128xf32>,
    } else {
    }
    %c0 = arith.constant 0 : index
    %c0_1 = arith.constant 0 : index
    %3 = vector.load %arg7[%c0, %c0_1] : memref<32x128xf32, #tpu.memory_space<vmem>>, vector<32x128xf32>
    %c0_2 = arith.constant 0 : index
    %c0_3 = arith.constant 0 : index
    %4 = vector.load %arg3[%c0_2, %c0_3] : memref<32x128xbf16, #tpu.memory_space<vmem>>, vector<32x128xbf16>
    %c0_4 = arith.constant 0 : index
    %c0_5 = arith.constant 0 : index
    %5 = vector.load %arg4[%c0_4, %c0_5] : memref<128x128xbf16, #tpu.memory_space<vmem>>, vector<128x128xbf16>
    %cst = arith.constant dense<0.000000e+00> : vector<32x128xf32>
    %6 = tpu.matmul %4, %5, %cst {dimension_numbers = #tpu.dot_dimension_numbers<[1], [0], [0], [1], [0, 0, 1, 1], [], []>} : vector<32x128xbf16>, vector<128x128xbf16>, vector<32x128xf32> -> vector<32x128xf32>
    %7 = arith.addf %3, %6 : vector<32x128xf32>
    %c0_6 = arith.constant 0 : index
    %c0_7 = arith.constant 0 : index
    %8 = vector.load %arg7[%c0_6, %c0_7] : memref<32x128xf32, #tpu.memory_space<vmem>>, vector<32x128xf32>
    tpu.vector_store %arg7[%c0_6, %c0_7], %7 {strides = array<i32>} : memref<32x128xf32, #tpu.memory_space<vmem>>, vector<32x128xf32>,
    %c0_i32_8 = arith.constant 0 : i32
    %9 = arith.cmpi eq, %arg2, %c0_i32_8 : i32
    %10 = arith.extui %9 : i1 to i32
    %c0_i32_9 = arith.constant 0 : i32
    %11 = arith.cmpi ne, %10, %c0_i32_9 : i32
    scf.if %11 {
      %c0_10 = arith.constant 0 : index
      %c0_11 = arith.constant 0 : index
      %12 = vector.load %arg7[%c0_10, %c0_11] : memref<32x128xf32, #tpu.memory_space<vmem>>, vector<32x128xf32>
      %c0_12 = arith.constant 0 : index
      %c0_13 = arith.constant 0 : index
      %13 = vector.load %arg5[%c0_12, %c0_13] : memref<1x128xf32, #tpu.memory_space<vmem>>, vector<1x128xf32>
      %14 = vector.broadcast %13 : vector<1x128xf32> to vector<32x128xf32>
      %15 = arith.addf %12, %14 : vector<32x128xf32>
      %cst_14 = arith.constant 0.000000e+00 : f32
      %16 = vector.broadcast %cst_14 : f32 to vector<32x128xf32>
      %17 = arith.maximumf %15, %16 : vector<32x128xf32>
      %c0_15 = arith.constant 0 : index
      %c0_16 = arith.constant 0 : index
      %18 = vector.load %arg6[%c0_15, %c0_16] : memref<32x128xf32, #tpu.memory_space<vmem>>, vector<32x128xf32>
      tpu.vector_store %arg6[%c0_15, %c0_16], %17 {strides = array<i32>} : memref<32x128xf32, #tpu.memory_space<vmem>>, vector<32x128xf32>,
    } else {
    }
    return
  }
  func.func @transform_0(%arg0: i32, %arg1: i32, %arg2: i32) -> (i32, i32) {
    %c0_i32 = arith.constant 0 : i32
    return %arg0, %arg2 : i32, i32
  }
  func.func @transform_1(%arg0: i32, %arg1: i32, %arg2: i32) -> (i32, i32) {
    %c0_i32 = arith.constant 0 : i32
    return %arg2, %arg1 : i32, i32
  }
  func.func @transform_2(%arg0: i32, %arg1: i32, %arg2: i32) -> (i32, i32) {
    %c0_i32 = arith.constant 0 : i32
    %c0_i32_0 = arith.constant 0 : i32
    return %c0_i32, %arg1 : i32, i32
  }
  func.func @transform_3(%arg0: i32, %arg1: i32, %arg2: i32) -> (i32, i32) {
    %c0_i32 = arith.constant 0 : i32
    return %arg0, %arg1 : i32, i32
  }
}

module attributes {stable_mosaic.version = 11 : i64} {
  func.func @_conv_mm_kernel(%arg0: i32, %arg1: i32, %arg2: i32, %arg3: memref<8x384xbf16, #tpu.memory_space<vmem>>, %arg4: memref<384x128xbf16, #tpu.memory_space<vmem>>, %arg5: memref<1x128xf32, #tpu.memory_space<vmem>>, %arg6: memref<8x128xf32, #tpu.memory_space<vmem>>, %arg7: memref<8x128xf32, #tpu.memory_space<vmem>>) attributes {dimension_semantics = [#tpu.dimension_semantics<parallel>, #tpu.dimension_semantics<parallel>, #tpu.dimension_semantics<arbitrary>], iteration_bounds = array<i64: 1, 1, 3>, scalar_prefetch = 0 : i64, scratch_operands = 1 : i64, tpu.core_type = #tpu.core_type<tc>, window_params = [{transform_indices = @transform_0, window_bounds = array<i64: 8, 384>}, {transform_indices = @transform_1, window_bounds = array<i64: 384, 128>}, {transform_indices = @transform_2, window_bounds = array<i64: 1, 128>}, {transform_indices = @transform_3, window_bounds = array<i64: 8, 128>}]} {
    %c0_i32 = arith.constant 0 : i32
    %0 = arith.cmpi eq, %arg2, %c0_i32 : i32
    %1 = arith.extui %0 : i1 to i32
    %c0_i32_0 = arith.constant 0 : i32
    %2 = arith.cmpi ne, %1, %c0_i32_0 : i32
    scf.if %2 {
      %cst_9 = arith.constant 0.000000e+00 : f32
      %12 = vector.broadcast %cst_9 : f32 to vector<8x128xf32>
      %c0_10 = arith.constant 0 : index
      %c0_11 = arith.constant 0 : index
      %13 = vector.load %arg7[%c0_10, %c0_11] : memref<8x128xf32, #tpu.memory_space<vmem>>, vector<8x128xf32>
      tpu.vector_store %arg7[%c0_10, %c0_11], %12 {strides = array<i32>} : memref<8x128xf32, #tpu.memory_space<vmem>>, vector<8x128xf32>,
    } else {
    }
    %c0 = arith.constant 0 : index
    %c0_1 = arith.constant 0 : index
    %3 = vector.load %arg7[%c0, %c0_1] : memref<8x128xf32, #tpu.memory_space<vmem>>, vector<8x128xf32>
    %c0_2 = arith.constant 0 : index
    %c0_3 = arith.constant 0 : index
    %4 = vector.load %arg3[%c0_2, %c0_3] : memref<8x384xbf16, #tpu.memory_space<vmem>>, vector<8x384xbf16>
    %c0_4 = arith.constant 0 : index
    %c0_5 = arith.constant 0 : index
    %5 = vector.load %arg4[%c0_4, %c0_5] : memref<384x128xbf16, #tpu.memory_space<vmem>>, vector<384x128xbf16>
    %cst = arith.constant dense<0.000000e+00> : vector<8x128xf32>
    %6 = tpu.matmul %4, %5, %cst {dimension_numbers = #tpu.dot_dimension_numbers<[1], [0], [0], [1], [0, 0, 1, 1], [], []>} : vector<8x384xbf16>, vector<384x128xbf16>, vector<8x128xf32> -> vector<8x128xf32>
    %7 = arith.addf %3, %6 : vector<8x128xf32>
    %c0_6 = arith.constant 0 : index
    %c0_7 = arith.constant 0 : index
    %8 = vector.load %arg7[%c0_6, %c0_7] : memref<8x128xf32, #tpu.memory_space<vmem>>, vector<8x128xf32>
    tpu.vector_store %arg7[%c0_6, %c0_7], %7 {strides = array<i32>} : memref<8x128xf32, #tpu.memory_space<vmem>>, vector<8x128xf32>,
    %c2_i32 = arith.constant 2 : i32
    %9 = arith.cmpi eq, %arg2, %c2_i32 : i32
    %10 = arith.extui %9 : i1 to i32
    %c0_i32_8 = arith.constant 0 : i32
    %11 = arith.cmpi ne, %10, %c0_i32_8 : i32
    scf.if %11 {
      %c0_9 = arith.constant 0 : index
      %c0_10 = arith.constant 0 : index
      %12 = vector.load %arg7[%c0_9, %c0_10] : memref<8x128xf32, #tpu.memory_space<vmem>>, vector<8x128xf32>
      %c0_11 = arith.constant 0 : index
      %c0_12 = arith.constant 0 : index
      %13 = vector.load %arg5[%c0_11, %c0_12] : memref<1x128xf32, #tpu.memory_space<vmem>>, vector<1x128xf32>
      %14 = vector.broadcast %13 : vector<1x128xf32> to vector<8x128xf32>
      %15 = arith.addf %12, %14 : vector<8x128xf32>
      %cst_13 = arith.constant 0.000000e+00 : f32
      %16 = vector.broadcast %cst_13 : f32 to vector<8x128xf32>
      %17 = arith.maximumf %15, %16 : vector<8x128xf32>
      %c0_14 = arith.constant 0 : index
      %c0_15 = arith.constant 0 : index
      %18 = vector.load %arg6[%c0_14, %c0_15] : memref<8x128xf32, #tpu.memory_space<vmem>>, vector<8x128xf32>
      tpu.vector_store %arg6[%c0_14, %c0_15], %17 {strides = array<i32>} : memref<8x128xf32, #tpu.memory_space<vmem>>, vector<8x128xf32>,
    } else {
    }
    return
  }
  func.func @transform_0(%arg0: i32, %arg1: i32, %arg2: i32) -> (i32, i32) {
    %c0_i32 = arith.constant 0 : i32
    return %arg0, %arg2 : i32, i32
  }
  func.func @transform_1(%arg0: i32, %arg1: i32, %arg2: i32) -> (i32, i32) {
    %c0_i32 = arith.constant 0 : i32
    return %arg2, %arg1 : i32, i32
  }
  func.func @transform_2(%arg0: i32, %arg1: i32, %arg2: i32) -> (i32, i32) {
    %c0_i32 = arith.constant 0 : i32
    %c0_i32_0 = arith.constant 0 : i32
    return %c0_i32, %arg1 : i32, i32
  }
  func.func @transform_3(%arg0: i32, %arg1: i32, %arg2: i32) -> (i32, i32) {
    %c0_i32 = arith.constant 0 : i32
    return %arg0, %arg1 : i32, i32
  }
}

module attributes {stable_mosaic.version = 11 : i64} {
  func.func @_conv_mm_kernel(%arg0: i32, %arg1: i32, %arg2: i32, %arg3: memref<8x128xbf16, #tpu.memory_space<vmem>>, %arg4: memref<128x256xbf16, #tpu.memory_space<vmem>>, %arg5: memref<1x256xf32, #tpu.memory_space<vmem>>, %arg6: memref<8x256xf32, #tpu.memory_space<vmem>>, %arg7: memref<8x256xf32, #tpu.memory_space<vmem>>) attributes {dimension_semantics = [#tpu.dimension_semantics<parallel>, #tpu.dimension_semantics<parallel>, #tpu.dimension_semantics<arbitrary>], iteration_bounds = array<i64: 1, 1, 1>, scalar_prefetch = 0 : i64, scratch_operands = 1 : i64, tpu.core_type = #tpu.core_type<tc>, window_params = [{transform_indices = @transform_0, window_bounds = array<i64: 8, 128>}, {transform_indices = @transform_1, window_bounds = array<i64: 128, 256>}, {transform_indices = @transform_2, window_bounds = array<i64: 1, 256>}, {transform_indices = @transform_3, window_bounds = array<i64: 8, 256>}]} {
    %c0_i32 = arith.constant 0 : i32
    %0 = arith.cmpi eq, %arg2, %c0_i32 : i32
    %1 = arith.extui %0 : i1 to i32
    %c0_i32_0 = arith.constant 0 : i32
    %2 = arith.cmpi ne, %1, %c0_i32_0 : i32
    scf.if %2 {
      %cst_10 = arith.constant 0.000000e+00 : f32
      %12 = vector.broadcast %cst_10 : f32 to vector<8x256xf32>
      %c0_11 = arith.constant 0 : index
      %c0_12 = arith.constant 0 : index
      %13 = vector.load %arg7[%c0_11, %c0_12] : memref<8x256xf32, #tpu.memory_space<vmem>>, vector<8x256xf32>
      tpu.vector_store %arg7[%c0_11, %c0_12], %12 {strides = array<i32>} : memref<8x256xf32, #tpu.memory_space<vmem>>, vector<8x256xf32>,
    } else {
    }
    %c0 = arith.constant 0 : index
    %c0_1 = arith.constant 0 : index
    %3 = vector.load %arg7[%c0, %c0_1] : memref<8x256xf32, #tpu.memory_space<vmem>>, vector<8x256xf32>
    %c0_2 = arith.constant 0 : index
    %c0_3 = arith.constant 0 : index
    %4 = vector.load %arg3[%c0_2, %c0_3] : memref<8x128xbf16, #tpu.memory_space<vmem>>, vector<8x128xbf16>
    %c0_4 = arith.constant 0 : index
    %c0_5 = arith.constant 0 : index
    %5 = vector.load %arg4[%c0_4, %c0_5] : memref<128x256xbf16, #tpu.memory_space<vmem>>, vector<128x256xbf16>
    %cst = arith.constant dense<0.000000e+00> : vector<8x256xf32>
    %6 = tpu.matmul %4, %5, %cst {dimension_numbers = #tpu.dot_dimension_numbers<[1], [0], [0], [1], [0, 0, 1, 1], [], []>} : vector<8x128xbf16>, vector<128x256xbf16>, vector<8x256xf32> -> vector<8x256xf32>
    %7 = arith.addf %3, %6 : vector<8x256xf32>
    %c0_6 = arith.constant 0 : index
    %c0_7 = arith.constant 0 : index
    %8 = vector.load %arg7[%c0_6, %c0_7] : memref<8x256xf32, #tpu.memory_space<vmem>>, vector<8x256xf32>
    tpu.vector_store %arg7[%c0_6, %c0_7], %7 {strides = array<i32>} : memref<8x256xf32, #tpu.memory_space<vmem>>, vector<8x256xf32>,
    %c0_i32_8 = arith.constant 0 : i32
    %9 = arith.cmpi eq, %arg2, %c0_i32_8 : i32
    %10 = arith.extui %9 : i1 to i32
    %c0_i32_9 = arith.constant 0 : i32
    %11 = arith.cmpi ne, %10, %c0_i32_9 : i32
    scf.if %11 {
      %c0_10 = arith.constant 0 : index
      %c0_11 = arith.constant 0 : index
      %12 = vector.load %arg7[%c0_10, %c0_11] : memref<8x256xf32, #tpu.memory_space<vmem>>, vector<8x256xf32>
      %c0_12 = arith.constant 0 : index
      %c0_13 = arith.constant 0 : index
      %13 = vector.load %arg5[%c0_12, %c0_13] : memref<1x256xf32, #tpu.memory_space<vmem>>, vector<1x256xf32>
      %14 = vector.broadcast %13 : vector<1x256xf32> to vector<8x256xf32>
      %15 = arith.addf %12, %14 : vector<8x256xf32>
      %c0_14 = arith.constant 0 : index
      %c0_15 = arith.constant 0 : index
      %16 = vector.load %arg6[%c0_14, %c0_15] : memref<8x256xf32, #tpu.memory_space<vmem>>, vector<8x256xf32>
      tpu.vector_store %arg6[%c0_14, %c0_15], %15 {strides = array<i32>} : memref<8x256xf32, #tpu.memory_space<vmem>>, vector<8x256xf32>,
    } else {
    }
    return
  }
  func.func @transform_0(%arg0: i32, %arg1: i32, %arg2: i32) -> (i32, i32) {
    %c0_i32 = arith.constant 0 : i32
    return %arg0, %arg2 : i32, i32
  }
  func.func @transform_1(%arg0: i32, %arg1: i32, %arg2: i32) -> (i32, i32) {
    %c0_i32 = arith.constant 0 : i32
    return %arg2, %arg1 : i32, i32
  }
  func.func @transform_2(%arg0: i32, %arg1: i32, %arg2: i32) -> (i32, i32) {
    %c0_i32 = arith.constant 0 : i32
    %c0_i32_0 = arith.constant 0 : i32
    return %c0_i32, %arg1 : i32, i32
  }
  func.func @transform_3(%arg0: i32, %arg1: i32, %arg2: i32) -> (i32, i32) {
    %c0_i32 = arith.constant 0 : i32
    return %arg0, %arg1 : i32, i32
  }
}

module attributes {stable_mosaic.version = 11 : i64} {
  func.func @_add_relu_kernel(%arg0: i32, %arg1: memref<8x256xf32, #tpu.memory_space<vmem>>, %arg2: memref<8x256xf32, #tpu.memory_space<vmem>>, %arg3: memref<8x256xf32, #tpu.memory_space<vmem>>) attributes {dimension_semantics = [#tpu.dimension_semantics<parallel>], iteration_bounds = array<i64: 1>, scalar_prefetch = 0 : i64, scratch_operands = 0 : i64, tpu.core_type = #tpu.core_type<tc>, window_params = [{transform_indices = @transform_0, window_bounds = array<i64: 8, 256>}, {transform_indices = @transform_1, window_bounds = array<i64: 8, 256>}, {transform_indices = @transform_2, window_bounds = array<i64: 8, 256>}]} {
    %c0 = arith.constant 0 : index
    %c0_0 = arith.constant 0 : index
    %0 = vector.load %arg1[%c0, %c0_0] : memref<8x256xf32, #tpu.memory_space<vmem>>, vector<8x256xf32>
    %c0_1 = arith.constant 0 : index
    %c0_2 = arith.constant 0 : index
    %1 = vector.load %arg2[%c0_1, %c0_2] : memref<8x256xf32, #tpu.memory_space<vmem>>, vector<8x256xf32>
    %2 = arith.addf %0, %1 : vector<8x256xf32>
    %cst = arith.constant 0.000000e+00 : f32
    %3 = vector.broadcast %cst : f32 to vector<8x256xf32>
    %4 = arith.maximumf %2, %3 : vector<8x256xf32>
    %c0_3 = arith.constant 0 : index
    %c0_4 = arith.constant 0 : index
    %5 = vector.load %arg3[%c0_3, %c0_4] : memref<8x256xf32, #tpu.memory_space<vmem>>, vector<8x256xf32>
    tpu.vector_store %arg3[%c0_3, %c0_4], %4 {strides = array<i32>} : memref<8x256xf32, #tpu.memory_space<vmem>>, vector<8x256xf32>,
    return
  }
  func.func @transform_0(%arg0: i32) -> (i32, i32) {
    %c0_i32 = arith.constant 0 : i32
    %c0_i32_0 = arith.constant 0 : i32
    return %arg0, %c0_i32 : i32, i32
  }
  func.func @transform_1(%arg0: i32) -> (i32, i32) {
    %c0_i32 = arith.constant 0 : i32
    %c0_i32_0 = arith.constant 0 : i32
    return %arg0, %c0_i32 : i32, i32
  }
  func.func @transform_2(%arg0: i32) -> (i32, i32) {
    %c0_i32 = arith.constant 0 : i32
    %c0_i32_0 = arith.constant 0 : i32
    return %arg0, %c0_i32 : i32, i32
  }
}

module attributes {stable_mosaic.version = 11 : i64} {
  func.func @_conv_mm_kernel(%arg0: i32, %arg1: i32, %arg2: i32, %arg3: memref<8x256xbf16, #tpu.memory_space<vmem>>, %arg4: memref<256x128xbf16, #tpu.memory_space<vmem>>, %arg5: memref<1x128xf32, #tpu.memory_space<vmem>>, %arg6: memref<8x128xf32, #tpu.memory_space<vmem>>, %arg7: memref<8x128xf32, #tpu.memory_space<vmem>>) attributes {dimension_semantics = [#tpu.dimension_semantics<parallel>, #tpu.dimension_semantics<parallel>, #tpu.dimension_semantics<arbitrary>], iteration_bounds = array<i64: 1, 1, 1>, scalar_prefetch = 0 : i64, scratch_operands = 1 : i64, tpu.core_type = #tpu.core_type<tc>, window_params = [{transform_indices = @transform_0, window_bounds = array<i64: 8, 256>}, {transform_indices = @transform_1, window_bounds = array<i64: 256, 128>}, {transform_indices = @transform_2, window_bounds = array<i64: 1, 128>}, {transform_indices = @transform_3, window_bounds = array<i64: 8, 128>}]} {
    %c0_i32 = arith.constant 0 : i32
    %0 = arith.cmpi eq, %arg2, %c0_i32 : i32
    %1 = arith.extui %0 : i1 to i32
    %c0_i32_0 = arith.constant 0 : i32
    %2 = arith.cmpi ne, %1, %c0_i32_0 : i32
    scf.if %2 {
      %cst_10 = arith.constant 0.000000e+00 : f32
      %12 = vector.broadcast %cst_10 : f32 to vector<8x128xf32>
      %c0_11 = arith.constant 0 : index
      %c0_12 = arith.constant 0 : index
      %13 = vector.load %arg7[%c0_11, %c0_12] : memref<8x128xf32, #tpu.memory_space<vmem>>, vector<8x128xf32>
      tpu.vector_store %arg7[%c0_11, %c0_12], %12 {strides = array<i32>} : memref<8x128xf32, #tpu.memory_space<vmem>>, vector<8x128xf32>,
    } else {
    }
    %c0 = arith.constant 0 : index
    %c0_1 = arith.constant 0 : index
    %3 = vector.load %arg7[%c0, %c0_1] : memref<8x128xf32, #tpu.memory_space<vmem>>, vector<8x128xf32>
    %c0_2 = arith.constant 0 : index
    %c0_3 = arith.constant 0 : index
    %4 = vector.load %arg3[%c0_2, %c0_3] : memref<8x256xbf16, #tpu.memory_space<vmem>>, vector<8x256xbf16>
    %c0_4 = arith.constant 0 : index
    %c0_5 = arith.constant 0 : index
    %5 = vector.load %arg4[%c0_4, %c0_5] : memref<256x128xbf16, #tpu.memory_space<vmem>>, vector<256x128xbf16>
    %cst = arith.constant dense<0.000000e+00> : vector<8x128xf32>
    %6 = tpu.matmul %4, %5, %cst {dimension_numbers = #tpu.dot_dimension_numbers<[1], [0], [0], [1], [0, 0, 1, 1], [], []>} : vector<8x256xbf16>, vector<256x128xbf16>, vector<8x128xf32> -> vector<8x128xf32>
    %7 = arith.addf %3, %6 : vector<8x128xf32>
    %c0_6 = arith.constant 0 : index
    %c0_7 = arith.constant 0 : index
    %8 = vector.load %arg7[%c0_6, %c0_7] : memref<8x128xf32, #tpu.memory_space<vmem>>, vector<8x128xf32>
    tpu.vector_store %arg7[%c0_6, %c0_7], %7 {strides = array<i32>} : memref<8x128xf32, #tpu.memory_space<vmem>>, vector<8x128xf32>,
    %c0_i32_8 = arith.constant 0 : i32
    %9 = arith.cmpi eq, %arg2, %c0_i32_8 : i32
    %10 = arith.extui %9 : i1 to i32
    %c0_i32_9 = arith.constant 0 : i32
    %11 = arith.cmpi ne, %10, %c0_i32_9 : i32
    scf.if %11 {
      %c0_10 = arith.constant 0 : index
      %c0_11 = arith.constant 0 : index
      %12 = vector.load %arg7[%c0_10, %c0_11] : memref<8x128xf32, #tpu.memory_space<vmem>>, vector<8x128xf32>
      %c0_12 = arith.constant 0 : index
      %c0_13 = arith.constant 0 : index
      %13 = vector.load %arg5[%c0_12, %c0_13] : memref<1x128xf32, #tpu.memory_space<vmem>>, vector<1x128xf32>
      %14 = vector.broadcast %13 : vector<1x128xf32> to vector<8x128xf32>
      %15 = arith.addf %12, %14 : vector<8x128xf32>
      %cst_14 = arith.constant 0.000000e+00 : f32
      %16 = vector.broadcast %cst_14 : f32 to vector<8x128xf32>
      %17 = arith.maximumf %15, %16 : vector<8x128xf32>
      %c0_15 = arith.constant 0 : index
      %c0_16 = arith.constant 0 : index
      %18 = vector.load %arg6[%c0_15, %c0_16] : memref<8x128xf32, #tpu.memory_space<vmem>>, vector<8x128xf32>
      tpu.vector_store %arg6[%c0_15, %c0_16], %17 {strides = array<i32>} : memref<8x128xf32, #tpu.memory_space<vmem>>, vector<8x128xf32>,
    } else {
    }
    return
  }
  func.func @transform_0(%arg0: i32, %arg1: i32, %arg2: i32) -> (i32, i32) {
    %c0_i32 = arith.constant 0 : i32
    return %arg0, %arg2 : i32, i32
  }
  func.func @transform_1(%arg0: i32, %arg1: i32, %arg2: i32) -> (i32, i32) {
    %c0_i32 = arith.constant 0 : i32
    return %arg2, %arg1 : i32, i32
  }
  func.func @transform_2(%arg0: i32, %arg1: i32, %arg2: i32) -> (i32, i32) {
    %c0_i32 = arith.constant 0 : i32
    %c0_i32_0 = arith.constant 0 : i32
    return %c0_i32, %arg1 : i32, i32
  }
  func.func @transform_3(%arg0: i32, %arg1: i32, %arg2: i32) -> (i32, i32) {
    %c0_i32 = arith.constant 0 : i32
    return %arg0, %arg1 : i32, i32
  }
}

module attributes {stable_mosaic.version = 11 : i64} {
  func.func @_add_relu_mean_kernel(%arg0: i32, %arg1: memref<8x256xf32, #tpu.memory_space<vmem>>, %arg2: memref<8x256xf32, #tpu.memory_space<vmem>>, %arg3: memref<8x1xf32, #tpu.memory_space<vmem>>) attributes {dimension_semantics = [#tpu.dimension_semantics<parallel>], iteration_bounds = array<i64: 1>, scalar_prefetch = 0 : i64, scratch_operands = 0 : i64, tpu.core_type = #tpu.core_type<tc>, window_params = [{transform_indices = @transform_0, window_bounds = array<i64: 8, 256>}, {transform_indices = @transform_1, window_bounds = array<i64: 8, 256>}, {transform_indices = @transform_2, window_bounds = array<i64: 8, 1>}]} {
    %c0 = arith.constant 0 : index
    %c0_0 = arith.constant 0 : index
    %0 = vector.load %arg1[%c0, %c0_0] : memref<8x256xf32, #tpu.memory_space<vmem>>, vector<8x256xf32>
    %c0_1 = arith.constant 0 : index
    %c0_2 = arith.constant 0 : index
    %1 = vector.load %arg2[%c0_1, %c0_2] : memref<8x256xf32, #tpu.memory_space<vmem>>, vector<8x256xf32>
    %2 = arith.addf %0, %1 : vector<8x256xf32>
    %cst = arith.constant 0.000000e+00 : f32
    %3 = vector.broadcast %cst : f32 to vector<8x256xf32>
    %4 = arith.maximumf %2, %3 : vector<8x256xf32>
    %cst_3 = arith.constant dense<0.000000e+00> : vector<8xf32>
    %5 = vector.multi_reduction <add>, %4, %cst_3 [1] : vector<8x256xf32> to vector<8xf32>
    %6 = vector.shape_cast %5 : vector<8xf32> to vector<8x1xf32>
    %cst_4 = arith.constant 3.906250e-03 : f32
    %7 = vector.broadcast %cst_4 : f32 to vector<8x1xf32>
    %8 = arith.mulf %6, %7 : vector<8x1xf32>
    %c0_5 = arith.constant 0 : index
    %c0_6 = arith.constant 0 : index
    %9 = vector.load %arg3[%c0_5, %c0_6] : memref<8x1xf32, #tpu.memory_space<vmem>>, vector<8x1xf32>
    tpu.vector_store %arg3[%c0_5, %c0_6], %8 {strides = array<i32>} : memref<8x1xf32, #tpu.memory_space<vmem>>, vector<8x1xf32>,
    return
  }
  func.func @transform_0(%arg0: i32) -> (i32, i32) {
    %c0_i32 = arith.constant 0 : i32
    %c0_i32_0 = arith.constant 0 : i32
    return %arg0, %c0_i32 : i32, i32
  }
  func.func @transform_1(%arg0: i32) -> (i32, i32) {
    %c0_i32 = arith.constant 0 : i32
    %c0_i32_0 = arith.constant 0 : i32
    return %arg0, %c0_i32 : i32, i32
  }
  func.func @transform_2(%arg0: i32) -> (i32, i32) {
    %c0_i32 = arith.constant 0 : i32
    %c0_i32_0 = arith.constant 0 : i32
    return %arg0, %c0_i32 : i32, i32
  }
}

</mosaic_0001>

<llo_original>
// kernel: video_features_forward.69
$region0: #{video_features_forward.69}
  #allocation0 [shape = 'u32[]', space=smem, size = 0x4, offset = 0x4, fixed_abs, tag = 'smem constant byte address 0x4 - core index']
  #allocation1 [shape = 'u32[144,128]{1,0:T(1,128)}', space=vmem, size = 0x12000, scoped, tag = 'internal scratch']
  #allocation2 [shape = 'f32[256,128]{1,0:T(8,128)}', space=vmem, size = 0x20000, scoped, tag = 'scratch operand']
  %s0 = inlined_call_operand.vmem [shape: bf16[2048,256], index: 0, kind: input, shape index: {}]
  %s1 = inlined_call_operand.vmem [shape: bf16[256,128], index: 1, kind: input, shape index: {}]
  %s2 = inlined_call_operand.vmem [shape: f32[1,128], index: 2, kind: input, shape index: {}]
  %s3 = inlined_call_operand.vmem [shape: f32[2048,128], index: 3, kind: output, shape index: {}]
  %s4 = sld [smem:[#allocation0]]
  $region53: #{video_features_forward.69} parent=0
    _
  %s6 = ssub.s32 1, %s4
  %s7 = scalar_select 0, %s6, %s4
  loop: start=0, step=1, limit=10
  $region2: #{video_features_forward.69} parent=0 // loop_pre_header
    _
  $region3: #{video_features_forward.69} parent=0 // loop_header
    %s9 = sphi 0, %s13
    %p10 = scmp.ge.s32.totalorder %s9, 10
    %s16 = sphi 0, %s35
    %s17 = sphi 0, %s31
    %s18 = sphi 0, %s27
    %s19 = sphi 0, %s16
    %s20 = sphi 0, %s17
    %s21 = sphi 0, %s18
    %s22 = sphi 0, %s19
    %s23 = sphi 0, %s20
    %s24 = sphi 0, %s21
    %s40 = sphi 0, %s42
    %s43 = sphi 0, %s40
    %s44 = sphi 0, %s43
    %s60 = sphi 0, %s44
    %s68 = sphi 0, %s70
    %s71 = sphi 0, %s68
    %s72 = sphi 0, %s71
    %s88 = sphi 0, %s72
    %s94 = sphi 0, %s96
    %s97 = sphi 0, %s94
    %s98 = sphi 0, %s97
    %s114 = sphi 0, %s98
    %s122 = sphi 0, %s124
    %s125 = sphi 0, %s122
    %s126 = sphi 0, %s125
    %s142 = sphi 0, %s126
  $region4: #{video_features_forward.69} parent=0 // loop_header_branch
    %12 = sbr.rel (%p10) target = $region8
  $region5: #{video_features_forward.69} parent=0 // loop_body
    %s14 = ssub.s32 %s9, 1
    %s15 = ssub.s32 %s9, 2
    %s25 = sadd.s32 1, %s18
    %p26 = scmp.ge.s32.totalorder %s25, 1
    %s27 = scalar_select %p26, 0, %s25
    %s28 = sadd.s32 1, %s17
    %s29 = scalar_select %p26, %s28, %s17
    %p30 = scmp.ge.s32.totalorder %s29, 1
    %s31 = scalar_select %p30, 0, %s29
    %s32 = sadd.s32 1, %s16
    %s33 = scalar_select %p30, %s32, %s16
    %p34 = scmp.ge.s32.totalorder %s33, 8
    %s35 = scalar_select %p34, 0, %s33
    %s36 = ssub.s32 %s16, %s35
    %s37 = ssub.s32 %s18, %s27
    %s38 = sor.u32 %s36, %s37
    %p39 = scmp.eq.s32.totalorder %s38, 0
    %s41 = sadd.s32 %s40, 1
    %s42 = scalar_select %p39, %s40, %s41
    %p45 = pneg %p39
    %p46 = scmp.eq.s32.totalorder %s9, 7
    %p47 = por %p45, %p46
    %p48 = scmp.ne.s32.totalorder %s40, %s43
    %p49 = scmp.eq.s32.totalorder %s9, 0
    %p50 = por %p48, %p49
    %p51 = scmp.ne.s32.totalorder %s40, %s43
    %p52 = scmp.eq.s32.totalorder %s14, 7
    %p53 = por %p51, %p52
    %p54 = scmp.ne.s32.totalorder %s43, %s44
    %p55 = scmp.eq.s32.totalorder %s14, 0
    %p56 = por %p54, %p55
    %p57 = scmp.ne.s32.totalorder %s43, %s44
    %p58 = scmp.eq.s32.totalorder %s15, 7
    %p59 = por %p57, %p58
    %p61 = scmp.ne.s32.totalorder %s44, %s60
    %p62 = scmp.eq.s32.totalorder %s15, 0
    %p63 = por %p61, %p62
    %s64 = ssub.s32 %s18, %s27
    %s65 = ssub.s32 %s17, %s31
    %s66 = sor.u32 %s64, %s65
    %p67 = scmp.eq.s32.totalorder %s66, 0
    %s69 = sadd.s32 %s68, 1
    %s70 = scalar_select %p67, %s68, %s69
    %p73 = pneg %p67
    %p74 = scmp.eq.s32.totalorder %s9, 7
    %p75 = por %p73, %p74
    %p76 = scmp.ne.s32.totalorder %s68, %s71
    %p77 = scmp.eq.s32.totalorder %s9, 0
    %p78 = por %p76, %p77
    %p79 = scmp.ne.s32.totalorder %s68, %s71
    %p80 = scmp.eq.s32.totalorder %s14, 7
    %p81 = por %p79, %p80
    %p82 = scmp.ne.s32.totalorder %s71, %s72
    %p83 = scmp.eq.s32.totalorder %s14, 0
    %p84 = por %p82, %p83
    %p85 = scmp.ne.s32.totalorder %s71, %s72
    %p86 = scmp.eq.s32.totalorder %s15, 7
    %p87 = por %p85, %p86
    %p89 = scmp.ne.s32.totalorder %s72, %s88
    %p90 = scmp.eq.s32.totalorder %s15, 0
    %p91 = por %p89, %p90
    %s92 = ssub.s32 %s17, %s31
    %p93 = scmp.eq.s32.totalorder %s92, 0
    %s95 = sadd.s32 %s94, 1
    %s96 = scalar_select %p93, %s94, %s95
    %p99 = pneg %p93
    %p100 = scmp.eq.s32.totalorder %s9, 7
    %p101 = por %p99, %p100
    %p102 = scmp.ne.s32.totalorder %s94, %s97
    %p103 = scmp.eq.s32.totalorder %s9, 0
    %p104 = por %p102, %p103
    %p105 = scmp.ne.s32.totalorder %s94, %s97
    %p106 = scmp.eq.s32.totalorder %s14, 7
    %p107 = por %p105, %p106
    %p108 = scmp.ne.s32.totalorder %s97, %s98
    %p109 = scmp.eq.s32.totalorder %s14, 0
    %p110 = por %p108, %p109
    %p111 = scmp.ne.s32.totalorder %s97, %s98
    %p112 = scmp.eq.s32.totalorder %s15, 7
    %p113 = por %p111, %p112
    %p115 = scmp.ne.s32.totalorder %s98, %s114
    %p116 = scmp.eq.s32.totalorder %s15, 0
    %p117 = por %p115, %p116
    %s118 = ssub.s32 %s16, %s35
    %s119 = ssub.s32 %s17, %s31
    %s120 = sor.u32 %s118, %s119
    %p121 = scmp.eq.s32.totalorder %s120, 0
    %s123 = sadd.s32 %s122, 1
    %s124 = scalar_select %p121, %s122, %s123
    %p127 = pneg %p121
    %p128 = scmp.eq.s32.totalorder %s9, 7
    %p129 = por %p127, %p128
    %p130 = scmp.ne.s32.totalorder %s122, %s125
    %p131 = scmp.eq.s32.totalorder %s9, 0
    %p132 = por %p130, %p131
    %p133 = scmp.ne.s32.totalorder %s122, %s125
    %p134 = scmp.eq.s32.totalorder %s14, 7
    %p135 = por %p133, %p134
    %p136 = scmp.ne.s32.totalorder %s125, %s126
    %p137 = scmp.eq.s32.totalorder %s14, 0
    %p138 = por %p136, %p137
    %p139 = scmp.ne.s32.totalorder %s125, %s126
    %p140 = scmp.eq.s32.totalorder %s15, 7
    %p141 = por %p139, %p140
    %p143 = scmp.ne.s32.totalorder %s126, %s142
    %p144 = scmp.eq.s32.totalorder %s15, 0
    %p145 = por %p143, %p144
    %p146 = scmp.le.s32.totalorder 1, %s9
    %p147 = scmp.lt.s32.totalorder %s9, 9
    %p148 = pnand %p146, %p147
    %p149 = pneg %p148
    // Predicated region
    $region9: #{video_features_forward.69} parent=5 // pred_check
      _
    $region10: #{video_features_forward.69} parent=5 // pred_check_branch
      %151 = sbr.rel (%p148) target = $region12
    $region11: #{video_features_forward.69} parent=5 // pred_region
      %s152 = ssub.s32 %s9, 1
      // Predicated region
      $region13: #{video_features_forward.69} parent=11 // pred_check
        %p153 = pneg %p84
      $region14: #{video_features_forward.69} parent=11 // pred_check_branch
        %155 = sbr.rel (%p153) target = $region16
      $region15: #{video_features_forward.69} parent=11 // pred_region
        %s156 = smul.u32 32, %s21
        %p157 = scmp.lt.s32.totalorder %s156, 31
        %s158 = scalar_select %p157, %s156, 31
        %p159 = scmp.lt.s32.totalorder %s20, 0
        %s160 = scalar_select %p159, %s20, 0
        %s161 = sadd.s32 %s160, %s158
        %s162 = smul.addr %s161, 4
        %s163 = scalar_lea.vmem %s1, %s162
        %s164 = smul.u32 32, %s21
      $region16: #{video_features_forward.69} parent=11 // pred_fallthru
        _
      // Predicated region
      $region17: #{video_features_forward.69} parent=11 // pred_check
        %p165 = pneg %p110
      $region18: #{video_features_forward.69} parent=11 // pred_check_branch
        %167 = sbr.rel (%p165) target = $region20
      $region19: #{video_features_forward.69} parent=11 // pred_region
        %p168 = scmp.lt.s32.totalorder %s20, 0
        %s169 = scalar_select %p168, %s20, 0
        %s170 = scalar_lea.vmem %s2, %s169
      $region20: #{video_features_forward.69} parent=11 // pred_fallthru
        _
    $region12: #{video_features_forward.69} parent=5 // pred_fallthru
      _
    %p171 = scmp.lt.s32.totalorder %s9, 8
    // Predicated region
    $region21: #{video_features_forward.69} parent=5 // pred_check
      %p172 = pneg %p171
    $region22: #{video_features_forward.69} parent=5 // pred_check_branch
      %174 = sbr.rel (%p172) target = $region24
    $region23: #{video_features_forward.69} parent=5 // pred_region
      // Predicated region
      $region25: #{video_features_forward.69} parent=23 // pred_check
        %p175 = pneg %p50
      $region26: #{video_features_forward.69} parent=23 // pred_check_branch
        %177 = sbr.rel (%p175) target = $region28
      $region27: #{video_features_forward.69} parent=23 // pred_region
        %s178 = smul.u32 32, %s16
        %s179 = smul.u32 2, %s18
        %p180 = scmp.lt.s32.totalorder %s178, 255
        %s181 = scalar_select %p180, %s178, 255
        %p182 = scmp.lt.s32.totalorder %s179, 1
        %s183 = scalar_select %p182, %s179, 1
        %s184 = smul.addr %s181, 2
        %s185 = sadd.s32 %s183, %s184
        %s186 = smul.addr %s185, 4
        %s187 = scalar_lea.vmem %s0, %s186
        %s188 = smul.u32 32, %s16
        %s189 = smul.u32 2, %s18
      $region28: #{video_features_forward.69} parent=23 // pred_fallthru
        _
    $region24: #{video_features_forward.69} parent=5 // pred_fallthru
      _
    %p190 = scmp.le.s32.totalorder 1, %s9
    %p191 = scmp.lt.s32.totalorder %s9, 9
    %p192 = pnand %p190, %p191
    %p193 = pneg %p192
    // Predicated region
    $region29: #{video_features_forward.69} parent=5 // pred_check
      _
    $region30: #{video_features_forward.69} parent=5 // pred_check_branch
      %195 = sbr.rel (%p192) target = $region32
    $region31: #{video_features_forward.69} parent=5 // pred_region
      %s196 = ssub.s32 %s9, 1
      %s197 = smul.u32 32, %s19
      %s198 = smul.u32 2, %s21
      %p199 = scmp.lt.s32.totalorder %s197, 255
      %s200 = scalar_select %p199, %s197, 255
      %p201 = scmp.lt.s32.totalorder %s198, 1
      %s202 = scalar_select %p201, %s198, 1
      %s203 = smul.addr %s200, 2
      %s204 = sadd.s32 %s202, %s203
      %s205 = smul.addr %s204, 4
      %s206 = scalar_lea.vmem %s0, %s205
      %p207 = pneg %p56
      %p208 = pneg %p53
      %s209 = smul.u32 32, %s21
      %p210 = scmp.lt.s32.totalorder %s209, 31
      %s211 = scalar_select %p210, %s209, 31
      %p212 = scmp.lt.s32.totalorder %s20, 0
      %s213 = scalar_select %p212, %s20, 0
      %s214 = sadd.s32 %s213, %s211
      %s215 = smul.addr %s214, 4
      %s216 = scalar_lea.vmem %s1, %s215
      %p217 = pneg %p84
      %p218 = pneg %p81
      %p219 = scmp.lt.s32.totalorder %s20, 0
      %s220 = scalar_select %p219, %s20, 0
      %s221 = scalar_lea.vmem %s2, %s220
      %p222 = pneg %p110
      %p223 = pneg %p107
      %p224 = pneg %p138
      %p225 = pneg %p135
      %s226 = smul.u32 32, %s19
      %p227 = scmp.lt.s32.totalorder %s226, 255
      %s228 = scalar_select %p227, %s226, 255
      %p229 = scmp.lt.s32.totalorder %s20, 0
      %s230 = scalar_select %p229, %s20, 0
      %s231 = sadd.s32 %s230, %s228
      %s232 = smul.addr %s231, 8
      %s233 = scalar_lea.vmem %s3, %s232
      %s234 = smul.u32 32, %s19
      %s235 = smul.u32 2, %s21
      %p236 = scmp.lt.s32.totalorder %s234, 255
      %s237 = scalar_select %p236, %s234, 255
      %p238 = scmp.lt.s32.totalorder %s235, 1
      %s239 = scalar_select %p238, %s235, 1
      %s240 = smul.addr %s237, 2
      %s241 = sadd.s32 %s239, %s240
      %s242 = smul.addr %s241, 4
      %s243 = scalar_lea.vmem %s0, %s242
      %s244 = smul.u32 32, %s19
      %s245 = smul.u32 2, %s21
      %s246 = smul.u32 32, %s21
      %p247 = scmp.lt.s32.totalorder %s246, 31
      %s248 = scalar_select %p247, %s246, 31
      %p249 = scmp.lt.s32.totalorder %s20, 0
      %s250 = scalar_select %p249, %s20, 0
      %s251 = sadd.s32 %s250, %s248
      %s252 = smul.addr %s251, 4
      %s253 = scalar_lea.vmem %s1, %s252
      %s254 = smul.u32 32, %s21
      %p255 = scmp.lt.s32.totalorder %s20, 0
      %s256 = scalar_select %p255, %s20, 0
      %s257 = scalar_lea.vmem %s2, %s256
      %s258 = smul.u32 32, %s19
      %p259 = scmp.lt.s32.totalorder %s258, 255
      %s260 = scalar_select %p259, %s258, 255
      %p261 = scmp.lt.s32.totalorder %s20, 0
      %s262 = scalar_select %p261, %s20, 0
      %s263 = sadd.s32 %s262, %s260
      %s264 = smul.addr %s263, 8
      %s265 = scalar_lea.vmem %s3, %s264
      %s266 = smul.u32 32, %s19
      %p268 = scmp.eq.s32.totalorder %s21, 0
      // Predicated region
      $region33: #{video_features_forward.69} parent=31 // pred_check
        %p269 = pneg %p268
      $region34: #{video_features_forward.69} parent=31 // pred_check_branch
        %271 = sbr.rel (%p269) target = $region36
      $region35: #{video_features_forward.69} parent=31 // pred_region
        %272 = vst [vmem:[#allocation2] sm:$0xff] 0.0
        %273 = vst [vmem:[#allocation2 + $0x8] sm:$0xff] 0.0
        %274 = vst [vmem:[#allocation2 + $0x10] sm:$0xff] 0.0
        %275 = vst [vmem:[#allocation2 + $0x18] sm:$0xff] 0.0
        %276 = vst [vmem:[#allocation2 + $0x20] sm:$0xff] 0.0
        %277 = vst [vmem:[#allocation2 + $0x28] sm:$0xff] 0.0
        %278 = vst [vmem:[#allocation2 + $0x30] sm:$0xff] 0.0
        %279 = vst [vmem:[#allocation2 + $0x38] sm:$0xff] 0.0
        %280 = vst [vmem:[#allocation2 + $0x40] sm:$0xff] 0.0
        %281 = vst [vmem:[#allocation2 + $0x48] sm:$0xff] 0.0
        %282 = vst [vmem:[#allocation2 + $0x50] sm:$0xff] 0.0
        %283 = vst [vmem:[#allocation2 + $0x58] sm:$0xff] 0.0
        %284 = vst [vmem:[#allocation2 + $0x60] sm:$0xff] 0.0
        %285 = vst [vmem:[#allocation2 + $0x68] sm:$0xff] 0.0
        %286 = vst [vmem:[#allocation2 + $0x70] sm:$0xff] 0.0
        %287 = vst [vmem:[#allocation2 + $0x78] sm:$0xff] 0.0
        %288 = vst [vmem:[#allocation2 + $0x80] sm:$0xff] 0.0
        %289 = vst [vmem:[#allocation2 + $0x88] sm:$0xff] 0.0
        %290 = vst [vmem:[#allocation2 + $0x90] sm:$0xff] 0.0
        %291 = vst [vmem:[#allocation2 + $0x98] sm:$0xff] 0.0
        %292 = vst [vmem:[#allocation2 + $0xa0] sm:$0xff] 0.0
        %293 = vst [vmem:[#allocation2 + $0xa8] sm:$0xff] 0.0
        %294 = vst [vmem:[#allocation2 + $0xb0] sm:$0xff] 0.0
        %295 = vst [vmem:[#allocation2 + $0xb8] sm:$0xff] 0.0
        %296 = vst [vmem:[#allocation2 + $0xc0] sm:$0xff] 0.0
        %297 = vst [vmem:[#allocation2 + $0xc8] sm:$0xff] 0.0
        %298 = vst [vmem:[#allocation2 + $0xd0] sm:$0xff] 0.0
        %299 = vst [vmem:[#allocation2 + $0xd8] sm:$0xff] 0.0
        %300 = vst [vmem:[#allocation2 + $0xe0] sm:$0xff] 0.0
        %301 = vst [vmem:[#allocation2 + $0xe8] sm:$0xff] 0.0
        %302 = vst [vmem:[#allocation2 + $0xf0] sm:$0xff] 0.0
        %303 = vst [vmem:[#allocation2 + $0xf8] sm:$0xff] 0.0
      $region36: #{video_features_forward.69} parent=31 // pred_fallthru
        _
      %v304 = vld [vmem:[#allocation2] sm:$0xff]
      %v305 = vld [vmem:[#allocation2 + $0x8] sm:$0xff]
      %v306 = vld [vmem:[#allocation2 + $0x10] sm:$0xff]
      %v307 = vld [vmem:[#allocation2 + $0x18] sm:$0xff]
      %v308 = vld [vmem:[#allocation2 + $0x20] sm:$0xff]
      %v309 = vld [vmem:[#allocation2 + $0x28] sm:$0xff]
      %v310 = vld [vmem:[#allocation2 + $0x30] sm:$0xff]
      %v311 = vld [vmem:[#allocation2 + $0x38] sm:$0xff]
      %v312 = vld [vmem:[#allocation2 + $0x40] sm:$0xff]
      %v313 = vld [vmem:[#allocation2 + $0x48] sm:$0xff]
      %v314 = vld [vmem:[#allocation2 + $0x50] sm:$0xff]
      %v315 = vld [vmem:[#allocation2 + $0x58] sm:$0xff]
      %v316 = vld [vmem:[#allocation2 + $0x60] sm:$0xff]
      %v317 = vld [vmem:[#allocation2 + $0x68] sm:$0xff]
      %v318 = vld [vmem:[#allocation2 + $0x70] sm:$0xff]
      %v319 = vld [vmem:[#allocation2 + $0x78] sm:$0xff]
      %v320 = vld [vmem:[#allocation2 + $0x80] sm:$0xff]
      %v321 = vld [vmem:[#allocation2 + $0x88] sm:$0xff]
      %v322 = vld [vmem:[#allocation2 + $0x90] sm:$0xff]
      %v323 = vld [vmem:[#allocation2 + $0x98] sm:$0xff]
      %v324 = vld [vmem:[#allocation2 + $0xa0] sm:$0xff]
      %v325 = vld [vmem:[#allocation2 + $0xa8] sm:$0xff]
      %v326 = vld [vmem:[#allocation2 + $0xb0] sm:$0xff]
      %v327 = vld [vmem:[#allocation2 + $0xb8] sm:$0xff]
      %v328 = vld [vmem:[#allocation2 + $0xc0] sm:$0xff]
      %v329 = vld [vmem:[#allocation2 + $0xc8] sm:$0xff]
      %v330 = vld [vmem:[#allocation2 + $0xd0] sm:$0xff]
      %v331 = vld [vmem:[#allocation2 + $0xd8] sm:$0xff]
      %v332 = vld [vmem:[#allocation2 + $0xe0] sm:$0xff]
      %v333 = vld [vmem:[#allocation2 + $0xe8] sm:$0xff]
      %v334 = vld [vmem:[#allocation2 + $0xf0] sm:$0xff]
      %v335 = vld [vmem:[#allocation2 + $0xf8] sm:$0xff]
      %v336 = vld [vmem:[%s243] sm:$0xff]
      %v337 = vld [vmem:[%s243 + $0x8] sm:$0xff]
      %v338 = vld [vmem:[%s243 + $0x10] sm:$0xff]
      %v339 = vld [vmem:[%s243 + $0x18] sm:$0xff]
      %v340 = vld [vmem:[%s243 + $0x20] sm:$0xff]
      %v341 = vld [vmem:[%s243 + $0x28] sm:$0xff]
      %v342 = vld [vmem:[%s243 + $0x30] sm:$0xff]
      %v343 = vld [vmem:[%s243 + $0x38] sm:$0xff]
      %v344 = vld [vmem:[%s243 + $0x40] sm:$0xff]
      %v345 = vld [vmem:[%s243 + $0x48] sm:$0xff]
      %v346 = vld [vmem:[%s243 + $0x50] sm:$0xff]
      %v347 = vld [vmem:[%s243 + $0x58] sm:$0xff]
      %v348 = vld [vmem:[%s243 + $0x60] sm:$0xff]
      %v349 = vld [vmem:[%s243 + $0x68] sm:$0xff]
      %v350 = vld [vmem:[%s243 + $0x70] sm:$0xff]
      %v351 = vld [vmem:[%s243 + $0x78] sm:$0xff]
      %v352 = vld [vmem:[%s243 + $0x80] sm:$0xff]
      %v353 = vld [vmem:[%s243 + $0x88] sm:$0xff]
      %v354 = vld [vmem:[%s243 + $0x90] sm:$0xff]
      %v355 = vld [vmem:[%s243 + $0x98] sm:$0xff]
      %v356 = vld [vmem:[%s243 + $0xa0] sm:$0xff]
      %v357 = vld [vmem:[%s243 + $0xa8] sm:$0xff]
      %v358 = vld [vmem:[%s243 + $0xb0] sm:$0xff]
      %v359 = vld [vmem:[%s243 + $0xb8] sm:$0xff]
      %v360 = vld [vmem:[%s243 + $0xc0] sm:$0xff]
      %v361 = vld [vmem:[%s243 + $0xc8] sm:$0xff]
      %v362 = vld [vmem:[%s243 + $0xd0] sm:$0xff]
      %v363 = vld [vmem:[%s243 + $0xd8] sm:$0xff]
      %v364 = vld [vmem:[%s243 + $0xe0] sm:$0xff]
      %v365 = vld [vmem:[%s243 + $0xe8] sm:$0xff]
      %v366 = vld [vmem:[%s243 + $0xf0] sm:$0xff]
      %v367 = vld [vmem:[%s243 + $0xf8] sm:$0xff]
      %v368 = vld [vmem:[%s253] sm:$0xf]
      %v369 = vld [vmem:[%s253 + $0x4] sm:$0xf]
      %v370 = vld [vmem:[%s253 + $0x8] sm:$0xf]
      %v371 = vld [vmem:[%s253 + $0xc] sm:$0xf]
      %v372 = vld [vmem:[%s253 + $0x10] sm:$0xf]
      %v373 = vld [vmem:[%s253 + $0x14] sm:$0xf]
      %v374 = vld [vmem:[%s253 + $0x18] sm:$0xf]
      %v375 = vld [vmem:[%s253 + $0x1c] sm:$0xf]
      %v376 = vld [vmem:[%s253 + $0x20] sm:$0xf]
      %v377 = vld [vmem:[%s253 + $0x24] sm:$0xf]
      %v378 = vld [vmem:[%s253 + $0x28] sm:$0xf]
      %v379 = vld [vmem:[%s253 + $0x2c] sm:$0xf]
      %v380 = vld [vmem:[%s253 + $0x30] sm:$0xf]
      %v381 = vld [vmem:[%s253 + $0x34] sm:$0xf]
      %v382 = vld [vmem:[%s253 + $0x38] sm:$0xf]
      %v383 = vld [vmem:[%s253 + $0x3c] sm:$0xf]
      %v384 = vld [vmem:[%s253 + $0x40] sm:$0xf]
      %v385 = vld [vmem:[%s253 + $0x44] sm:$0xf]
      %v386 = vld [vmem:[%s253 + $0x48] sm:$0xf]
      %v387 = vld [vmem:[%s253 + $0x4c] sm:$0xf]
      %v388 = vld [vmem:[%s253 + $0x50] sm:$0xf]
      %v389 = vld [vmem:[%s253 + $0x54] sm:$0xf]
      %v390 = vld [vmem:[%s253 + $0x58] sm:$0xf]
      %v391 = vld [vmem:[%s253 + $0x5c] sm:$0xf]
      %v392 = vld [vmem:[%s253 + $0x60] sm:$0xf]
      %v393 = vld [vmem:[%s253 + $0x64] sm:$0xf]
      %v394 = vld [vmem:[%s253 + $0x68] sm:$0xf]
      %v395 = vld [vmem:[%s253 + $0x6c] sm:$0xf]
      %v396 = vld [vmem:[%s253 + $0x70] sm:$0xf]
      %v397 = vld [vmem:[%s253 + $0x74] sm:$0xf]
      %v398 = vld [vmem:[%s253 + $0x78] sm:$0xf]
      %v399 = vld [vmem:[%s253 + $0x7c] sm:$0xf]
      %v432 = vunpack.c.l.b16 %v336
      %v433 = vunpack.c.h.b16 %v336
      %v434 = vunpack.c.l.b16 %v337
      %v435 = vunpack.c.h.b16 %v337
      %v436 = vunpack.c.l.b16 %v338
      %v437 = vunpack.c.h.b16 %v338
      %v438 = vunpack.c.l.b16 %v339
      %v439 = vunpack.c.h.b16 %v339
      %v440 = vunpack.c.l.b16 %v340
      %v441 = vunpack.c.h.b16 %v340
      %v442 = vunpack.c.l.b16 %v341
      %v443 = vunpack.c.h.b16 %v341
      %v444 = vunpack.c.l.b16 %v342
      %v445 = vunpack.c.h.b16 %v342
      %v446 = vunpack.c.l.b16 %v343
      %v447 = vunpack.c.h.b16 %v343
      %v448 = vunpack.c.l.b16 %v344
      %v449 = vunpack.c.h.b16 %v344
      %v450 = vunpack.c.l.b16 %v345
      %v451 = vunpack.c.h.b16 %v345
      %v452 = vunpack.c.l.b16 %v346
      %v453 = vunpack.c.h.b16 %v346
      %v454 = vunpack.c.l.b16 %v347
      %v455 = vunpack.c.h.b16 %v347
      %v456 = vunpack.c.l.b16 %v348
      %v457 = vunpack.c.h.b16 %v348
      %v458 = vunpack.c.l.b16 %v349
      %v459 = vunpack.c.h.b16 %v349
      %v460 = vunpack.c.l.b16 %v350
      %v461 = vunpack.c.h.b16 %v350
      %v462 = vunpack.c.l.b16 %v351
      %v463 = vunpack.c.h.b16 %v351
      %v464 = vunpack.c.l.b16 %v352
      %v465 = vunpack.c.h.b16 %v352
      %v466 = vunpack.c.l.b16 %v353
      %v467 = vunpack.c.h.b16 %v353
      %v468 = vunpack.c.l.b16 %v354
      %v469 = vunpack.c.h.b16 %v354
      %v470 = vunpack.c.l.b16 %v355
      %v471 = vunpack.c.h.b16 %v355
      %v472 = vunpack.c.l.b16 %v356
      %v473 = vunpack.c.h.b16 %v356
      %v474 = vunpack.c.l.b16 %v357
      %v475 = vunpack.c.h.b16 %v357
      %v476 = vunpack.c.l.b16 %v358
      %v477 = vunpack.c.h.b16 %v358
      %v478 = vunpack.c.l.b16 %v359
      %v479 = vunpack.c.h.b16 %v359
      %v480 = vunpack.c.l.b16 %v360
      %v481 = vunpack.c.h.b16 %v360
      %v482 = vunpack.c.l.b16 %v361
      %v483 = vunpack.c.h.b16 %v361
      %v484 = vunpack.c.l.b16 %v362
      %v485 = vunpack.c.h.b16 %v362
      %v486 = vunpack.c.l.b16 %v363
      %v487 = vunpack.c.h.b16 %v363
      %v488 = vunpack.c.l.b16 %v364
      %v489 = vunpack.c.h.b16 %v364
      %v490 = vunpack.c.l.b16 %v365
      %v491 = vunpack.c.h.b16 %v365
      %v492 = vunpack.c.l.b16 %v366
      %v493 = vunpack.c.h.b16 %v366
      %v494 = vunpack.c.l.b16 %v367
      %v495 = vunpack.c.h.b16 %v367
      %v496 = vpack.c.b16 %v434, %v432
      %v497 = vpack.c.b16 %v435, %v433
      %v498 = vpack.c.b16 %v438, %v436
      %v499 = vpack.c.b16 %v439, %v437
      %v500 = vpack.c.b16 %v442, %v440
      %v501 = vpack.c.b16 %v443, %v441
      %v502 = vpack.c.b16 %v446, %v444
      %v503 = vpack.c.b16 %v447, %v445
      %v504 = vpack.c.b16 %v450, %v448
      %v505 = vpack.c.b16 %v451, %v449
      %v506 = vpack.c.b16 %v454, %v452
      %v507 = vpack.c.b16 %v455, %v453
      %v508 = vpack.c.b16 %v458, %v456
      %v509 = vpack.c.b16 %v459, %v457
      %v510 = vpack.c.b16 %v462, %v460
      %v511 = vpack.c.b16 %v463, %v461
      %v512 = vpack.c.b16 %v466, %v464
      %v513 = vpack.c.b16 %v467, %v465
      %v514 = vpack.c.b16 %v470, %v468
      %v515 = vpack.c.b16 %v471, %v469
      %v516 = vpack.c.b16 %v474, %v472
      %v517 = vpack.c.b16 %v475, %v473
      %v518 = vpack.c.b16 %v478, %v476
      %v519 = vpack.c.b16 %v479, %v477
      %v520 = vpack.c.b16 %v482, %v480
      %v521 = vpack.c.b16 %v483, %v481
      %v522 = vpack.c.b16 %v486, %v484
      %v523 = vpack.c.b16 %v487, %v485
      %v524 = vpack.c.b16 %v490, %v488
      %v525 = vpack.c.b16 %v491, %v489
      %v526 = vpack.c.b16 %v494, %v492
      %v527 = vpack.c.b16 %v495, %v493
      %v592 = vunpack.c.l.b16 %v368
      %v593 = vunpack.c.l.b16 %v369
      %v594 = vunpack.c.l.b16 %v370
      %v595 = vunpack.c.l.b16 %v371
      %v596 = vunpack.c.l.b16 %v372
      %v597 = vunpack.c.l.b16 %v373
      %v598 = vunpack.c.l.b16 %v374
      %v599 = vunpack.c.l.b16 %v375
      %v600 = vunpack.c.l.b16 %v376
      %v601 = vunpack.c.l.b16 %v377
      %v602 = vunpack.c.l.b16 %v378
      %v603 = vunpack.c.l.b16 %v379
      %v604 = vunpack.c.l.b16 %v380
      %v605 = vunpack.c.l.b16 %v381
      %v606 = vunpack.c.l.b16 %v382
      %v607 = vunpack.c.l.b16 %v383
      %v608 = vunpack.c.l.b16 %v384
      %v609 = vunpack.c.l.b16 %v385
      %v610 = vunpack.c.l.b16 %v386
      %v611 = vunpack.c.l.b16 %v387
      %v612 = vunpack.c.l.b16 %v388
      %v613 = vunpack.c.l.b16 %v389
      %v614 = vunpack.c.l.b16 %v390
      %v615 = vunpack.c.l.b16 %v391
      %v616 = vunpack.c.l.b16 %v392
      %v617 = vunpack.c.l.b16 %v393
      %v618 = vunpack.c.l.b16 %v394
      %v619 = vunpack.c.l.b16 %v395
      %v620 = vunpack.c.l.b16 %v396
      %v621 = vunpack.c.l.b16 %v397
      %v622 = vunpack.c.l.b16 %v398
      %v623 = vunpack.c.l.b16 %v399
      %v624 = vpack.c.b16 %v593, %v592
      %v625 = vpack.c.b16 %v595, %v594
      %v626 = vpack.c.b16 %v597, %v596
      %v627 = vpack.c.b16 %v599, %v598
      %v628 = vpack.c.b16 %v601, %v600
      %v629 = vpack.c.b16 %v603, %v602
      %v630 = vpack.c.b16 %v605, %v604
      %v631 = vpack.c.b16 %v607, %v606
      %v632 = vpack.c.b16 %v609, %v608
      %v633 = vpack.c.b16 %v611, %v610
      %v634 = vpack.c.b16 %v613, %v612
      %v635 = vpack.c.b16 %v615, %v614
      %v636 = vpack.c.b16 %v617, %v616
      %v637 = vpack.c.b16 %v619, %v618
      %v638 = vpack.c.b16 %v621, %v620
      %v639 = vpack.c.b16 %v623, %v622
      %656 = vmatprep.subr.bf16.mxu0 0
      %657 = vmatpush1.bf16.msra.mxu0 %v624
      %658 = vmatprep.subr.bf16.mxu0 0
      %659 = vmatpush1.bf16.msra.mxu0 %v625
      %660 = vmatprep.subr.bf16.mxu0 0
      %661 = vmatpush1.bf16.msra.mxu0 %v626
      %662 = vmatprep.subr.bf16.mxu0 0
      %663 = vmatpush1.bf16.msra.mxu0 %v627
      %664 = vmatprep.subr.bf16.mxu0 0
      %665 = vmatpush1.bf16.msra.mxu0 %v628
      %666 = vmatprep.subr.bf16.mxu0 0
      %667 = vmatpush1.bf16.msra.mxu0 %v629
      %668 = vmatprep.subr.bf16.mxu0 0
      %669 = vmatpush1.bf16.msra.mxu0 %v630
      %670 = vmatprep.subr.bf16.mxu0 0
      %671 = vmatpush1.bf16.msra.mxu0 %v631
      %672 = vmatprep.subr.bf16.mxu0 0
      %673 = vmatpush1.bf16.msra.mxu0 %v632
      %674 = vmatprep.subr.bf16.mxu0 0
      %675 = vmatpush1.bf16.msra.mxu0 %v633
      %676 = vmatprep.subr.bf16.mxu0 0
      %677 = vmatpush1.bf16.msra.mxu0 %v634
      %678 = vmatprep.subr.bf16.mxu0 0
      %679 = vmatpush1.bf16.msra.mxu0 %v635
      %680 = vmatprep.subr.bf16.mxu0 0
      %681 = vmatpush1.bf16.msra.mxu0 %v636
      %682 = vmatprep.subr.bf16.mxu0 0
      %683 = vmatpush1.bf16.msra.mxu0 %v637
      %684 = vmatprep.subr.bf16.mxu0 0
      %685 = vmatpush1.bf16.msra.mxu0 %v638
      %686 = vmatprep.subr.bf16.mxu0 0
      %687 = vmatpush1.bf16.msra.mxu0 %v639
      %688 = vmatprep.mubr.bf16.mxu0 %v497
      %689 = vmatmul.mubr.bf16.gmra.mrb[0].mxu0 %v496
      %v690 = vpop.f32.mrb[0].mxu0
      %v691 = vadd.f32 0.0, %v690
      %v692 = vpop.f32.mrb[0].mxu0
      %v693 = vpop.f32.mrb[0].mxu0
      %v694 = vadd.f32 0.0, %v693
      %v695 = vpop.f32.mrb[0].mxu0
      %696 = vmatprep.mubr.bf16.mxu0 %v499
      %697 = vmatmul.mubr.bf16.gmra.mrb[0].mxu0 %v498
      %v698 = vpop.f32.mrb[0].mxu0
      %v699 = vadd.f32 0.0, %v698
      %v700 = vpop.f32.mrb[0].mxu0
      %v701 = vpop.f32.mrb[0].mxu0
      %v702 = vadd.f32 0.0, %v701
      %v703 = vpop.f32.mrb[0].mxu0
      %704 = vmatprep.mubr.bf16.mxu0 %v501
      %705 = vmatmul.mubr.bf16.gmra.mrb[0].mxu0 %v500
      %v706 = vpop.f32.mrb[0].mxu0
      %v707 = vadd.f32 0.0, %v706
      %v708 = vpop.f32.mrb[0].mxu0
      %v709 = vpop.f32.mrb[0].mxu0
      %v710 = vadd.f32 0.0, %v709
      %v711 = vpop.f32.mrb[0].mxu0
      %712 = vmatprep.mubr.bf16.mxu0 %v503
      %713 = vmatmul.mubr.bf16.gmra.mrb[0].mxu0 %v502
      %v714 = vpop.f32.mrb[0].mxu0
      %v715 = vadd.f32 0.0, %v714
      %v716 = vpop.f32.mrb[0].mxu0
      %v717 = vpop.f32.mrb[0].mxu0
      %v718 = vadd.f32 0.0, %v717
      %v719 = vpop.f32.mrb[0].mxu0
      %720 = vmatprep.mubr.bf16.mxu0 %v505
      %721 = vmatmul.mubr.bf16.gmra.mrb[0].mxu0 %v504
      %v722 = vpop.f32.mrb[0].mxu0
      %v723 = vadd.f32 0.0, %v722
      %v724 = vpop.f32.mrb[0].mxu0
      %v725 = vpop.f32.mrb[0].mxu0
      %v726 = vadd.f32 0.0, %v725
      %v727 = vpop.f32.mrb[0].mxu0
      %728 = vmatprep.mubr.bf16.mxu0 %v507
      %729 = vmatmul.mubr.bf16.gmra.mrb[0].mxu0 %v506
      %v730 = vpop.f32.mrb[0].mxu0
      %v731 = vadd.f32 0.0, %v730
      %v732 = vpop.f32.mrb[0].mxu0
      %v733 = vpop.f32.mrb[0].mxu0
      %v734 = vadd.f32 0.0, %v733
      %v735 = vpop.f32.mrb[0].mxu0
      %736 = vmatprep.mubr.bf16.mxu0 %v509
      %737 = vmatmul.mubr.bf16.gmra.mrb[0].mxu0 %v508
      %v738 = vpop.f32.mrb[0].mxu0
      %v739 = vadd.f32 0.0, %v738
      %v740 = vpop.f32.mrb[0].mxu0
      %v741 = vpop.f32.mrb[0].mxu0
      %v742 = vadd.f32 0.0, %v741
      %v743 = vpop.f32.mrb[0].mxu0
      %744 = vmatprep.mubr.bf16.mxu0 %v511
      %745 = vmatmul.mubr.bf16.gmra.mrb[0].mxu0 %v510
      %v746 = vpop.f32.mrb[0].mxu0
      %v747 = vadd.f32 0.0, %v746
      %v748 = vpop.f32.mrb[0].mxu0
      %v749 = vpop.f32.mrb[0].mxu0
      %v750 = vadd.f32 0.0, %v749
      %v751 = vpop.f32.mrb[0].mxu0
      %752 = vmatprep.mubr.bf16.mxu0 %v513
      %753 = vmatmul.mubr.bf16.gmra.mrb[0].mxu0 %v512
      %v754 = vpop.f32.mrb[0].mxu0
      %v755 = vadd.f32 0.0, %v754
      %v756 = vpop.f32.mrb[0].mxu0
      %v757 = vpop.f32.mrb[0].mxu0
      %v758 = vadd.f32 0.0, %v757
      %v759 = vpop.f32.mrb[0].mxu0
      %760 = vmatprep.mubr.bf16.mxu0 %v515
      %761 = vmatmul.mubr.bf16.gmra.mrb[0].mxu0 %v514
      %v762 = vpop.f32.mrb[0].mxu0
      %v763 = vadd.f32 0.0, %v762
      %v764 = vpop.f32.mrb[0].mxu0
      %v765 = vpop.f32.mrb[0].mxu0
      %v766 = vadd.f32 0.0, %v765
      %v767 = vpop.f32.mrb[0].mxu0
      %768 = vmatprep.mubr.bf16.mxu0 %v517
      %769 = vmatmul.mubr.bf16.gmra.mrb[0].mxu0 %v516
      %v770 = vpop.f32.mrb[0].mxu0
      %v771 = vadd.f32 0.0, %v770
      %v772 = vpop.f32.mrb[0].mxu0
      %v773 = vpop.f32.mrb[0].mxu0
      %v774 = vadd.f32 0.0, %v773
      %v775 = vpop.f32.mrb[0].mxu0
      %776 = vmatprep.mubr.bf16.mxu0 %v519
      %777 = vmatmul.mubr.bf16.gmra.mrb[0].mxu0 %v518
      %v778 = vpop.f32.mrb[0].mxu0
      %v779 = vadd.f32 0.0, %v778
      %v780 = vpop.f32.mrb[0].mxu0
      %v781 = vpop.f32.mrb[0].mxu0
      %v782 = vadd.f32 0.0, %v781
      %v783 = vpop.f32.mrb[0].mxu0
      %784 = vmatprep.mubr.bf16.mxu0 %v521
      %785 = vmatmul.mubr.bf16.gmra.mrb[0].mxu0 %v520
      %v786 = vpop.f32.mrb[0].mxu0
      %v787 = vadd.f32 0.0, %v786
      %v788 = vpop.f32.mrb[0].mxu0
      %v789 = vpop.f32.mrb[0].mxu0
      %v790 = vadd.f32 0.0, %v789
      %v791 = vpop.f32.mrb[0].mxu0
      %792 = vmatprep.mubr.bf16.mxu0 %v523
      %793 = vmatmul.mubr.bf16.gmra.mrb[0].mxu0 %v522
      %v794 = vpop.f32.mrb[0].mxu0
      %v795 = vadd.f32 0.0, %v794
      %v796 = vpop.f32.mrb[0].mxu0
      %v797 = vpop.f32.mrb[0].mxu0
      %v798 = vadd.f32 0.0, %v797
      %v799 = vpop.f32.mrb[0].mxu0
      %800 = vmatprep.mubr.bf16.mxu0 %v525
      %801 = vmatmul.mubr.bf16.gmra.mrb[0].mxu0 %v524
      %v802 = vpop.f32.mrb[0].mxu0
      %v803 = vadd.f32 0.0, %v802
      %v804 = vpop.f32.mrb[0].mxu0
      %v805 = vpop.f32.mrb[0].mxu0
      %v806 = vadd.f32 0.0, %v805
      %v807 = vpop.f32.mrb[0].mxu0
      %808 = vmatprep.mubr.bf16.mxu0 %v527
      %809 = vmatmul.mubr.bf16.gmra.mrb[0].mxu0 %v526
      %v810 = vpop.f32.mrb[0].mxu0
      %v811 = vadd.f32 0.0, %v810
      %v812 = vpop.f32.mrb[0].mxu0
      %v813 = vpop.f32.mrb[0].mxu0
      %v814 = vadd.f32 0.0, %v813
      %v815 = vpop.f32.mrb[0].mxu0
      %816 = vdwg.mxu0
      %v817 = vadd.f32 %v304, %v691
      %v818 = vadd.f32 %v305, %v694
      %v819 = vadd.f32 %v306, %v699
      %v820 = vadd.f32 %v307, %v702
      %v821 = vadd.f32 %v308, %v707
      %v822 = vadd.f32 %v309, %v710
      %v823 = vadd.f32 %v310, %v715
      %v824 = vadd.f32 %v311, %v718
      %v825 = vadd.f32 %v312, %v723
      %v826 = vadd.f32 %v313, %v726
      %v827 = vadd.f32 %v314, %v731
      %v828 = vadd.f32 %v315, %v734
      %v829 = vadd.f32 %v316, %v739
      %v830 = vadd.f32 %v317, %v742
      %v831 = vadd.f32 %v318, %v747
      %v832 = vadd.f32 %v319, %v750
      %v833 = vadd.f32 %v320, %v755
      %v834 = vadd.f32 %v321, %v758
      %v835 = vadd.f32 %v322, %v763
      %v836 = vadd.f32 %v323, %v766
      %v837 = vadd.f32 %v324, %v771
      %v838 = vadd.f32 %v325, %v774
      %v839 = vadd.f32 %v326, %v779
      %v840 = vadd.f32 %v327, %v782
      %v841 = vadd.f32 %v328, %v787
      %v842 = vadd.f32 %v329, %v790
      %v843 = vadd.f32 %v330, %v795
      %v844 = vadd.f32 %v331, %v798
      %v845 = vadd.f32 %v332, %v803
      %v846 = vadd.f32 %v333, %v806
      %v847 = vadd.f32 %v334, %v811
      %v848 = vadd.f32 %v335, %v814
      %849 = vst [vmem:[#allocation2] sm:$0xff] %v817
      %850 = vst [vmem:[#allocation2 + $0x8] sm:$0xff] %v818
      %851 = vst [vmem:[#allocation2 + $0x10] sm:$0xff] %v819
      %852 = vst [vmem:[#allocation2 + $0x18] sm:$0xff] %v820
      %853 = vst [vmem:[#allocation2 + $0x20] sm:$0xff] %v821
      %854 = vst [vmem:[#allocation2 + $0x28] sm:$0xff] %v822
      %855 = vst [vmem:[#allocation2 + $0x30] sm:$0xff] %v823
      %856 = vst [vmem:[#allocation2 + $0x38] sm:$0xff] %v824
      %857 = vst [vmem:[#allocation2 + $0x40] sm:$0xff] %v825
      %858 = vst [vmem:[#allocation2 + $0x48] sm:$0xff] %v826
      %859 = vst [vmem:[#allocation2 + $0x50] sm:$0xff] %v827
      %860 = vst [vmem:[#allocation2 + $0x58] sm:$0xff] %v828
      %861 = vst [vmem:[#allocation2 + $0x60] sm:$0xff] %v829
      %862 = vst [vmem:[#allocation2 + $0x68] sm:$0xff] %v830
      %863 = vst [vmem:[#allocation2 + $0x70] sm:$0xff] %v831
      %864 = vst [vmem:[#allocation2 + $0x78] sm:$0xff] %v832
      %865 = vst [vmem:[#allocation2 + $0x80] sm:$0xff] %v833
      %866 = vst [vmem:[#allocation2 + $0x88] sm:$0xff] %v834
      %867 = vst [vmem:[#allocation2 + $0x90] sm:$0xff] %v835
      %868 = vst [vmem:[#allocation2 + $0x98] sm:$0xff] %v836
      %869 = vst [vmem:[#allocation2 + $0xa0] sm:$0xff] %v837
      %870 = vst [vmem:[#allocation2 + $0xa8] sm:$0xff] %v838
      %871 = vst [vmem:[#allocation2 + $0xb0] sm:$0xff] %v839
      %872 = vst [vmem:[#allocation2 + $0xb8] sm:$0xff] %v840
      %873 = vst [vmem:[#allocation2 + $0xc0] sm:$0xff] %v841
      %874 = vst [vmem:[#allocation2 + $0xc8] sm:$0xff] %v842
      %875 = vst [vmem:[#allocation2 + $0xd0] sm:$0xff] %v843
      %876 = vst [vmem:[#allocation2 + $0xd8] sm:$0xff] %v844
      %877 = vst [vmem:[#allocation2 + $0xe0] sm:$0xff] %v845
      %878 = vst [vmem:[#allocation2 + $0xe8] sm:$0xff] %v846
      %879 = vst [vmem:[#allocation2 + $0xf0] sm:$0xff] %v847
      %880 = vst [vmem:[#allocation2 + $0xf8] sm:$0xff] %v848
      // Predicated region
      $region37: #{video_features_forward.69} parent=31 // pred_check
        %p881 = pneg %p268
      $region38: #{video_features_forward.69} parent=31 // pred_check_branch
        %883 = sbr.rel (%p881) target = $region40
      $region39: #{video_features_forward.69} parent=31 // pred_region
        %v884 = vld [vmem:[#allocation2] sm:$0xff]
        %v885 = vld [vmem:[#allocation2 + $0x8] sm:$0xff]
        %v886 = vld [vmem:[#allocation2 + $0x10] sm:$0xff]
        %v887 = vld [vmem:[#allocation2 + $0x18] sm:$0xff]
        %v888 = vld [vmem:[#allocation2 + $0x20] sm:$0xff]
        %v889 = vld [vmem:[#allocation2 + $0x28] sm:$0xff]
        %v890 = vld [vmem:[#allocation2 + $0x30] sm:$0xff]
        %v891 = vld [vmem:[#allocation2 + $0x38] sm:$0xff]
        %v892 = vld [vmem:[#allocation2 + $0x40] sm:$0xff]
        %v893 = vld [vmem:[#allocation2 + $0x48] sm:$0xff]
        %v894 = vld [vmem:[#allocation2 + $0x50] sm:$0xff]
        %v895 = vld [vmem:[#allocation2 + $0x58] sm:$0xff]
        %v896 = vld [vmem:[#allocation2 + $0x60] sm:$0xff]
        %v897 = vld [vmem:[#allocation2 + $0x68] sm:$0xff]
        %v898 = vld [vmem:[#allocation2 + $0x70] sm:$0xff]
        %v899 = vld [vmem:[#allocation2 + $0x78] sm:$0xff]
        %v900 = vld [vmem:[#allocation2 + $0x80] sm:$0xff]
        %v901 = vld [vmem:[#allocation2 + $0x88] sm:$0xff]
        %v902 = vld [vmem:[#allocation2 + $0x90] sm:$0xff]
        %v903 = vld [vmem:[#allocation2 + $0x98] sm:$0xff]
        %v904 = vld [vmem:[#allocation2 + $0xa0] sm:$0xff]
        %v905 = vld [vmem:[#allocation2 + $0xa8] sm:$0xff]
        %v906 = vld [vmem:[#allocation2 + $0xb0] sm:$0xff]
        %v907 = vld [vmem:[#allocation2 + $0xb8] sm:$0xff]
        %v908 = vld [vmem:[#allocation2 + $0xc0] sm:$0xff]
        %v909 = vld [vmem:[#allocation2 + $0xc8] sm:$0xff]
        %v910 = vld [vmem:[#allocation2 + $0xd0] sm:$0xff]
        %v911 = vld [vmem:[#allocation2 + $0xd8] sm:$0xff]
        %v912 = vld [vmem:[#allocation2 + $0xe0] sm:$0xff]
        %v913 = vld [vmem:[#allocation2 + $0xe8] sm:$0xff]
        %v914 = vld [vmem:[#allocation2 + $0xf0] sm:$0xff]
        %v915 = vld [vmem:[#allocation2 + $0xf8] sm:$0xff]
        %v916 = vld [vmem:[%s257] sm:$0x1]
        %v918 = vlaneseq
        %v919 = vshrl.u32 %v918, 7
        %v920 = vsub.s32 0, %v919
        %v921 = vrot.slane %v916, %v920
        %v923 = vadd.f32 %v884, %v921
        %v924 = vadd.f32 %v885, %v921
        %v925 = vadd.f32 %v886, %v921
        %v926 = vadd.f32 %v887, %v921
        %v927 = vadd.f32 %v888, %v921
        %v928 = vadd.f32 %v889, %v921
        %v929 = vadd.f32 %v890, %v921
        %v930 = vadd.f32 %v891, %v921
        %v931 = vadd.f32 %v892, %v921
        %v932 = vadd.f32 %v893, %v921
        %v933 = vadd.f32 %v894, %v921
        %v934 = vadd.f32 %v895, %v921
        %v935 = vadd.f32 %v896, %v921
        %v936 = vadd.f32 %v897, %v921
        %v937 = vadd.f32 %v898, %v921
        %v938 = vadd.f32 %v899, %v921
        %v939 = vadd.f32 %v900, %v921
        %v940 = vadd.f32 %v901, %v921
        %v941 = vadd.f32 %v902, %v921
        %v942 = vadd.f32 %v903, %v921
        %v943 = vadd.f32 %v904, %v921
        %v944 = vadd.f32 %v905, %v921
        %v945 = vadd.f32 %v906, %v921
        %v946 = vadd.f32 %v907, %v921
        %v947 = vadd.f32 %v908, %v921
        %v948 = vadd.f32 %v909, %v921
        %v949 = vadd.f32 %v910, %v921
        %v950 = vadd.f32 %v911, %v921
        %v951 = vadd.f32 %v912, %v921
        %v952 = vadd.f32 %v913, %v921
        %v953 = vadd.f32 %v914, %v921
        %v954 = vadd.f32 %v915, %v921
        %v955 = vmax.f32 %v923, 0.0
        %v956 = vmax.f32 %v924, 0.0
        %v957 = vmax.f32 %v925, 0.0
        %v958 = vmax.f32 %v926, 0.0
        %v959 = vmax.f32 %v927, 0.0
        %v960 = vmax.f32 %v928, 0.0
        %v961 = vmax.f32 %v929, 0.0
        %v962 = vmax.f32 %v930, 0.0
        %v963 = vmax.f32 %v931, 0.0
        %v964 = vmax.f32 %v932, 0.0
        %v965 = vmax.f32 %v933, 0.0
        %v966 = vmax.f32 %v934, 0.0
        %v967 = vmax.f32 %v935, 0.0
        %v968 = vmax.f32 %v936, 0.0
        %v969 = vmax.f32 %v937, 0.0
        %v970 = vmax.f32 %v938, 0.0
        %v971 = vmax.f32 %v939, 0.0
        %v972 = vmax.f32 %v940, 0.0
        %v973 = vmax.f32 %v941, 0.0
        %v974 = vmax.f32 %v942, 0.0
        %v975 = vmax.f32 %v943, 0.0
        %v976 = vmax.f32 %v944, 0.0
        %v977 = vmax.f32 %v945, 0.0
        %v978 = vmax.f32 %v946, 0.0
        %v979 = vmax.f32 %v947, 0.0
        %v980 = vmax.f32 %v948, 0.0
        %v981 = vmax.f32 %v949, 0.0
        %v982 = vmax.f32 %v950, 0.0
        %v983 = vmax.f32 %v951, 0.0
        %v984 = vmax.f32 %v952, 0.0
        %v985 = vmax.f32 %v953, 0.0
        %v986 = vmax.f32 %v954, 0.0
        %987 = vst [vmem:[%s265] sm:$0xff] %v955
        %988 = vst [vmem:[%s265 + $0x8] sm:$0xff] %v956
        %989 = vst [vmem:[%s265 + $0x10] sm:$0xff] %v957
        %990 = vst [vmem:[%s265 + $0x18] sm:$0xff] %v958
        %991 = vst [vmem:[%s265 + $0x20] sm:$0xff] %v959
        %992 = vst [vmem:[%s265 + $0x28] sm:$0xff] %v960
        %993 = vst [vmem:[%s265 + $0x30] sm:$0xff] %v961
        %994 = vst [vmem:[%s265 + $0x38] sm:$0xff] %v962
        %995 = vst [vmem:[%s265 + $0x40] sm:$0xff] %v963
        %996 = vst [vmem:[%s265 + $0x48] sm:$0xff] %v964
        %997 = vst [vmem:[%s265 + $0x50] sm:$0xff] %v965
        %998 = vst [vmem:[%s265 + $0x58] sm:$0xff] %v966
        %999 = vst [vmem:[%s265 + $0x60] sm:$0xff] %v967
        %1000 = vst [vmem:[%s265 + $0x68] sm:$0xff] %v968
        %1001 = vst [vmem:[%s265 + $0x70] sm:$0xff] %v969
        %1002 = vst [vmem:[%s265 + $0x78] sm:$0xff] %v970
        %1003 = vst [vmem:[%s265 + $0x80] sm:$0xff] %v971
        %1004 = vst [vmem:[%s265 + $0x88] sm:$0xff] %v972
        %1005 = vst [vmem:[%s265 + $0x90] sm:$0xff] %v973
        %1006 = vst [vmem:[%s265 + $0x98] sm:$0xff] %v974
        %1007 = vst [vmem:[%s265 + $0xa0] sm:$0xff] %v975
        %1008 = vst [vmem:[%s265 + $0xa8] sm:$0xff] %v976
        %1009 = vst [vmem:[%s265 + $0xb0] sm:$0xff] %v977
        %1010 = vst [vmem:[%s265 + $0xb8] sm:$0xff] %v978
        %1011 = vst [vmem:[%s265 + $0xc0] sm:$0xff] %v979
        %1012 = vst [vmem:[%s265 + $0xc8] sm:$0xff] %v980
        %1013 = vst [vmem:[%s265 + $0xd0] sm:$0xff] %v981
        %1014 = vst [vmem:[%s265 + $0xd8] sm:$0xff] %v982
        %1015 = vst [vmem:[%s265 + $0xe0] sm:$0xff] %v983
        %1016 = vst [vmem:[%s265 + $0xe8] sm:$0xff] %v984
        %1017 = vst [vmem:[%s265 + $0xf0] sm:$0xff] %v985
        %1018 = vst [vmem:[%s265 + $0xf8] sm:$0xff] %v986
      $region40: #{video_features_forward.69} parent=31 // pred_fallthru
        _
      %s1019 = smul.u32 32, %s19
      %p1020 = scmp.lt.s32.totalorder %s1019, 255
      %s1021 = scalar_select %p1020, %s1019, 255
      %p1022 = scmp.lt.s32.totalorder %s20, 0
      %s1023 = scalar_select %p1022, %s20, 0
      %s1024 = sadd.s32 %s1023, %s1021
      %s1025 = smul.addr %s1024, 8
      %s1026 = scalar_lea.vmem %s3, %s1025
      // Predicated region
      $region41: #{video_features_forward.69} parent=31 // pred_check
        %p1027 = pneg %p135
      $region42: #{video_features_forward.69} parent=31 // pred_check_branch
        %1029 = sbr.rel (%p1027) target = $region44
      $region43: #{video_features_forward.69} parent=31 // pred_region
        %s1030 = smul.u32 32, %s19
      $region44: #{video_features_forward.69} parent=31 // pred_fallthru
        _
    $region32: #{video_features_forward.69} parent=5 // pred_fallthru
      _
    %p1031 = scmp.le.s32.totalorder 2, %s9
    // Predicated region
    $region45: #{video_features_forward.69} parent=5 // pred_check
      %p1032 = pneg %p1031
    $region46: #{video_features_forward.69} parent=5 // pred_check_branch
      %1034 = sbr.rel (%p1032) target = $region48
    $region47: #{video_features_forward.69} parent=5 // pred_region
      %s1035 = ssub.s32 %s9, 2
      // Predicated region
      $region49: #{video_features_forward.69} parent=47 // pred_check
        %p1036 = pneg %p141
      $region50: #{video_features_forward.69} parent=47 // pred_check_branch
        %1038 = sbr.rel (%p1036) target = $region52
      $region51: #{video_features_forward.69} parent=47 // pred_region
        %s1039 = smul.u32 32, %s22
        %p1040 = scmp.lt.s32.totalorder %s1039, 255
        %s1041 = scalar_select %p1040, %s1039, 255
        %p1042 = scmp.lt.s32.totalorder %s23, 0
        %s1043 = scalar_select %p1042, %s23, 0
        %s1044 = sadd.s32 %s1043, %s1041
        %s1045 = smul.addr %s1044, 8
        %s1046 = scalar_lea.vmem %s3, %s1045
      $region52: #{video_features_forward.69} parent=47 // pred_fallthru
        _
    $region48: #{video_features_forward.69} parent=5 // pred_fallthru
      _
  $region6: #{video_features_forward.69} parent=0 // loop_footer
    %s13 = sadd.s32 1, %s9
  $region7: #{video_features_forward.69} parent=0 // loop_footer_branch
    %8 = sbr.rel target = $region3
  $region8: #{video_features_forward.69} parent=0 // loop_exit
    _

// kernel: video_features_forward.70
$region0: #{video_features_forward.70}
  #allocation0 [shape = 'u32[]', space=smem, size = 0x4, offset = 0x4, fixed_abs, tag = 'smem constant byte address 0x4 - core index']
  #allocation1 [shape = 'u32[144,128]{1,0:T(1,128)}', space=vmem, size = 0x12000, scoped, tag = 'internal scratch']
  #allocation2 [shape = 'f32[256,128]{1,0:T(8,128)}', space=vmem, size = 0x20000, scoped, tag = 'scratch operand']
  %s0 = inlined_call_operand.vmem [shape: bf16[512,128], index: 0, kind: input, shape index: {}]
  %s1 = inlined_call_operand.vmem [shape: bf16[128,128], index: 1, kind: input, shape index: {}]
  %s2 = inlined_call_operand.vmem [shape: f32[1,128], index: 2, kind: input, shape index: {}]
  %s3 = inlined_call_operand.vmem [shape: f32[512,128], index: 3, kind: output, shape index: {}]
  %s4 = sld [smem:[#allocation0]]
  $region53: #{video_features_forward.70} parent=0
    _
  %s6 = ssub.s32 1, %s4
  %s7 = scalar_select 0, %s6, %s4
  loop: start=0, step=1, limit=4
  $region2: #{video_features_forward.70} parent=0 // loop_pre_header
    _
  $region3: #{video_features_forward.70} parent=0 // loop_header
    %s9 = sphi 0, %s13
    %p10 = scmp.ge.s32.totalorder %s9, 4
    %s16 = sphi 0, %s35
    %s17 = sphi 0, %s31
    %s18 = sphi 0, %s27
    %s19 = sphi 0, %s16
    %s20 = sphi 0, %s17
    %s21 = sphi 0, %s18
    %s22 = sphi 0, %s19
    %s23 = sphi 0, %s20
    %s24 = sphi 0, %s21
    %s40 = sphi 0, %s42
    %s43 = sphi 0, %s40
    %s44 = sphi 0, %s43
    %s60 = sphi 0, %s44
    %s68 = sphi 0, %s70
    %s71 = sphi 0, %s68
    %s72 = sphi 0, %s71
    %s88 = sphi 0, %s72
    %s94 = sphi 0, %s96
    %s97 = sphi 0, %s94
    %s98 = sphi 0, %s97
    %s114 = sphi 0, %s98
    %s122 = sphi 0, %s124
    %s125 = sphi 0, %s122
    %s126 = sphi 0, %s125
    %s142 = sphi 0, %s126
  $region4: #{video_features_forward.70} parent=0 // loop_header_branch
    %12 = sbr.rel (%p10) target = $region8
  $region5: #{video_features_forward.70} parent=0 // loop_body
    %s14 = ssub.s32 %s9, 1
    %s15 = ssub.s32 %s9, 2
    %s25 = sadd.s32 1, %s18
    %p26 = scmp.ge.s32.totalorder %s25, 1
    %s27 = scalar_select %p26, 0, %s25
    %s28 = sadd.s32 1, %s17
    %s29 = scalar_select %p26, %s28, %s17
    %p30 = scmp.ge.s32.totalorder %s29, 1
    %s31 = scalar_select %p30, 0, %s29
    %s32 = sadd.s32 1, %s16
    %s33 = scalar_select %p30, %s32, %s16
    %p34 = scmp.ge.s32.totalorder %s33, 2
    %s35 = scalar_select %p34, 0, %s33
    %s36 = ssub.s32 %s16, %s35
    %s37 = ssub.s32 %s18, %s27
    %s38 = sor.u32 %s36, %s37
    %p39 = scmp.eq.s32.totalorder %s38, 0
    %s41 = sadd.s32 %s40, 1
    %s42 = scalar_select %p39, %s40, %s41
    %p45 = pneg %p39
    %p46 = scmp.eq.s32.totalorder %s9, 1
    %p47 = por %p45, %p46
    %p48 = scmp.ne.s32.totalorder %s40, %s43
    %p49 = scmp.eq.s32.totalorder %s9, 0
    %p50 = por %p48, %p49
    %p51 = scmp.ne.s32.totalorder %s40, %s43
    %p52 = scmp.eq.s32.totalorder %s14, 1
    %p53 = por %p51, %p52
    %p54 = scmp.ne.s32.totalorder %s43, %s44
    %p55 = scmp.eq.s32.totalorder %s14, 0
    %p56 = por %p54, %p55
    %p57 = scmp.ne.s32.totalorder %s43, %s44
    %p58 = scmp.eq.s32.totalorder %s15, 1
    %p59 = por %p57, %p58
    %p61 = scmp.ne.s32.totalorder %s44, %s60
    %p62 = scmp.eq.s32.totalorder %s15, 0
    %p63 = por %p61, %p62
    %s64 = ssub.s32 %s18, %s27
    %s65 = ssub.s32 %s17, %s31
    %s66 = sor.u32 %s64, %s65
    %p67 = scmp.eq.s32.totalorder %s66, 0
    %s69 = sadd.s32 %s68, 1
    %s70 = scalar_select %p67, %s68, %s69
    %p73 = pneg %p67
    %p74 = scmp.eq.s32.totalorder %s9, 1
    %p75 = por %p73, %p74
    %p76 = scmp.ne.s32.totalorder %s68, %s71
    %p77 = scmp.eq.s32.totalorder %s9, 0
    %p78 = por %p76, %p77
    %p79 = scmp.ne.s32.totalorder %s68, %s71
    %p80 = scmp.eq.s32.totalorder %s14, 1
    %p81 = por %p79, %p80
    %p82 = scmp.ne.s32.totalorder %s71, %s72
    %p83 = scmp.eq.s32.totalorder %s14, 0
    %p84 = por %p82, %p83
    %p85 = scmp.ne.s32.totalorder %s71, %s72
    %p86 = scmp.eq.s32.totalorder %s15, 1
    %p87 = por %p85, %p86
    %p89 = scmp.ne.s32.totalorder %s72, %s88
    %p90 = scmp.eq.s32.totalorder %s15, 0
    %p91 = por %p89, %p90
    %s92 = ssub.s32 %s17, %s31
    %p93 = scmp.eq.s32.totalorder %s92, 0
    %s95 = sadd.s32 %s94, 1
    %s96 = scalar_select %p93, %s94, %s95
    %p99 = pneg %p93
    %p100 = scmp.eq.s32.totalorder %s9, 1
    %p101 = por %p99, %p100
    %p102 = scmp.ne.s32.totalorder %s94, %s97
    %p103 = scmp.eq.s32.totalorder %s9, 0
    %p104 = por %p102, %p103
    %p105 = scmp.ne.s32.totalorder %s94, %s97
    %p106 = scmp.eq.s32.totalorder %s14, 1
    %p107 = por %p105, %p106
    %p108 = scmp.ne.s32.totalorder %s97, %s98
    %p109 = scmp.eq.s32.totalorder %s14, 0
    %p110 = por %p108, %p109
    %p111 = scmp.ne.s32.totalorder %s97, %s98
    %p112 = scmp.eq.s32.totalorder %s15, 1
    %p113 = por %p111, %p112
    %p115 = scmp.ne.s32.totalorder %s98, %s114
    %p116 = scmp.eq.s32.totalorder %s15, 0
    %p117 = por %p115, %p116
    %s118 = ssub.s32 %s16, %s35
    %s119 = ssub.s32 %s17, %s31
    %s120 = sor.u32 %s118, %s119
    %p121 = scmp.eq.s32.totalorder %s120, 0
    %s123 = sadd.s32 %s122, 1
    %s124 = scalar_select %p121, %s122, %s123
    %p127 = pneg %p121
    %p128 = scmp.eq.s32.totalorder %s9, 1
    %p129 = por %p127, %p128
    %p130 = scmp.ne.s32.totalorder %s122, %s125
    %p131 = scmp.eq.s32.totalorder %s9, 0
    %p132 = por %p130, %p131
    %p133 = scmp.ne.s32.totalorder %s122, %s125
    %p134 = scmp.eq.s32.totalorder %s14, 1
    %p135 = por %p133, %p134
    %p136 = scmp.ne.s32.totalorder %s125, %s126
    %p137 = scmp.eq.s32.totalorder %s14, 0
    %p138 = por %p136, %p137
    %p139 = scmp.ne.s32.totalorder %s125, %s126
    %p140 = scmp.eq.s32.totalorder %s15, 1
    %p141 = por %p139, %p140
    %p143 = scmp.ne.s32.totalorder %s126, %s142
    %p144 = scmp.eq.s32.totalorder %s15, 0
    %p145 = por %p143, %p144
    %p146 = scmp.le.s32.totalorder 1, %s9
    %p147 = scmp.lt.s32.totalorder %s9, 3
    %p148 = pnand %p146, %p147
    %p149 = pneg %p148
    // Predicated region
    $region9: #{video_features_forward.70} parent=5 // pred_check
      _
    $region10: #{video_features_forward.70} parent=5 // pred_check_branch
      %151 = sbr.rel (%p148) target = $region12
    $region11: #{video_features_forward.70} parent=5 // pred_region
      %s152 = ssub.s32 %s9, 1
      // Predicated region
      $region13: #{video_features_forward.70} parent=11 // pred_check
        %p153 = pneg %p84
      $region14: #{video_features_forward.70} parent=11 // pred_check_branch
        %155 = sbr.rel (%p153) target = $region16
      $region15: #{video_features_forward.70} parent=11 // pred_region
        %s156 = smul.u32 16, %s21
        %p157 = scmp.lt.s32.totalorder %s156, 15
        %s158 = scalar_select %p157, %s156, 15
        %p159 = scmp.lt.s32.totalorder %s20, 0
        %s160 = scalar_select %p159, %s20, 0
        %s161 = sadd.s32 %s160, %s158
        %s162 = smul.addr %s161, 4
        %s163 = scalar_lea.vmem %s1, %s162
        %s164 = smul.u32 16, %s21
      $region16: #{video_features_forward.70} parent=11 // pred_fallthru
        _
      // Predicated region
      $region17: #{video_features_forward.70} parent=11 // pred_check
        %p165 = pneg %p110
      $region18: #{video_features_forward.70} parent=11 // pred_check_branch
        %167 = sbr.rel (%p165) target = $region20
      $region19: #{video_features_forward.70} parent=11 // pred_region
        %p168 = scmp.lt.s32.totalorder %s20, 0
        %s169 = scalar_select %p168, %s20, 0
        %s170 = scalar_lea.vmem %s2, %s169
      $region20: #{video_features_forward.70} parent=11 // pred_fallthru
        _
    $region12: #{video_features_forward.70} parent=5 // pred_fallthru
      _
    %p171 = scmp.lt.s32.totalorder %s9, 2
    // Predicated region
    $region21: #{video_features_forward.70} parent=5 // pred_check
      %p172 = pneg %p171
    $region22: #{video_features_forward.70} parent=5 // pred_check_branch
      %174 = sbr.rel (%p172) target = $region24
    $region23: #{video_features_forward.70} parent=5 // pred_region
      // Predicated region
      $region25: #{video_features_forward.70} parent=23 // pred_check
        %p175 = pneg %p50
      $region26: #{video_features_forward.70} parent=23 // pred_check_branch
        %177 = sbr.rel (%p175) target = $region28
      $region27: #{video_features_forward.70} parent=23 // pred_region
        %s178 = smul.u32 32, %s16
        %p179 = scmp.lt.s32.totalorder %s178, 63
        %s180 = scalar_select %p179, %s178, 63
        %p181 = scmp.lt.s32.totalorder %s18, 0
        %s182 = scalar_select %p181, %s18, 0
        %s183 = sadd.s32 %s182, %s180
        %s184 = smul.addr %s183, 4
        %s185 = scalar_lea.vmem %s0, %s184
        %s186 = smul.u32 32, %s16
      $region28: #{video_features_forward.70} parent=23 // pred_fallthru
        _
    $region24: #{video_features_forward.70} parent=5 // pred_fallthru
      _
    %p187 = scmp.le.s32.totalorder 1, %s9
    %p188 = scmp.lt.s32.totalorder %s9, 3
    %p189 = pnand %p187, %p188
    %p190 = pneg %p189
    // Predicated region
    $region29: #{video_features_forward.70} parent=5 // pred_check
      _
    $region30: #{video_features_forward.70} parent=5 // pred_check_branch
      %192 = sbr.rel (%p189) target = $region32
    $region31: #{video_features_forward.70} parent=5 // pred_region
      %s193 = ssub.s32 %s9, 1
      %s194 = smul.u32 32, %s19
      %p195 = scmp.lt.s32.totalorder %s194, 63
      %s196 = scalar_select %p195, %s194, 63
      %p197 = scmp.lt.s32.totalorder %s21, 0
      %s198 = scalar_select %p197, %s21, 0
      %s199 = sadd.s32 %s198, %s196
      %s200 = smul.addr %s199, 4
      %s201 = scalar_lea.vmem %s0, %s200
      %p202 = pneg %p56
      %p203 = pneg %p53
      %s204 = smul.u32 16, %s21
      %p205 = scmp.lt.s32.totalorder %s204, 15
      %s206 = scalar_select %p205, %s204, 15
      %p207 = scmp.lt.s32.totalorder %s20, 0
      %s208 = scalar_select %p207, %s20, 0
      %s209 = sadd.s32 %s208, %s206
      %s210 = smul.addr %s209, 4
      %s211 = scalar_lea.vmem %s1, %s210
      %p212 = pneg %p84
      %p213 = pneg %p81
      %p214 = scmp.lt.s32.totalorder %s20, 0
      %s215 = scalar_select %p214, %s20, 0
      %s216 = scalar_lea.vmem %s2, %s215
      %p217 = pneg %p110
      %p218 = pneg %p107
      %p219 = pneg %p138
      %p220 = pneg %p135
      %s221 = smul.u32 32, %s19
      %p222 = scmp.lt.s32.totalorder %s221, 63
      %s223 = scalar_select %p222, %s221, 63
      %p224 = scmp.lt.s32.totalorder %s20, 0
      %s225 = scalar_select %p224, %s20, 0
      %s226 = sadd.s32 %s225, %s223
      %s227 = smul.addr %s226, 8
      %s228 = scalar_lea.vmem %s3, %s227
      %s229 = smul.u32 32, %s19
      %p230 = scmp.lt.s32.totalorder %s229, 63
      %s231 = scalar_select %p230, %s229, 63
      %p232 = scmp.lt.s32.totalorder %s21, 0
      %s233 = scalar_select %p232, %s21, 0
      %s234 = sadd.s32 %s233, %s231
      %s235 = smul.addr %s234, 4
      %s236 = scalar_lea.vmem %s0, %s235
      %s237 = smul.u32 32, %s19
      %s238 = smul.u32 16, %s21
      %p239 = scmp.lt.s32.totalorder %s238, 15
      %s240 = scalar_select %p239, %s238, 15
      %p241 = scmp.lt.s32.totalorder %s20, 0
      %s242 = scalar_select %p241, %s20, 0
      %s243 = sadd.s32 %s242, %s240
      %s244 = smul.addr %s243, 4
      %s245 = scalar_lea.vmem %s1, %s244
      %s246 = smul.u32 16, %s21
      %p247 = scmp.lt.s32.totalorder %s20, 0
      %s248 = scalar_select %p247, %s20, 0
      %s249 = scalar_lea.vmem %s2, %s248
      %s250 = smul.u32 32, %s19
      %p251 = scmp.lt.s32.totalorder %s250, 63
      %s252 = scalar_select %p251, %s250, 63
      %p253 = scmp.lt.s32.totalorder %s20, 0
      %s254 = scalar_select %p253, %s20, 0
      %s255 = sadd.s32 %s254, %s252
      %s256 = smul.addr %s255, 8
      %s257 = scalar_lea.vmem %s3, %s256
      %s258 = smul.u32 32, %s19
      %p260 = scmp.eq.s32.totalorder %s21, 0
      // Predicated region
      $region33: #{video_features_forward.70} parent=31 // pred_check
        %p261 = pneg %p260
      $region34: #{video_features_forward.70} parent=31 // pred_check_branch
        %263 = sbr.rel (%p261) target = $region36
      $region35: #{video_features_forward.70} parent=31 // pred_region
        %264 = vst [vmem:[#allocation2] sm:$0xff] 0.0
        %265 = vst [vmem:[#allocation2 + $0x8] sm:$0xff] 0.0
        %266 = vst [vmem:[#allocation2 + $0x10] sm:$0xff] 0.0
        %267 = vst [vmem:[#allocation2 + $0x18] sm:$0xff] 0.0
        %268 = vst [vmem:[#allocation2 + $0x20] sm:$0xff] 0.0
        %269 = vst [vmem:[#allocation2 + $0x28] sm:$0xff] 0.0
        %270 = vst [vmem:[#allocation2 + $0x30] sm:$0xff] 0.0
        %271 = vst [vmem:[#allocation2 + $0x38] sm:$0xff] 0.0
        %272 = vst [vmem:[#allocation2 + $0x40] sm:$0xff] 0.0
        %273 = vst [vmem:[#allocation2 + $0x48] sm:$0xff] 0.0
        %274 = vst [vmem:[#allocation2 + $0x50] sm:$0xff] 0.0
        %275 = vst [vmem:[#allocation2 + $0x58] sm:$0xff] 0.0
        %276 = vst [vmem:[#allocation2 + $0x60] sm:$0xff] 0.0
        %277 = vst [vmem:[#allocation2 + $0x68] sm:$0xff] 0.0
        %278 = vst [vmem:[#allocation2 + $0x70] sm:$0xff] 0.0
        %279 = vst [vmem:[#allocation2 + $0x78] sm:$0xff] 0.0
        %280 = vst [vmem:[#allocation2 + $0x80] sm:$0xff] 0.0
        %281 = vst [vmem:[#allocation2 + $0x88] sm:$0xff] 0.0
        %282 = vst [vmem:[#allocation2 + $0x90] sm:$0xff] 0.0
        %283 = vst [vmem:[#allocation2 + $0x98] sm:$0xff] 0.0
        %284 = vst [vmem:[#allocation2 + $0xa0] sm:$0xff] 0.0
        %285 = vst [vmem:[#allocation2 + $0xa8] sm:$0xff] 0.0
        %286 = vst [vmem:[#allocation2 + $0xb0] sm:$0xff] 0.0
        %287 = vst [vmem:[#allocation2 + $0xb8] sm:$0xff] 0.0
        %288 = vst [vmem:[#allocation2 + $0xc0] sm:$0xff] 0.0
        %289 = vst [vmem:[#allocation2 + $0xc8] sm:$0xff] 0.0
        %290 = vst [vmem:[#allocation2 + $0xd0] sm:$0xff] 0.0
        %291 = vst [vmem:[#allocation2 + $0xd8] sm:$0xff] 0.0
        %292 = vst [vmem:[#allocation2 + $0xe0] sm:$0xff] 0.0
        %293 = vst [vmem:[#allocation2 + $0xe8] sm:$0xff] 0.0
        %294 = vst [vmem:[#allocation2 + $0xf0] sm:$0xff] 0.0
        %295 = vst [vmem:[#allocation2 + $0xf8] sm:$0xff] 0.0
      $region36: #{video_features_forward.70} parent=31 // pred_fallthru
        _
      %v296 = vld [vmem:[#allocation2] sm:$0xff]
      %v297 = vld [vmem:[#allocation2 + $0x8] sm:$0xff]
      %v298 = vld [vmem:[#allocation2 + $0x10] sm:$0xff]
      %v299 = vld [vmem:[#allocation2 + $0x18] sm:$0xff]
      %v300 = vld [vmem:[#allocation2 + $0x20] sm:$0xff]
      %v301 = vld [vmem:[#allocation2 + $0x28] sm:$0xff]
      %v302 = vld [vmem:[#allocation2 + $0x30] sm:$0xff]
      %v303 = vld [vmem:[#allocation2 + $0x38] sm:$0xff]
      %v304 = vld [vmem:[#allocation2 + $0x40] sm:$0xff]
      %v305 = vld [vmem:[#allocation2 + $0x48] sm:$0xff]
      %v306 = vld [vmem:[#allocation2 + $0x50] sm:$0xff]
      %v307 = vld [vmem:[#allocation2 + $0x58] sm:$0xff]
      %v308 = vld [vmem:[#allocation2 + $0x60] sm:$0xff]
      %v309 = vld [vmem:[#allocation2 + $0x68] sm:$0xff]
      %v310 = vld [vmem:[#allocation2 + $0x70] sm:$0xff]
      %v311 = vld [vmem:[#allocation2 + $0x78] sm:$0xff]
      %v312 = vld [vmem:[#allocation2 + $0x80] sm:$0xff]
      %v313 = vld [vmem:[#allocation2 + $0x88] sm:$0xff]
      %v314 = vld [vmem:[#allocation2 + $0x90] sm:$0xff]
      %v315 = vld [vmem:[#allocation2 + $0x98] sm:$0xff]
      %v316 = vld [vmem:[#allocation2 + $0xa0] sm:$0xff]
      %v317 = vld [vmem:[#allocation2 + $0xa8] sm:$0xff]
      %v318 = vld [vmem:[#allocation2 + $0xb0] sm:$0xff]
      %v319 = vld [vmem:[#allocation2 + $0xb8] sm:$0xff]
      %v320 = vld [vmem:[#allocation2 + $0xc0] sm:$0xff]
      %v321 = vld [vmem:[#allocation2 + $0xc8] sm:$0xff]
      %v322 = vld [vmem:[#allocation2 + $0xd0] sm:$0xff]
      %v323 = vld [vmem:[#allocation2 + $0xd8] sm:$0xff]
      %v324 = vld [vmem:[#allocation2 + $0xe0] sm:$0xff]
      %v325 = vld [vmem:[#allocation2 + $0xe8] sm:$0xff]
      %v326 = vld [vmem:[#allocation2 + $0xf0] sm:$0xff]
      %v327 = vld [vmem:[#allocation2 + $0xf8] sm:$0xff]
      %v328 = vld [vmem:[%s236] sm:$0xf]
      %v329 = vld [vmem:[%s236 + $0x4] sm:$0xf]
      %v330 = vld [vmem:[%s236 + $0x8] sm:$0xf]
      %v331 = vld [vmem:[%s236 + $0xc] sm:$0xf]
      %v332 = vld [vmem:[%s236 + $0x10] sm:$0xf]
      %v333 = vld [vmem:[%s236 + $0x14] sm:$0xf]
      %v334 = vld [vmem:[%s236 + $0x18] sm:$0xf]
      %v335 = vld [vmem:[%s236 + $0x1c] sm:$0xf]
      %v336 = vld [vmem:[%s236 + $0x20] sm:$0xf]
      %v337 = vld [vmem:[%s236 + $0x24] sm:$0xf]
      %v338 = vld [vmem:[%s236 + $0x28] sm:$0xf]
      %v339 = vld [vmem:[%s236 + $0x2c] sm:$0xf]
      %v340 = vld [vmem:[%s236 + $0x30] sm:$0xf]
      %v341 = vld [vmem:[%s236 + $0x34] sm:$0xf]
      %v342 = vld [vmem:[%s236 + $0x38] sm:$0xf]
      %v343 = vld [vmem:[%s236 + $0x3c] sm:$0xf]
      %v344 = vld [vmem:[%s236 + $0x40] sm:$0xf]
      %v345 = vld [vmem:[%s236 + $0x44] sm:$0xf]
      %v346 = vld [vmem:[%s236 + $0x48] sm:$0xf]
      %v347 = vld [vmem:[%s236 + $0x4c] sm:$0xf]
      %v348 = vld [vmem:[%s236 + $0x50] sm:$0xf]
      %v349 = vld [vmem:[%s236 + $0x54] sm:$0xf]
      %v350 = vld [vmem:[%s236 + $0x58] sm:$0xf]
      %v351 = vld [vmem:[%s236 + $0x5c] sm:$0xf]
      %v352 = vld [vmem:[%s236 + $0x60] sm:$0xf]
      %v353 = vld [vmem:[%s236 + $0x64] sm:$0xf]
      %v354 = vld [vmem:[%s236 + $0x68] sm:$0xf]
      %v355 = vld [vmem:[%s236 + $0x6c] sm:$0xf]
      %v356 = vld [vmem:[%s236 + $0x70] sm:$0xf]
      %v357 = vld [vmem:[%s236 + $0x74] sm:$0xf]
      %v358 = vld [vmem:[%s236 + $0x78] sm:$0xf]
      %v359 = vld [vmem:[%s236 + $0x7c] sm:$0xf]
      %v360 = vld [vmem:[%s245] sm:$0xf]
      %v361 = vld [vmem:[%s245 + $0x4] sm:$0xf]
      %v362 = vld [vmem:[%s245 + $0x8] sm:$0xf]
      %v363 = vld [vmem:[%s245 + $0xc] sm:$0xf]
      %v364 = vld [vmem:[%s245 + $0x10] sm:$0xf]
      %v365 = vld [vmem:[%s245 + $0x14] sm:$0xf]
      %v366 = vld [vmem:[%s245 + $0x18] sm:$0xf]
      %v367 = vld [vmem:[%s245 + $0x1c] sm:$0xf]
      %v368 = vld [vmem:[%s245 + $0x20] sm:$0xf]
      %v369 = vld [vmem:[%s245 + $0x24] sm:$0xf]
      %v370 = vld [vmem:[%s245 + $0x28] sm:$0xf]
      %v371 = vld [vmem:[%s245 + $0x2c] sm:$0xf]
      %v372 = vld [vmem:[%s245 + $0x30] sm:$0xf]
      %v373 = vld [vmem:[%s245 + $0x34] sm:$0xf]
      %v374 = vld [vmem:[%s245 + $0x38] sm:$0xf]
      %v375 = vld [vmem:[%s245 + $0x3c] sm:$0xf]
      %v408 = vunpack.c.l.b16 %v328
      %v409 = vunpack.c.l.b16 %v329
      %v410 = vunpack.c.l.b16 %v330
      %v411 = vunpack.c.l.b16 %v331
      %v412 = vunpack.c.l.b16 %v332
      %v413 = vunpack.c.l.b16 %v333
      %v414 = vunpack.c.l.b16 %v334
      %v415 = vunpack.c.l.b16 %v335
      %v416 = vunpack.c.l.b16 %v336
      %v417 = vunpack.c.l.b16 %v337
      %v418 = vunpack.c.l.b16 %v338
      %v419 = vunpack.c.l.b16 %v339
      %v420 = vunpack.c.l.b16 %v340
      %v421 = vunpack.c.l.b16 %v341
      %v422 = vunpack.c.l.b16 %v342
      %v423 = vunpack.c.l.b16 %v343
      %v424 = vunpack.c.l.b16 %v344
      %v425 = vunpack.c.l.b16 %v345
      %v426 = vunpack.c.l.b16 %v346
      %v427 = vunpack.c.l.b16 %v347
      %v428 = vunpack.c.l.b16 %v348
      %v429 = vunpack.c.l.b16 %v349
      %v430 = vunpack.c.l.b16 %v350
      %v431 = vunpack.c.l.b16 %v351
      %v432 = vunpack.c.l.b16 %v352
      %v433 = vunpack.c.l.b16 %v353
      %v434 = vunpack.c.l.b16 %v354
      %v435 = vunpack.c.l.b16 %v355
      %v436 = vunpack.c.l.b16 %v356
      %v437 = vunpack.c.l.b16 %v357
      %v438 = vunpack.c.l.b16 %v358
      %v439 = vunpack.c.l.b16 %v359
      %v440 = vpack.c.b16 %v409, %v408
      %v441 = vpack.c.b16 %v411, %v410
      %v442 = vpack.c.b16 %v413, %v412
      %v443 = vpack.c.b16 %v415, %v414
      %v444 = vpack.c.b16 %v417, %v416
      %v445 = vpack.c.b16 %v419, %v418
      %v446 = vpack.c.b16 %v421, %v420
      %v447 = vpack.c.b16 %v423, %v422
      %v448 = vpack.c.b16 %v425, %v424
      %v449 = vpack.c.b16 %v427, %v426
      %v450 = vpack.c.b16 %v429, %v428
      %v451 = vpack.c.b16 %v431, %v430
      %v452 = vpack.c.b16 %v433, %v432
      %v453 = vpack.c.b16 %v435, %v434
      %v454 = vpack.c.b16 %v437, %v436
      %v455 = vpack.c.b16 %v439, %v438
      %v488 = vunpack.c.l.b16 %v360
      %v489 = vunpack.c.l.b16 %v361
      %v490 = vunpack.c.l.b16 %v362
      %v491 = vunpack.c.l.b16 %v363
      %v492 = vunpack.c.l.b16 %v364
      %v493 = vunpack.c.l.b16 %v365
      %v494 = vunpack.c.l.b16 %v366
      %v495 = vunpack.c.l.b16 %v367
      %v496 = vunpack.c.l.b16 %v368
      %v497 = vunpack.c.l.b16 %v369
      %v498 = vunpack.c.l.b16 %v370
      %v499 = vunpack.c.l.b16 %v371
      %v500 = vunpack.c.l.b16 %v372
      %v501 = vunpack.c.l.b16 %v373
      %v502 = vunpack.c.l.b16 %v374
      %v503 = vunpack.c.l.b16 %v375
      %v504 = vpack.c.b16 %v489, %v488
      %v505 = vpack.c.b16 %v491, %v490
      %v506 = vpack.c.b16 %v493, %v492
      %v507 = vpack.c.b16 %v495, %v494
      %v508 = vpack.c.b16 %v497, %v496
      %v509 = vpack.c.b16 %v499, %v498
      %v510 = vpack.c.b16 %v501, %v500
      %v511 = vpack.c.b16 %v503, %v502
      %520 = vmatprep.subr.bf16.mxu0 0
      %521 = vmatpush1.bf16.msra.mxu0 %v504
      %522 = vmatprep.subr.bf16.mxu0 0
      %523 = vmatpush1.bf16.msra.mxu0 %v505
      %524 = vmatprep.subr.bf16.mxu0 0
      %525 = vmatpush1.bf16.msra.mxu0 %v506
      %526 = vmatprep.subr.bf16.mxu0 0
      %527 = vmatpush1.bf16.msra.mxu0 %v507
      %528 = vmatprep.subr.bf16.mxu0 0
      %529 = vmatpush1.bf16.msra.mxu0 %v508
      %530 = vmatprep.subr.bf16.mxu0 0
      %531 = vmatpush1.bf16.msra.mxu0 %v509
      %532 = vmatprep.subr.bf16.mxu0 0
      %533 = vmatpush1.bf16.msra.mxu0 %v510
      %534 = vmatprep.subr.bf16.mxu0 0
      %535 = vmatpush1.bf16.msra.mxu0 %v511
      %536 = vmatprep.subr.bf16.mxu0 0
      %537 = vmatpush1.bf16.msra.mxu0 0
      %538 = vmatprep.subr.bf16.mxu0 0
      %539 = vmatpush1.bf16.msra.mxu0 0
      %540 = vmatprep.subr.bf16.mxu0 0
      %541 = vmatpush1.bf16.msra.mxu0 0
      %542 = vmatprep.subr.bf16.mxu0 0
      %543 = vmatpush1.bf16.msra.mxu0 0
      %544 = vmatprep.subr.bf16.mxu0 0
      %545 = vmatpush1.bf16.msra.mxu0 0
      %546 = vmatprep.subr.bf16.mxu0 0
      %547 = vmatpush1.bf16.msra.mxu0 0
      %548 = vmatprep.subr.bf16.mxu0 0
      %549 = vmatpush1.bf16.msra.mxu0 0
      %550 = vmatprep.subr.bf16.mxu0 0
      %551 = vmatpush1.bf16.msra.mxu0 0
      %552 = vmatprep.mubr.bf16.mxu0 0
      %553 = vmatmul.mubr.bf16.gmra.mrb[0].mxu0 %v440
      %v554 = vpop.f32.mrb[0].mxu0
      %v555 = vadd.f32 0.0, %v554
      %v556 = vpop.f32.mrb[0].mxu0
      %v557 = vpop.f32.mrb[0].mxu0
      %v558 = vadd.f32 0.0, %v557
      %v559 = vpop.f32.mrb[0].mxu0
      %560 = vmatprep.mubr.bf16.mxu0 0
      %561 = vmatmul.mubr.bf16.gmra.mrb[0].mxu0 %v441
      %v562 = vpop.f32.mrb[0].mxu0
      %v563 = vadd.f32 0.0, %v562
      %v564 = vpop.f32.mrb[0].mxu0
      %v565 = vpop.f32.mrb[0].mxu0
      %v566 = vadd.f32 0.0, %v565
      %v567 = vpop.f32.mrb[0].mxu0
      %568 = vmatprep.mubr.bf16.mxu0 0
      %569 = vmatmul.mubr.bf16.gmra.mrb[0].mxu0 %v442
      %v570 = vpop.f32.mrb[0].mxu0
      %v571 = vadd.f32 0.0, %v570
      %v572 = vpop.f32.mrb[0].mxu0
      %v573 = vpop.f32.mrb[0].mxu0
      %v574 = vadd.f32 0.0, %v573
      %v575 = vpop.f32.mrb[0].mxu0
      %576 = vmatprep.mubr.bf16.mxu0 0
      %577 = vmatmul.mubr.bf16.gmra.mrb[0].mxu0 %v443
      %v578 = vpop.f32.mrb[0].mxu0
      %v579 = vadd.f32 0.0, %v578
      %v580 = vpop.f32.mrb[0].mxu0
      %v581 = vpop.f32.mrb[0].mxu0
      %v582 = vadd.f32 0.0, %v581
      %v583 = vpop.f32.mrb[0].mxu0
      %584 = vmatprep.mubr.bf16.mxu0 0
      %585 = vmatmul.mubr.bf16.gmra.mrb[0].mxu0 %v444
      %v586 = vpop.f32.mrb[0].mxu0
      %v587 = vadd.f32 0.0, %v586
      %v588 = vpop.f32.mrb[0].mxu0
      %v589 = vpop.f32.mrb[0].mxu0
      %v590 = vadd.f32 0.0, %v589
      %v591 = vpop.f32.mrb[0].mxu0
      %592 = vmatprep.mubr.bf16.mxu0 0
      %593 = vmatmul.mubr.bf16.gmra.mrb[0].mxu0 %v445
      %v594 = vpop.f32.mrb[0].mxu0
      %v595 = vadd.f32 0.0, %v594
      %v596 = vpop.f32.mrb[0].mxu0
      %v597 = vpop.f32.mrb[0].mxu0
      %v598 = vadd.f32 0.0, %v597
      %v599 = vpop.f32.mrb[0].mxu0
      %600 = vmatprep.mubr.bf16.mxu0 0
      %601 = vmatmul.mubr.bf16.gmra.mrb[0].mxu0 %v446
      %v602 = vpop.f32.mrb[0].mxu0
      %v603 = vadd.f32 0.0, %v602
      %v604 = vpop.f32.mrb[0].mxu0
      %v605 = vpop.f32.mrb[0].mxu0
      %v606 = vadd.f32 0.0, %v605
      %v607 = vpop.f32.mrb[0].mxu0
      %608 = vmatprep.mubr.bf16.mxu0 0
      %609 = vmatmul.mubr.bf16.gmra.mrb[0].mxu0 %v447
      %v610 = vpop.f32.mrb[0].mxu0
      %v611 = vadd.f32 0.0, %v610
      %v612 = vpop.f32.mrb[0].mxu0
      %v613 = vpop.f32.mrb[0].mxu0
      %v614 = vadd.f32 0.0, %v613
      %v615 = vpop.f32.mrb[0].mxu0
      %616 = vmatprep.mubr.bf16.mxu0 0
      %617 = vmatmul.mubr.bf16.gmra.mrb[0].mxu0 %v448
      %v618 = vpop.f32.mrb[0].mxu0
      %v619 = vadd.f32 0.0, %v618
      %v620 = vpop.f32.mrb[0].mxu0
      %v621 = vpop.f32.mrb[0].mxu0
      %v622 = vadd.f32 0.0, %v621
      %v623 = vpop.f32.mrb[0].mxu0
      %624 = vmatprep.mubr.bf16.mxu0 0
      %625 = vmatmul.mubr.bf16.gmra.mrb[0].mxu0 %v449
      %v626 = vpop.f32.mrb[0].mxu0
      %v627 = vadd.f32 0.0, %v626
      %v628 = vpop.f32.mrb[0].mxu0
      %v629 = vpop.f32.mrb[0].mxu0
      %v630 = vadd.f32 0.0, %v629
      %v631 = vpop.f32.mrb[0].mxu0
      %632 = vmatprep.mubr.bf16.mxu0 0
      %633 = vmatmul.mubr.bf16.gmra.mrb[0].mxu0 %v450
      %v634 = vpop.f32.mrb[0].mxu0
      %v635 = vadd.f32 0.0, %v634
      %v636 = vpop.f32.mrb[0].mxu0
      %v637 = vpop.f32.mrb[0].mxu0
      %v638 = vadd.f32 0.0, %v637
      %v639 = vpop.f32.mrb[0].mxu0
      %640 = vmatprep.mubr.bf16.mxu0 0
      %641 = vmatmul.mubr.bf16.gmra.mrb[0].mxu0 %v451
      %v642 = vpop.f32.mrb[0].mxu0
      %v643 = vadd.f32 0.0, %v642
      %v644 = vpop.f32.mrb[0].mxu0
      %v645 = vpop.f32.mrb[0].mxu0
      %v646 = vadd.f32 0.0, %v645
      %v647 = vpop.f32.mrb[0].mxu0
      %648 = vmatprep.mubr.bf16.mxu0 0
      %649 = vmatmul.mubr.bf16.gmra.mrb[0].mxu0 %v452
      %v650 = vpop.f32.mrb[0].mxu0
      %v651 = vadd.f32 0.0, %v650
      %v652 = vpop.f32.mrb[0].mxu0
      %v653 = vpop.f32.mrb[0].mxu0
      %v654 = vadd.f32 0.0, %v653
      %v655 = vpop.f32.mrb[0].mxu0
      %656 = vmatprep.mubr.bf16.mxu0 0
      %657 = vmatmul.mubr.bf16.gmra.mrb[0].mxu0 %v453
      %v658 = vpop.f32.mrb[0].mxu0
      %v659 = vadd.f32 0.0, %v658
      %v660 = vpop.f32.mrb[0].mxu0
      %v661 = vpop.f32.mrb[0].mxu0
      %v662 = vadd.f32 0.0, %v661
      %v663 = vpop.f32.mrb[0].mxu0
      %664 = vmatprep.mubr.bf16.mxu0 0
      %665 = vmatmul.mubr.bf16.gmra.mrb[0].mxu0 %v454
      %v666 = vpop.f32.mrb[0].mxu0
      %v667 = vadd.f32 0.0, %v666
      %v668 = vpop.f32.mrb[0].mxu0
      %v669 = vpop.f32.mrb[0].mxu0
      %v670 = vadd.f32 0.0, %v669
      %v671 = vpop.f32.mrb[0].mxu0
      %672 = vmatprep.mubr.bf16.mxu0 0
      %673 = vmatmul.mubr.bf16.gmra.mrb[0].mxu0 %v455
      %v674 = vpop.f32.mrb[0].mxu0
      %v675 = vadd.f32 0.0, %v674
      %v676 = vpop.f32.mrb[0].mxu0
      %v677 = vpop.f32.mrb[0].mxu0
      %v678 = vadd.f32 0.0, %v677
      %v679 = vpop.f32.mrb[0].mxu0
      %680 = vdwg.mxu0
      %v681 = vadd.f32 %v296, %v555
      %v682 = vadd.f32 %v297, %v558
      %v683 = vadd.f32 %v298, %v563
      %v684 = vadd.f32 %v299, %v566
      %v685 = vadd.f32 %v300, %v571
      %v686 = vadd.f32 %v301, %v574
      %v687 = vadd.f32 %v302, %v579
      %v688 = vadd.f32 %v303, %v582
      %v689 = vadd.f32 %v304, %v587
      %v690 = vadd.f32 %v305, %v590
      %v691 = vadd.f32 %v306, %v595
      %v692 = vadd.f32 %v307, %v598
      %v693 = vadd.f32 %v308, %v603
      %v694 = vadd.f32 %v309, %v606
      %v695 = vadd.f32 %v310, %v611
      %v696 = vadd.f32 %v311, %v614
      %v697 = vadd.f32 %v312, %v619
      %v698 = vadd.f32 %v313, %v622
      %v699 = vadd.f32 %v314, %v627
      %v700 = vadd.f32 %v315, %v630
      %v701 = vadd.f32 %v316, %v635
      %v702 = vadd.f32 %v317, %v638
      %v703 = vadd.f32 %v318, %v643
      %v704 = vadd.f32 %v319, %v646
      %v705 = vadd.f32 %v320, %v651
      %v706 = vadd.f32 %v321, %v654
      %v707 = vadd.f32 %v322, %v659
      %v708 = vadd.f32 %v323, %v662
      %v709 = vadd.f32 %v324, %v667
      %v710 = vadd.f32 %v325, %v670
      %v711 = vadd.f32 %v326, %v675
      %v712 = vadd.f32 %v327, %v678
      %713 = vst [vmem:[#allocation2] sm:$0xff] %v681
      %714 = vst [vmem:[#allocation2 + $0x8] sm:$0xff] %v682
      %715 = vst [vmem:[#allocation2 + $0x10] sm:$0xff] %v683
      %716 = vst [vmem:[#allocation2 + $0x18] sm:$0xff] %v684
      %717 = vst [vmem:[#allocation2 + $0x20] sm:$0xff] %v685
      %718 = vst [vmem:[#allocation2 + $0x28] sm:$0xff] %v686
      %719 = vst [vmem:[#allocation2 + $0x30] sm:$0xff] %v687
      %720 = vst [vmem:[#allocation2 + $0x38] sm:$0xff] %v688
      %721 = vst [vmem:[#allocation2 + $0x40] sm:$0xff] %v689
      %722 = vst [vmem:[#allocation2 + $0x48] sm:$0xff] %v690
      %723 = vst [vmem:[#allocation2 + $0x50] sm:$0xff] %v691
      %724 = vst [vmem:[#allocation2 + $0x58] sm:$0xff] %v692
      %725 = vst [vmem:[#allocation2 + $0x60] sm:$0xff] %v693
      %726 = vst [vmem:[#allocation2 + $0x68] sm:$0xff] %v694
      %727 = vst [vmem:[#allocation2 + $0x70] sm:$0xff] %v695
      %728 = vst [vmem:[#allocation2 + $0x78] sm:$0xff] %v696
      %729 = vst [vmem:[#allocation2 + $0x80] sm:$0xff] %v697
      %730 = vst [vmem:[#allocation2 + $0x88] sm:$0xff] %v698
      %731 = vst [vmem:[#allocation2 + $0x90] sm:$0xff] %v699
      %732 = vst [vmem:[#allocation2 + $0x98] sm:$0xff] %v700
      %733 = vst [vmem:[#allocation2 + $0xa0] sm:$0xff] %v701
      %734 = vst [vmem:[#allocation2 + $0xa8] sm:$0xff] %v702
      %735 = vst [vmem:[#allocation2 + $0xb0] sm:$0xff] %v703
      %736 = vst [vmem:[#allocation2 + $0xb8] sm:$0xff] %v704
      %737 = vst [vmem:[#allocation2 + $0xc0] sm:$0xff] %v705
      %738 = vst [vmem:[#allocation2 + $0xc8] sm:$0xff] %v706
      %739 = vst [vmem:[#allocation2 + $0xd0] sm:$0xff] %v707
      %740 = vst [vmem:[#allocation2 + $0xd8] sm:$0xff] %v708
      %741 = vst [vmem:[#allocation2 + $0xe0] sm:$0xff] %v709
      %742 = vst [vmem:[#allocation2 + $0xe8] sm:$0xff] %v710
      %743 = vst [vmem:[#allocation2 + $0xf0] sm:$0xff] %v711
      %744 = vst [vmem:[#allocation2 + $0xf8] sm:$0xff] %v712
      // Predicated region
      $region37: #{video_features_forward.70} parent=31 // pred_check
        %p745 = pneg %p260
      $region38: #{video_features_forward.70} parent=31 // pred_check_branch
        %747 = sbr.rel (%p745) target = $region40
      $region39: #{video_features_forward.70} parent=31 // pred_region
        %v748 = vld [vmem:[#allocation2] sm:$0xff]
        %v749 = vld [vmem:[#allocation2 + $0x8] sm:$0xff]
        %v750 = vld [vmem:[#allocation2 + $0x10] sm:$0xff]
        %v751 = vld [vmem:[#allocation2 + $0x18] sm:$0xff]
        %v752 = vld [vmem:[#allocation2 + $0x20] sm:$0xff]
        %v753 = vld [vmem:[#allocation2 + $0x28] sm:$0xff]
        %v754 = vld [vmem:[#allocation2 + $0x30] sm:$0xff]
        %v755 = vld [vmem:[#allocation2 + $0x38] sm:$0xff]
        %v756 = vld [vmem:[#allocation2 + $0x40] sm:$0xff]
        %v757 = vld [vmem:[#allocation2 + $0x48] sm:$0xff]
        %v758 = vld [vmem:[#allocation2 + $0x50] sm:$0xff]
        %v759 = vld [vmem:[#allocation2 + $0x58] sm:$0xff]
        %v760 = vld [vmem:[#allocation2 + $0x60] sm:$0xff]
        %v761 = vld [vmem:[#allocation2 + $0x68] sm:$0xff]
        %v762 = vld [vmem:[#allocation2 + $0x70] sm:$0xff]
        %v763 = vld [vmem:[#allocation2 + $0x78] sm:$0xff]
        %v764 = vld [vmem:[#allocation2 + $0x80] sm:$0xff]
        %v765 = vld [vmem:[#allocation2 + $0x88] sm:$0xff]
        %v766 = vld [vmem:[#allocation2 + $0x90] sm:$0xff]
        %v767 = vld [vmem:[#allocation2 + $0x98] sm:$0xff]
        %v768 = vld [vmem:[#allocation2 + $0xa0] sm:$0xff]
        %v769 = vld [vmem:[#allocation2 + $0xa8] sm:$0xff]
        %v770 = vld [vmem:[#allocation2 + $0xb0] sm:$0xff]
        %v771 = vld [vmem:[#allocation2 + $0xb8] sm:$0xff]
        %v772 = vld [vmem:[#allocation2 + $0xc0] sm:$0xff]
        %v773 = vld [vmem:[#allocation2 + $0xc8] sm:$0xff]
        %v774 = vld [vmem:[#allocation2 + $0xd0] sm:$0xff]
        %v775 = vld [vmem:[#allocation2 + $0xd8] sm:$0xff]
        %v776 = vld [vmem:[#allocation2 + $0xe0] sm:$0xff]
        %v777 = vld [vmem:[#allocation2 + $0xe8] sm:$0xff]
        %v778 = vld [vmem:[#allocation2 + $0xf0] sm:$0xff]
        %v779 = vld [vmem:[#allocation2 + $0xf8] sm:$0xff]
        %v780 = vld [vmem:[%s249] sm:$0x1]
        %v782 = vlaneseq
        %v783 = vshrl.u32 %v782, 7
        %v784 = vsub.s32 0, %v783
        %v785 = vrot.slane %v780, %v784
        %v787 = vadd.f32 %v748, %v785
        %v788 = vadd.f32 %v749, %v785
        %v789 = vadd.f32 %v750, %v785
        %v790 = vadd.f32 %v751, %v785
        %v791 = vadd.f32 %v752, %v785
        %v792 = vadd.f32 %v753, %v785
        %v793 = vadd.f32 %v754, %v785
        %v794 = vadd.f32 %v755, %v785
        %v795 = vadd.f32 %v756, %v785
        %v796 = vadd.f32 %v757, %v785
        %v797 = vadd.f32 %v758, %v785
        %v798 = vadd.f32 %v759, %v785
        %v799 = vadd.f32 %v760, %v785
        %v800 = vadd.f32 %v761, %v785
        %v801 = vadd.f32 %v762, %v785
        %v802 = vadd.f32 %v763, %v785
        %v803 = vadd.f32 %v764, %v785
        %v804 = vadd.f32 %v765, %v785
        %v805 = vadd.f32 %v766, %v785
        %v806 = vadd.f32 %v767, %v785
        %v807 = vadd.f32 %v768, %v785
        %v808 = vadd.f32 %v769, %v785
        %v809 = vadd.f32 %v770, %v785
        %v810 = vadd.f32 %v771, %v785
        %v811 = vadd.f32 %v772, %v785
        %v812 = vadd.f32 %v773, %v785
        %v813 = vadd.f32 %v774, %v785
        %v814 = vadd.f32 %v775, %v785
        %v815 = vadd.f32 %v776, %v785
        %v816 = vadd.f32 %v777, %v785
        %v817 = vadd.f32 %v778, %v785
        %v818 = vadd.f32 %v779, %v785
        %v819 = vmax.f32 %v787, 0.0
        %v820 = vmax.f32 %v788, 0.0
        %v821 = vmax.f32 %v789, 0.0
        %v822 = vmax.f32 %v790, 0.0
        %v823 = vmax.f32 %v791, 0.0
        %v824 = vmax.f32 %v792, 0.0
        %v825 = vmax.f32 %v793, 0.0
        %v826 = vmax.f32 %v794, 0.0
        %v827 = vmax.f32 %v795, 0.0
        %v828 = vmax.f32 %v796, 0.0
        %v829 = vmax.f32 %v797, 0.0
        %v830 = vmax.f32 %v798, 0.0
        %v831 = vmax.f32 %v799, 0.0
        %v832 = vmax.f32 %v800, 0.0
        %v833 = vmax.f32 %v801, 0.0
        %v834 = vmax.f32 %v802, 0.0
        %v835 = vmax.f32 %v803, 0.0
        %v836 = vmax.f32 %v804, 0.0
        %v837 = vmax.f32 %v805, 0.0
        %v838 = vmax.f32 %v806, 0.0
        %v839 = vmax.f32 %v807, 0.0
        %v840 = vmax.f32 %v808, 0.0
        %v841 = vmax.f32 %v809, 0.0
        %v842 = vmax.f32 %v810, 0.0
        %v843 = vmax.f32 %v811, 0.0
        %v844 = vmax.f32 %v812, 0.0
        %v845 = vmax.f32 %v813, 0.0
        %v846 = vmax.f32 %v814, 0.0
        %v847 = vmax.f32 %v815, 0.0
        %v848 = vmax.f32 %v816, 0.0
        %v849 = vmax.f32 %v817, 0.0
        %v850 = vmax.f32 %v818, 0.0
        %851 = vst [vmem:[%s257] sm:$0xff] %v819
        %852 = vst [vmem:[%s257 + $0x8] sm:$0xff] %v820
        %853 = vst [vmem:[%s257 + $0x10] sm:$0xff] %v821
        %854 = vst [vmem:[%s257 + $0x18] sm:$0xff] %v822
        %855 = vst [vmem:[%s257 + $0x20] sm:$0xff] %v823
        %856 = vst [vmem:[%s257 + $0x28] sm:$0xff] %v824
        %857 = vst [vmem:[%s257 + $0x30] sm:$0xff] %v825
        %858 = vst [vmem:[%s257 + $0x38] sm:$0xff] %v826
        %859 = vst [vmem:[%s257 + $0x40] sm:$0xff] %v827
        %860 = vst [vmem:[%s257 + $0x48] sm:$0xff] %v828
        %861 = vst [vmem:[%s257 + $0x50] sm:$0xff] %v829
        %862 = vst [vmem:[%s257 + $0x58] sm:$0xff] %v830
        %863 = vst [vmem:[%s257 + $0x60] sm:$0xff] %v831
        %864 = vst [vmem:[%s257 + $0x68] sm:$0xff] %v832
        %865 = vst [vmem:[%s257 + $0x70] sm:$0xff] %v833
        %866 = vst [vmem:[%s257 + $0x78] sm:$0xff] %v834
        %867 = vst [vmem:[%s257 + $0x80] sm:$0xff] %v835
        %868 = vst [vmem:[%s257 + $0x88] sm:$0xff] %v836
        %869 = vst [vmem:[%s257 + $0x90] sm:$0xff] %v837
        %870 = vst [vmem:[%s257 + $0x98] sm:$0xff] %v838
        %871 = vst [vmem:[%s257 + $0xa0] sm:$0xff] %v839
        %872 = vst [vmem:[%s257 + $0xa8] sm:$0xff] %v840
        %873 = vst [vmem:[%s257 + $0xb0] sm:$0xff] %v841
        %874 = vst [vmem:[%s257 + $0xb8] sm:$0xff] %v842
        %875 = vst [vmem:[%s257 + $0xc0] sm:$0xff] %v843
        %876 = vst [vmem:[%s257 + $0xc8] sm:$0xff] %v844
        %877 = vst [vmem:[%s257 + $0xd0] sm:$0xff] %v845
        %878 = vst [vmem:[%s257 + $0xd8] sm:$0xff] %v846
        %879 = vst [vmem:[%s257 + $0xe0] sm:$0xff] %v847
        %880 = vst [vmem:[%s257 + $0xe8] sm:$0xff] %v848
        %881 = vst [vmem:[%s257 + $0xf0] sm:$0xff] %v849
        %882 = vst [vmem:[%s257 + $0xf8] sm:$0xff] %v850
      $region40: #{video_features_forward.70} parent=31 // pred_fallthru
        _
      %s883 = smul.u32 32, %s19
      %p884 = scmp.lt.s32.totalorder %s883, 63
      %s885 = scalar_select %p884, %s883, 63
      %p886 = scmp.lt.s32.totalorder %s20, 0
      %s887 = scalar_select %p886, %s20, 0
      %s888 = sadd.s32 %s887, %s885
      %s889 = smul.addr %s888, 8
      %s890 = scalar_lea.vmem %s3, %s889
      // Predicated region
      $region41: #{video_features_forward.70} parent=31 // pred_check
        %p891 = pneg %p135
      $region42: #{video_features_forward.70} parent=31 // pred_check_branch
        %893 = sbr.rel (%p891) target = $region44
      $region43: #{video_features_forward.70} parent=31 // pred_region
        %s894 = smul.u32 32, %s19
      $region44: #{video_features_forward.70} parent=31 // pred_fallthru
        _
    $region32: #{video_features_forward.70} parent=5 // pred_fallthru
      _
    %p895 = scmp.le.s32.totalorder 2, %s9
    // Predicated region
    $region45: #{video_features_forward.70} parent=5 // pred_check
      %p896 = pneg %p895
    $region46: #{video_features_forward.70} parent=5 // pred_check_branch
      %898 = sbr.rel (%p896) target = $region48
    $region47: #{video_features_forward.70} parent=5 // pred_region
      %s899 = ssub.s32 %s9, 2
      // Predicated region
      $region49: #{video_features_forward.70} parent=47 // pred_check
        %p900 = pneg %p141
      $region50: #{video_features_forward.70} parent=47 // pred_check_branch
        %902 = sbr.rel (%p900) target = $region52
      $region51: #{video_features_forward.70} parent=47 // pred_region
        %s903 = smul.u32 32, %s22
        %p904 = scmp.lt.s32.totalorder %s903, 63
        %s905 = scalar_select %p904, %s903, 63
        %p906 = scmp.lt.s32.totalorder %s23, 0
        %s907 = scalar_select %p906, %s23, 0
        %s908 = sadd.s32 %s907, %s905
        %s909 = smul.addr %s908, 8
        %s910 = scalar_lea.vmem %s3, %s909
      $region52: #{video_features_forward.70} parent=47 // pred_fallthru
        _
    $region48: #{video_features_forward.70} parent=5 // pred_fallthru
      _
  $region6: #{video_features_forward.70} parent=0 // loop_footer
    %s13 = sadd.s32 1, %s9
  $region7: #{video_features_forward.70} parent=0 // loop_footer_branch
    %8 = sbr.rel target = $region3
  $region8: #{video_features_forward.70} parent=0 // loop_exit
    _

// kernel: video_features_forward.71
$region0: #{video_features_forward.71}
  #allocation0 [shape = 'u32[]', space=smem, size = 0x4, offset = 0x4, fixed_abs, tag = 'smem constant byte address 0x4 - core index']
  #allocation1 [shape = 'u32[144,128]{1,0:T(1,128)}', space=vmem, size = 0x12000, scoped, tag = 'internal scratch']
  #allocation2 [shape = 'f32[256,128]{1,0:T(8,128)}', space=vmem, size = 0x20000, scoped, tag = 'scratch operand']
  %s0 = inlined_call_operand.vmem [shape: bf16[512,1152], index: 0, kind: input, shape index: {}]
  %s1 = inlined_call_operand.vmem [shape: bf16[1152,128], index: 1, kind: input, shape index: {}]
  %s2 = inlined_call_operand.vmem [shape: f32[1,128], index: 2, kind: input, shape index: {}]
  %s3 = inlined_call_operand.vmem [shape: f32[512,128], index: 3, kind: output, shape index: {}]
  %s4 = sld [smem:[#allocation0]]
  $region79: #{video_features_forward.71} parent=0
    _
  %s6 = ssub.s32 1, %s4
  %s7 = scalar_select 0, %s6, %s4
  $region1: #{video_features_forward.71} parent=0
    #allocation3 [shape = 'u8[393216]{0}', space=vmem, size = 0x60000, scoped, tag = 'input window, operand 0']
    loop: start=0, step=1, limit=8
    $region2: #{video_features_forward.71} parent=1 // loop_pre_header
      _
    $region3: #{video_features_forward.71} parent=1 // loop_header
      %s9 = sphi 0, %s13
      %p10 = scmp.ge.s32.totalorder %s9, 8
      %s16 = sphi 0, %s35
      %s17 = sphi 0, %s31
      %s18 = sphi 0, %s27
      %s19 = sphi 0, %s16
      %s20 = sphi 0, %s17
      %s21 = sphi 0, %s18
      %s22 = sphi 0, %s19
      %s23 = sphi 0, %s20
      %s24 = sphi 0, %s21
      %s40 = sphi 0, %s42
      %s43 = sphi 0, %s40
      %s44 = sphi 0, %s43
      %s60 = sphi 0, %s44
      %s68 = sphi 0, %s70
      %s71 = sphi 0, %s68
      %s72 = sphi 0, %s71
      %s88 = sphi 0, %s72
      %s94 = sphi 0, %s96
      %s97 = sphi 0, %s94
      %s98 = sphi 0, %s97
      %s114 = sphi 0, %s98
      %s122 = sphi 0, %s124
      %s125 = sphi 0, %s122
      %s126 = sphi 0, %s125
      %s142 = sphi 0, %s126
    $region4: #{video_features_forward.71} parent=1 // loop_header_branch
      %12 = sbr.rel (%p10) target = $region8
    $region5: #{video_features_forward.71} parent=1 // loop_body
      %s14 = ssub.s32 %s9, 1
      %s15 = ssub.s32 %s9, 2
      %s25 = sadd.s32 1, %s18
      %p26 = scmp.ge.s32.totalorder %s25, 3
      %s27 = scalar_select %p26, 0, %s25
      %s28 = sadd.s32 1, %s17
      %s29 = scalar_select %p26, %s28, %s17
      %p30 = scmp.ge.s32.totalorder %s29, 1
      %s31 = scalar_select %p30, 0, %s29
      %s32 = sadd.s32 1, %s16
      %s33 = scalar_select %p30, %s32, %s16
      %p34 = scmp.ge.s32.totalorder %s33, 2
      %s35 = scalar_select %p34, 0, %s33
      %s36 = ssub.s32 %s16, %s35
      %s37 = ssub.s32 %s18, %s27
      %s38 = sor.u32 %s36, %s37
      %p39 = scmp.eq.s32.totalorder %s38, 0
      %s41 = sadd.s32 %s40, 1
      %s42 = scalar_select %p39, %s40, %s41
      %p45 = pneg %p39
      %p46 = scmp.eq.s32.totalorder %s9, 5
      %p47 = por %p45, %p46
      %p48 = scmp.ne.s32.totalorder %s40, %s43
      %p49 = scmp.eq.s32.totalorder %s9, 0
      %p50 = por %p48, %p49
      %p51 = scmp.ne.s32.totalorder %s40, %s43
      %p52 = scmp.eq.s32.totalorder %s14, 5
      %p53 = por %p51, %p52
      %p54 = scmp.ne.s32.totalorder %s43, %s44
      %p55 = scmp.eq.s32.totalorder %s14, 0
      %p56 = por %p54, %p55
      %p57 = scmp.ne.s32.totalorder %s43, %s44
      %p58 = scmp.eq.s32.totalorder %s15, 5
      %p59 = por %p57, %p58
      %p61 = scmp.ne.s32.totalorder %s44, %s60
      %p62 = scmp.eq.s32.totalorder %s15, 0
      %p63 = por %p61, %p62
      %s64 = ssub.s32 %s18, %s27
      %s65 = ssub.s32 %s17, %s31
      %s66 = sor.u32 %s64, %s65
      %p67 = scmp.eq.s32.totalorder %s66, 0
      %s69 = sadd.s32 %s68, 1
      %s70 = scalar_select %p67, %s68, %s69
      %p73 = pneg %p67
      %p74 = scmp.eq.s32.totalorder %s9, 5
      %p75 = por %p73, %p74
      %p76 = scmp.ne.s32.totalorder %s68, %s71
      %p77 = scmp.eq.s32.totalorder %s9, 0
      %p78 = por %p76, %p77
      %p79 = scmp.ne.s32.totalorder %s68, %s71
      %p80 = scmp.eq.s32.totalorder %s14, 5
      %p81 = por %p79, %p80
      %p82 = scmp.ne.s32.totalorder %s71, %s72
      %p83 = scmp.eq.s32.totalorder %s14, 0
      %p84 = por %p82, %p83
      %p85 = scmp.ne.s32.totalorder %s71, %s72
      %p86 = scmp.eq.s32.totalorder %s15, 5
      %p87 = por %p85, %p86
      %p89 = scmp.ne.s32.totalorder %s72, %s88
      %p90 = scmp.eq.s32.totalorder %s15, 0
      %p91 = por %p89, %p90
      %s92 = ssub.s32 %s17, %s31
      %p93 = scmp.eq.s32.totalorder %s92, 0
      %s95 = sadd.s32 %s94, 1
      %s96 = scalar_select %p93, %s94, %s95
      %p99 = pneg %p93
      %p100 = scmp.eq.s32.totalorder %s9, 5
      %p101 = por %p99, %p100
      %p102 = scmp.ne.s32.totalorder %s94, %s97
      %p103 = scmp.eq.s32.totalorder %s9, 0
      %p104 = por %p102, %p103
      %p105 = scmp.ne.s32.totalorder %s94, %s97
      %p106 = scmp.eq.s32.totalorder %s14, 5
      %p107 = por %p105, %p106
      %p108 = scmp.ne.s32.totalorder %s97, %s98
      %p109 = scmp.eq.s32.totalorder %s14, 0
      %p110 = por %p108, %p109
      %p111 = scmp.ne.s32.totalorder %s97, %s98
      %p112 = scmp.eq.s32.totalorder %s15, 5
      %p113 = por %p111, %p112
      %p115 = scmp.ne.s32.totalorder %s98, %s114
      %p116 = scmp.eq.s32.totalorder %s15, 0
      %p117 = por %p115, %p116
      %s118 = ssub.s32 %s16, %s35
      %s119 = ssub.s32 %s17, %s31
      %s120 = sor.u32 %s118, %s119
      %p121 = scmp.eq.s32.totalorder %s120, 0
      %s123 = sadd.s32 %s122, 1
      %s124 = scalar_select %p121, %s122, %s123
      %p127 = pneg %p121
      %p128 = scmp.eq.s32.totalorder %s9, 5
      %p129 = por %p127, %p128
      %p130 = scmp.ne.s32.totalorder %s122, %s125
      %p131 = scmp.eq.s32.totalorder %s9, 0
      %p132 = por %p130, %p131
      %p133 = scmp.ne.s32.totalorder %s122, %s125
      %p134 = scmp.eq.s32.totalorder %s14, 5
      %p135 = por %p133, %p134
      %p136 = scmp.ne.s32.totalorder %s125, %s126
      %p137 = scmp.eq.s32.totalorder %s14, 0
      %p138 = por %p136, %p137
      %p139 = scmp.ne.s32.totalorder %s125, %s126
      %p140 = scmp.eq.s32.totalorder %s15, 5
      %p141 = por %p139, %p140
      %p143 = scmp.ne.s32.totalorder %s126, %s142
      %p144 = scmp.eq.s32.totalorder %s15, 0
      %p145 = por %p143, %p144
      %p146 = scmp.le.s32.totalorder 1, %s9
      %p147 = scmp.lt.s32.totalorder %s9, 7
      %p148 = pnand %p146, %p147
      %p149 = pneg %p148
      // Predicated region
      $region9: #{video_features_forward.71} parent=5 // pred_check
        _
      $region10: #{video_features_forward.71} parent=5 // pred_check_branch
        %151 = sbr.rel (%p148) target = $region12
      $region11: #{video_features_forward.71} parent=5 // pred_region
        %s152 = ssub.s32 %s9, 1
        // Predicated region
        $region13: #{video_features_forward.71} parent=11 // pred_check
          %p153 = pneg %p110
        $region14: #{video_features_forward.71} parent=11 // pred_check_branch
          %155 = sbr.rel (%p153) target = $region16
        $region15: #{video_features_forward.71} parent=11 // pred_region
          %p156 = scmp.lt.s32.totalorder %s20, 0
          %s157 = scalar_select %p156, %s20, 0
          %s158 = scalar_lea.vmem %s2, %s157
        $region16: #{video_features_forward.71} parent=11 // pred_fallthru
          _
      $region12: #{video_features_forward.71} parent=5 // pred_fallthru
        _
      %p159 = scmp.lt.s32.totalorder %s9, 6
      // Predicated region
      $region17: #{video_features_forward.71} parent=5 // pred_check
        %p160 = pneg %p159
      $region18: #{video_features_forward.71} parent=5 // pred_check_branch
        %162 = sbr.rel (%p160) target = $region20
      $region19: #{video_features_forward.71} parent=5 // pred_region
        // Predicated region
        $region21: #{video_features_forward.71} parent=19 // pred_check
          %p163 = pneg %p50
        $region22: #{video_features_forward.71} parent=19 // pred_check_branch
          %165 = sbr.rel (%p163) target = $region24
        $region23: #{video_features_forward.71} parent=19 // pred_region
          %s166 = sand.u32 %s40, 1
          %s167 = sand.u32 %s40, 1
          %s168 = smul.addr %s167, 384
          %s169 = scalar_lea.vmem [#allocation3], %s168
          %s170 = smul.u32 32, %s16
          %s171 = smul.u32 3, %s18
          %s172 = smul.addr %s170, 9
          %s173 = sadd.s32 %s171, %s172
          %s174 = smul.addr %s173, 4
          %s175 = scalar_lea.vmem %s0, %s174
          // Predicated region
          $region25: #{video_features_forward.71} parent=23 // pred_check
            _
          $region26: #{video_features_forward.71} parent=23 // pred_check_branch
            %177 = sbr.rel (0) target = $region28
          $region27: #{video_features_forward.71} parent=23 // pred_region
            // Predicated region
            $region29: #{video_features_forward.71} parent=27 // pred_check
              _
            $region30: #{video_features_forward.71} parent=27 // pred_check_branch
              %179 = sbr.rel (0) target = $region32
            $region31: #{video_features_forward.71} parent=27 // pred_region
              %s180 = scalar_lea.vmem %s175, 8
              %s181 = scalar_lea.vmem %s169, 8 [#allocation3]
              loop: start=0, step=1, limit=1
              $region33: #{video_features_forward.71} parent=31 // loop_pre_header
                _
              $region34: #{video_features_forward.71} parent=31 // loop_header
                %s183 = sphi 0, %s187
                %p184 = scmp.ge.s32.totalorder %s183, 1
                %s188 = sphi %s175, %s175
                %s189 = sphi %s169, %s169
              $region35: #{video_features_forward.71} parent=31 // loop_header_branch
                %186 = sbr.rel (%p184) target = $region39
              $region36: #{video_features_forward.71} parent=31 // loop_body
                %v190 = vld [vmem:[%s188] sm:$0xff]
                %191 = vst [vmem:[%s189] sm:$0xff] %v190
                %v192 = vld [vmem:[%s188 + $0x24] sm:$0xff]
                %193 = vst [vmem:[%s189 + $0xc] sm:$0xff] %v192
                %v194 = vld [vmem:[%s188 + $0x48] sm:$0xff]
                %195 = vst [vmem:[%s189 + $0x18] sm:$0xff] %v194
                %v196 = vld [vmem:[%s188 + $0x6c] sm:$0xff]
                %197 = vst [vmem:[%s189 + $0x24] sm:$0xff] %v196
                %v198 = vld [vmem:[%s188 + $0x90] sm:$0xff]
                %199 = vst [vmem:[%s189 + $0x30] sm:$0xff] %v198
                %v200 = vld [vmem:[%s188 + $0xb4] sm:$0xff]
                %201 = vst [vmem:[%s189 + $0x3c] sm:$0xff] %v200
                %v202 = vld [vmem:[%s188 + $0xd8] sm:$0xff]
                %203 = vst [vmem:[%s189 + $0x48] sm:$0xff] %v202
                %v204 = vld [vmem:[%s188 + $0xfc] sm:$0xff]
                %205 = vst [vmem:[%s189 + $0x54] sm:$0xff] %v204
                %v206 = vld [vmem:[%s188 + $0x120] sm:$0xff]
                %207 = vst [vmem:[%s189 + $0x60] sm:$0xff] %v206
                %v208 = vld [vmem:[%s188 + $0x144] sm:$0xff]
                %209 = vst [vmem:[%s189 + $0x6c] sm:$0xff] %v208
                %v210 = vld [vmem:[%s188 + $0x168] sm:$0xff]
                %211 = vst [vmem:[%s189 + $0x78] sm:$0xff] %v210
                %v212 = vld [vmem:[%s188 + $0x18c] sm:$0xff]
                %213 = vst [vmem:[%s189 + $0x84] sm:$0xff] %v212
                %v214 = vld [vmem:[%s188 + $0x1b0] sm:$0xff]
                %215 = vst [vmem:[%s189 + $0x90] sm:$0xff] %v214
                %v216 = vld [vmem:[%s188 + $0x1d4] sm:$0xff]
                %217 = vst [vmem:[%s189 + $0x9c] sm:$0xff] %v216
                %v218 = vld [vmem:[%s188 + $0x1f8] sm:$0xff]
                %219 = vst [vmem:[%s189 + $0xa8] sm:$0xff] %v218
                %v220 = vld [vmem:[%s188 + $0x21c] sm:$0xff]
                %221 = vst [vmem:[%s189 + $0xb4] sm:$0xff] %v220
                %v222 = vld [vmem:[%s188 + $0x240] sm:$0xff]
                %223 = vst [vmem:[%s189 + $0xc0] sm:$0xff] %v222
                %v224 = vld [vmem:[%s188 + $0x264] sm:$0xff]
                %225 = vst [vmem:[%s189 + $0xcc] sm:$0xff] %v224
                %v226 = vld [vmem:[%s188 + $0x288] sm:$0xff]
                %227 = vst [vmem:[%s189 + $0xd8] sm:$0xff] %v226
                %v228 = vld [vmem:[%s188 + $0x2ac] sm:$0xff]
                %229 = vst [vmem:[%s189 + $0xe4] sm:$0xff] %v228
                %v230 = vld [vmem:[%s188 + $0x2d0] sm:$0xff]
                %231 = vst [vmem:[%s189 + $0xf0] sm:$0xff] %v230
                %v232 = vld [vmem:[%s188 + $0x2f4] sm:$0xff]
                %233 = vst [vmem:[%s189 + $0xfc] sm:$0xff] %v232
                %v234 = vld [vmem:[%s188 + $0x318] sm:$0xff]
                %235 = vst [vmem:[%s189 + $0x108] sm:$0xff] %v234
                %v236 = vld [vmem:[%s188 + $0x33c] sm:$0xff]
                %237 = vst [vmem:[%s189 + $0x114] sm:$0xff] %v236
                %v238 = vld [vmem:[%s188 + $0x360] sm:$0xff]
                %239 = vst [vmem:[%s189 + $0x120] sm:$0xff] %v238
                %v240 = vld [vmem:[%s188 + $0x384] sm:$0xff]
                %241 = vst [vmem:[%s189 + $0x12c] sm:$0xff] %v240
                %v242 = vld [vmem:[%s188 + $0x3a8] sm:$0xff]
                %243 = vst [vmem:[%s189 + $0x138] sm:$0xff] %v242
                %v244 = vld [vmem:[%s188 + $0x3cc] sm:$0xff]
                %245 = vst [vmem:[%s189 + $0x144] sm:$0xff] %v244
                %v246 = vld [vmem:[%s188 + $0x3f0] sm:$0xff]
                %247 = vst [vmem:[%s189 + $0x150] sm:$0xff] %v246
                %v248 = vld [vmem:[%s188 + $0x414] sm:$0xff]
                %249 = vst [vmem:[%s189 + $0x15c] sm:$0xff] %v248
                %v250 = vld [vmem:[%s188 + $0x438] sm:$0xff]
                %251 = vst [vmem:[%s189 + $0x168] sm:$0xff] %v250
                %v252 = vld [vmem:[%s188 + $0x45c] sm:$0xff]
                %253 = vst [vmem:[%s189 + $0x174] sm:$0xff] %v252
              $region37: #{video_features_forward.71} parent=31 // loop_footer
                %s187 = sadd.s32 1, %s183
              $region38: #{video_features_forward.71} parent=31 // loop_footer_branch
                %182 = sbr.rel target = $region34
              $region39: #{video_features_forward.71} parent=31 // loop_exit
                _
              loop: start=0, step=1, limit=1
              $region40: #{video_features_forward.71} parent=31 // loop_pre_header
                _
              $region41: #{video_features_forward.71} parent=31 // loop_header
                %s256 = sphi 0, %s260
                %p257 = scmp.ge.s32.totalorder %s256, 1
                %s261 = sphi %s180, %s180
                %s262 = sphi %s181, %s181
              $region42: #{video_features_forward.71} parent=31 // loop_header_branch
                %259 = sbr.rel (%p257) target = $region46
              $region43: #{video_features_forward.71} parent=31 // loop_body
                %v263 = vld [vmem:[%s261] sm:$0xf]
                %264 = vst [vmem:[%s262] sm:$0xf] %v263
                %v265 = vld [vmem:[%s261 + $0x24] sm:$0xf]
                %266 = vst [vmem:[%s262 + $0xc] sm:$0xf] %v265
                %v267 = vld [vmem:[%s261 + $0x48] sm:$0xf]
                %268 = vst [vmem:[%s262 + $0x18] sm:$0xf] %v267
                %v269 = vld [vmem:[%s261 + $0x6c] sm:$0xf]
                %270 = vst [vmem:[%s262 + $0x24] sm:$0xf] %v269
                %v271 = vld [vmem:[%s261 + $0x90] sm:$0xf]
                %272 = vst [vmem:[%s262 + $0x30] sm:$0xf] %v271
                %v273 = vld [vmem:[%s261 + $0xb4] sm:$0xf]
                %274 = vst [vmem:[%s262 + $0x3c] sm:$0xf] %v273
                %v275 = vld [vmem:[%s261 + $0xd8] sm:$0xf]
                %276 = vst [vmem:[%s262 + $0x48] sm:$0xf] %v275
                %v277 = vld [vmem:[%s261 + $0xfc] sm:$0xf]
                %278 = vst [vmem:[%s262 + $0x54] sm:$0xf] %v277
                %v279 = vld [vmem:[%s261 + $0x120] sm:$0xf]
                %280 = vst [vmem:[%s262 + $0x60] sm:$0xf] %v279
                %v281 = vld [vmem:[%s261 + $0x144] sm:$0xf]
                %282 = vst [vmem:[%s262 + $0x6c] sm:$0xf] %v281
                %v283 = vld [vmem:[%s261 + $0x168] sm:$0xf]
                %284 = vst [vmem:[%s262 + $0x78] sm:$0xf] %v283
                %v285 = vld [vmem:[%s261 + $0x18c] sm:$0xf]
                %286 = vst [vmem:[%s262 + $0x84] sm:$0xf] %v285
                %v287 = vld [vmem:[%s261 + $0x1b0] sm:$0xf]
                %288 = vst [vmem:[%s262 + $0x90] sm:$0xf] %v287
                %v289 = vld [vmem:[%s261 + $0x1d4] sm:$0xf]
                %290 = vst [vmem:[%s262 + $0x9c] sm:$0xf] %v289
                %v291 = vld [vmem:[%s261 + $0x1f8] sm:$0xf]
                %292 = vst [vmem:[%s262 + $0xa8] sm:$0xf] %v291
                %v293 = vld [vmem:[%s261 + $0x21c] sm:$0xf]
                %294 = vst [vmem:[%s262 + $0xb4] sm:$0xf] %v293
                %v295 = vld [vmem:[%s261 + $0x240] sm:$0xf]
                %296 = vst [vmem:[%s262 + $0xc0] sm:$0xf] %v295
                %v297 = vld [vmem:[%s261 + $0x264] sm:$0xf]
                %298 = vst [vmem:[%s262 + $0xcc] sm:$0xf] %v297
                %v299 = vld [vmem:[%s261 + $0x288] sm:$0xf]
                %300 = vst [vmem:[%s262 + $0xd8] sm:$0xf] %v299
                %v301 = vld [vmem:[%s261 + $0x2ac] sm:$0xf]
                %302 = vst [vmem:[%s262 + $0xe4] sm:$0xf] %v301
                %v303 = vld [vmem:[%s261 + $0x2d0] sm:$0xf]
                %304 = vst [vmem:[%s262 + $0xf0] sm:$0xf] %v303
                %v305 = vld [vmem:[%s261 + $0x2f4] sm:$0xf]
                %306 = vst [vmem:[%s262 + $0xfc] sm:$0xf] %v305
                %v307 = vld [vmem:[%s261 + $0x318] sm:$0xf]
                %308 = vst [vmem:[%s262 + $0x108] sm:$0xf] %v307
                %v309 = vld [vmem:[%s261 + $0x33c] sm:$0xf]
                %310 = vst [vmem:[%s262 + $0x114] sm:$0xf] %v309
                %v311 = vld [vmem:[%s261 + $0x360] sm:$0xf]
                %312 = vst [vmem:[%s262 + $0x120] sm:$0xf] %v311
                %v313 = vld [vmem:[%s261 + $0x384] sm:$0xf]
                %314 = vst [vmem:[%s262 + $0x12c] sm:$0xf] %v313
                %v315 = vld [vmem:[%s261 + $0x3a8] sm:$0xf]
                %316 = vst [vmem:[%s262 + $0x138] sm:$0xf] %v315
                %v317 = vld [vmem:[%s261 + $0x3cc] sm:$0xf]
                %318 = vst [vmem:[%s262 + $0x144] sm:$0xf] %v317
                %v319 = vld [vmem:[%s261 + $0x3f0] sm:$0xf]
                %320 = vst [vmem:[%s262 + $0x150] sm:$0xf] %v319
                %v321 = vld [vmem:[%s261 + $0x414] sm:$0xf]
                %322 = vst [vmem:[%s262 + $0x15c] sm:$0xf] %v321
                %v323 = vld [vmem:[%s261 + $0x438] sm:$0xf]
                %324 = vst [vmem:[%s262 + $0x168] sm:$0xf] %v323
                %v325 = vld [vmem:[%s261 + $0x45c] sm:$0xf]
                %326 = vst [vmem:[%s262 + $0x174] sm:$0xf] %v325
              $region44: #{video_features_forward.71} parent=31 // loop_footer
                %s260 = sadd.s32 1, %s256
              $region45: #{video_features_forward.71} parent=31 // loop_footer_branch
                %255 = sbr.rel target = $region41
              $region46: #{video_features_forward.71} parent=31 // loop_exit
                _
            $region32: #{video_features_forward.71} parent=27 // pred_fallthru
              _
          $region28: #{video_features_forward.71} parent=23 // pred_fallthru
            _
          %327 = vnop
        $region24: #{video_features_forward.71} parent=19 // pred_fallthru
          _
        // Predicated region
        $region47: #{video_features_forward.71} parent=19 // pred_check
          %p328 = pneg %p78
        $region48: #{video_features_forward.71} parent=19 // pred_check_branch
          %330 = sbr.rel (%p328) target = $region50
        $region49: #{video_features_forward.71} parent=19 // pred_region
          %s331 = smul.u32 48, %s18
          %p332 = scmp.lt.s32.totalorder %s331, 143
          %s333 = scalar_select %p332, %s331, 143
          %p334 = scmp.lt.s32.totalorder %s17, 0
          %s335 = scalar_select %p334, %s17, 0
          %s336 = sadd.s32 %s335, %s333
          %s337 = smul.addr %s336, 4
          %s338 = scalar_lea.vmem %s1, %s337
          %s339 = smul.u32 48, %s18
        $region50: #{video_features_forward.71} parent=19 // pred_fallthru
          _
      $region20: #{video_features_forward.71} parent=5 // pred_fallthru
        _
      %p340 = scmp.le.s32.totalorder 1, %s9
      %p341 = scmp.lt.s32.totalorder %s9, 7
      %p342 = pnand %p340, %p341
      %p343 = pneg %p342
      // Predicated region
      $region51: #{video_features_forward.71} parent=5 // pred_check
        _
      $region52: #{video_features_forward.71} parent=5 // pred_check_branch
        %345 = sbr.rel (%p342) target = $region54
      $region53: #{video_features_forward.71} parent=5 // pred_region
        %s346 = ssub.s32 %s9, 1
        %s347 = sand.u32 %s43, 1
        %s348 = sand.u32 %s43, 1
        %s349 = smul.addr %s348, 384
        %s350 = scalar_lea.vmem [#allocation3], %s349
        // Predicated region
        $region55: #{video_features_forward.71} parent=53 // pred_check
          %p351 = pneg %p56
        $region56: #{video_features_forward.71} parent=53 // pred_check_branch
          %353 = sbr.rel (%p351) target = $region58
        $region57: #{video_features_forward.71} parent=53 // pred_region
          _
        $region58: #{video_features_forward.71} parent=53 // pred_fallthru
          _
        %s354 = sand.u32 %s43, 1
        %s355 = sand.u32 %s43, 1
        %s356 = smul.addr %s355, 384
        %s357 = scalar_lea.vmem [#allocation3], %s356
        %p358 = pneg %p56
        %p359 = pneg %p53
        %s360 = smul.u32 48, %s21
        %p361 = scmp.lt.s32.totalorder %s360, 143
        %s362 = scalar_select %p361, %s360, 143
        %p363 = scmp.lt.s32.totalorder %s20, 0
        %s364 = scalar_select %p363, %s20, 0
        %s365 = sadd.s32 %s364, %s362
        %s366 = smul.addr %s365, 4
        %s367 = scalar_lea.vmem %s1, %s366
        %p368 = pneg %p84
        %p369 = pneg %p81
        %p370 = scmp.lt.s32.totalorder %s20, 0
        %s371 = scalar_select %p370, %s20, 0
        %s372 = scalar_lea.vmem %s2, %s371
        %p373 = pneg %p110
        %p374 = pneg %p107
        %p375 = pneg %p138
        %p376 = pneg %p135
        %s377 = smul.u32 32, %s19
        %p378 = scmp.lt.s32.totalorder %s377, 63
        %s379 = scalar_select %p378, %s377, 63
        %p380 = scmp.lt.s32.totalorder %s20, 0
        %s381 = scalar_select %p380, %s20, 0
        %s382 = sadd.s32 %s381, %s379
        %s383 = smul.addr %s382, 8
        %s384 = scalar_lea.vmem %s3, %s383
        %s385 = smul.u32 32, %s19
        %s386 = smul.u32 3, %s21
        %s387 = smul.u32 48, %s21
        %p388 = scmp.lt.s32.totalorder %s387, 143
        %s389 = scalar_select %p388, %s387, 143
        %p390 = scmp.lt.s32.totalorder %s20, 0
        %s391 = scalar_select %p390, %s20, 0
        %s392 = sadd.s32 %s391, %s389
        %s393 = smul.addr %s392, 4
        %s394 = scalar_lea.vmem %s1, %s393
        %s395 = smul.u32 48, %s21
        %p396 = scmp.lt.s32.totalorder %s20, 0
        %s397 = scalar_select %p396, %s20, 0
        %s398 = scalar_lea.vmem %s2, %s397
        %s399 = smul.u32 32, %s19
        %p400 = scmp.lt.s32.totalorder %s399, 63
        %s401 = scalar_select %p400, %s399, 63
        %p402 = scmp.lt.s32.totalorder %s20, 0
        %s403 = scalar_select %p402, %s20, 0
        %s404 = sadd.s32 %s403, %s401
        %s405 = smul.addr %s404, 8
        %s406 = scalar_lea.vmem %s3, %s405
        %s407 = smul.u32 32, %s19
        %p409 = scmp.eq.s32.totalorder %s21, 0
        // Predicated region
        $region59: #{video_features_forward.71} parent=53 // pred_check
          %p410 = pneg %p409
        $region60: #{video_features_forward.71} parent=53 // pred_check_branch
          %412 = sbr.rel (%p410) target = $region62
        $region61: #{video_features_forward.71} parent=53 // pred_region
          %413 = vst [vmem:[#allocation2] sm:$0xff] 0.0
          %414 = vst [vmem:[#allocation2 + $0x8] sm:$0xff] 0.0
          %415 = vst [vmem:[#allocation2 + $0x10] sm:$0xff] 0.0
          %416 = vst [vmem:[#allocation2 + $0x18] sm:$0xff] 0.0
          %417 = vst [vmem:[#allocation2 + $0x20] sm:$0xff] 0.0
          %418 = vst [vmem:[#allocation2 + $0x28] sm:$0xff] 0.0
          %419 = vst [vmem:[#allocation2 + $0x30] sm:$0xff] 0.0
          %420 = vst [vmem:[#allocation2 + $0x38] sm:$0xff] 0.0
          %421 = vst [vmem:[#allocation2 + $0x40] sm:$0xff] 0.0
          %422 = vst [vmem:[#allocation2 + $0x48] sm:$0xff] 0.0
          %423 = vst [vmem:[#allocation2 + $0x50] sm:$0xff] 0.0
          %424 = vst [vmem:[#allocation2 + $0x58] sm:$0xff] 0.0
          %425 = vst [vmem:[#allocation2 + $0x60] sm:$0xff] 0.0
          %426 = vst [vmem:[#allocation2 + $0x68] sm:$0xff] 0.0
          %427 = vst [vmem:[#allocation2 + $0x70] sm:$0xff] 0.0
          %428 = vst [vmem:[#allocation2 + $0x78] sm:$0xff] 0.0
          %429 = vst [vmem:[#allocation2 + $0x80] sm:$0xff] 0.0
          %430 = vst [vmem:[#allocation2 + $0x88] sm:$0xff] 0.0
          %431 = vst [vmem:[#allocation2 + $0x90] sm:$0xff] 0.0
          %432 = vst [vmem:[#allocation2 + $0x98] sm:$0xff] 0.0
          %433 = vst [vmem:[#allocation2 + $0xa0] sm:$0xff] 0.0
          %434 = vst [vmem:[#allocation2 + $0xa8] sm:$0xff] 0.0
          %435 = vst [vmem:[#allocation2 + $0xb0] sm:$0xff] 0.0
          %436 = vst [vmem:[#allocation2 + $0xb8] sm:$0xff] 0.0
          %437 = vst [vmem:[#allocation2 + $0xc0] sm:$0xff] 0.0
          %438 = vst [vmem:[#allocation2 + $0xc8] sm:$0xff] 0.0
          %439 = vst [vmem:[#allocation2 + $0xd0] sm:$0xff] 0.0
          %440 = vst [vmem:[#allocation2 + $0xd8] sm:$0xff] 0.0
          %441 = vst [vmem:[#allocation2 + $0xe0] sm:$0xff] 0.0
          %442 = vst [vmem:[#allocation2 + $0xe8] sm:$0xff] 0.0
          %443 = vst [vmem:[#allocation2 + $0xf0] sm:$0xff] 0.0
          %444 = vst [vmem:[#allocation2 + $0xf8] sm:$0xff] 0.0
        $region62: #{video_features_forward.71} parent=53 // pred_fallthru
          _
        %v445 = vld [vmem:[#allocation2] sm:$0xff]
        %v446 = vld [vmem:[#allocation2 + $0x8] sm:$0xff]
        %v447 = vld [vmem:[#allocation2 + $0x10] sm:$0xff]
        %v448 = vld [vmem:[#allocation2 + $0x18] sm:$0xff]
        %v449 = vld [vmem:[#allocation2 + $0x20] sm:$0xff]
        %v450 = vld [vmem:[#allocation2 + $0x28] sm:$0xff]
        %v451 = vld [vmem:[#allocation2 + $0x30] sm:$0xff]
        %v452 = vld [vmem:[#allocation2 + $0x38] sm:$0xff]
        %v453 = vld [vmem:[#allocation2 + $0x40] sm:$0xff]
        %v454 = vld [vmem:[#allocation2 + $0x48] sm:$0xff]
        %v455 = vld [vmem:[#allocation2 + $0x50] sm:$0xff]
        %v456 = vld [vmem:[#allocation2 + $0x58] sm:$0xff]
        %v457 = vld [vmem:[#allocation2 + $0x60] sm:$0xff]
        %v458 = vld [vmem:[#allocation2 + $0x68] sm:$0xff]
        %v459 = vld [vmem:[#allocation2 + $0x70] sm:$0xff]
        %v460 = vld [vmem:[#allocation2 + $0x78] sm:$0xff]
        %v461 = vld [vmem:[#allocation2 + $0x80] sm:$0xff]
        %v462 = vld [vmem:[#allocation2 + $0x88] sm:$0xff]
        %v463 = vld [vmem:[#allocation2 + $0x90] sm:$0xff]
        %v464 = vld [vmem:[#allocation2 + $0x98] sm:$0xff]
        %v465 = vld [vmem:[#allocation2 + $0xa0] sm:$0xff]
        %v466 = vld [vmem:[#allocation2 + $0xa8] sm:$0xff]
        %v467 = vld [vmem:[#allocation2 + $0xb0] sm:$0xff]
        %v468 = vld [vmem:[#allocation2 + $0xb8] sm:$0xff]
        %v469 = vld [vmem:[#allocation2 + $0xc0] sm:$0xff]
        %v470 = vld [vmem:[#allocation2 + $0xc8] sm:$0xff]
        %v471 = vld [vmem:[#allocation2 + $0xd0] sm:$0xff]
        %v472 = vld [vmem:[#allocation2 + $0xd8] sm:$0xff]
        %v473 = vld [vmem:[#allocation2 + $0xe0] sm:$0xff]
        %v474 = vld [vmem:[#allocation2 + $0xe8] sm:$0xff]
        %v475 = vld [vmem:[#allocation2 + $0xf0] sm:$0xff]
        %v476 = vld [vmem:[#allocation2 + $0xf8] sm:$0xff]
        %v477 = vld [vmem:[%s350] sm:$0xff]
        %v478 = vld [vmem:[%s350 + $0x8] sm:$0xf]
        %v479 = vld [vmem:[%s350 + $0xc] sm:$0xff]
        %v480 = vld [vmem:[%s350 + $0x14] sm:$0xf]
        %v481 = vld [vmem:[%s350 + $0x18] sm:$0xff]
        %v482 = vld [vmem:[%s350 + $0x20] sm:$0xf]
        %v483 = vld [vmem:[%s350 + $0x24] sm:$0xff]
        %v484 = vld [vmem:[%s350 + $0x2c] sm:$0xf]
        %v485 = vld [vmem:[%s350 + $0x30] sm:$0xff]
        %v486 = vld [vmem:[%s350 + $0x38] sm:$0xf]
        %v487 = vld [vmem:[%s350 + $0x3c] sm:$0xff]
        %v488 = vld [vmem:[%s350 + $0x44] sm:$0xf]
        %v489 = vld [vmem:[%s350 + $0x48] sm:$0xff]
        %v490 = vld [vmem:[%s350 + $0x50] sm:$0xf]
        %v491 = vld [vmem:[%s350 + $0x54] sm:$0xff]
        %v492 = vld [vmem:[%s350 + $0x5c] sm:$0xf]
        %v493 = vld [vmem:[%s350 + $0x60] sm:$0xff]
        %v494 = vld [vmem:[%s350 + $0x68] sm:$0xf]
        %v495 = vld [vmem:[%s350 + $0x6c] sm:$0xff]
        %v496 = vld [vmem:[%s350 + $0x74] sm:$0xf]
        %v497 = vld [vmem:[%s350 + $0x78] sm:$0xff]
        %v498 = vld [vmem:[%s350 + $0x80] sm:$0xf]
        %v499 = vld [vmem:[%s350 + $0x84] sm:$0xff]
        %v500 = vld [vmem:[%s350 + $0x8c] sm:$0xf]
        %v501 = vld [vmem:[%s350 + $0x90] sm:$0xff]
        %v502 = vld [vmem:[%s350 + $0x98] sm:$0xf]
        %v503 = vld [vmem:[%s350 + $0x9c] sm:$0xff]
        %v504 = vld [vmem:[%s350 + $0xa4] sm:$0xf]
        %v505 = vld [vmem:[%s350 + $0xa8] sm:$0xff]
        %v506 = vld [vmem:[%s350 + $0xb0] sm:$0xf]
        %v507 = vld [vmem:[%s350 + $0xb4] sm:$0xff]
        %v508 = vld [vmem:[%s350 + $0xbc] sm:$0xf]
        %v509 = vld [vmem:[%s350 + $0xc0] sm:$0xff]
        %v510 = vld [vmem:[%s350 + $0xc8] sm:$0xf]
        %v511 = vld [vmem:[%s350 + $0xcc] sm:$0xff]
        %v512 = vld [vmem:[%s350 + $0xd4] sm:$0xf]
        %v513 = vld [vmem:[%s350 + $0xd8] sm:$0xff]
        %v514 = vld [vmem:[%s350 + $0xe0] sm:$0xf]
        %v515 = vld [vmem:[%s350 + $0xe4] sm:$0xff]
        %v516 = vld [vmem:[%s350 + $0xec] sm:$0xf]
        %v517 = vld [vmem:[%s350 + $0xf0] sm:$0xff]
        %v518 = vld [vmem:[%s350 + $0xf8] sm:$0xf]
        %v519 = vld [vmem:[%s350 + $0xfc] sm:$0xff]
        %v520 = vld [vmem:[%s350 + $0x104] sm:$0xf]
        %v521 = vld [vmem:[%s350 + $0x108] sm:$0xff]
        %v522 = vld [vmem:[%s350 + $0x110] sm:$0xf]
        %v523 = vld [vmem:[%s350 + $0x114] sm:$0xff]
        %v524 = vld [vmem:[%s350 + $0x11c] sm:$0xf]
        %v525 = vld [vmem:[%s350 + $0x120] sm:$0xff]
        %v526 = vld [vmem:[%s350 + $0x128] sm:$0xf]
        %v527 = vld [vmem:[%s350 + $0x12c] sm:$0xff]
        %v528 = vld [vmem:[%s350 + $0x134] sm:$0xf]
        %v529 = vld [vmem:[%s350 + $0x138] sm:$0xff]
        %v530 = vld [vmem:[%s350 + $0x140] sm:$0xf]
        %v531 = vld [vmem:[%s350 + $0x144] sm:$0xff]
        %v532 = vld [vmem:[%s350 + $0x14c] sm:$0xf]
        %v533 = vld [vmem:[%s350 + $0x150] sm:$0xff]
        %v534 = vld [vmem:[%s350 + $0x158] sm:$0xf]
        %v535 = vld [vmem:[%s350 + $0x15c] sm:$0xff]
        %v536 = vld [vmem:[%s350 + $0x164] sm:$0xf]
        %v537 = vld [vmem:[%s350 + $0x168] sm:$0xff]
        %v538 = vld [vmem:[%s350 + $0x170] sm:$0xf]
        %v539 = vld [vmem:[%s350 + $0x174] sm:$0xff]
        %v540 = vld [vmem:[%s350 + $0x17c] sm:$0xf]
        %v541 = vld [vmem:[%s394] sm:$0xf]
        %v542 = vld [vmem:[%s394 + $0x4] sm:$0xf]
        %v543 = vld [vmem:[%s394 + $0x8] sm:$0xf]
        %v544 = vld [vmem:[%s394 + $0xc] sm:$0xf]
        %v545 = vld [vmem:[%s394 + $0x10] sm:$0xf]
        %v546 = vld [vmem:[%s394 + $0x14] sm:$0xf]
        %v547 = vld [vmem:[%s394 + $0x18] sm:$0xf]
        %v548 = vld [vmem:[%s394 + $0x1c] sm:$0xf]
        %v549 = vld [vmem:[%s394 + $0x20] sm:$0xf]
        %v550 = vld [vmem:[%s394 + $0x24] sm:$0xf]
        %v551 = vld [vmem:[%s394 + $0x28] sm:$0xf]
        %v552 = vld [vmem:[%s394 + $0x2c] sm:$0xf]
        %v553 = vld [vmem:[%s394 + $0x30] sm:$0xf]
        %v554 = vld [vmem:[%s394 + $0x34] sm:$0xf]
        %v555 = vld [vmem:[%s394 + $0x38] sm:$0xf]
        %v556 = vld [vmem:[%s394 + $0x3c] sm:$0xf]
        %v557 = vld [vmem:[%s394 + $0x40] sm:$0xf]
        %v558 = vld [vmem:[%s394 + $0x44] sm:$0xf]
        %v559 = vld [vmem:[%s394 + $0x48] sm:$0xf]
        %v560 = vld [vmem:[%s394 + $0x4c] sm:$0xf]
        %v561 = vld [vmem:[%s394 + $0x50] sm:$0xf]
        %v562 = vld [vmem:[%s394 + $0x54] sm:$0xf]
        %v563 = vld [vmem:[%s394 + $0x58] sm:$0xf]
        %v564 = vld [vmem:[%s394 + $0x5c] sm:$0xf]
        %v565 = vld [vmem:[%s394 + $0x60] sm:$0xf]
        %v566 = vld [vmem:[%s394 + $0x64] sm:$0xf]
        %v567 = vld [vmem:[%s394 + $0x68] sm:$0xf]
        %v568 = vld [vmem:[%s394 + $0x6c] sm:$0xf]
        %v569 = vld [vmem:[%s394 + $0x70] sm:$0xf]
        %v570 = vld [vmem:[%s394 + $0x74] sm:$0xf]
        %v571 = vld [vmem:[%s394 + $0x78] sm:$0xf]
        %v572 = vld [vmem:[%s394 + $0x7c] sm:$0xf]
        %v573 = vld [vmem:[%s394 + $0x80] sm:$0xf]
        %v574 = vld [vmem:[%s394 + $0x84] sm:$0xf]
        %v575 = vld [vmem:[%s394 + $0x88] sm:$0xf]
        %v576 = vld [vmem:[%s394 + $0x8c] sm:$0xf]
        %v577 = vld [vmem:[%s394 + $0x90] sm:$0xf]
        %v578 = vld [vmem:[%s394 + $0x94] sm:$0xf]
        %v579 = vld [vmem:[%s394 + $0x98] sm:$0xf]
        %v580 = vld [vmem:[%s394 + $0x9c] sm:$0xf]
        %v581 = vld [vmem:[%s394 + $0xa0] sm:$0xf]
        %v582 = vld [vmem:[%s394 + $0xa4] sm:$0xf]
        %v583 = vld [vmem:[%s394 + $0xa8] sm:$0xf]
        %v584 = vld [vmem:[%s394 + $0xac] sm:$0xf]
        %v585 = vld [vmem:[%s394 + $0xb0] sm:$0xf]
        %v586 = vld [vmem:[%s394 + $0xb4] sm:$0xf]
        %v587 = vld [vmem:[%s394 + $0xb8] sm:$0xf]
        %v588 = vld [vmem:[%s394 + $0xbc] sm:$0xf]
        %v653 = vunpack.c.l.b16 %v477
        %v654 = vunpack.c.h.b16 %v477
        %v655 = vunpack.c.l.b16 %v478
        %v656 = vunpack.c.l.b16 %v479
        %v657 = vunpack.c.h.b16 %v479
        %v658 = vunpack.c.l.b16 %v480
        %v659 = vunpack.c.l.b16 %v481
        %v660 = vunpack.c.h.b16 %v481
        %v661 = vunpack.c.l.b16 %v482
        %v662 = vunpack.c.l.b16 %v483
        %v663 = vunpack.c.h.b16 %v483
        %v664 = vunpack.c.l.b16 %v484
        %v665 = vunpack.c.l.b16 %v485
        %v666 = vunpack.c.h.b16 %v485
        %v667 = vunpack.c.l.b16 %v486
        %v668 = vunpack.c.l.b16 %v487
        %v669 = vunpack.c.h.b16 %v487
        %v670 = vunpack.c.l.b16 %v488
        %v671 = vunpack.c.l.b16 %v489
        %v672 = vunpack.c.h.b16 %v489
        %v673 = vunpack.c.l.b16 %v490
        %v674 = vunpack.c.l.b16 %v491
        %v675 = vunpack.c.h.b16 %v491
        %v676 = vunpack.c.l.b16 %v492
        %v677 = vunpack.c.l.b16 %v493
        %v678 = vunpack.c.h.b16 %v493
        %v679 = vunpack.c.l.b16 %v494
        %v680 = vunpack.c.l.b16 %v495
        %v681 = vunpack.c.h.b16 %v495
        %v682 = vunpack.c.l.b16 %v496
        %v683 = vunpack.c.l.b16 %v497
        %v684 = vunpack.c.h.b16 %v497
        %v685 = vunpack.c.l.b16 %v498
        %v686 = vunpack.c.l.b16 %v499
        %v687 = vunpack.c.h.b16 %v499
        %v688 = vunpack.c.l.b16 %v500
        %v689 = vunpack.c.l.b16 %v501
        %v690 = vunpack.c.h.b16 %v501
        %v691 = vunpack.c.l.b16 %v502
        %v692 = vunpack.c.l.b16 %v503
        %v693 = vunpack.c.h.b16 %v503
        %v694 = vunpack.c.l.b16 %v504
        %v695 = vunpack.c.l.b16 %v505
        %v696 = vunpack.c.h.b16 %v505
        %v697 = vunpack.c.l.b16 %v506
        %v698 = vunpack.c.l.b16 %v507
        %v699 = vunpack.c.h.b16 %v507
        %v700 = vunpack.c.l.b16 %v508
        %v701 = vunpack.c.l.b16 %v509
        %v702 = vunpack.c.h.b16 %v509
        %v703 = vunpack.c.l.b16 %v510
        %v704 = vunpack.c.l.b16 %v511
        %v705 = vunpack.c.h.b16 %v511
        %v706 = vunpack.c.l.b16 %v512
        %v707 = vunpack.c.l.b16 %v513
        %v708 = vunpack.c.h.b16 %v513
        %v709 = vunpack.c.l.b16 %v514
        %v710 = vunpack.c.l.b16 %v515
        %v711 = vunpack.c.h.b16 %v515
        %v712 = vunpack.c.l.b16 %v516
        %v713 = vunpack.c.l.b16 %v517
        %v714 = vunpack.c.h.b16 %v517
        %v715 = vunpack.c.l.b16 %v518
        %v716 = vunpack.c.l.b16 %v519
        %v717 = vunpack.c.h.b16 %v519
        %v718 = vunpack.c.l.b16 %v520
        %v719 = vunpack.c.l.b16 %v521
        %v720 = vunpack.c.h.b16 %v521
        %v721 = vunpack.c.l.b16 %v522
        %v722 = vunpack.c.l.b16 %v523
        %v723 = vunpack.c.h.b16 %v523
        %v724 = vunpack.c.l.b16 %v524
        %v725 = vunpack.c.l.b16 %v525
        %v726 = vunpack.c.h.b16 %v525
        %v727 = vunpack.c.l.b16 %v526
        %v728 = vunpack.c.l.b16 %v527
        %v729 = vunpack.c.h.b16 %v527
        %v730 = vunpack.c.l.b16 %v528
        %v731 = vunpack.c.l.b16 %v529
        %v732 = vunpack.c.h.b16 %v529
        %v733 = vunpack.c.l.b16 %v530
        %v734 = vunpack.c.l.b16 %v531
        %v735 = vunpack.c.h.b16 %v531
        %v736 = vunpack.c.l.b16 %v532
        %v737 = vunpack.c.l.b16 %v533
        %v738 = vunpack.c.h.b16 %v533
        %v739 = vunpack.c.l.b16 %v534
        %v740 = vunpack.c.l.b16 %v535
        %v741 = vunpack.c.h.b16 %v535
        %v742 = vunpack.c.l.b16 %v536
        %v743 = vunpack.c.l.b16 %v537
        %v744 = vunpack.c.h.b16 %v537
        %v745 = vunpack.c.l.b16 %v538
        %v746 = vunpack.c.l.b16 %v539
        %v747 = vunpack.c.h.b16 %v539
        %v748 = vunpack.c.l.b16 %v540
        %v749 = vpack.c.b16 %v656, %v653
        %v750 = vpack.c.b16 %v657, %v654
        %v751 = vpack.c.b16 %v658, %v655
        %v752 = vpack.c.b16 %v662, %v659
        %v753 = vpack.c.b16 %v663, %v660
        %v754 = vpack.c.b16 %v664, %v661
        %v755 = vpack.c.b16 %v668, %v665
        %v756 = vpack.c.b16 %v669, %v666
        %v757 = vpack.c.b16 %v670, %v667
        %v758 = vpack.c.b16 %v674, %v671
        %v759 = vpack.c.b16 %v675, %v672
        %v760 = vpack.c.b16 %v676, %v673
        %v761 = vpack.c.b16 %v680, %v677
        %v762 = vpack.c.b16 %v681, %v678
        %v763 = vpack.c.b16 %v682, %v679
        %v764 = vpack.c.b16 %v686, %v683
        %v765 = vpack.c.b16 %v687, %v684
        %v766 = vpack.c.b16 %v688, %v685
        %v767 = vpack.c.b16 %v692, %v689
        %v768 = vpack.c.b16 %v693, %v690
        %v769 = vpack.c.b16 %v694, %v691
        %v770 = vpack.c.b16 %v698, %v695
        %v771 = vpack.c.b16 %v699, %v696
        %v772 = vpack.c.b16 %v700, %v697
        %v773 = vpack.c.b16 %v704, %v701
        %v774 = vpack.c.b16 %v705, %v702
        %v775 = vpack.c.b16 %v706, %v703
        %v776 = vpack.c.b16 %v710, %v707
        %v777 = vpack.c.b16 %v711, %v708
        %v778 = vpack.c.b16 %v712, %v709
        %v779 = vpack.c.b16 %v716, %v713
        %v780 = vpack.c.b16 %v717, %v714
        %v781 = vpack.c.b16 %v718, %v715
        %v782 = vpack.c.b16 %v722, %v719
        %v783 = vpack.c.b16 %v723, %v720
        %v784 = vpack.c.b16 %v724, %v721
        %v785 = vpack.c.b16 %v728, %v725
        %v786 = vpack.c.b16 %v729, %v726
        %v787 = vpack.c.b16 %v730, %v727
        %v788 = vpack.c.b16 %v734, %v731
        %v789 = vpack.c.b16 %v735, %v732
        %v790 = vpack.c.b16 %v736, %v733
        %v791 = vpack.c.b16 %v740, %v737
        %v792 = vpack.c.b16 %v741, %v738
        %v793 = vpack.c.b16 %v742, %v739
        %v794 = vpack.c.b16 %v746, %v743
        %v795 = vpack.c.b16 %v747, %v744
        %v796 = vpack.c.b16 %v748, %v745
        %v893 = vunpack.c.l.b16 %v541
        %v894 = vunpack.c.l.b16 %v542
        %v895 = vunpack.c.l.b16 %v543
        %v896 = vunpack.c.l.b16 %v544
        %v897 = vunpack.c.l.b16 %v545
        %v898 = vunpack.c.l.b16 %v546
        %v899 = vunpack.c.l.b16 %v547
        %v900 = vunpack.c.l.b16 %v548
        %v901 = vunpack.c.l.b16 %v549
        %v902 = vunpack.c.l.b16 %v550
        %v903 = vunpack.c.l.b16 %v551
        %v904 = vunpack.c.l.b16 %v552
        %v905 = vunpack.c.l.b16 %v553
        %v906 = vunpack.c.l.b16 %v554
        %v907 = vunpack.c.l.b16 %v555
        %v908 = vunpack.c.l.b16 %v556
        %v909 = vunpack.c.l.b16 %v557
        %v910 = vunpack.c.l.b16 %v558
        %v911 = vunpack.c.l.b16 %v559
        %v912 = vunpack.c.l.b16 %v560
        %v913 = vunpack.c.l.b16 %v561
        %v914 = vunpack.c.l.b16 %v562
        %v915 = vunpack.c.l.b16 %v563
        %v916 = vunpack.c.l.b16 %v564
        %v917 = vunpack.c.l.b16 %v565
        %v918 = vunpack.c.l.b16 %v566
        %v919 = vunpack.c.l.b16 %v567
        %v920 = vunpack.c.l.b16 %v568
        %v921 = vunpack.c.l.b16 %v569
        %v922 = vunpack.c.l.b16 %v570
        %v923 = vunpack.c.l.b16 %v571
        %v924 = vunpack.c.l.b16 %v572
        %v925 = vunpack.c.l.b16 %v573
        %v926 = vunpack.c.l.b16 %v574
        %v927 = vunpack.c.l.b16 %v575
        %v928 = vunpack.c.l.b16 %v576
        %v929 = vunpack.c.l.b16 %v577
        %v930 = vunpack.c.l.b16 %v578
        %v931 = vunpack.c.l.b16 %v579
        %v932 = vunpack.c.l.b16 %v580
        %v933 = vunpack.c.l.b16 %v581
        %v934 = vunpack.c.l.b16 %v582
        %v935 = vunpack.c.l.b16 %v583
        %v936 = vunpack.c.l.b16 %v584
        %v937 = vunpack.c.l.b16 %v585
        %v938 = vunpack.c.l.b16 %v586
        %v939 = vunpack.c.l.b16 %v587
        %v940 = vunpack.c.l.b16 %v588
        %v941 = vpack.c.b16 %v894, %v893
        %v942 = vpack.c.b16 %v896, %v895
        %v943 = vpack.c.b16 %v898, %v897
        %v944 = vpack.c.b16 %v900, %v899
        %v945 = vpack.c.b16 %v902, %v901
        %v946 = vpack.c.b16 %v904, %v903
        %v947 = vpack.c.b16 %v906, %v905
        %v948 = vpack.c.b16 %v908, %v907
        %v949 = vpack.c.b16 %v910, %v909
        %v950 = vpack.c.b16 %v912, %v911
        %v951 = vpack.c.b16 %v914, %v913
        %v952 = vpack.c.b16 %v916, %v915
        %v953 = vpack.c.b16 %v918, %v917
        %v954 = vpack.c.b16 %v920, %v919
        %v955 = vpack.c.b16 %v922, %v921
        %v956 = vpack.c.b16 %v924, %v923
        %v957 = vpack.c.b16 %v926, %v925
        %v958 = vpack.c.b16 %v928, %v927
        %v959 = vpack.c.b16 %v930, %v929
        %v960 = vpack.c.b16 %v932, %v931
        %v961 = vpack.c.b16 %v934, %v933
        %v962 = vpack.c.b16 %v936, %v935
        %v963 = vpack.c.b16 %v938, %v937
        %v964 = vpack.c.b16 %v940, %v939
        %989 = vmatprep.subr.bf16.mxu0 0
        %990 = vmatpush1.bf16.msra.mxu0 %v941
        %991 = vmatprep.subr.bf16.mxu0 0
        %992 = vmatpush1.bf16.msra.mxu0 %v942
        %993 = vmatprep.subr.bf16.mxu0 0
        %994 = vmatpush1.bf16.msra.mxu0 %v943
        %995 = vmatprep.subr.bf16.mxu0 0
        %996 = vmatpush1.bf16.msra.mxu0 %v944
        %997 = vmatprep.subr.bf16.mxu0 0
        %998 = vmatpush1.bf16.msra.mxu0 %v945
        %999 = vmatprep.subr.bf16.mxu0 0
        %1000 = vmatpush1.bf16.msra.mxu0 %v946
        %1001 = vmatprep.subr.bf16.mxu0 0
        %1002 = vmatpush1.bf16.msra.mxu0 %v947
        %1003 = vmatprep.subr.bf16.mxu0 0
        %1004 = vmatpush1.bf16.msra.mxu0 %v948
        %1005 = vmatprep.subr.bf16.mxu0 0
        %1006 = vmatpush1.bf16.msra.mxu0 %v949
        %1007 = vmatprep.subr.bf16.mxu0 0
        %1008 = vmatpush1.bf16.msra.mxu0 %v950
        %1009 = vmatprep.subr.bf16.mxu0 0
        %1010 = vmatpush1.bf16.msra.mxu0 %v951
        %1011 = vmatprep.subr.bf16.mxu0 0
        %1012 = vmatpush1.bf16.msra.mxu0 %v952
        %1013 = vmatprep.subr.bf16.mxu0 0
        %1014 = vmatpush1.bf16.msra.mxu0 %v953
        %1015 = vmatprep.subr.bf16.mxu0 0
        %1016 = vmatpush1.bf16.msra.mxu0 %v954
        %1017 = vmatprep.subr.bf16.mxu0 0
        %1018 = vmatpush1.bf16.msra.mxu0 %v955
        %1019 = vmatprep.subr.bf16.mxu0 0
        %1020 = vmatpush1.bf16.msra.mxu0 %v956
        %1021 = vmatprep.mubr.bf16.mxu0 %v750
        %1022 = vmatmul.mubr.bf16.gmra.mrb[0].mxu0 %v749
        %v1023 = vpop.f32.mrb[0].mxu0
        %v1024 = vadd.f32 0.0, %v1023
        %v1025 = vpop.f32.mrb[0].mxu0
        %v1026 = vpop.f32.mrb[0].mxu0
        %v1027 = vadd.f32 0.0, %v1026
        %v1028 = vpop.f32.mrb[0].mxu0
        %1029 = vmatprep.mubr.bf16.mxu0 %v753
        %1030 = vmatmul.mubr.bf16.gmra.mrb[0].mxu0 %v752
        %v1031 = vpop.f32.mrb[0].mxu0
        %v1032 = vadd.f32 0.0, %v1031
        %v1033 = vpop.f32.mrb[0].mxu0
        %v1034 = vpop.f32.mrb[0].mxu0
        %v1035 = vadd.f32 0.0, %v1034
        %v1036 = vpop.f32.mrb[0].mxu0
        %1037 = vmatprep.mubr.bf16.mxu0 %v756
        %1038 = vmatmul.mubr.bf16.gmra.mrb[0].mxu0 %v755
        %v1039 = vpop.f32.mrb[0].mxu0
        %v1040 = vadd.f32 0.0, %v1039
        %v1041 = vpop.f32.mrb[0].mxu0
        %v1042 = vpop.f32.mrb[0].mxu0
        %v1043 = vadd.f32 0.0, %v1042
        %v1044 = vpop.f32.mrb[0].mxu0
        %1045 = vmatprep.mubr.bf16.mxu0 %v759
        %1046 = vmatmul.mubr.bf16.gmra.mrb[0].mxu0 %v758
        %v1047 = vpop.f32.mrb[0].mxu0
        %v1048 = vadd.f32 0.0, %v1047
        %v1049 = vpop.f32.mrb[0].mxu0
        %v1050 = vpop.f32.mrb[0].mxu0
        %v1051 = vadd.f32 0.0, %v1050
        %v1052 = vpop.f32.mrb[0].mxu0
        %1053 = vmatprep.mubr.bf16.mxu0 %v762
        %1054 = vmatmul.mubr.bf16.gmra.mrb[0].mxu0 %v761
        %v1055 = vpop.f32.mrb[0].mxu0
        %v1056 = vadd.f32 0.0, %v1055
        %v1057 = vpop.f32.mrb[0].mxu0
        %v1058 = vpop.f32.mrb[0].mxu0
        %v1059 = vadd.f32 0.0, %v1058
        %v1060 = vpop.f32.mrb[0].mxu0
        %1061 = vmatprep.mubr.bf16.mxu0 %v765
        %1062 = vmatmul.mubr.bf16.gmra.mrb[0].mxu0 %v764
        %v1063 = vpop.f32.mrb[0].mxu0
        %v1064 = vadd.f32 0.0, %v1063
        %v1065 = vpop.f32.mrb[0].mxu0
        %v1066 = vpop.f32.mrb[0].mxu0
        %v1067 = vadd.f32 0.0, %v1066
        %v1068 = vpop.f32.mrb[0].mxu0
        %1069 = vmatprep.mubr.bf16.mxu0 %v768
        %1070 = vmatmul.mubr.bf16.gmra.mrb[0].mxu0 %v767
        %v1071 = vpop.f32.mrb[0].mxu0
        %v1072 = vadd.f32 0.0, %v1071
        %v1073 = vpop.f32.mrb[0].mxu0
        %v1074 = vpop.f32.mrb[0].mxu0
        %v1075 = vadd.f32 0.0, %v1074
        %v1076 = vpop.f32.mrb[0].mxu0
        %1077 = vmatprep.mubr.bf16.mxu0 %v771
        %1078 = vmatmul.mubr.bf16.gmra.mrb[0].mxu0 %v770
        %v1079 = vpop.f32.mrb[0].mxu0
        %v1080 = vadd.f32 0.0, %v1079
        %v1081 = vpop.f32.mrb[0].mxu0
        %v1082 = vpop.f32.mrb[0].mxu0
        %v1083 = vadd.f32 0.0, %v1082
        %v1084 = vpop.f32.mrb[0].mxu0
        %1085 = vmatprep.mubr.bf16.mxu0 %v774
        %1086 = vmatmul.mubr.bf16.gmra.mrb[0].mxu0 %v773
        %v1087 = vpop.f32.mrb[0].mxu0
        %v1088 = vadd.f32 0.0, %v1087
        %v1089 = vpop.f32.mrb[0].mxu0
        %v1090 = vpop.f32.mrb[0].mxu0
        %v1091 = vadd.f32 0.0, %v1090
        %v1092 = vpop.f32.mrb[0].mxu0
        %1093 = vmatprep.mubr.bf16.mxu0 %v777
        %1094 = vmatmul.mubr.bf16.gmra.mrb[0].mxu0 %v776
        %v1095 = vpop.f32.mrb[0].mxu0
        %v1096 = vadd.f32 0.0, %v1095
        %v1097 = vpop.f32.mrb[0].mxu0
        %v1098 = vpop.f32.mrb[0].mxu0
        %v1099 = vadd.f32 0.0, %v1098
        %v1100 = vpop.f32.mrb[0].mxu0
        %1101 = vmatprep.mubr.bf16.mxu0 %v780
        %1102 = vmatmul.mubr.bf16.gmra.mrb[0].mxu0 %v779
        %v1103 = vpop.f32.mrb[0].mxu0
        %v1104 = vadd.f32 0.0, %v1103
        %v1105 = vpop.f32.mrb[0].mxu0
        %v1106 = vpop.f32.mrb[0].mxu0
        %v1107 = vadd.f32 0.0, %v1106
        %v1108 = vpop.f32.mrb[0].mxu0
        %1109 = vmatprep.mubr.bf16.mxu0 %v783
        %1110 = vmatmul.mubr.bf16.gmra.mrb[0].mxu0 %v782
        %v1111 = vpop.f32.mrb[0].mxu0
        %v1112 = vadd.f32 0.0, %v1111
        %v1113 = vpop.f32.mrb[0].mxu0
        %v1114 = vpop.f32.mrb[0].mxu0
        %v1115 = vadd.f32 0.0, %v1114
        %v1116 = vpop.f32.mrb[0].mxu0
        %1117 = vmatprep.mubr.bf16.mxu0 %v786
        %1118 = vmatmul.mubr.bf16.gmra.mrb[0].mxu0 %v785
        %v1119 = vpop.f32.mrb[0].mxu0
        %v1120 = vadd.f32 0.0, %v1119
        %v1121 = vpop.f32.mrb[0].mxu0
        %v1122 = vpop.f32.mrb[0].mxu0
        %v1123 = vadd.f32 0.0, %v1122
        %v1124 = vpop.f32.mrb[0].mxu0
        %1125 = vmatprep.mubr.bf16.mxu0 %v789
        %1126 = vmatmul.mubr.bf16.gmra.mrb[0].mxu0 %v788
        %v1127 = vpop.f32.mrb[0].mxu0
        %v1128 = vadd.f32 0.0, %v1127
        %v1129 = vpop.f32.mrb[0].mxu0
        %v1130 = vpop.f32.mrb[0].mxu0
        %v1131 = vadd.f32 0.0, %v1130
        %v1132 = vpop.f32.mrb[0].mxu0
        %1133 = vmatprep.mubr.bf16.mxu0 %v792
        %1134 = vmatmul.mubr.bf16.gmra.mrb[0].mxu0 %v791
        %v1135 = vpop.f32.mrb[0].mxu0
        %v1136 = vadd.f32 0.0, %v1135
        %v1137 = vpop.f32.mrb[0].mxu0
        %v1138 = vpop.f32.mrb[0].mxu0
        %v1139 = vadd.f32 0.0, %v1138
        %v1140 = vpop.f32.mrb[0].mxu0
        %1141 = vmatprep.mubr.bf16.mxu0 %v795
        %1142 = vmatmul.mubr.bf16.gmra.mrb[0].mxu0 %v794
        %v1143 = vpop.f32.mrb[0].mxu0
        %v1144 = vadd.f32 0.0, %v1143
        %v1145 = vpop.f32.mrb[0].mxu0
        %v1146 = vpop.f32.mrb[0].mxu0
        %v1147 = vadd.f32 0.0, %v1146
        %v1148 = vpop.f32.mrb[0].mxu0
        %1149 = vdwg.mxu0
        %1150 = vmatprep.subr.bf16.mxu0 0
        %1151 = vmatpush1.bf16.msra.mxu0 %v957
        %1152 = vmatprep.subr.bf16.mxu0 0
        %1153 = vmatpush1.bf16.msra.mxu0 %v958
        %1154 = vmatprep.subr.bf16.mxu0 0
        %1155 = vmatpush1.bf16.msra.mxu0 %v959
        %1156 = vmatprep.subr.bf16.mxu0 0
        %1157 = vmatpush1.bf16.msra.mxu0 %v960
        %1158 = vmatprep.subr.bf16.mxu0 0
        %1159 = vmatpush1.bf16.msra.mxu0 %v961
        %1160 = vmatprep.subr.bf16.mxu0 0
        %1161 = vmatpush1.bf16.msra.mxu0 %v962
        %1162 = vmatprep.subr.bf16.mxu0 0
        %1163 = vmatpush1.bf16.msra.mxu0 %v963
        %1164 = vmatprep.subr.bf16.mxu0 0
        %1165 = vmatpush1.bf16.msra.mxu0 %v964
        %1166 = vmatprep.subr.bf16.mxu0 0
        %1167 = vmatpush1.bf16.msra.mxu0 0
        %1168 = vmatprep.subr.bf16.mxu0 0
        %1169 = vmatpush1.bf16.msra.mxu0 0
        %1170 = vmatprep.subr.bf16.mxu0 0
        %1171 = vmatpush1.bf16.msra.mxu0 0
        %1172 = vmatprep.subr.bf16.mxu0 0
        %1173 = vmatpush1.bf16.msra.mxu0 0
        %1174 = vmatprep.subr.bf16.mxu0 0
        %1175 = vmatpush1.bf16.msra.mxu0 0
        %1176 = vmatprep.subr.bf16.mxu0 0
        %1177 = vmatpush1.bf16.msra.mxu0 0
        %1178 = vmatprep.subr.bf16.mxu0 0
        %1179 = vmatpush1.bf16.msra.mxu0 0
        %1180 = vmatprep.subr.bf16.mxu0 0
        %1181 = vmatpush1.bf16.msra.mxu0 0
        %1182 = vmatprep.mubr.bf16.mxu0 0
        %1183 = vmatmul.mubr.bf16.gmra.mrb[0].mxu0 %v751
        %v1184 = vpop.f32.mrb[0].mxu0
        %v1185 = vadd.f32 %v1024, %v1184
        %v1186 = vpop.f32.mrb[0].mxu0
        %v1187 = vpop.f32.mrb[0].mxu0
        %v1188 = vadd.f32 %v1027, %v1187
        %v1189 = vpop.f32.mrb[0].mxu0
        %1190 = vmatprep.mubr.bf16.mxu0 0
        %1191 = vmatmul.mubr.bf16.gmra.mrb[0].mxu0 %v754
        %v1192 = vpop.f32.mrb[0].mxu0
        %v1193 = vadd.f32 %v1032, %v1192
        %v1194 = vpop.f32.mrb[0].mxu0
        %v1195 = vpop.f32.mrb[0].mxu0
        %v1196 = vadd.f32 %v1035, %v1195
        %v1197 = vpop.f32.mrb[0].mxu0
        %1198 = vmatprep.mubr.bf16.mxu0 0
        %1199 = vmatmul.mubr.bf16.gmra.mrb[0].mxu0 %v757
        %v1200 = vpop.f32.mrb[0].mxu0
        %v1201 = vadd.f32 %v1040, %v1200
        %v1202 = vpop.f32.mrb[0].mxu0
        %v1203 = vpop.f32.mrb[0].mxu0
        %v1204 = vadd.f32 %v1043, %v1203
        %v1205 = vpop.f32.mrb[0].mxu0
        %1206 = vmatprep.mubr.bf16.mxu0 0
        %1207 = vmatmul.mubr.bf16.gmra.mrb[0].mxu0 %v760
        %v1208 = vpop.f32.mrb[0].mxu0
        %v1209 = vadd.f32 %v1048, %v1208
        %v1210 = vpop.f32.mrb[0].mxu0
        %v1211 = vpop.f32.mrb[0].mxu0
        %v1212 = vadd.f32 %v1051, %v1211
        %v1213 = vpop.f32.mrb[0].mxu0
        %1214 = vmatprep.mubr.bf16.mxu0 0
        %1215 = vmatmul.mubr.bf16.gmra.mrb[0].mxu0 %v763
        %v1216 = vpop.f32.mrb[0].mxu0
        %v1217 = vadd.f32 %v1056, %v1216
        %v1218 = vpop.f32.mrb[0].mxu0
        %v1219 = vpop.f32.mrb[0].mxu0
        %v1220 = vadd.f32 %v1059, %v1219
        %v1221 = vpop.f32.mrb[0].mxu0
        %1222 = vmatprep.mubr.bf16.mxu0 0
        %1223 = vmatmul.mubr.bf16.gmra.mrb[0].mxu0 %v766
        %v1224 = vpop.f32.mrb[0].mxu0
        %v1225 = vadd.f32 %v1064, %v1224
        %v1226 = vpop.f32.mrb[0].mxu0
        %v1227 = vpop.f32.mrb[0].mxu0
        %v1228 = vadd.f32 %v1067, %v1227
        %v1229 = vpop.f32.mrb[0].mxu0
        %1230 = vmatprep.mubr.bf16.mxu0 0
        %1231 = vmatmul.mubr.bf16.gmra.mrb[0].mxu0 %v769
        %v1232 = vpop.f32.mrb[0].mxu0
        %v1233 = vadd.f32 %v1072, %v1232
        %v1234 = vpop.f32.mrb[0].mxu0
        %v1235 = vpop.f32.mrb[0].mxu0
        %v1236 = vadd.f32 %v1075, %v1235
        %v1237 = vpop.f32.mrb[0].mxu0
        %1238 = vmatprep.mubr.bf16.mxu0 0
        %1239 = vmatmul.mubr.bf16.gmra.mrb[0].mxu0 %v772
        %v1240 = vpop.f32.mrb[0].mxu0
        %v1241 = vadd.f32 %v1080, %v1240
        %v1242 = vpop.f32.mrb[0].mxu0
        %v1243 = vpop.f32.mrb[0].mxu0
        %v1244 = vadd.f32 %v1083, %v1243
        %v1245 = vpop.f32.mrb[0].mxu0
        %1246 = vmatprep.mubr.bf16.mxu0 0
        %1247 = vmatmul.mubr.bf16.gmra.mrb[0].mxu0 %v775
        %v1248 = vpop.f32.mrb[0].mxu0
        %v1249 = vadd.f32 %v1088, %v1248
        %v1250 = vpop.f32.mrb[0].mxu0
        %v1251 = vpop.f32.mrb[0].mxu0
        %v1252 = vadd.f32 %v1091, %v1251
        %v1253 = vpop.f32.mrb[0].mxu0
        %1254 = vmatprep.mubr.bf16.mxu0 0
        %1255 = vmatmul.mubr.bf16.gmra.mrb[0].mxu0 %v778
        %v1256 = vpop.f32.mrb[0].mxu0
        %v1257 = vadd.f32 %v1096, %v1256
        %v1258 = vpop.f32.mrb[0].mxu0
        %v1259 = vpop.f32.mrb[0].mxu0
        %v1260 = vadd.f32 %v1099, %v1259
        %v1261 = vpop.f32.mrb[0].mxu0
        %1262 = vmatprep.mubr.bf16.mxu0 0
        %1263 = vmatmul.mubr.bf16.gmra.mrb[0].mxu0 %v781
        %v1264 = vpop.f32.mrb[0].mxu0
        %v1265 = vadd.f32 %v1104, %v1264
        %v1266 = vpop.f32.mrb[0].mxu0
        %v1267 = vpop.f32.mrb[0].mxu0
        %v1268 = vadd.f32 %v1107, %v1267
        %v1269 = vpop.f32.mrb[0].mxu0
        %1270 = vmatprep.mubr.bf16.mxu0 0
        %1271 = vmatmul.mubr.bf16.gmra.mrb[0].mxu0 %v784
        %v1272 = vpop.f32.mrb[0].mxu0
        %v1273 = vadd.f32 %v1112, %v1272
        %v1274 = vpop.f32.mrb[0].mxu0
        %v1275 = vpop.f32.mrb[0].mxu0
        %v1276 = vadd.f32 %v1115, %v1275
        %v1277 = vpop.f32.mrb[0].mxu0
        %1278 = vmatprep.mubr.bf16.mxu0 0
        %1279 = vmatmul.mubr.bf16.gmra.mrb[0].mxu0 %v787
        %v1280 = vpop.f32.mrb[0].mxu0
        %v1281 = vadd.f32 %v1120, %v1280
        %v1282 = vpop.f32.mrb[0].mxu0
        %v1283 = vpop.f32.mrb[0].mxu0
        %v1284 = vadd.f32 %v1123, %v1283
        %v1285 = vpop.f32.mrb[0].mxu0
        %1286 = vmatprep.mubr.bf16.mxu0 0
        %1287 = vmatmul.mubr.bf16.gmra.mrb[0].mxu0 %v790
        %v1288 = vpop.f32.mrb[0].mxu0
        %v1289 = vadd.f32 %v1128, %v1288
        %v1290 = vpop.f32.mrb[0].mxu0
        %v1291 = vpop.f32.mrb[0].mxu0
        %v1292 = vadd.f32 %v1131, %v1291
        %v1293 = vpop.f32.mrb[0].mxu0
        %1294 = vmatprep.mubr.bf16.mxu0 0
        %1295 = vmatmul.mubr.bf16.gmra.mrb[0].mxu0 %v793
        %v1296 = vpop.f32.mrb[0].mxu0
        %v1297 = vadd.f32 %v1136, %v1296
        %v1298 = vpop.f32.mrb[0].mxu0
        %v1299 = vpop.f32.mrb[0].mxu0
        %v1300 = vadd.f32 %v1139, %v1299
        %v1301 = vpop.f32.mrb[0].mxu0
        %1302 = vmatprep.mubr.bf16.mxu0 0
        %1303 = vmatmul.mubr.bf16.gmra.mrb[0].mxu0 %v796
        %v1304 = vpop.f32.mrb[0].mxu0
        %v1305 = vadd.f32 %v1144, %v1304
        %v1306 = vpop.f32.mrb[0].mxu0
        %v1307 = vpop.f32.mrb[0].mxu0
        %v1308 = vadd.f32 %v1147, %v1307
        %v1309 = vpop.f32.mrb[0].mxu0
        %1310 = vdwg.mxu0
        %v1311 = vadd.f32 %v445, %v1185
        %v1312 = vadd.f32 %v446, %v1188
        %v1313 = vadd.f32 %v447, %v1193
        %v1314 = vadd.f32 %v448, %v1196
        %v1315 = vadd.f32 %v449, %v1201
        %v1316 = vadd.f32 %v450, %v1204
        %v1317 = vadd.f32 %v451, %v1209
        %v1318 = vadd.f32 %v452, %v1212
        %v1319 = vadd.f32 %v453, %v1217
        %v1320 = vadd.f32 %v454, %v1220
        %v1321 = vadd.f32 %v455, %v1225
        %v1322 = vadd.f32 %v456, %v1228
        %v1323 = vadd.f32 %v457, %v1233
        %v1324 = vadd.f32 %v458, %v1236
        %v1325 = vadd.f32 %v459, %v1241
        %v1326 = vadd.f32 %v460, %v1244
        %v1327 = vadd.f32 %v461, %v1249
        %v1328 = vadd.f32 %v462, %v1252
        %v1329 = vadd.f32 %v463, %v1257
        %v1330 = vadd.f32 %v464, %v1260
        %v1331 = vadd.f32 %v465, %v1265
        %v1332 = vadd.f32 %v466, %v1268
        %v1333 = vadd.f32 %v467, %v1273
        %v1334 = vadd.f32 %v468, %v1276
        %v1335 = vadd.f32 %v469, %v1281
        %v1336 = vadd.f32 %v470, %v1284
        %v1337 = vadd.f32 %v471, %v1289
        %v1338 = vadd.f32 %v472, %v1292
        %v1339 = vadd.f32 %v473, %v1297
        %v1340 = vadd.f32 %v474, %v1300
        %v1341 = vadd.f32 %v475, %v1305
        %v1342 = vadd.f32 %v476, %v1308
        %1343 = vst [vmem:[#allocation2] sm:$0xff] %v1311
        %1344 = vst [vmem:[#allocation2 + $0x8] sm:$0xff] %v1312
        %1345 = vst [vmem:[#allocation2 + $0x10] sm:$0xff] %v1313
        %1346 = vst [vmem:[#allocation2 + $0x18] sm:$0xff] %v1314
        %1347 = vst [vmem:[#allocation2 + $0x20] sm:$0xff] %v1315
        %1348 = vst [vmem:[#allocation2 + $0x28] sm:$0xff] %v1316
        %1349 = vst [vmem:[#allocation2 + $0x30] sm:$0xff] %v1317
        %1350 = vst [vmem:[#allocation2 + $0x38] sm:$0xff] %v1318
        %1351 = vst [vmem:[#allocation2 + $0x40] sm:$0xff] %v1319
        %1352 = vst [vmem:[#allocation2 + $0x48] sm:$0xff] %v1320
        %1353 = vst [vmem:[#allocation2 + $0x50] sm:$0xff] %v1321
        %1354 = vst [vmem:[#allocation2 + $0x58] sm:$0xff] %v1322
        %1355 = vst [vmem:[#allocation2 + $0x60] sm:$0xff] %v1323
        %1356 = vst [vmem:[#allocation2 + $0x68] sm:$0xff] %v1324
        %1357 = vst [vmem:[#allocation2 + $0x70] sm:$0xff] %v1325
        %1358 = vst [vmem:[#allocation2 + $0x78] sm:$0xff] %v1326
        %1359 = vst [vmem:[#allocation2 + $0x80] sm:$0xff] %v1327
        %1360 = vst [vmem:[#allocation2 + $0x88] sm:$0xff] %v1328
        %1361 = vst [vmem:[#allocation2 + $0x90] sm:$0xff] %v1329
        %1362 = vst [vmem:[#allocation2 + $0x98] sm:$0xff] %v1330
        %1363 = vst [vmem:[#allocation2 + $0xa0] sm:$0xff] %v1331
        %1364 = vst [vmem:[#allocation2 + $0xa8] sm:$0xff] %v1332
        %1365 = vst [vmem:[#allocation2 + $0xb0] sm:$0xff] %v1333
        %1366 = vst [vmem:[#allocation2 + $0xb8] sm:$0xff] %v1334
        %1367 = vst [vmem:[#allocation2 + $0xc0] sm:$0xff] %v1335
        %1368 = vst [vmem:[#allocation2 + $0xc8] sm:$0xff] %v1336
        %1369 = vst [vmem:[#allocation2 + $0xd0] sm:$0xff] %v1337
        %1370 = vst [vmem:[#allocation2 + $0xd8] sm:$0xff] %v1338
        %1371 = vst [vmem:[#allocation2 + $0xe0] sm:$0xff] %v1339
        %1372 = vst [vmem:[#allocation2 + $0xe8] sm:$0xff] %v1340
        %1373 = vst [vmem:[#allocation2 + $0xf0] sm:$0xff] %v1341
        %1374 = vst [vmem:[#allocation2 + $0xf8] sm:$0xff] %v1342
        %p1375 = scmp.eq.s32.totalorder %s21, 2
        // Predicated region
        $region63: #{video_features_forward.71} parent=53 // pred_check
          %p1376 = pneg %p1375
        $region64: #{video_features_forward.71} parent=53 // pred_check_branch
          %1378 = sbr.rel (%p1376) target = $region66
        $region65: #{video_features_forward.71} parent=53 // pred_region
          %v1379 = vld [vmem:[#allocation2] sm:$0xff]
          %v1380 = vld [vmem:[#allocation2 + $0x8] sm:$0xff]
          %v1381 = vld [vmem:[#allocation2 + $0x10] sm:$0xff]
          %v1382 = vld [vmem:[#allocation2 + $0x18] sm:$0xff]
          %v1383 = vld [vmem:[#allocation2 + $0x20] sm:$0xff]
          %v1384 = vld [vmem:[#allocation2 + $0x28] sm:$0xff]
          %v1385 = vld [vmem:[#allocation2 + $0x30] sm:$0xff]
          %v1386 = vld [vmem:[#allocation2 + $0x38] sm:$0xff]
          %v1387 = vld [vmem:[#allocation2 + $0x40] sm:$0xff]
          %v1388 = vld [vmem:[#allocation2 + $0x48] sm:$0xff]
          %v1389 = vld [vmem:[#allocation2 + $0x50] sm:$0xff]
          %v1390 = vld [vmem:[#allocation2 + $0x58] sm:$0xff]
          %v1391 = vld [vmem:[#allocation2 + $0x60] sm:$0xff]
          %v1392 = vld [vmem:[#allocation2 + $0x68] sm:$0xff]
          %v1393 = vld [vmem:[#allocation2 + $0x70] sm:$0xff]
          %v1394 = vld [vmem:[#allocation2 + $0x78] sm:$0xff]
          %v1395 = vld [vmem:[#allocation2 + $0x80] sm:$0xff]
          %v1396 = vld [vmem:[#allocation2 + $0x88] sm:$0xff]
          %v1397 = vld [vmem:[#allocation2 + $0x90] sm:$0xff]
          %v1398 = vld [vmem:[#allocation2 + $0x98] sm:$0xff]
          %v1399 = vld [vmem:[#allocation2 + $0xa0] sm:$0xff]
          %v1400 = vld [vmem:[#allocation2 + $0xa8] sm:$0xff]
          %v1401 = vld [vmem:[#allocation2 + $0xb0] sm:$0xff]
          %v1402 = vld [vmem:[#allocation2 + $0xb8] sm:$0xff]
          %v1403 = vld [vmem:[#allocation2 + $0xc0] sm:$0xff]
          %v1404 = vld [vmem:[#allocation2 + $0xc8] sm:$0xff]
          %v1405 = vld [vmem:[#allocation2 + $0xd0] sm:$0xff]
          %v1406 = vld [vmem:[#allocation2 + $0xd8] sm:$0xff]
          %v1407 = vld [vmem:[#allocation2 + $0xe0] sm:$0xff]
          %v1408 = vld [vmem:[#allocation2 + $0xe8] sm:$0xff]
          %v1409 = vld [vmem:[#allocation2 + $0xf0] sm:$0xff]
          %v1410 = vld [vmem:[#allocation2 + $0xf8] sm:$0xff]
          %v1411 = vld [vmem:[%s398] sm:$0x1]
          %v1413 = vlaneseq
          %v1414 = vshrl.u32 %v1413, 7
          %v1415 = vsub.s32 0, %v1414
          %v1416 = vrot.slane %v1411, %v1415
          %v1418 = vadd.f32 %v1379, %v1416
          %v1419 = vadd.f32 %v1380, %v1416
          %v1420 = vadd.f32 %v1381, %v1416
          %v1421 = vadd.f32 %v1382, %v1416
          %v1422 = vadd.f32 %v1383, %v1416
          %v1423 = vadd.f32 %v1384, %v1416
          %v1424 = vadd.f32 %v1385, %v1416
          %v1425 = vadd.f32 %v1386, %v1416
          %v1426 = vadd.f32 %v1387, %v1416
          %v1427 = vadd.f32 %v1388, %v1416
          %v1428 = vadd.f32 %v1389, %v1416
          %v1429 = vadd.f32 %v1390, %v1416
          %v1430 = vadd.f32 %v1391, %v1416
          %v1431 = vadd.f32 %v1392, %v1416
          %v1432 = vadd.f32 %v1393, %v1416
          %v1433 = vadd.f32 %v1394, %v1416
          %v1434 = vadd.f32 %v1395, %v1416
          %v1435 = vadd.f32 %v1396, %v1416
          %v1436 = vadd.f32 %v1397, %v1416
          %v1437 = vadd.f32 %v1398, %v1416
          %v1438 = vadd.f32 %v1399, %v1416
          %v1439 = vadd.f32 %v1400, %v1416
          %v1440 = vadd.f32 %v1401, %v1416
          %v1441 = vadd.f32 %v1402, %v1416
          %v1442 = vadd.f32 %v1403, %v1416
          %v1443 = vadd.f32 %v1404, %v1416
          %v1444 = vadd.f32 %v1405, %v1416
          %v1445 = vadd.f32 %v1406, %v1416
          %v1446 = vadd.f32 %v1407, %v1416
          %v1447 = vadd.f32 %v1408, %v1416
          %v1448 = vadd.f32 %v1409, %v1416
          %v1449 = vadd.f32 %v1410, %v1416
          %v1450 = vmax.f32 %v1418, 0.0
          %v1451 = vmax.f32 %v1419, 0.0
          %v1452 = vmax.f32 %v1420, 0.0
          %v1453 = vmax.f32 %v1421, 0.0
          %v1454 = vmax.f32 %v1422, 0.0
          %v1455 = vmax.f32 %v1423, 0.0
          %v1456 = vmax.f32 %v1424, 0.0
          %v1457 = vmax.f32 %v1425, 0.0
          %v1458 = vmax.f32 %v1426, 0.0
          %v1459 = vmax.f32 %v1427, 0.0
          %v1460 = vmax.f32 %v1428, 0.0
          %v1461 = vmax.f32 %v1429, 0.0
          %v1462 = vmax.f32 %v1430, 0.0
          %v1463 = vmax.f32 %v1431, 0.0
          %v1464 = vmax.f32 %v1432, 0.0
          %v1465 = vmax.f32 %v1433, 0.0
          %v1466 = vmax.f32 %v1434, 0.0
          %v1467 = vmax.f32 %v1435, 0.0
          %v1468 = vmax.f32 %v1436, 0.0
          %v1469 = vmax.f32 %v1437, 0.0
          %v1470 = vmax.f32 %v1438, 0.0
          %v1471 = vmax.f32 %v1439, 0.0
          %v1472 = vmax.f32 %v1440, 0.0
          %v1473 = vmax.f32 %v1441, 0.0
          %v1474 = vmax.f32 %v1442, 0.0
          %v1475 = vmax.f32 %v1443, 0.0
          %v1476 = vmax.f32 %v1444, 0.0
          %v1477 = vmax.f32 %v1445, 0.0
          %v1478 = vmax.f32 %v1446, 0.0
          %v1479 = vmax.f32 %v1447, 0.0
          %v1480 = vmax.f32 %v1448, 0.0
          %v1481 = vmax.f32 %v1449, 0.0
          %1482 = vst [vmem:[%s406] sm:$0xff] %v1450
          %1483 = vst [vmem:[%s406 + $0x8] sm:$0xff] %v1451
          %1484 = vst [vmem:[%s406 + $0x10] sm:$0xff] %v1452
          %1485 = vst [vmem:[%s406 + $0x18] sm:$0xff] %v1453
          %1486 = vst [vmem:[%s406 + $0x20] sm:$0xff] %v1454
          %1487 = vst [vmem:[%s406 + $0x28] sm:$0xff] %v1455
          %1488 = vst [vmem:[%s406 + $0x30] sm:$0xff] %v1456
          %1489 = vst [vmem:[%s406 + $0x38] sm:$0xff] %v1457
          %1490 = vst [vmem:[%s406 + $0x40] sm:$0xff] %v1458
          %1491 = vst [vmem:[%s406 + $0x48] sm:$0xff] %v1459
          %1492 = vst [vmem:[%s406 + $0x50] sm:$0xff] %v1460
          %1493 = vst [vmem:[%s406 + $0x58] sm:$0xff] %v1461
          %1494 = vst [vmem:[%s406 + $0x60] sm:$0xff] %v1462
          %1495 = vst [vmem:[%s406 + $0x68] sm:$0xff] %v1463
          %1496 = vst [vmem:[%s406 + $0x70] sm:$0xff] %v1464
          %1497 = vst [vmem:[%s406 + $0x78] sm:$0xff] %v1465
          %1498 = vst [vmem:[%s406 + $0x80] sm:$0xff] %v1466
          %1499 = vst [vmem:[%s406 + $0x88] sm:$0xff] %v1467
          %1500 = vst [vmem:[%s406 + $0x90] sm:$0xff] %v1468
          %1501 = vst [vmem:[%s406 + $0x98] sm:$0xff] %v1469
          %1502 = vst [vmem:[%s406 + $0xa0] sm:$0xff] %v1470
          %1503 = vst [vmem:[%s406 + $0xa8] sm:$0xff] %v1471
          %1504 = vst [vmem:[%s406 + $0xb0] sm:$0xff] %v1472
          %1505 = vst [vmem:[%s406 + $0xb8] sm:$0xff] %v1473
          %1506 = vst [vmem:[%s406 + $0xc0] sm:$0xff] %v1474
          %1507 = vst [vmem:[%s406 + $0xc8] sm:$0xff] %v1475
          %1508 = vst [vmem:[%s406 + $0xd0] sm:$0xff] %v1476
          %1509 = vst [vmem:[%s406 + $0xd8] sm:$0xff] %v1477
          %1510 = vst [vmem:[%s406 + $0xe0] sm:$0xff] %v1478
          %1511 = vst [vmem:[%s406 + $0xe8] sm:$0xff] %v1479
          %1512 = vst [vmem:[%s406 + $0xf0] sm:$0xff] %v1480
          %1513 = vst [vmem:[%s406 + $0xf8] sm:$0xff] %v1481
        $region66: #{video_features_forward.71} parent=53 // pred_fallthru
          _
        %s1514 = smul.u32 32, %s19
        %p1515 = scmp.lt.s32.totalorder %s1514, 63
        %s1516 = scalar_select %p1515, %s1514, 63
        %p1517 = scmp.lt.s32.totalorder %s20, 0
        %s1518 = scalar_select %p1517, %s20, 0
        %s1519 = sadd.s32 %s1518, %s1516
        %s1520 = smul.addr %s1519, 8
        %s1521 = scalar_lea.vmem %s3, %s1520
        // Predicated region
        $region67: #{video_features_forward.71} parent=53 // pred_check
          %p1522 = pneg %p135
        $region68: #{video_features_forward.71} parent=53 // pred_check_branch
          %1524 = sbr.rel (%p1522) target = $region70
        $region69: #{video_features_forward.71} parent=53 // pred_region
          %s1525 = smul.u32 32, %s19
        $region70: #{video_features_forward.71} parent=53 // pred_fallthru
          _
      $region54: #{video_features_forward.71} parent=5 // pred_fallthru
        _
      %p1526 = scmp.le.s32.totalorder 2, %s9
      // Predicated region
      $region71: #{video_features_forward.71} parent=5 // pred_check
        %p1527 = pneg %p1526
      $region72: #{video_features_forward.71} parent=5 // pred_check_branch
        %1529 = sbr.rel (%p1527) target = $region74
      $region73: #{video_features_forward.71} parent=5 // pred_region
        %s1530 = ssub.s32 %s9, 2
        // Predicated region
        $region75: #{video_features_forward.71} parent=73 // pred_check
          %p1531 = pneg %p141
        $region76: #{video_features_forward.71} parent=73 // pred_check_branch
          %1533 = sbr.rel (%p1531) target = $region78
        $region77: #{video_features_forward.71} parent=73 // pred_region
          %s1534 = smul.u32 32, %s22
          %p1535 = scmp.lt.s32.totalorder %s1534, 63
          %s1536 = scalar_select %p1535, %s1534, 63
          %p1537 = scmp.lt.s32.totalorder %s23, 0
          %s1538 = scalar_select %p1537, %s23, 0
          %s1539 = sadd.s32 %s1538, %s1536
          %s1540 = smul.addr %s1539, 8
          %s1541 = scalar_lea.vmem %s3, %s1540
        $region78: #{video_features_forward.71} parent=73 // pred_fallthru
          _
      $region74: #{video_features_forward.71} parent=5 // pred_fallthru
        _
    $region6: #{video_features_forward.71} parent=1 // loop_footer
      %s13 = sadd.s32 1, %s9
    $region7: #{video_features_forward.71} parent=1 // loop_footer_branch
      %8 = sbr.rel target = $region3
    $region8: #{video_features_forward.71} parent=1 // loop_exit
      _

// kernel: video_features_forward.72
$region0: #{video_features_forward.72}
  #allocation0 [shape = 'u32[]', space=smem, size = 0x4, offset = 0x4, fixed_abs, tag = 'smem constant byte address 0x4 - core index']
  #allocation1 [shape = 'u32[144,128]{1,0:T(1,128)}', space=vmem, size = 0x12000, scoped, tag = 'internal scratch']
  #allocation2 [shape = 'f32[256,128]{1,0:T(8,128)}', space=vmem, size = 0x20000, scoped, tag = 'scratch operand']
  %s0 = inlined_call_operand.vmem [shape: bf16[512,128], index: 0, kind: input, shape index: {}]
  %s1 = inlined_call_operand.vmem [shape: bf16[128,128], index: 1, kind: input, shape index: {}]
  %s2 = inlined_call_operand.vmem [shape: f32[1,128], index: 2, kind: input, shape index: {}]
  %s3 = inlined_call_operand.vmem [shape: f32[512,128], index: 3, kind: output, shape index: {}]
  %s4 = sld [smem:[#allocation0]]
  $region53: #{video_features_forward.72} parent=0
    _
  %s6 = ssub.s32 1, %s4
  %s7 = scalar_select 0, %s6, %s4
  loop: start=0, step=1, limit=4
  $region2: #{video_features_forward.72} parent=0 // loop_pre_header
    _
  $region3: #{video_features_forward.72} parent=0 // loop_header
    %s9 = sphi 0, %s13
    %p10 = scmp.ge.s32.totalorder %s9, 4
    %s16 = sphi 0, %s35
    %s17 = sphi 0, %s31
    %s18 = sphi 0, %s27
    %s19 = sphi 0, %s16
    %s20 = sphi 0, %s17
    %s21 = sphi 0, %s18
    %s22 = sphi 0, %s19
    %s23 = sphi 0, %s20
    %s24 = sphi 0, %s21
    %s40 = sphi 0, %s42
    %s43 = sphi 0, %s40
    %s44 = sphi 0, %s43
    %s60 = sphi 0, %s44
    %s68 = sphi 0, %s70
    %s71 = sphi 0, %s68
    %s72 = sphi 0, %s71
    %s88 = sphi 0, %s72
    %s94 = sphi 0, %s96
    %s97 = sphi 0, %s94
    %s98 = sphi 0, %s97
    %s114 = sphi 0, %s98
    %s122 = sphi 0, %s124
    %s125 = sphi 0, %s122
    %s126 = sphi 0, %s125
    %s142 = sphi 0, %s126
  $region4: #{video_features_forward.72} parent=0 // loop_header_branch
    %12 = sbr.rel (%p10) target = $region8
  $region5: #{video_features_forward.72} parent=0 // loop_body
    %s14 = ssub.s32 %s9, 1
    %s15 = ssub.s32 %s9, 2
    %s25 = sadd.s32 1, %s18
    %p26 = scmp.ge.s32.totalorder %s25, 1
    %s27 = scalar_select %p26, 0, %s25
    %s28 = sadd.s32 1, %s17
    %s29 = scalar_select %p26, %s28, %s17
    %p30 = scmp.ge.s32.totalorder %s29, 1
    %s31 = scalar_select %p30, 0, %s29
    %s32 = sadd.s32 1, %s16
    %s33 = scalar_select %p30, %s32, %s16
    %p34 = scmp.ge.s32.totalorder %s33, 2
    %s35 = scalar_select %p34, 0, %s33
    %s36 = ssub.s32 %s16, %s35
    %s37 = ssub.s32 %s18, %s27
    %s38 = sor.u32 %s36, %s37
    %p39 = scmp.eq.s32.totalorder %s38, 0
    %s41 = sadd.s32 %s40, 1
    %s42 = scalar_select %p39, %s40, %s41
    %p45 = pneg %p39
    %p46 = scmp.eq.s32.totalorder %s9, 1
    %p47 = por %p45, %p46
    %p48 = scmp.ne.s32.totalorder %s40, %s43
    %p49 = scmp.eq.s32.totalorder %s9, 0
    %p50 = por %p48, %p49
    %p51 = scmp.ne.s32.totalorder %s40, %s43
    %p52 = scmp.eq.s32.totalorder %s14, 1
    %p53 = por %p51, %p52
    %p54 = scmp.ne.s32.totalorder %s43, %s44
    %p55 = scmp.eq.s32.totalorder %s14, 0
    %p56 = por %p54, %p55
    %p57 = scmp.ne.s32.totalorder %s43, %s44
    %p58 = scmp.eq.s32.totalorder %s15, 1
    %p59 = por %p57, %p58
    %p61 = scmp.ne.s32.totalorder %s44, %s60
    %p62 = scmp.eq.s32.totalorder %s15, 0
    %p63 = por %p61, %p62
    %s64 = ssub.s32 %s18, %s27
    %s65 = ssub.s32 %s17, %s31
    %s66 = sor.u32 %s64, %s65
    %p67 = scmp.eq.s32.totalorder %s66, 0
    %s69 = sadd.s32 %s68, 1
    %s70 = scalar_select %p67, %s68, %s69
    %p73 = pneg %p67
    %p74 = scmp.eq.s32.totalorder %s9, 1
    %p75 = por %p73, %p74
    %p76 = scmp.ne.s32.totalorder %s68, %s71
    %p77 = scmp.eq.s32.totalorder %s9, 0
    %p78 = por %p76, %p77
    %p79 = scmp.ne.s32.totalorder %s68, %s71
    %p80 = scmp.eq.s32.totalorder %s14, 1
    %p81 = por %p79, %p80
    %p82 = scmp.ne.s32.totalorder %s71, %s72
    %p83 = scmp.eq.s32.totalorder %s14, 0
    %p84 = por %p82, %p83
    %p85 = scmp.ne.s32.totalorder %s71, %s72
    %p86 = scmp.eq.s32.totalorder %s15, 1
    %p87 = por %p85, %p86
    %p89 = scmp.ne.s32.totalorder %s72, %s88
    %p90 = scmp.eq.s32.totalorder %s15, 0
    %p91 = por %p89, %p90
    %s92 = ssub.s32 %s17, %s31
    %p93 = scmp.eq.s32.totalorder %s92, 0
    %s95 = sadd.s32 %s94, 1
    %s96 = scalar_select %p93, %s94, %s95
    %p99 = pneg %p93
    %p100 = scmp.eq.s32.totalorder %s9, 1
    %p101 = por %p99, %p100
    %p102 = scmp.ne.s32.totalorder %s94, %s97
    %p103 = scmp.eq.s32.totalorder %s9, 0
    %p104 = por %p102, %p103
    %p105 = scmp.ne.s32.totalorder %s94, %s97
    %p106 = scmp.eq.s32.totalorder %s14, 1
    %p107 = por %p105, %p106
    %p108 = scmp.ne.s32.totalorder %s97, %s98
    %p109 = scmp.eq.s32.totalorder %s14, 0
    %p110 = por %p108, %p109
    %p111 = scmp.ne.s32.totalorder %s97, %s98
    %p112 = scmp.eq.s32.totalorder %s15, 1
    %p113 = por %p111, %p112
    %p115 = scmp.ne.s32.totalorder %s98, %s114
    %p116 = scmp.eq.s32.totalorder %s15, 0
    %p117 = por %p115, %p116
    %s118 = ssub.s32 %s16, %s35
    %s119 = ssub.s32 %s17, %s31
    %s120 = sor.u32 %s118, %s119
    %p121 = scmp.eq.s32.totalorder %s120, 0
    %s123 = sadd.s32 %s122, 1
    %s124 = scalar_select %p121, %s122, %s123
    %p127 = pneg %p121
    %p128 = scmp.eq.s32.totalorder %s9, 1
    %p129 = por %p127, %p128
    %p130 = scmp.ne.s32.totalorder %s122, %s125
    %p131 = scmp.eq.s32.totalorder %s9, 0
    %p132 = por %p130, %p131
    %p133 = scmp.ne.s32.totalorder %s122, %s125
    %p134 = scmp.eq.s32.totalorder %s14, 1
    %p135 = por %p133, %p134
    %p136 = scmp.ne.s32.totalorder %s125, %s126
    %p137 = scmp.eq.s32.totalorder %s14, 0
    %p138 = por %p136, %p137
    %p139 = scmp.ne.s32.totalorder %s125, %s126
    %p140 = scmp.eq.s32.totalorder %s15, 1
    %p141 = por %p139, %p140
    %p143 = scmp.ne.s32.totalorder %s126, %s142
    %p144 = scmp.eq.s32.totalorder %s15, 0
    %p145 = por %p143, %p144
    %p146 = scmp.le.s32.totalorder 1, %s9
    %p147 = scmp.lt.s32.totalorder %s9, 3
    %p148 = pnand %p146, %p147
    %p149 = pneg %p148
    // Predicated region
    $region9: #{video_features_forward.72} parent=5 // pred_check
      _
    $region10: #{video_features_forward.72} parent=5 // pred_check_branch
      %151 = sbr.rel (%p148) target = $region12
    $region11: #{video_features_forward.72} parent=5 // pred_region
      %s152 = ssub.s32 %s9, 1
      // Predicated region
      $region13: #{video_features_forward.72} parent=11 // pred_check
        %p153 = pneg %p84
      $region14: #{video_features_forward.72} parent=11 // pred_check_branch
        %155 = sbr.rel (%p153) target = $region16
      $region15: #{video_features_forward.72} parent=11 // pred_region
        %s156 = smul.u32 16, %s21
        %p157 = scmp.lt.s32.totalorder %s156, 15
        %s158 = scalar_select %p157, %s156, 15
        %p159 = scmp.lt.s32.totalorder %s20, 0
        %s160 = scalar_select %p159, %s20, 0
        %s161 = sadd.s32 %s160, %s158
        %s162 = smul.addr %s161, 4
        %s163 = scalar_lea.vmem %s1, %s162
        %s164 = smul.u32 16, %s21
      $region16: #{video_features_forward.72} parent=11 // pred_fallthru
        _
      // Predicated region
      $region17: #{video_features_forward.72} parent=11 // pred_check
        %p165 = pneg %p110
      $region18: #{video_features_forward.72} parent=11 // pred_check_branch
        %167 = sbr.rel (%p165) target = $region20
      $region19: #{video_features_forward.72} parent=11 // pred_region
        %p168 = scmp.lt.s32.totalorder %s20, 0
        %s169 = scalar_select %p168, %s20, 0
        %s170 = scalar_lea.vmem %s2, %s169
      $region20: #{video_features_forward.72} parent=11 // pred_fallthru
        _
    $region12: #{video_features_forward.72} parent=5 // pred_fallthru
      _
    %p171 = scmp.lt.s32.totalorder %s9, 2
    // Predicated region
    $region21: #{video_features_forward.72} parent=5 // pred_check
      %p172 = pneg %p171
    $region22: #{video_features_forward.72} parent=5 // pred_check_branch
      %174 = sbr.rel (%p172) target = $region24
    $region23: #{video_features_forward.72} parent=5 // pred_region
      // Predicated region
      $region25: #{video_features_forward.72} parent=23 // pred_check
        %p175 = pneg %p50
      $region26: #{video_features_forward.72} parent=23 // pred_check_branch
        %177 = sbr.rel (%p175) target = $region28
      $region27: #{video_features_forward.72} parent=23 // pred_region
        %s178 = smul.u32 32, %s16
        %p179 = scmp.lt.s32.totalorder %s178, 63
        %s180 = scalar_select %p179, %s178, 63
        %p181 = scmp.lt.s32.totalorder %s18, 0
        %s182 = scalar_select %p181, %s18, 0
        %s183 = sadd.s32 %s182, %s180
        %s184 = smul.addr %s183, 4
        %s185 = scalar_lea.vmem %s0, %s184
        %s186 = smul.u32 32, %s16
      $region28: #{video_features_forward.72} parent=23 // pred_fallthru
        _
    $region24: #{video_features_forward.72} parent=5 // pred_fallthru
      _
    %p187 = scmp.le.s32.totalorder 1, %s9
    %p188 = scmp.lt.s32.totalorder %s9, 3
    %p189 = pnand %p187, %p188
    %p190 = pneg %p189
    // Predicated region
    $region29: #{video_features_forward.72} parent=5 // pred_check
      _
    $region30: #{video_features_forward.72} parent=5 // pred_check_branch
      %192 = sbr.rel (%p189) target = $region32
    $region31: #{video_features_forward.72} parent=5 // pred_region
      %s193 = ssub.s32 %s9, 1
      %s194 = smul.u32 32, %s19
      %p195 = scmp.lt.s32.totalorder %s194, 63
      %s196 = scalar_select %p195, %s194, 63
      %p197 = scmp.lt.s32.totalorder %s21, 0
      %s198 = scalar_select %p197, %s21, 0
      %s199 = sadd.s32 %s198, %s196
      %s200 = smul.addr %s199, 4
      %s201 = scalar_lea.vmem %s0, %s200
      %p202 = pneg %p56
      %p203 = pneg %p53
      %s204 = smul.u32 16, %s21
      %p205 = scmp.lt.s32.totalorder %s204, 15
      %s206 = scalar_select %p205, %s204, 15
      %p207 = scmp.lt.s32.totalorder %s20, 0
      %s208 = scalar_select %p207, %s20, 0
      %s209 = sadd.s32 %s208, %s206
      %s210 = smul.addr %s209, 4
      %s211 = scalar_lea.vmem %s1, %s210
      %p212 = pneg %p84
      %p213 = pneg %p81
      %p214 = scmp.lt.s32.totalorder %s20, 0
      %s215 = scalar_select %p214, %s20, 0
      %s216 = scalar_lea.vmem %s2, %s215
      %p217 = pneg %p110
      %p218 = pneg %p107
      %p219 = pneg %p138
      %p220 = pneg %p135
      %s221 = smul.u32 32, %s19
      %p222 = scmp.lt.s32.totalorder %s221, 63
      %s223 = scalar_select %p222, %s221, 63
      %p224 = scmp.lt.s32.totalorder %s20, 0
      %s225 = scalar_select %p224, %s20, 0
      %s226 = sadd.s32 %s225, %s223
      %s227 = smul.addr %s226, 8
      %s228 = scalar_lea.vmem %s3, %s227
      %s229 = smul.u32 32, %s19
      %p230 = scmp.lt.s32.totalorder %s229, 63
      %s231 = scalar_select %p230, %s229, 63
      %p232 = scmp.lt.s32.totalorder %s21, 0
      %s233 = scalar_select %p232, %s21, 0
      %s234 = sadd.s32 %s233, %s231
      %s235 = smul.addr %s234, 4
      %s236 = scalar_lea.vmem %s0, %s235
      %s237 = smul.u32 32, %s19
      %s238 = smul.u32 16, %s21
      %p239 = scmp.lt.s32.totalorder %s238, 15
      %s240 = scalar_select %p239, %s238, 15
      %p241 = scmp.lt.s32.totalorder %s20, 0
      %s242 = scalar_select %p241, %s20, 0
      %s243 = sadd.s32 %s242, %s240
      %s244 = smul.addr %s243, 4
      %s245 = scalar_lea.vmem %s1, %s244
      %s246 = smul.u32 16, %s21
      %p247 = scmp.lt.s32.totalorder %s20, 0
      %s248 = scalar_select %p247, %s20, 0
      %s249 = scalar_lea.vmem %s2, %s248
      %s250 = smul.u32 32, %s19
      %p251 = scmp.lt.s32.totalorder %s250, 63
      %s252 = scalar_select %p251, %s250, 63
      %p253 = scmp.lt.s32.totalorder %s20, 0
      %s254 = scalar_select %p253, %s20, 0
      %s255 = sadd.s32 %s254, %s252
      %s256 = smul.addr %s255, 8
      %s257 = scalar_lea.vmem %s3, %s256
      %s258 = smul.u32 32, %s19
      %p260 = scmp.eq.s32.totalorder %s21, 0
      // Predicated region
      $region33: #{video_features_forward.72} parent=31 // pred_check
        %p261 = pneg %p260
      $region34: #{video_features_forward.72} parent=31 // pred_check_branch
        %263 = sbr.rel (%p261) target = $region36
      $region35: #{video_features_forward.72} parent=31 // pred_region
        %264 = vst [vmem:[#allocation2] sm:$0xff] 0.0
        %265 = vst [vmem:[#allocation2 + $0x8] sm:$0xff] 0.0
        %266 = vst [vmem:[#allocation2 + $0x10] sm:$0xff] 0.0
        %267 = vst [vmem:[#allocation2 + $0x18] sm:$0xff] 0.0
        %268 = vst [vmem:[#allocation2 + $0x20] sm:$0xff] 0.0
        %269 = vst [vmem:[#allocation2 + $0x28] sm:$0xff] 0.0
        %270 = vst [vmem:[#allocation2 + $0x30] sm:$0xff] 0.0
        %271 = vst [vmem:[#allocation2 + $0x38] sm:$0xff] 0.0
        %272 = vst [vmem:[#allocation2 + $0x40] sm:$0xff] 0.0
        %273 = vst [vmem:[#allocation2 + $0x48] sm:$0xff] 0.0
        %274 = vst [vmem:[#allocation2 + $0x50] sm:$0xff] 0.0
        %275 = vst [vmem:[#allocation2 + $0x58] sm:$0xff] 0.0
        %276 = vst [vmem:[#allocation2 + $0x60] sm:$0xff] 0.0
        %277 = vst [vmem:[#allocation2 + $0x68] sm:$0xff] 0.0
        %278 = vst [vmem:[#allocation2 + $0x70] sm:$0xff] 0.0
        %279 = vst [vmem:[#allocation2 + $0x78] sm:$0xff] 0.0
        %280 = vst [vmem:[#allocation2 + $0x80] sm:$0xff] 0.0
        %281 = vst [vmem:[#allocation2 + $0x88] sm:$0xff] 0.0
        %282 = vst [vmem:[#allocation2 + $0x90] sm:$0xff] 0.0
        %283 = vst [vmem:[#allocation2 + $0x98] sm:$0xff] 0.0
        %284 = vst [vmem:[#allocation2 + $0xa0] sm:$0xff] 0.0
        %285 = vst [vmem:[#allocation2 + $0xa8] sm:$0xff] 0.0
        %286 = vst [vmem:[#allocation2 + $0xb0] sm:$0xff] 0.0
        %287 = vst [vmem:[#allocation2 + $0xb8] sm:$0xff] 0.0
        %288 = vst [vmem:[#allocation2 + $0xc0] sm:$0xff] 0.0
        %289 = vst [vmem:[#allocation2 + $0xc8] sm:$0xff] 0.0
        %290 = vst [vmem:[#allocation2 + $0xd0] sm:$0xff] 0.0
        %291 = vst [vmem:[#allocation2 + $0xd8] sm:$0xff] 0.0
        %292 = vst [vmem:[#allocation2 + $0xe0] sm:$0xff] 0.0
        %293 = vst [vmem:[#allocation2 + $0xe8] sm:$0xff] 0.0
        %294 = vst [vmem:[#allocation2 + $0xf0] sm:$0xff] 0.0
        %295 = vst [vmem:[#allocation2 + $0xf8] sm:$0xff] 0.0
      $region36: #{video_features_forward.72} parent=31 // pred_fallthru
        _
      %v296 = vld [vmem:[#allocation2] sm:$0xff]
      %v297 = vld [vmem:[#allocation2 + $0x8] sm:$0xff]
      %v298 = vld [vmem:[#allocation2 + $0x10] sm:$0xff]
      %v299 = vld [vmem:[#allocation2 + $0x18] sm:$0xff]
      %v300 = vld [vmem:[#allocation2 + $0x20] sm:$0xff]
      %v301 = vld [vmem:[#allocation2 + $0x28] sm:$0xff]
      %v302 = vld [vmem:[#allocation2 + $0x30] sm:$0xff]
      %v303 = vld [vmem:[#allocation2 + $0x38] sm:$0xff]
      %v304 = vld [vmem:[#allocation2 + $0x40] sm:$0xff]
      %v305 = vld [vmem:[#allocation2 + $0x48] sm:$0xff]
      %v306 = vld [vmem:[#allocation2 + $0x50] sm:$0xff]
      %v307 = vld [vmem:[#allocation2 + $0x58] sm:$0xff]
      %v308 = vld [vmem:[#allocation2 + $0x60] sm:$0xff]
      %v309 = vld [vmem:[#allocation2 + $0x68] sm:$0xff]
      %v310 = vld [vmem:[#allocation2 + $0x70] sm:$0xff]
      %v311 = vld [vmem:[#allocation2 + $0x78] sm:$0xff]
      %v312 = vld [vmem:[#allocation2 + $0x80] sm:$0xff]
      %v313 = vld [vmem:[#allocation2 + $0x88] sm:$0xff]
      %v314 = vld [vmem:[#allocation2 + $0x90] sm:$0xff]
      %v315 = vld [vmem:[#allocation2 + $0x98] sm:$0xff]
      %v316 = vld [vmem:[#allocation2 + $0xa0] sm:$0xff]
      %v317 = vld [vmem:[#allocation2 + $0xa8] sm:$0xff]
      %v318 = vld [vmem:[#allocation2 + $0xb0] sm:$0xff]
      %v319 = vld [vmem:[#allocation2 + $0xb8] sm:$0xff]
      %v320 = vld [vmem:[#allocation2 + $0xc0] sm:$0xff]
      %v321 = vld [vmem:[#allocation2 + $0xc8] sm:$0xff]
      %v322 = vld [vmem:[#allocation2 + $0xd0] sm:$0xff]
      %v323 = vld [vmem:[#allocation2 + $0xd8] sm:$0xff]
      %v324 = vld [vmem:[#allocation2 + $0xe0] sm:$0xff]
      %v325 = vld [vmem:[#allocation2 + $0xe8] sm:$0xff]
      %v326 = vld [vmem:[#allocation2 + $0xf0] sm:$0xff]
      %v327 = vld [vmem:[#allocation2 + $0xf8] sm:$0xff]
      %v328 = vld [vmem:[%s236] sm:$0xf]
      %v329 = vld [vmem:[%s236 + $0x4] sm:$0xf]
      %v330 = vld [vmem:[%s236 + $0x8] sm:$0xf]
      %v331 = vld [vmem:[%s236 + $0xc] sm:$0xf]
      %v332 = vld [vmem:[%s236 + $0x10] sm:$0xf]
      %v333 = vld [vmem:[%s236 + $0x14] sm:$0xf]
      %v334 = vld [vmem:[%s236 + $0x18] sm:$0xf]
      %v335 = vld [vmem:[%s236 + $0x1c] sm:$0xf]
      %v336 = vld [vmem:[%s236 + $0x20] sm:$0xf]
      %v337 = vld [vmem:[%s236 + $0x24] sm:$0xf]
      %v338 = vld [vmem:[%s236 + $0x28] sm:$0xf]
      %v339 = vld [vmem:[%s236 + $0x2c] sm:$0xf]
      %v340 = vld [vmem:[%s236 + $0x30] sm:$0xf]
      %v341 = vld [vmem:[%s236 + $0x34] sm:$0xf]
      %v342 = vld [vmem:[%s236 + $0x38] sm:$0xf]
      %v343 = vld [vmem:[%s236 + $0x3c] sm:$0xf]
      %v344 = vld [vmem:[%s236 + $0x40] sm:$0xf]
      %v345 = vld [vmem:[%s236 + $0x44] sm:$0xf]
      %v346 = vld [vmem:[%s236 + $0x48] sm:$0xf]
      %v347 = vld [vmem:[%s236 + $0x4c] sm:$0xf]
      %v348 = vld [vmem:[%s236 + $0x50] sm:$0xf]
      %v349 = vld [vmem:[%s236 + $0x54] sm:$0xf]
      %v350 = vld [vmem:[%s236 + $0x58] sm:$0xf]
      %v351 = vld [vmem:[%s236 + $0x5c] sm:$0xf]
      %v352 = vld [vmem:[%s236 + $0x60] sm:$0xf]
      %v353 = vld [vmem:[%s236 + $0x64] sm:$0xf]
      %v354 = vld [vmem:[%s236 + $0x68] sm:$0xf]
      %v355 = vld [vmem:[%s236 + $0x6c] sm:$0xf]
      %v356 = vld [vmem:[%s236 + $0x70] sm:$0xf]
      %v357 = vld [vmem:[%s236 + $0x74] sm:$0xf]
      %v358 = vld [vmem:[%s236 + $0x78] sm:$0xf]
      %v359 = vld [vmem:[%s236 + $0x7c] sm:$0xf]
      %v360 = vld [vmem:[%s245] sm:$0xf]
      %v361 = vld [vmem:[%s245 + $0x4] sm:$0xf]
      %v362 = vld [vmem:[%s245 + $0x8] sm:$0xf]
      %v363 = vld [vmem:[%s245 + $0xc] sm:$0xf]
      %v364 = vld [vmem:[%s245 + $0x10] sm:$0xf]
      %v365 = vld [vmem:[%s245 + $0x14] sm:$0xf]
      %v366 = vld [vmem:[%s245 + $0x18] sm:$0xf]
      %v367 = vld [vmem:[%s245 + $0x1c] sm:$0xf]
      %v368 = vld [vmem:[%s245 + $0x20] sm:$0xf]
      %v369 = vld [vmem:[%s245 + $0x24] sm:$0xf]
      %v370 = vld [vmem:[%s245 + $0x28] sm:$0xf]
      %v371 = vld [vmem:[%s245 + $0x2c] sm:$0xf]
      %v372 = vld [vmem:[%s245 + $0x30] sm:$0xf]
      %v373 = vld [vmem:[%s245 + $0x34] sm:$0xf]
      %v374 = vld [vmem:[%s245 + $0x38] sm:$0xf]
      %v375 = vld [vmem:[%s245 + $0x3c] sm:$0xf]
      %v408 = vunpack.c.l.b16 %v328
      %v409 = vunpack.c.l.b16 %v329
      %v410 = vunpack.c.l.b16 %v330
      %v411 = vunpack.c.l.b16 %v331
      %v412 = vunpack.c.l.b16 %v332
      %v413 = vunpack.c.l.b16 %v333
      %v414 = vunpack.c.l.b16 %v334
      %v415 = vunpack.c.l.b16 %v335
      %v416 = vunpack.c.l.b16 %v336
      %v417 = vunpack.c.l.b16 %v337
      %v418 = vunpack.c.l.b16 %v338
      %v419 = vunpack.c.l.b16 %v339
      %v420 = vunpack.c.l.b16 %v340
      %v421 = vunpack.c.l.b16 %v341
      %v422 = vunpack.c.l.b16 %v342
      %v423 = vunpack.c.l.b16 %v343
      %v424 = vunpack.c.l.b16 %v344
      %v425 = vunpack.c.l.b16 %v345
      %v426 = vunpack.c.l.b16 %v346
      %v427 = vunpack.c.l.b16 %v347
      %v428 = vunpack.c.l.b16 %v348
      %v429 = vunpack.c.l.b16 %v349
      %v430 = vunpack.c.l.b16 %v350
      %v431 = vunpack.c.l.b16 %v351
      %v432 = vunpack.c.l.b16 %v352
      %v433 = vunpack.c.l.b16 %v353
      %v434 = vunpack.c.l.b16 %v354
      %v435 = vunpack.c.l.b16 %v355
      %v436 = vunpack.c.l.b16 %v356
      %v437 = vunpack.c.l.b16 %v357
      %v438 = vunpack.c.l.b16 %v358
      %v439 = vunpack.c.l.b16 %v359
      %v440 = vpack.c.b16 %v409, %v408
      %v441 = vpack.c.b16 %v411, %v410
      %v442 = vpack.c.b16 %v413, %v412
      %v443 = vpack.c.b16 %v415, %v414
      %v444 = vpack.c.b16 %v417, %v416
      %v445 = vpack.c.b16 %v419, %v418
      %v446 = vpack.c.b16 %v421, %v420
      %v447 = vpack.c.b16 %v423, %v422
      %v448 = vpack.c.b16 %v425, %v424
      %v449 = vpack.c.b16 %v427, %v426
      %v450 = vpack.c.b16 %v429, %v428
      %v451 = vpack.c.b16 %v431, %v430
      %v452 = vpack.c.b16 %v433, %v432
      %v453 = vpack.c.b16 %v435, %v434
      %v454 = vpack.c.b16 %v437, %v436
      %v455 = vpack.c.b16 %v439, %v438
      %v488 = vunpack.c.l.b16 %v360
      %v489 = vunpack.c.l.b16 %v361
      %v490 = vunpack.c.l.b16 %v362
      %v491 = vunpack.c.l.b16 %v363
      %v492 = vunpack.c.l.b16 %v364
      %v493 = vunpack.c.l.b16 %v365
      %v494 = vunpack.c.l.b16 %v366
      %v495 = vunpack.c.l.b16 %v367
      %v496 = vunpack.c.l.b16 %v368
      %v497 = vunpack.c.l.b16 %v369
      %v498 = vunpack.c.l.b16 %v370
      %v499 = vunpack.c.l.b16 %v371
      %v500 = vunpack.c.l.b16 %v372
      %v501 = vunpack.c.l.b16 %v373
      %v502 = vunpack.c.l.b16 %v374
      %v503 = vunpack.c.l.b16 %v375
      %v504 = vpack.c.b16 %v489, %v488
      %v505 = vpack.c.b16 %v491, %v490
      %v506 = vpack.c.b16 %v493, %v492
      %v507 = vpack.c.b16 %v495, %v494
      %v508 = vpack.c.b16 %v497, %v496
      %v509 = vpack.c.b16 %v499, %v498
      %v510 = vpack.c.b16 %v501, %v500
      %v511 = vpack.c.b16 %v503, %v502
      %520 = vmatprep.subr.bf16.mxu0 0
      %521 = vmatpush1.bf16.msra.mxu0 %v504
      %522 = vmatprep.subr.bf16.mxu0 0
      %523 = vmatpush1.bf16.msra.mxu0 %v505
      %524 = vmatprep.subr.bf16.mxu0 0
      %525 = vmatpush1.bf16.msra.mxu0 %v506
      %526 = vmatprep.subr.bf16.mxu0 0
      %527 = vmatpush1.bf16.msra.mxu0 %v507
      %528 = vmatprep.subr.bf16.mxu0 0
      %529 = vmatpush1.bf16.msra.mxu0 %v508
      %530 = vmatprep.subr.bf16.mxu0 0
      %531 = vmatpush1.bf16.msra.mxu0 %v509
      %532 = vmatprep.subr.bf16.mxu0 0
      %533 = vmatpush1.bf16.msra.mxu0 %v510
      %534 = vmatprep.subr.bf16.mxu0 0
      %535 = vmatpush1.bf16.msra.mxu0 %v511
      %536 = vmatprep.subr.bf16.mxu0 0
      %537 = vmatpush1.bf16.msra.mxu0 0
      %538 = vmatprep.subr.bf16.mxu0 0
      %539 = vmatpush1.bf16.msra.mxu0 0
      %540 = vmatprep.subr.bf16.mxu0 0
      %541 = vmatpush1.bf16.msra.mxu0 0
      %542 = vmatprep.subr.bf16.mxu0 0
      %543 = vmatpush1.bf16.msra.mxu0 0
      %544 = vmatprep.subr.bf16.mxu0 0
      %545 = vmatpush1.bf16.msra.mxu0 0
      %546 = vmatprep.subr.bf16.mxu0 0
      %547 = vmatpush1.bf16.msra.mxu0 0
      %548 = vmatprep.subr.bf16.mxu0 0
      %549 = vmatpush1.bf16.msra.mxu0 0
      %550 = vmatprep.subr.bf16.mxu0 0
      %551 = vmatpush1.bf16.msra.mxu0 0
      %552 = vmatprep.mubr.bf16.mxu0 0
      %553 = vmatmul.mubr.bf16.gmra.mrb[0].mxu0 %v440
      %v554 = vpop.f32.mrb[0].mxu0
      %v555 = vadd.f32 0.0, %v554
      %v556 = vpop.f32.mrb[0].mxu0
      %v557 = vpop.f32.mrb[0].mxu0
      %v558 = vadd.f32 0.0, %v557
      %v559 = vpop.f32.mrb[0].mxu0
      %560 = vmatprep.mubr.bf16.mxu0 0
      %561 = vmatmul.mubr.bf16.gmra.mrb[0].mxu0 %v441
      %v562 = vpop.f32.mrb[0].mxu0
      %v563 = vadd.f32 0.0, %v562
      %v564 = vpop.f32.mrb[0].mxu0
      %v565 = vpop.f32.mrb[0].mxu0
      %v566 = vadd.f32 0.0, %v565
      %v567 = vpop.f32.mrb[0].mxu0
      %568 = vmatprep.mubr.bf16.mxu0 0
      %569 = vmatmul.mubr.bf16.gmra.mrb[0].mxu0 %v442
      %v570 = vpop.f32.mrb[0].mxu0
      %v571 = vadd.f32 0.0, %v570
      %v572 = vpop.f32.mrb[0].mxu0
      %v573 = vpop.f32.mrb[0].mxu0
      %v574 = vadd.f32 0.0, %v573
      %v575 = vpop.f32.mrb[0].mxu0
      %576 = vmatprep.mubr.bf16.mxu0 0
      %577 = vmatmul.mubr.bf16.gmra.mrb[0].mxu0 %v443
      %v578 = vpop.f32.mrb[0].mxu0
      %v579 = vadd.f32 0.0, %v578
      %v580 = vpop.f32.mrb[0].mxu0
      %v581 = vpop.f32.mrb[0].mxu0
      %v582 = vadd.f32 0.0, %v581
      %v583 = vpop.f32.mrb[0].mxu0
      %584 = vmatprep.mubr.bf16.mxu0 0
      %585 = vmatmul.mubr.bf16.gmra.mrb[0].mxu0 %v444
      %v586 = vpop.f32.mrb[0].mxu0
      %v587 = vadd.f32 0.0, %v586
      %v588 = vpop.f32.mrb[0].mxu0
      %v589 = vpop.f32.mrb[0].mxu0
      %v590 = vadd.f32 0.0, %v589
      %v591 = vpop.f32.mrb[0].mxu0
      %592 = vmatprep.mubr.bf16.mxu0 0
      %593 = vmatmul.mubr.bf16.gmra.mrb[0].mxu0 %v445
      %v594 = vpop.f32.mrb[0].mxu0
      %v595 = vadd.f32 0.0, %v594
      %v596 = vpop.f32.mrb[0].mxu0
      %v597 = vpop.f32.mrb[0].mxu0
      %v598 = vadd.f32 0.0, %v597
      %v599 = vpop.f32.mrb[0].mxu0
      %600 = vmatprep.mubr.bf16.mxu0 0
      %601 = vmatmul.mubr.bf16.gmra.mrb[0].mxu0 %v446
      %v602 = vpop.f32.mrb[0].mxu0
      %v603 = vadd.f32 0.0, %v602
      %v604 = vpop.f32.mrb[0].mxu0
      %v605 = vpop.f32.mrb[0].mxu0
      %v606 = vadd.f32 0.0, %v605
      %v607 = vpop.f32.mrb[0].mxu0
      %608 = vmatprep.mubr.bf16.mxu0 0
      %609 = vmatmul.mubr.bf16.gmra.mrb[0].mxu0 %v447
      %v610 = vpop.f32.mrb[0].mxu0
      %v611 = vadd.f32 0.0, %v610
      %v612 = vpop.f32.mrb[0].mxu0
      %v613 = vpop.f32.mrb[0].mxu0
      %v614 = vadd.f32 0.0, %v613
      %v615 = vpop.f32.mrb[0].mxu0
      %616 = vmatprep.mubr.bf16.mxu0 0
      %617 = vmatmul.mubr.bf16.gmra.mrb[0].mxu0 %v448
      %v618 = vpop.f32.mrb[0].mxu0
      %v619 = vadd.f32 0.0, %v618
      %v620 = vpop.f32.mrb[0].mxu0
      %v621 = vpop.f32.mrb[0].mxu0
      %v622 = vadd.f32 0.0, %v621
      %v623 = vpop.f32.mrb[0].mxu0
      %624 = vmatprep.mubr.bf16.mxu0 0
      %625 = vmatmul.mubr.bf16.gmra.mrb[0].mxu0 %v449
      %v626 = vpop.f32.mrb[0].mxu0
      %v627 = vadd.f32 0.0, %v626
      %v628 = vpop.f32.mrb[0].mxu0
      %v629 = vpop.f32.mrb[0].mxu0
      %v630 = vadd.f32 0.0, %v629
      %v631 = vpop.f32.mrb[0].mxu0
      %632 = vmatprep.mubr.bf16.mxu0 0
      %633 = vmatmul.mubr.bf16.gmra.mrb[0].mxu0 %v450
      %v634 = vpop.f32.mrb[0].mxu0
      %v635 = vadd.f32 0.0, %v634
      %v636 = vpop.f32.mrb[0].mxu0
      %v637 = vpop.f32.mrb[0].mxu0
      %v638 = vadd.f32 0.0, %v637
      %v639 = vpop.f32.mrb[0].mxu0
      %640 = vmatprep.mubr.bf16.mxu0 0
      %641 = vmatmul.mubr.bf16.gmra.mrb[0].mxu0 %v451
      %v642 = vpop.f32.mrb[0].mxu0
      %v643 = vadd.f32 0.0, %v642
      %v644 = vpop.f32.mrb[0].mxu0
      %v645 = vpop.f32.mrb[0].mxu0
      %v646 = vadd.f32 0.0, %v645
      %v647 = vpop.f32.mrb[0].mxu0
      %648 = vmatprep.mubr.bf16.mxu0 0
      %649 = vmatmul.mubr.bf16.gmra.mrb[0].mxu0 %v452
      %v650 = vpop.f32.mrb[0].mxu0
      %v651 = vadd.f32 0.0, %v650
      %v652 = vpop.f32.mrb[0].mxu0
      %v653 = vpop.f32.mrb[0].mxu0
      %v654 = vadd.f32 0.0, %v653
      %v655 = vpop.f32.mrb[0].mxu0
      %656 = vmatprep.mubr.bf16.mxu0 0
      %657 = vmatmul.mubr.bf16.gmra.mrb[0].mxu0 %v453
      %v658 = vpop.f32.mrb[0].mxu0
      %v659 = vadd.f32 0.0, %v658
      %v660 = vpop.f32.mrb[0].mxu0
      %v661 = vpop.f32.mrb[0].mxu0
      %v662 = vadd.f32 0.0, %v661
      %v663 = vpop.f32.mrb[0].mxu0
      %664 = vmatprep.mubr.bf16.mxu0 0
      %665 = vmatmul.mubr.bf16.gmra.mrb[0].mxu0 %v454
      %v666 = vpop.f32.mrb[0].mxu0
      %v667 = vadd.f32 0.0, %v666
      %v668 = vpop.f32.mrb[0].mxu0
      %v669 = vpop.f32.mrb[0].mxu0
      %v670 = vadd.f32 0.0, %v669
      %v671 = vpop.f32.mrb[0].mxu0
      %672 = vmatprep.mubr.bf16.mxu0 0
      %673 = vmatmul.mubr.bf16.gmra.mrb[0].mxu0 %v455
      %v674 = vpop.f32.mrb[0].mxu0
      %v675 = vadd.f32 0.0, %v674
      %v676 = vpop.f32.mrb[0].mxu0
      %v677 = vpop.f32.mrb[0].mxu0
      %v678 = vadd.f32 0.0, %v677
      %v679 = vpop.f32.mrb[0].mxu0
      %680 = vdwg.mxu0
      %v681 = vadd.f32 %v296, %v555
      %v682 = vadd.f32 %v297, %v558
      %v683 = vadd.f32 %v298, %v563
      %v684 = vadd.f32 %v299, %v566
      %v685 = vadd.f32 %v300, %v571
      %v686 = vadd.f32 %v301, %v574
      %v687 = vadd.f32 %v302, %v579
      %v688 = vadd.f32 %v303, %v582
      %v689 = vadd.f32 %v304, %v587
      %v690 = vadd.f32 %v305, %v590
      %v691 = vadd.f32 %v306, %v595
      %v692 = vadd.f32 %v307, %v598
      %v693 = vadd.f32 %v308, %v603
      %v694 = vadd.f32 %v309, %v606
      %v695 = vadd.f32 %v310, %v611
      %v696 = vadd.f32 %v311, %v614
      %v697 = vadd.f32 %v312, %v619
      %v698 = vadd.f32 %v313, %v622
      %v699 = vadd.f32 %v314, %v627
      %v700 = vadd.f32 %v315, %v630
      %v701 = vadd.f32 %v316, %v635
      %v702 = vadd.f32 %v317, %v638
      %v703 = vadd.f32 %v318, %v643
      %v704 = vadd.f32 %v319, %v646
      %v705 = vadd.f32 %v320, %v651
      %v706 = vadd.f32 %v321, %v654
      %v707 = vadd.f32 %v322, %v659
      %v708 = vadd.f32 %v323, %v662
      %v709 = vadd.f32 %v324, %v667
      %v710 = vadd.f32 %v325, %v670
      %v711 = vadd.f32 %v326, %v675
      %v712 = vadd.f32 %v327, %v678
      %713 = vst [vmem:[#allocation2] sm:$0xff] %v681
      %714 = vst [vmem:[#allocation2 + $0x8] sm:$0xff] %v682
      %715 = vst [vmem:[#allocation2 + $0x10] sm:$0xff] %v683
      %716 = vst [vmem:[#allocation2 + $0x18] sm:$0xff] %v684
      %717 = vst [vmem:[#allocation2 + $0x20] sm:$0xff] %v685
      %718 = vst [vmem:[#allocation2 + $0x28] sm:$0xff] %v686
      %719 = vst [vmem:[#allocation2 + $0x30] sm:$0xff] %v687
      %720 = vst [vmem:[#allocation2 + $0x38] sm:$0xff] %v688
      %721 = vst [vmem:[#allocation2 + $0x40] sm:$0xff] %v689
      %722 = vst [vmem:[#allocation2 + $0x48] sm:$0xff] %v690
      %723 = vst [vmem:[#allocation2 + $0x50] sm:$0xff] %v691
      %724 = vst [vmem:[#allocation2 + $0x58] sm:$0xff] %v692
      %725 = vst [vmem:[#allocation2 + $0x60] sm:$0xff] %v693
      %726 = vst [vmem:[#allocation2 + $0x68] sm:$0xff] %v694
      %727 = vst [vmem:[#allocation2 + $0x70] sm:$0xff] %v695
      %728 = vst [vmem:[#allocation2 + $0x78] sm:$0xff] %v696
      %729 = vst [vmem:[#allocation2 + $0x80] sm:$0xff] %v697
      %730 = vst [vmem:[#allocation2 + $0x88] sm:$0xff] %v698
      %731 = vst [vmem:[#allocation2 + $0x90] sm:$0xff] %v699
      %732 = vst [vmem:[#allocation2 + $0x98] sm:$0xff] %v700
      %733 = vst [vmem:[#allocation2 + $0xa0] sm:$0xff] %v701
      %734 = vst [vmem:[#allocation2 + $0xa8] sm:$0xff] %v702
      %735 = vst [vmem:[#allocation2 + $0xb0] sm:$0xff] %v703
      %736 = vst [vmem:[#allocation2 + $0xb8] sm:$0xff] %v704
      %737 = vst [vmem:[#allocation2 + $0xc0] sm:$0xff] %v705
      %738 = vst [vmem:[#allocation2 + $0xc8] sm:$0xff] %v706
      %739 = vst [vmem:[#allocation2 + $0xd0] sm:$0xff] %v707
      %740 = vst [vmem:[#allocation2 + $0xd8] sm:$0xff] %v708
      %741 = vst [vmem:[#allocation2 + $0xe0] sm:$0xff] %v709
      %742 = vst [vmem:[#allocation2 + $0xe8] sm:$0xff] %v710
      %743 = vst [vmem:[#allocation2 + $0xf0] sm:$0xff] %v711
      %744 = vst [vmem:[#allocation2 + $0xf8] sm:$0xff] %v712
      // Predicated region
      $region37: #{video_features_forward.72} parent=31 // pred_check
        %p745 = pneg %p260
      $region38: #{video_features_forward.72} parent=31 // pred_check_branch
        %747 = sbr.rel (%p745) target = $region40
      $region39: #{video_features_forward.72} parent=31 // pred_region
        %v748 = vld [vmem:[#allocation2] sm:$0xff]
        %v749 = vld [vmem:[#allocation2 + $0x8] sm:$0xff]
        %v750 = vld [vmem:[#allocation2 + $0x10] sm:$0xff]
        %v751 = vld [vmem:[#allocation2 + $0x18] sm:$0xff]
        %v752 = vld [vmem:[#allocation2 + $0x20] sm:$0xff]
        %v753 = vld [vmem:[#allocation2 + $0x28] sm:$0xff]
        %v754 = vld [vmem:[#allocation2 + $0x30] sm:$0xff]
        %v755 = vld [vmem:[#allocation2 + $0x38] sm:$0xff]
        %v756 = vld [vmem:[#allocation2 + $0x40] sm:$0xff]
        %v757 = vld [vmem:[#allocation2 + $0x48] sm:$0xff]
        %v758 = vld [vmem:[#allocation2 + $0x50] sm:$0xff]
        %v759 = vld [vmem:[#allocation2 + $0x58] sm:$0xff]
        %v760 = vld [vmem:[#allocation2 + $0x60] sm:$0xff]
        %v761 = vld [vmem:[#allocation2 + $0x68] sm:$0xff]
        %v762 = vld [vmem:[#allocation2 + $0x70] sm:$0xff]
        %v763 = vld [vmem:[#allocation2 + $0x78] sm:$0xff]
        %v764 = vld [vmem:[#allocation2 + $0x80] sm:$0xff]
        %v765 = vld [vmem:[#allocation2 + $0x88] sm:$0xff]
        %v766 = vld [vmem:[#allocation2 + $0x90] sm:$0xff]
        %v767 = vld [vmem:[#allocation2 + $0x98] sm:$0xff]
        %v768 = vld [vmem:[#allocation2 + $0xa0] sm:$0xff]
        %v769 = vld [vmem:[#allocation2 + $0xa8] sm:$0xff]
        %v770 = vld [vmem:[#allocation2 + $0xb0] sm:$0xff]
        %v771 = vld [vmem:[#allocation2 + $0xb8] sm:$0xff]
        %v772 = vld [vmem:[#allocation2 + $0xc0] sm:$0xff]
        %v773 = vld [vmem:[#allocation2 + $0xc8] sm:$0xff]
        %v774 = vld [vmem:[#allocation2 + $0xd0] sm:$0xff]
        %v775 = vld [vmem:[#allocation2 + $0xd8] sm:$0xff]
        %v776 = vld [vmem:[#allocation2 + $0xe0] sm:$0xff]
        %v777 = vld [vmem:[#allocation2 + $0xe8] sm:$0xff]
        %v778 = vld [vmem:[#allocation2 + $0xf0] sm:$0xff]
        %v779 = vld [vmem:[#allocation2 + $0xf8] sm:$0xff]
        %v780 = vld [vmem:[%s249] sm:$0x1]
        %v782 = vlaneseq
        %v783 = vshrl.u32 %v782, 7
        %v784 = vsub.s32 0, %v783
        %v785 = vrot.slane %v780, %v784
        %v787 = vadd.f32 %v748, %v785
        %v788 = vadd.f32 %v749, %v785
        %v789 = vadd.f32 %v750, %v785
        %v790 = vadd.f32 %v751, %v785
        %v791 = vadd.f32 %v752, %v785
        %v792 = vadd.f32 %v753, %v785
        %v793 = vadd.f32 %v754, %v785
        %v794 = vadd.f32 %v755, %v785
        %v795 = vadd.f32 %v756, %v785
        %v796 = vadd.f32 %v757, %v785
        %v797 = vadd.f32 %v758, %v785
        %v798 = vadd.f32 %v759, %v785
        %v799 = vadd.f32 %v760, %v785
        %v800 = vadd.f32 %v761, %v785
        %v801 = vadd.f32 %v762, %v785
        %v802 = vadd.f32 %v763, %v785
        %v803 = vadd.f32 %v764, %v785
        %v804 = vadd.f32 %v765, %v785
        %v805 = vadd.f32 %v766, %v785
        %v806 = vadd.f32 %v767, %v785
        %v807 = vadd.f32 %v768, %v785
        %v808 = vadd.f32 %v769, %v785
        %v809 = vadd.f32 %v770, %v785
        %v810 = vadd.f32 %v771, %v785
        %v811 = vadd.f32 %v772, %v785
        %v812 = vadd.f32 %v773, %v785
        %v813 = vadd.f32 %v774, %v785
        %v814 = vadd.f32 %v775, %v785
        %v815 = vadd.f32 %v776, %v785
        %v816 = vadd.f32 %v777, %v785
        %v817 = vadd.f32 %v778, %v785
        %v818 = vadd.f32 %v779, %v785
        %819 = vst [vmem:[%s257] sm:$0xff] %v787
        %820 = vst [vmem:[%s257 + $0x8] sm:$0xff] %v788
        %821 = vst [vmem:[%s257 + $0x10] sm:$0xff] %v789
        %822 = vst [vmem:[%s257 + $0x18] sm:$0xff] %v790
        %823 = vst [vmem:[%s257 + $0x20] sm:$0xff] %v791
        %824 = vst [vmem:[%s257 + $0x28] sm:$0xff] %v792
        %825 = vst [vmem:[%s257 + $0x30] sm:$0xff] %v793
        %826 = vst [vmem:[%s257 + $0x38] sm:$0xff] %v794
        %827 = vst [vmem:[%s257 + $0x40] sm:$0xff] %v795
        %828 = vst [vmem:[%s257 + $0x48] sm:$0xff] %v796
        %829 = vst [vmem:[%s257 + $0x50] sm:$0xff] %v797
        %830 = vst [vmem:[%s257 + $0x58] sm:$0xff] %v798
        %831 = vst [vmem:[%s257 + $0x60] sm:$0xff] %v799
        %832 = vst [vmem:[%s257 + $0x68] sm:$0xff] %v800
        %833 = vst [vmem:[%s257 + $0x70] sm:$0xff] %v801
        %834 = vst [vmem:[%s257 + $0x78] sm:$0xff] %v802
        %835 = vst [vmem:[%s257 + $0x80] sm:$0xff] %v803
        %836 = vst [vmem:[%s257 + $0x88] sm:$0xff] %v804
        %837 = vst [vmem:[%s257 + $0x90] sm:$0xff] %v805
        %838 = vst [vmem:[%s257 + $0x98] sm:$0xff] %v806
        %839 = vst [vmem:[%s257 + $0xa0] sm:$0xff] %v807
        %840 = vst [vmem:[%s257 + $0xa8] sm:$0xff] %v808
        %841 = vst [vmem:[%s257 + $0xb0] sm:$0xff] %v809
        %842 = vst [vmem:[%s257 + $0xb8] sm:$0xff] %v810
        %843 = vst [vmem:[%s257 + $0xc0] sm:$0xff] %v811
        %844 = vst [vmem:[%s257 + $0xc8] sm:$0xff] %v812
        %845 = vst [vmem:[%s257 + $0xd0] sm:$0xff] %v813
        %846 = vst [vmem:[%s257 + $0xd8] sm:$0xff] %v814
        %847 = vst [vmem:[%s257 + $0xe0] sm:$0xff] %v815
        %848 = vst [vmem:[%s257 + $0xe8] sm:$0xff] %v816
        %849 = vst [vmem:[%s257 + $0xf0] sm:$0xff] %v817
        %850 = vst [vmem:[%s257 + $0xf8] sm:$0xff] %v818
      $region40: #{video_features_forward.72} parent=31 // pred_fallthru
        _
      %s851 = smul.u32 32, %s19
      %p852 = scmp.lt.s32.totalorder %s851, 63
      %s853 = scalar_select %p852, %s851, 63
      %p854 = scmp.lt.s32.totalorder %s20, 0
      %s855 = scalar_select %p854, %s20, 0
      %s856 = sadd.s32 %s855, %s853
      %s857 = smul.addr %s856, 8
      %s858 = scalar_lea.vmem %s3, %s857
      // Predicated region
      $region41: #{video_features_forward.72} parent=31 // pred_check
        %p859 = pneg %p135
      $region42: #{video_features_forward.72} parent=31 // pred_check_branch
        %861 = sbr.rel (%p859) target = $region44
      $region43: #{video_features_forward.72} parent=31 // pred_region
        %s862 = smul.u32 32, %s19
      $region44: #{video_features_forward.72} parent=31 // pred_fallthru
        _
    $region32: #{video_features_forward.72} parent=5 // pred_fallthru
      _
    %p863 = scmp.le.s32.totalorder 2, %s9
    // Predicated region
    $region45: #{video_features_forward.72} parent=5 // pred_check
      %p864 = pneg %p863
    $region46: #{video_features_forward.72} parent=5 // pred_check_branch
      %866 = sbr.rel (%p864) target = $region48
    $region47: #{video_features_forward.72} parent=5 // pred_region
      %s867 = ssub.s32 %s9, 2
      // Predicated region
      $region49: #{video_features_forward.72} parent=47 // pred_check
        %p868 = pneg %p141
      $region50: #{video_features_forward.72} parent=47 // pred_check_branch
        %870 = sbr.rel (%p868) target = $region52
      $region51: #{video_features_forward.72} parent=47 // pred_region
        %s871 = smul.u32 32, %s22
        %p872 = scmp.lt.s32.totalorder %s871, 63
        %s873 = scalar_select %p872, %s871, 63
        %p874 = scmp.lt.s32.totalorder %s23, 0
        %s875 = scalar_select %p874, %s23, 0
        %s876 = sadd.s32 %s875, %s873
        %s877 = smul.addr %s876, 8
        %s878 = scalar_lea.vmem %s3, %s877
      $region52: #{video_features_forward.72} parent=47 // pred_fallthru
        _
    $region48: #{video_features_forward.72} parent=5 // pred_fallthru
      _
  $region6: #{video_features_forward.72} parent=0 // loop_footer
    %s13 = sadd.s32 1, %s9
  $region7: #{video_features_forward.72} parent=0 // loop_footer_branch
    %8 = sbr.rel target = $region3
  $region8: #{video_features_forward.72} parent=0 // loop_exit
    _

// kernel: video_features_forward.74
$region0: #{video_features_forward.74}
  #allocation0 [shape = 'u32[]', space=smem, size = 0x4, offset = 0x4, fixed_abs, tag = 'smem constant byte address 0x4 - core index']
  #allocation1 [shape = 'u32[144,128]{1,0:T(1,128)}', space=vmem, size = 0x12000, scoped, tag = 'internal scratch']
  %s0 = inlined_call_operand.vmem [shape: f32[512,128], index: 0, kind: input, shape index: {}]
  %s1 = inlined_call_operand.vmem [shape: f32[512,128], index: 1, kind: input, shape index: {}]
  %s2 = inlined_call_operand.vmem [shape: f32[512,128], index: 2, kind: output, shape index: {}]
  %s3 = sld [smem:[#allocation0]]
  $region18: #{video_features_forward.74} parent=0
    _
  %s5 = ssub.s32 1, %s3
  %s6 = scalar_select 0, %s5, %s3
  // Predicated region
  $region2: #{video_features_forward.74} parent=0 // pred_check
    _
  $region3: #{video_features_forward.74} parent=0 // pred_check_branch
    %8 = sbr.rel (0) target = $region5
  $region4: #{video_features_forward.74} parent=0 // pred_region
    _
  $region5: #{video_features_forward.74} parent=0 // pred_fallthru
    _
  // Predicated region
  $region6: #{video_features_forward.74} parent=0 // pred_check
    _
  $region7: #{video_features_forward.74} parent=0 // pred_check_branch
    %10 = sbr.rel (0) target = $region9
  $region8: #{video_features_forward.74} parent=0 // pred_region
    _
  $region9: #{video_features_forward.74} parent=0 // pred_fallthru
    _
  %v11 = vld [vmem:[%s0] sm:$0xff]
  %v12 = vld [vmem:[%s0 + $0x8] sm:$0xff]
  %v13 = vld [vmem:[%s0 + $0x10] sm:$0xff]
  %v14 = vld [vmem:[%s0 + $0x18] sm:$0xff]
  %v15 = vld [vmem:[%s0 + $0x20] sm:$0xff]
  %v16 = vld [vmem:[%s0 + $0x28] sm:$0xff]
  %v17 = vld [vmem:[%s0 + $0x30] sm:$0xff]
  %v18 = vld [vmem:[%s0 + $0x38] sm:$0xff]
  %v19 = vld [vmem:[%s0 + $0x40] sm:$0xff]
  %v20 = vld [vmem:[%s0 + $0x48] sm:$0xff]
  %v21 = vld [vmem:[%s0 + $0x50] sm:$0xff]
  %v22 = vld [vmem:[%s0 + $0x58] sm:$0xff]
  %v23 = vld [vmem:[%s0 + $0x60] sm:$0xff]
  %v24 = vld [vmem:[%s0 + $0x68] sm:$0xff]
  %v25 = vld [vmem:[%s0 + $0x70] sm:$0xff]
  %v26 = vld [vmem:[%s0 + $0x78] sm:$0xff]
  %v27 = vld [vmem:[%s0 + $0x80] sm:$0xff]
  %v28 = vld [vmem:[%s0 + $0x88] sm:$0xff]
  %v29 = vld [vmem:[%s0 + $0x90] sm:$0xff]
  %v30 = vld [vmem:[%s0 + $0x98] sm:$0xff]
  %v31 = vld [vmem:[%s0 + $0xa0] sm:$0xff]
  %v32 = vld [vmem:[%s0 + $0xa8] sm:$0xff]
  %v33 = vld [vmem:[%s0 + $0xb0] sm:$0xff]
  %v34 = vld [vmem:[%s0 + $0xb8] sm:$0xff]
  %v35 = vld [vmem:[%s0 + $0xc0] sm:$0xff]
  %v36 = vld [vmem:[%s0 + $0xc8] sm:$0xff]
  %v37 = vld [vmem:[%s0 + $0xd0] sm:$0xff]
  %v38 = vld [vmem:[%s0 + $0xd8] sm:$0xff]
  %v39 = vld [vmem:[%s0 + $0xe0] sm:$0xff]
  %v40 = vld [vmem:[%s0 + $0xe8] sm:$0xff]
  %v41 = vld [vmem:[%s0 + $0xf0] sm:$0xff]
  %v42 = vld [vmem:[%s0 + $0xf8] sm:$0xff]
  %v43 = vld [vmem:[%s0 + $0x100] sm:$0xff]
  %v44 = vld [vmem:[%s0 + $0x108] sm:$0xff]
  %v45 = vld [vmem:[%s0 + $0x110] sm:$0xff]
  %v46 = vld [vmem:[%s0 + $0x118] sm:$0xff]
  %v47 = vld [vmem:[%s0 + $0x120] sm:$0xff]
  %v48 = vld [vmem:[%s0 + $0x128] sm:$0xff]
  %v49 = vld [vmem:[%s0 + $0x130] sm:$0xff]
  %v50 = vld [vmem:[%s0 + $0x138] sm:$0xff]
  %v51 = vld [vmem:[%s0 + $0x140] sm:$0xff]
  %v52 = vld [vmem:[%s0 + $0x148] sm:$0xff]
  %v53 = vld [vmem:[%s0 + $0x150] sm:$0xff]
  %v54 = vld [vmem:[%s0 + $0x158] sm:$0xff]
  %v55 = vld [vmem:[%s0 + $0x160] sm:$0xff]
  %v56 = vld [vmem:[%s0 + $0x168] sm:$0xff]
  %v57 = vld [vmem:[%s0 + $0x170] sm:$0xff]
  %v58 = vld [vmem:[%s0 + $0x178] sm:$0xff]
  %v59 = vld [vmem:[%s0 + $0x180] sm:$0xff]
  %v60 = vld [vmem:[%s0 + $0x188] sm:$0xff]
  %v61 = vld [vmem:[%s0 + $0x190] sm:$0xff]
  %v62 = vld [vmem:[%s0 + $0x198] sm:$0xff]
  %v63 = vld [vmem:[%s0 + $0x1a0] sm:$0xff]
  %v64 = vld [vmem:[%s0 + $0x1a8] sm:$0xff]
  %v65 = vld [vmem:[%s0 + $0x1b0] sm:$0xff]
  %v66 = vld [vmem:[%s0 + $0x1b8] sm:$0xff]
  %v67 = vld [vmem:[%s0 + $0x1c0] sm:$0xff]
  %v68 = vld [vmem:[%s0 + $0x1c8] sm:$0xff]
  %v69 = vld [vmem:[%s0 + $0x1d0] sm:$0xff]
  %v70 = vld [vmem:[%s0 + $0x1d8] sm:$0xff]
  %v71 = vld [vmem:[%s0 + $0x1e0] sm:$0xff]
  %v72 = vld [vmem:[%s0 + $0x1e8] sm:$0xff]
  %v73 = vld [vmem:[%s0 + $0x1f0] sm:$0xff]
  %v74 = vld [vmem:[%s0 + $0x1f8] sm:$0xff]
  %v75 = vld [vmem:[%s1] sm:$0xff]
  %v76 = vld [vmem:[%s1 + $0x8] sm:$0xff]
  %v77 = vld [vmem:[%s1 + $0x10] sm:$0xff]
  %v78 = vld [vmem:[%s1 + $0x18] sm:$0xff]
  %v79 = vld [vmem:[%s1 + $0x20] sm:$0xff]
  %v80 = vld [vmem:[%s1 + $0x28] sm:$0xff]
  %v81 = vld [vmem:[%s1 + $0x30] sm:$0xff]
  %v82 = vld [vmem:[%s1 + $0x38] sm:$0xff]
  %v83 = vld [vmem:[%s1 + $0x40] sm:$0xff]
  %v84 = vld [vmem:[%s1 + $0x48] sm:$0xff]
  %v85 = vld [vmem:[%s1 + $0x50] sm:$0xff]
  %v86 = vld [vmem:[%s1 + $0x58] sm:$0xff]
  %v87 = vld [vmem:[%s1 + $0x60] sm:$0xff]
  %v88 = vld [vmem:[%s1 + $0x68] sm:$0xff]
  %v89 = vld [vmem:[%s1 + $0x70] sm:$0xff]
  %v90 = vld [vmem:[%s1 + $0x78] sm:$0xff]
  %v91 = vld [vmem:[%s1 + $0x80] sm:$0xff]
  %v92 = vld [vmem:[%s1 + $0x88] sm:$0xff]
  %v93 = vld [vmem:[%s1 + $0x90] sm:$0xff]
  %v94 = vld [vmem:[%s1 + $0x98] sm:$0xff]
  %v95 = vld [vmem:[%s1 + $0xa0] sm:$0xff]
  %v96 = vld [vmem:[%s1 + $0xa8] sm:$0xff]
  %v97 = vld [vmem:[%s1 + $0xb0] sm:$0xff]
  %v98 = vld [vmem:[%s1 + $0xb8] sm:$0xff]
  %v99 = vld [vmem:[%s1 + $0xc0] sm:$0xff]
  %v100 = vld [vmem:[%s1 + $0xc8] sm:$0xff]
  %v101 = vld [vmem:[%s1 + $0xd0] sm:$0xff]
  %v102 = vld [vmem:[%s1 + $0xd8] sm:$0xff]
  %v103 = vld [vmem:[%s1 + $0xe0] sm:$0xff]
  %v104 = vld [vmem:[%s1 + $0xe8] sm:$0xff]
  %v105 = vld [vmem:[%s1 + $0xf0] sm:$0xff]
  %v106 = vld [vmem:[%s1 + $0xf8] sm:$0xff]
  %v107 = vld [vmem:[%s1 + $0x100] sm:$0xff]
  %v108 = vld [vmem:[%s1 + $0x108] sm:$0xff]
  %v109 = vld [vmem:[%s1 + $0x110] sm:$0xff]
  %v110 = vld [vmem:[%s1 + $0x118] sm:$0xff]
  %v111 = vld [vmem:[%s1 + $0x120] sm:$0xff]
  %v112 = vld [vmem:[%s1 + $0x128] sm:$0xff]
  %v113 = vld [vmem:[%s1 + $0x130] sm:$0xff]
  %v114 = vld [vmem:[%s1 + $0x138] sm:$0xff]
  %v115 = vld [vmem:[%s1 + $0x140] sm:$0xff]
  %v116 = vld [vmem:[%s1 + $0x148] sm:$0xff]
  %v117 = vld [vmem:[%s1 + $0x150] sm:$0xff]
  %v118 = vld [vmem:[%s1 + $0x158] sm:$0xff]
  %v119 = vld [vmem:[%s1 + $0x160] sm:$0xff]
  %v120 = vld [vmem:[%s1 + $0x168] sm:$0xff]
  %v121 = vld [vmem:[%s1 + $0x170] sm:$0xff]
  %v122 = vld [vmem:[%s1 + $0x178] sm:$0xff]
  %v123 = vld [vmem:[%s1 + $0x180] sm:$0xff]
  %v124 = vld [vmem:[%s1 + $0x188] sm:$0xff]
  %v125 = vld [vmem:[%s1 + $0x190] sm:$0xff]
  %v126 = vld [vmem:[%s1 + $0x198] sm:$0xff]
  %v127 = vld [vmem:[%s1 + $0x1a0] sm:$0xff]
  %v128 = vld [vmem:[%s1 + $0x1a8] sm:$0xff]
  %v129 = vld [vmem:[%s1 + $0x1b0] sm:$0xff]
  %v130 = vld [vmem:[%s1 + $0x1b8] sm:$0xff]
  %v131 = vld [vmem:[%s1 + $0x1c0] sm:$0xff]
  %v132 = vld [vmem:[%s1 + $0x1c8] sm:$0xff]
  %v133 = vld [vmem:[%s1 + $0x1d0] sm:$0xff]
  %v134 = vld [vmem:[%s1 + $0x1d8] sm:$0xff]
  %v135 = vld [vmem:[%s1 + $0x1e0] sm:$0xff]
  %v136 = vld [vmem:[%s1 + $0x1e8] sm:$0xff]
  %v137 = vld [vmem:[%s1 + $0x1f0] sm:$0xff]
  %v138 = vld [vmem:[%s1 + $0x1f8] sm:$0xff]
  %v139 = vadd.f32 %v11, %v75
  %v140 = vadd.f32 %v12, %v76
  %v141 = vadd.f32 %v13, %v77
  %v142 = vadd.f32 %v14, %v78
  %v143 = vadd.f32 %v15, %v79
  %v144 = vadd.f32 %v16, %v80
  %v145 = vadd.f32 %v17, %v81
  %v146 = vadd.f32 %v18, %v82
  %v147 = vadd.f32 %v19, %v83
  %v148 = vadd.f32 %v20, %v84
  %v149 = vadd.f32 %v21, %v85
  %v150 = vadd.f32 %v22, %v86
  %v151 = vadd.f32 %v23, %v87
  %v152 = vadd.f32 %v24, %v88
  %v153 = vadd.f32 %v25, %v89
  %v154 = vadd.f32 %v26, %v90
  %v155 = vadd.f32 %v27, %v91
  %v156 = vadd.f32 %v28, %v92
  %v157 = vadd.f32 %v29, %v93
  %v158 = vadd.f32 %v30, %v94
  %v159 = vadd.f32 %v31, %v95
  %v160 = vadd.f32 %v32, %v96
  %v161 = vadd.f32 %v33, %v97
  %v162 = vadd.f32 %v34, %v98
  %v163 = vadd.f32 %v35, %v99
  %v164 = vadd.f32 %v36, %v100
  %v165 = vadd.f32 %v37, %v101
  %v166 = vadd.f32 %v38, %v102
  %v167 = vadd.f32 %v39, %v103
  %v168 = vadd.f32 %v40, %v104
  %v169 = vadd.f32 %v41, %v105
  %v170 = vadd.f32 %v42, %v106
  %v171 = vadd.f32 %v43, %v107
  %v172 = vadd.f32 %v44, %v108
  %v173 = vadd.f32 %v45, %v109
  %v174 = vadd.f32 %v46, %v110
  %v175 = vadd.f32 %v47, %v111
  %v176 = vadd.f32 %v48, %v112
  %v177 = vadd.f32 %v49, %v113
  %v178 = vadd.f32 %v50, %v114
  %v179 = vadd.f32 %v51, %v115
  %v180 = vadd.f32 %v52, %v116
  %v181 = vadd.f32 %v53, %v117
  %v182 = vadd.f32 %v54, %v118
  %v183 = vadd.f32 %v55, %v119
  %v184 = vadd.f32 %v56, %v120
  %v185 = vadd.f32 %v57, %v121
  %v186 = vadd.f32 %v58, %v122
  %v187 = vadd.f32 %v59, %v123
  %v188 = vadd.f32 %v60, %v124
  %v189 = vadd.f32 %v61, %v125
  %v190 = vadd.f32 %v62, %v126
  %v191 = vadd.f32 %v63, %v127
  %v192 = vadd.f32 %v64, %v128
  %v193 = vadd.f32 %v65, %v129
  %v194 = vadd.f32 %v66, %v130
  %v195 = vadd.f32 %v67, %v131
  %v196 = vadd.f32 %v68, %v132
  %v197 = vadd.f32 %v69, %v133
  %v198 = vadd.f32 %v70, %v134
  %v199 = vadd.f32 %v71, %v135
  %v200 = vadd.f32 %v72, %v136
  %v201 = vadd.f32 %v73, %v137
  %v202 = vadd.f32 %v74, %v138
  %v203 = vmax.f32 %v139, 0.0
  %v204 = vmax.f32 %v140, 0.0
  %v205 = vmax.f32 %v141, 0.0
  %v206 = vmax.f32 %v142, 0.0
  %v207 = vmax.f32 %v143, 0.0
  %v208 = vmax.f32 %v144, 0.0
  %v209 = vmax.f32 %v145, 0.0
  %v210 = vmax.f32 %v146, 0.0
  %v211 = vmax.f32 %v147, 0.0
  %v212 = vmax.f32 %v148, 0.0
  %v213 = vmax.f32 %v149, 0.0
  %v214 = vmax.f32 %v150, 0.0
  %v215 = vmax.f32 %v151, 0.0
  %v216 = vmax.f32 %v152, 0.0
  %v217 = vmax.f32 %v153, 0.0
  %v218 = vmax.f32 %v154, 0.0
  %v219 = vmax.f32 %v155, 0.0
  %v220 = vmax.f32 %v156, 0.0
  %v221 = vmax.f32 %v157, 0.0
  %v222 = vmax.f32 %v158, 0.0
  %v223 = vmax.f32 %v159, 0.0
  %v224 = vmax.f32 %v160, 0.0
  %v225 = vmax.f32 %v161, 0.0
  %v226 = vmax.f32 %v162, 0.0
  %v227 = vmax.f32 %v163, 0.0
  %v228 = vmax.f32 %v164, 0.0
  %v229 = vmax.f32 %v165, 0.0
  %v230 = vmax.f32 %v166, 0.0
  %v231 = vmax.f32 %v167, 0.0
  %v232 = vmax.f32 %v168, 0.0
  %v233 = vmax.f32 %v169, 0.0
  %v234 = vmax.f32 %v170, 0.0
  %v235 = vmax.f32 %v171, 0.0
  %v236 = vmax.f32 %v172, 0.0
  %v237 = vmax.f32 %v173, 0.0
  %v238 = vmax.f32 %v174, 0.0
  %v239 = vmax.f32 %v175, 0.0
  %v240 = vmax.f32 %v176, 0.0
  %v241 = vmax.f32 %v177, 0.0
  %v242 = vmax.f32 %v178, 0.0
  %v243 = vmax.f32 %v179, 0.0
  %v244 = vmax.f32 %v180, 0.0
  %v245 = vmax.f32 %v181, 0.0
  %v246 = vmax.f32 %v182, 0.0
  %v247 = vmax.f32 %v183, 0.0
  %v248 = vmax.f32 %v184, 0.0
  %v249 = vmax.f32 %v185, 0.0
  %v250 = vmax.f32 %v186, 0.0
  %v251 = vmax.f32 %v187, 0.0
  %v252 = vmax.f32 %v188, 0.0
  %v253 = vmax.f32 %v189, 0.0
  %v254 = vmax.f32 %v190, 0.0
  %v255 = vmax.f32 %v191, 0.0
  %v256 = vmax.f32 %v192, 0.0
  %v257 = vmax.f32 %v193, 0.0
  %v258 = vmax.f32 %v194, 0.0
  %v259 = vmax.f32 %v195, 0.0
  %v260 = vmax.f32 %v196, 0.0
  %v261 = vmax.f32 %v197, 0.0
  %v262 = vmax.f32 %v198, 0.0
  %v263 = vmax.f32 %v199, 0.0
  %v264 = vmax.f32 %v200, 0.0
  %v265 = vmax.f32 %v201, 0.0
  %v266 = vmax.f32 %v202, 0.0
  %267 = vst [vmem:[%s2] sm:$0xff] %v203
  %268 = vst [vmem:[%s2 + $0x8] sm:$0xff] %v204
  %269 = vst [vmem:[%s2 + $0x10] sm:$0xff] %v205
  %270 = vst [vmem:[%s2 + $0x18] sm:$0xff] %v206
  %271 = vst [vmem:[%s2 + $0x20] sm:$0xff] %v207
  %272 = vst [vmem:[%s2 + $0x28] sm:$0xff] %v208
  %273 = vst [vmem:[%s2 + $0x30] sm:$0xff] %v209
  %274 = vst [vmem:[%s2 + $0x38] sm:$0xff] %v210
  %275 = vst [vmem:[%s2 + $0x40] sm:$0xff] %v211
  %276 = vst [vmem:[%s2 + $0x48] sm:$0xff] %v212
  %277 = vst [vmem:[%s2 + $0x50] sm:$0xff] %v213
  %278 = vst [vmem:[%s2 + $0x58] sm:$0xff] %v214
  %279 = vst [vmem:[%s2 + $0x60] sm:$0xff] %v215
  %280 = vst [vmem:[%s2 + $0x68] sm:$0xff] %v216
  %281 = vst [vmem:[%s2 + $0x70] sm:$0xff] %v217
  %282 = vst [vmem:[%s2 + $0x78] sm:$0xff] %v218
  %283 = vst [vmem:[%s2 + $0x80] sm:$0xff] %v219
  %284 = vst [vmem:[%s2 + $0x88] sm:$0xff] %v220
  %285 = vst [vmem:[%s2 + $0x90] sm:$0xff] %v221
  %286 = vst [vmem:[%s2 + $0x98] sm:$0xff] %v222
  %287 = vst [vmem:[%s2 + $0xa0] sm:$0xff] %v223
  %288 = vst [vmem:[%s2 + $0xa8] sm:$0xff] %v224
  %289 = vst [vmem:[%s2 + $0xb0] sm:$0xff] %v225
  %290 = vst [vmem:[%s2 + $0xb8] sm:$0xff] %v226
  %291 = vst [vmem:[%s2 + $0xc0] sm:$0xff] %v227
  %292 = vst [vmem:[%s2 + $0xc8] sm:$0xff] %v228
  %293 = vst [vmem:[%s2 + $0xd0] sm:$0xff] %v229
  %294 = vst [vmem:[%s2 + $0xd8] sm:$0xff] %v230
  %295 = vst [vmem:[%s2 + $0xe0] sm:$0xff] %v231
  %296 = vst [vmem:[%s2 + $0xe8] sm:$0xff] %v232
  %297 = vst [vmem:[%s2 + $0xf0] sm:$0xff] %v233
  %298 = vst [vmem:[%s2 + $0xf8] sm:$0xff] %v234
  %299 = vst [vmem:[%s2 + $0x100] sm:$0xff] %v235
  %300 = vst [vmem:[%s2 + $0x108] sm:$0xff] %v236
  %301 = vst [vmem:[%s2 + $0x110] sm:$0xff] %v237
  %302 = vst [vmem:[%s2 + $0x118] sm:$0xff] %v238
  %303 = vst [vmem:[%s2 + $0x120] sm:$0xff] %v239
  %304 = vst [vmem:[%s2 + $0x128] sm:$0xff] %v240
  %305 = vst [vmem:[%s2 + $0x130] sm:$0xff] %v241
  %306 = vst [vmem:[%s2 + $0x138] sm:$0xff] %v242
  %307 = vst [vmem:[%s2 + $0x140] sm:$0xff] %v243
  %308 = vst [vmem:[%s2 + $0x148] sm:$0xff] %v244
  %309 = vst [vmem:[%s2 + $0x150] sm:$0xff] %v245
  %310 = vst [vmem:[%s2 + $0x158] sm:$0xff] %v246
  %311 = vst [vmem:[%s2 + $0x160] sm:$0xff] %v247
  %312 = vst [vmem:[%s2 + $0x168] sm:$0xff] %v248
  %313 = vst [vmem:[%s2 + $0x170] sm:$0xff] %v249
  %314 = vst [vmem:[%s2 + $0x178] sm:$0xff] %v250
  %315 = vst [vmem:[%s2 + $0x180] sm:$0xff] %v251
  %316 = vst [vmem:[%s2 + $0x188] sm:$0xff] %v252
  %317 = vst [vmem:[%s2 + $0x190] sm:$0xff] %v253
  %318 = vst [vmem:[%s2 + $0x198] sm:$0xff] %v254
  %319 = vst [vmem:[%s2 + $0x1a0] sm:$0xff] %v255
  %320 = vst [vmem:[%s2 + $0x1a8] sm:$0xff] %v256
  %321 = vst [vmem:[%s2 + $0x1b0] sm:$0xff] %v257
  %322 = vst [vmem:[%s2 + $0x1b8] sm:$0xff] %v258
  %323 = vst [vmem:[%s2 + $0x1c0] sm:$0xff] %v259
  %324 = vst [vmem:[%s2 + $0x1c8] sm:$0xff] %v260
  %325 = vst [vmem:[%s2 + $0x1d0] sm:$0xff] %v261
  %326 = vst [vmem:[%s2 + $0x1d8] sm:$0xff] %v262
  %327 = vst [vmem:[%s2 + $0x1e0] sm:$0xff] %v263
  %328 = vst [vmem:[%s2 + $0x1e8] sm:$0xff] %v264
  %329 = vst [vmem:[%s2 + $0x1f0] sm:$0xff] %v265
  %330 = vst [vmem:[%s2 + $0x1f8] sm:$0xff] %v266
  // Predicated region
  $region10: #{video_features_forward.74} parent=0 // pred_check
    _
  $region11: #{video_features_forward.74} parent=0 // pred_check_branch
    %332 = sbr.rel (0) target = $region13
  $region12: #{video_features_forward.74} parent=0 // pred_region
    _
  $region13: #{video_features_forward.74} parent=0 // pred_fallthru
    _
  // Predicated region
  $region14: #{video_features_forward.74} parent=0 // pred_check
    _
  $region15: #{video_features_forward.74} parent=0 // pred_check_branch
    %334 = sbr.rel (0) target = $region17
  $region16: #{video_features_forward.74} parent=0 // pred_region
    _
  $region17: #{video_features_forward.74} parent=0 // pred_fallthru
    _

// kernel: video_features_forward.85
$region0: #{video_features_forward.85}
  #allocation0 [shape = 'u32[]', space=smem, size = 0x4, offset = 0x4, fixed_abs, tag = 'smem constant byte address 0x4 - core index']
  #allocation1 [shape = 'u32[144,128]{1,0:T(1,128)}', space=vmem, size = 0x12000, scoped, tag = 'internal scratch']
  #allocation2 [shape = 'f32[128,128]{1,0:T(8,128)}', space=vmem, size = 0x10000, scoped, tag = 'scratch operand']
  %s0 = inlined_call_operand.vmem [shape: bf16[128,128], index: 0, kind: input, shape index: {}]
  %s1 = inlined_call_operand.vmem [shape: bf16[128,128], index: 1, kind: input, shape index: {}]
  %s2 = inlined_call_operand.vmem [shape: f32[1,128], index: 2, kind: input, shape index: {}]
  %s3 = inlined_call_operand.vmem [shape: f32[128,128], index: 3, kind: output, shape index: {}]
  %s4 = sld [smem:[#allocation0]]
  $region30: #{video_features_forward.85} parent=0
    _
  %s6 = ssub.s32 1, %s4
  %s7 = scalar_select 0, %s6, %s4
  // Predicated region
  $region2: #{video_features_forward.85} parent=0 // pred_check
    _
  $region3: #{video_features_forward.85} parent=0 // pred_check_branch
    %9 = sbr.rel (0) target = $region5
  $region4: #{video_features_forward.85} parent=0 // pred_region
    _
  $region5: #{video_features_forward.85} parent=0 // pred_fallthru
    _
  // Predicated region
  $region6: #{video_features_forward.85} parent=0 // pred_check
    _
  $region7: #{video_features_forward.85} parent=0 // pred_check_branch
    %11 = sbr.rel (0) target = $region9
  $region8: #{video_features_forward.85} parent=0 // pred_region
    _
  $region9: #{video_features_forward.85} parent=0 // pred_fallthru
    _
  // Predicated region
  $region10: #{video_features_forward.85} parent=0 // pred_check
    _
  $region11: #{video_features_forward.85} parent=0 // pred_check_branch
    %13 = sbr.rel (0) target = $region13
  $region12: #{video_features_forward.85} parent=0 // pred_region
    _
  $region13: #{video_features_forward.85} parent=0 // pred_fallthru
    _
  %p15 = scmp.eq.s32.totalorder 0, 0
  // Predicated region
  $region14: #{video_features_forward.85} parent=0 // pred_check
    %p16 = pneg %p15
  $region15: #{video_features_forward.85} parent=0 // pred_check_branch
    %18 = sbr.rel (%p16) target = $region17
  $region16: #{video_features_forward.85} parent=0 // pred_region
    %19 = vst [vmem:[#allocation2] sm:$0xff] 0.0
    %20 = vst [vmem:[#allocation2 + $0x8] sm:$0xff] 0.0
    %21 = vst [vmem:[#allocation2 + $0x10] sm:$0xff] 0.0
    %22 = vst [vmem:[#allocation2 + $0x18] sm:$0xff] 0.0
    %23 = vst [vmem:[#allocation2 + $0x20] sm:$0xff] 0.0
    %24 = vst [vmem:[#allocation2 + $0x28] sm:$0xff] 0.0
    %25 = vst [vmem:[#allocation2 + $0x30] sm:$0xff] 0.0
    %26 = vst [vmem:[#allocation2 + $0x38] sm:$0xff] 0.0
    %27 = vst [vmem:[#allocation2 + $0x40] sm:$0xff] 0.0
    %28 = vst [vmem:[#allocation2 + $0x48] sm:$0xff] 0.0
    %29 = vst [vmem:[#allocation2 + $0x50] sm:$0xff] 0.0
    %30 = vst [vmem:[#allocation2 + $0x58] sm:$0xff] 0.0
    %31 = vst [vmem:[#allocation2 + $0x60] sm:$0xff] 0.0
    %32 = vst [vmem:[#allocation2 + $0x68] sm:$0xff] 0.0
    %33 = vst [vmem:[#allocation2 + $0x70] sm:$0xff] 0.0
    %34 = vst [vmem:[#allocation2 + $0x78] sm:$0xff] 0.0
  $region17: #{video_features_forward.85} parent=0 // pred_fallthru
    _
  %v35 = vld [vmem:[#allocation2] sm:$0xff]
  %v36 = vld [vmem:[#allocation2 + $0x8] sm:$0xff]
  %v37 = vld [vmem:[#allocation2 + $0x10] sm:$0xff]
  %v38 = vld [vmem:[#allocation2 + $0x18] sm:$0xff]
  %v39 = vld [vmem:[#allocation2 + $0x20] sm:$0xff]
  %v40 = vld [vmem:[#allocation2 + $0x28] sm:$0xff]
  %v41 = vld [vmem:[#allocation2 + $0x30] sm:$0xff]
  %v42 = vld [vmem:[#allocation2 + $0x38] sm:$0xff]
  %v43 = vld [vmem:[#allocation2 + $0x40] sm:$0xff]
  %v44 = vld [vmem:[#allocation2 + $0x48] sm:$0xff]
  %v45 = vld [vmem:[#allocation2 + $0x50] sm:$0xff]
  %v46 = vld [vmem:[#allocation2 + $0x58] sm:$0xff]
  %v47 = vld [vmem:[#allocation2 + $0x60] sm:$0xff]
  %v48 = vld [vmem:[#allocation2 + $0x68] sm:$0xff]
  %v49 = vld [vmem:[#allocation2 + $0x70] sm:$0xff]
  %v50 = vld [vmem:[#allocation2 + $0x78] sm:$0xff]
  %v51 = vld [vmem:[%s0] sm:$0xf]
  %v52 = vld [vmem:[%s0 + $0x4] sm:$0xf]
  %v53 = vld [vmem:[%s0 + $0x8] sm:$0xf]
  %v54 = vld [vmem:[%s0 + $0xc] sm:$0xf]
  %v55 = vld [vmem:[%s0 + $0x10] sm:$0xf]
  %v56 = vld [vmem:[%s0 + $0x14] sm:$0xf]
  %v57 = vld [vmem:[%s0 + $0x18] sm:$0xf]
  %v58 = vld [vmem:[%s0 + $0x1c] sm:$0xf]
  %v59 = vld [vmem:[%s0 + $0x20] sm:$0xf]
  %v60 = vld [vmem:[%s0 + $0x24] sm:$0xf]
  %v61 = vld [vmem:[%s0 + $0x28] sm:$0xf]
  %v62 = vld [vmem:[%s0 + $0x2c] sm:$0xf]
  %v63 = vld [vmem:[%s0 + $0x30] sm:$0xf]
  %v64 = vld [vmem:[%s0 + $0x34] sm:$0xf]
  %v65 = vld [vmem:[%s0 + $0x38] sm:$0xf]
  %v66 = vld [vmem:[%s0 + $0x3c] sm:$0xf]
  %v67 = vld [vmem:[%s1] sm:$0xf]
  %v68 = vld [vmem:[%s1 + $0x4] sm:$0xf]
  %v69 = vld [vmem:[%s1 + $0x8] sm:$0xf]
  %v70 = vld [vmem:[%s1 + $0xc] sm:$0xf]
  %v71 = vld [vmem:[%s1 + $0x10] sm:$0xf]
  %v72 = vld [vmem:[%s1 + $0x14] sm:$0xf]
  %v73 = vld [vmem:[%s1 + $0x18] sm:$0xf]
  %v74 = vld [vmem:[%s1 + $0x1c] sm:$0xf]
  %v75 = vld [vmem:[%s1 + $0x20] sm:$0xf]
  %v76 = vld [vmem:[%s1 + $0x24] sm:$0xf]
  %v77 = vld [vmem:[%s1 + $0x28] sm:$0xf]
  %v78 = vld [vmem:[%s1 + $0x2c] sm:$0xf]
  %v79 = vld [vmem:[%s1 + $0x30] sm:$0xf]
  %v80 = vld [vmem:[%s1 + $0x34] sm:$0xf]
  %v81 = vld [vmem:[%s1 + $0x38] sm:$0xf]
  %v82 = vld [vmem:[%s1 + $0x3c] sm:$0xf]
  %v99 = vunpack.c.l.b16 %v51
  %v100 = vunpack.c.l.b16 %v52
  %v101 = vunpack.c.l.b16 %v53
  %v102 = vunpack.c.l.b16 %v54
  %v103 = vunpack.c.l.b16 %v55
  %v104 = vunpack.c.l.b16 %v56
  %v105 = vunpack.c.l.b16 %v57
  %v106 = vunpack.c.l.b16 %v58
  %v107 = vunpack.c.l.b16 %v59
  %v108 = vunpack.c.l.b16 %v60
  %v109 = vunpack.c.l.b16 %v61
  %v110 = vunpack.c.l.b16 %v62
  %v111 = vunpack.c.l.b16 %v63
  %v112 = vunpack.c.l.b16 %v64
  %v113 = vunpack.c.l.b16 %v65
  %v114 = vunpack.c.l.b16 %v66
  %v115 = vpack.c.b16 %v100, %v99
  %v116 = vpack.c.b16 %v102, %v101
  %v117 = vpack.c.b16 %v104, %v103
  %v118 = vpack.c.b16 %v106, %v105
  %v119 = vpack.c.b16 %v108, %v107
  %v120 = vpack.c.b16 %v110, %v109
  %v121 = vpack.c.b16 %v112, %v111
  %v122 = vpack.c.b16 %v114, %v113
  %v147 = vunpack.c.l.b16 %v67
  %v148 = vunpack.c.l.b16 %v68
  %v149 = vunpack.c.l.b16 %v69
  %v150 = vunpack.c.l.b16 %v70
  %v151 = vunpack.c.l.b16 %v71
  %v152 = vunpack.c.l.b16 %v72
  %v153 = vunpack.c.l.b16 %v73
  %v154 = vunpack.c.l.b16 %v74
  %v155 = vunpack.c.l.b16 %v75
  %v156 = vunpack.c.l.b16 %v76
  %v157 = vunpack.c.l.b16 %v77
  %v158 = vunpack.c.l.b16 %v78
  %v159 = vunpack.c.l.b16 %v79
  %v160 = vunpack.c.l.b16 %v80
  %v161 = vunpack.c.l.b16 %v81
  %v162 = vunpack.c.l.b16 %v82
  %v163 = vpack.c.b16 %v148, %v147
  %v164 = vpack.c.b16 %v150, %v149
  %v165 = vpack.c.b16 %v152, %v151
  %v166 = vpack.c.b16 %v154, %v153
  %v167 = vpack.c.b16 %v156, %v155
  %v168 = vpack.c.b16 %v158, %v157
  %v169 = vpack.c.b16 %v160, %v159
  %v170 = vpack.c.b16 %v162, %v161
  %179 = vmatprep.subr.bf16.mxu0 0
  %180 = vmatpush1.bf16.msra.mxu0 %v163
  %181 = vmatprep.subr.bf16.mxu0 0
  %182 = vmatpush1.bf16.msra.mxu0 %v164
  %183 = vmatprep.subr.bf16.mxu0 0
  %184 = vmatpush1.bf16.msra.mxu0 %v165
  %185 = vmatprep.subr.bf16.mxu0 0
  %186 = vmatpush1.bf16.msra.mxu0 %v166
  %187 = vmatprep.subr.bf16.mxu0 0
  %188 = vmatpush1.bf16.msra.mxu0 %v167
  %189 = vmatprep.subr.bf16.mxu0 0
  %190 = vmatpush1.bf16.msra.mxu0 %v168
  %191 = vmatprep.subr.bf16.mxu0 0
  %192 = vmatpush1.bf16.msra.mxu0 %v169
  %193 = vmatprep.subr.bf16.mxu0 0
  %194 = vmatpush1.bf16.msra.mxu0 %v170
  %195 = vmatprep.subr.bf16.mxu0 0
  %196 = vmatpush1.bf16.msra.mxu0 0
  %197 = vmatprep.subr.bf16.mxu0 0
  %198 = vmatpush1.bf16.msra.mxu0 0
  %199 = vmatprep.subr.bf16.mxu0 0
  %200 = vmatpush1.bf16.msra.mxu0 0
  %201 = vmatprep.subr.bf16.mxu0 0
  %202 = vmatpush1.bf16.msra.mxu0 0
  %203 = vmatprep.subr.bf16.mxu0 0
  %204 = vmatpush1.bf16.msra.mxu0 0
  %205 = vmatprep.subr.bf16.mxu0 0
  %206 = vmatpush1.bf16.msra.mxu0 0
  %207 = vmatprep.subr.bf16.mxu0 0
  %208 = vmatpush1.bf16.msra.mxu0 0
  %209 = vmatprep.subr.bf16.mxu0 0
  %210 = vmatpush1.bf16.msra.mxu0 0
  %211 = vmatprep.mubr.bf16.mxu0 0
  %212 = vmatmul.mubr.bf16.gmra.mrb[0].mxu0 %v115
  %v213 = vpop.f32.mrb[0].mxu0
  %v214 = vadd.f32 0.0, %v213
  %v215 = vpop.f32.mrb[0].mxu0
  %v216 = vpop.f32.mrb[0].mxu0
  %v217 = vadd.f32 0.0, %v216
  %v218 = vpop.f32.mrb[0].mxu0
  %219 = vmatprep.mubr.bf16.mxu0 0
  %220 = vmatmul.mubr.bf16.gmra.mrb[0].mxu0 %v116
  %v221 = vpop.f32.mrb[0].mxu0
  %v222 = vadd.f32 0.0, %v221
  %v223 = vpop.f32.mrb[0].mxu0
  %v224 = vpop.f32.mrb[0].mxu0
  %v225 = vadd.f32 0.0, %v224
  %v226 = vpop.f32.mrb[0].mxu0
  %227 = vmatprep.mubr.bf16.mxu0 0
  %228 = vmatmul.mubr.bf16.gmra.mrb[0].mxu0 %v117
  %v229 = vpop.f32.mrb[0].mxu0
  %v230 = vadd.f32 0.0, %v229
  %v231 = vpop.f32.mrb[0].mxu0
  %v232 = vpop.f32.mrb[0].mxu0
  %v233 = vadd.f32 0.0, %v232
  %v234 = vpop.f32.mrb[0].mxu0
  %235 = vmatprep.mubr.bf16.mxu0 0
  %236 = vmatmul.mubr.bf16.gmra.mrb[0].mxu0 %v118
  %v237 = vpop.f32.mrb[0].mxu0
  %v238 = vadd.f32 0.0, %v237
  %v239 = vpop.f32.mrb[0].mxu0
  %v240 = vpop.f32.mrb[0].mxu0
  %v241 = vadd.f32 0.0, %v240
  %v242 = vpop.f32.mrb[0].mxu0
  %243 = vmatprep.mubr.bf16.mxu0 0
  %244 = vmatmul.mubr.bf16.gmra.mrb[0].mxu0 %v119
  %v245 = vpop.f32.mrb[0].mxu0
  %v246 = vadd.f32 0.0, %v245
  %v247 = vpop.f32.mrb[0].mxu0
  %v248 = vpop.f32.mrb[0].mxu0
  %v249 = vadd.f32 0.0, %v248
  %v250 = vpop.f32.mrb[0].mxu0
  %251 = vmatprep.mubr.bf16.mxu0 0
  %252 = vmatmul.mubr.bf16.gmra.mrb[0].mxu0 %v120
  %v253 = vpop.f32.mrb[0].mxu0
  %v254 = vadd.f32 0.0, %v253
  %v255 = vpop.f32.mrb[0].mxu0
  %v256 = vpop.f32.mrb[0].mxu0
  %v257 = vadd.f32 0.0, %v256
  %v258 = vpop.f32.mrb[0].mxu0
  %259 = vmatprep.mubr.bf16.mxu0 0
  %260 = vmatmul.mubr.bf16.gmra.mrb[0].mxu0 %v121
  %v261 = vpop.f32.mrb[0].mxu0
  %v262 = vadd.f32 0.0, %v261
  %v263 = vpop.f32.mrb[0].mxu0
  %v264 = vpop.f32.mrb[0].mxu0
  %v265 = vadd.f32 0.0, %v264
  %v266 = vpop.f32.mrb[0].mxu0
  %267 = vmatprep.mubr.bf16.mxu0 0
  %268 = vmatmul.mubr.bf16.gmra.mrb[0].mxu0 %v122
  %v269 = vpop.f32.mrb[0].mxu0
  %v270 = vadd.f32 0.0, %v269
  %v271 = vpop.f32.mrb[0].mxu0
  %v272 = vpop.f32.mrb[0].mxu0
  %v273 = vadd.f32 0.0, %v272
  %v274 = vpop.f32.mrb[0].mxu0
  %275 = vdwg.mxu0
  %v276 = vadd.f32 %v35, %v214
  %v277 = vadd.f32 %v36, %v217
  %v278 = vadd.f32 %v37, %v222
  %v279 = vadd.f32 %v38, %v225
  %v280 = vadd.f32 %v39, %v230
  %v281 = vadd.f32 %v40, %v233
  %v282 = vadd.f32 %v41, %v238
  %v283 = vadd.f32 %v42, %v241
  %v284 = vadd.f32 %v43, %v246
  %v285 = vadd.f32 %v44, %v249
  %v286 = vadd.f32 %v45, %v254
  %v287 = vadd.f32 %v46, %v257
  %v288 = vadd.f32 %v47, %v262
  %v289 = vadd.f32 %v48, %v265
  %v290 = vadd.f32 %v49, %v270
  %v291 = vadd.f32 %v50, %v273
  %292 = vst [vmem:[#allocation2] sm:$0xff] %v276
  %293 = vst [vmem:[#allocation2 + $0x8] sm:$0xff] %v277
  %294 = vst [vmem:[#allocation2 + $0x10] sm:$0xff] %v278
  %295 = vst [vmem:[#allocation2 + $0x18] sm:$0xff] %v279
  %296 = vst [vmem:[#allocation2 + $0x20] sm:$0xff] %v280
  %297 = vst [vmem:[#allocation2 + $0x28] sm:$0xff] %v281
  %298 = vst [vmem:[#allocation2 + $0x30] sm:$0xff] %v282
  %299 = vst [vmem:[#allocation2 + $0x38] sm:$0xff] %v283
  %300 = vst [vmem:[#allocation2 + $0x40] sm:$0xff] %v284
  %301 = vst [vmem:[#allocation2 + $0x48] sm:$0xff] %v285
  %302 = vst [vmem:[#allocation2 + $0x50] sm:$0xff] %v286
  %303 = vst [vmem:[#allocation2 + $0x58] sm:$0xff] %v287
  %304 = vst [vmem:[#allocation2 + $0x60] sm:$0xff] %v288
  %305 = vst [vmem:[#allocation2 + $0x68] sm:$0xff] %v289
  %306 = vst [vmem:[#allocation2 + $0x70] sm:$0xff] %v290
  %307 = vst [vmem:[#allocation2 + $0x78] sm:$0xff] %v291
  // Predicated region
  $region18: #{video_features_forward.85} parent=0 // pred_check
    %p308 = pneg %p15
  $region19: #{video_features_forward.85} parent=0 // pred_check_branch
    %310 = sbr.rel (%p308) target = $region21
  $region20: #{video_features_forward.85} parent=0 // pred_region
    %v311 = vld [vmem:[#allocation2] sm:$0xff]
    %v312 = vld [vmem:[#allocation2 + $0x8] sm:$0xff]
    %v313 = vld [vmem:[#allocation2 + $0x10] sm:$0xff]
    %v314 = vld [vmem:[#allocation2 + $0x18] sm:$0xff]
    %v315 = vld [vmem:[#allocation2 + $0x20] sm:$0xff]
    %v316 = vld [vmem:[#allocation2 + $0x28] sm:$0xff]
    %v317 = vld [vmem:[#allocation2 + $0x30] sm:$0xff]
    %v318 = vld [vmem:[#allocation2 + $0x38] sm:$0xff]
    %v319 = vld [vmem:[#allocation2 + $0x40] sm:$0xff]
    %v320 = vld [vmem:[#allocation2 + $0x48] sm:$0xff]
    %v321 = vld [vmem:[#allocation2 + $0x50] sm:$0xff]
    %v322 = vld [vmem:[#allocation2 + $0x58] sm:$0xff]
    %v323 = vld [vmem:[#allocation2 + $0x60] sm:$0xff]
    %v324 = vld [vmem:[#allocation2 + $0x68] sm:$0xff]
    %v325 = vld [vmem:[#allocation2 + $0x70] sm:$0xff]
    %v326 = vld [vmem:[#allocation2 + $0x78] sm:$0xff]
    %v327 = vld [vmem:[%s2] sm:$0x1]
    %v329 = vlaneseq
    %v330 = vshrl.u32 %v329, 7
    %v331 = vsub.s32 0, %v330
    %v332 = vrot.slane %v327, %v331
    %v334 = vadd.f32 %v311, %v332
    %v335 = vadd.f32 %v312, %v332
    %v336 = vadd.f32 %v313, %v332
    %v337 = vadd.f32 %v314, %v332
    %v338 = vadd.f32 %v315, %v332
    %v339 = vadd.f32 %v316, %v332
    %v340 = vadd.f32 %v317, %v332
    %v341 = vadd.f32 %v318, %v332
    %v342 = vadd.f32 %v319, %v332
    %v343 = vadd.f32 %v320, %v332
    %v344 = vadd.f32 %v321, %v332
    %v345 = vadd.f32 %v322, %v332
    %v346 = vadd.f32 %v323, %v332
    %v347 = vadd.f32 %v324, %v332
    %v348 = vadd.f32 %v325, %v332
    %v349 = vadd.f32 %v326, %v332
    %350 = vst [vmem:[%s3] sm:$0xff] %v334
    %351 = vst [vmem:[%s3 + $0x8] sm:$0xff] %v335
    %352 = vst [vmem:[%s3 + $0x10] sm:$0xff] %v336
    %353 = vst [vmem:[%s3 + $0x18] sm:$0xff] %v337
    %354 = vst [vmem:[%s3 + $0x20] sm:$0xff] %v338
    %355 = vst [vmem:[%s3 + $0x28] sm:$0xff] %v339
    %356 = vst [vmem:[%s3 + $0x30] sm:$0xff] %v340
    %357 = vst [vmem:[%s3 + $0x38] sm:$0xff] %v341
    %358 = vst [vmem:[%s3 + $0x40] sm:$0xff] %v342
    %359 = vst [vmem:[%s3 + $0x48] sm:$0xff] %v343
    %360 = vst [vmem:[%s3 + $0x50] sm:$0xff] %v344
    %361 = vst [vmem:[%s3 + $0x58] sm:$0xff] %v345
    %362 = vst [vmem:[%s3 + $0x60] sm:$0xff] %v346
    %363 = vst [vmem:[%s3 + $0x68] sm:$0xff] %v347
    %364 = vst [vmem:[%s3 + $0x70] sm:$0xff] %v348
    %365 = vst [vmem:[%s3 + $0x78] sm:$0xff] %v349
  $region21: #{video_features_forward.85} parent=0 // pred_fallthru
    _
  // Predicated region
  $region22: #{video_features_forward.85} parent=0 // pred_check
    _
  $region23: #{video_features_forward.85} parent=0 // pred_check_branch
    %367 = sbr.rel (0) target = $region25
  $region24: #{video_features_forward.85} parent=0 // pred_region
    _
  $region25: #{video_features_forward.85} parent=0 // pred_fallthru
    _
  // Predicated region
  $region26: #{video_features_forward.85} parent=0 // pred_check
    _
  $region27: #{video_features_forward.85} parent=0 // pred_check_branch
    %369 = sbr.rel (0) target = $region29
  $region28: #{video_features_forward.85} parent=0 // pred_region
    _
  $region29: #{video_features_forward.85} parent=0 // pred_fallthru
    _

// kernel: video_features_forward.84
$region0: #{video_features_forward.84}
  #allocation0 [shape = 'u32[]', space=smem, size = 0x4, offset = 0x4, fixed_abs, tag = 'smem constant byte address 0x4 - core index']
  #allocation1 [shape = 'u32[144,128]{1,0:T(1,128)}', space=vmem, size = 0x12000, scoped, tag = 'internal scratch']
  #allocation2 [shape = 'f32[128,128]{1,0:T(8,128)}', space=vmem, size = 0x10000, scoped, tag = 'scratch operand']
  %s0 = inlined_call_operand.vmem [shape: bf16[128,1152], index: 0, kind: input, shape index: {}]
  %s1 = inlined_call_operand.vmem [shape: bf16[1152,128], index: 1, kind: input, shape index: {}]
  %s2 = inlined_call_operand.vmem [shape: f32[1,128], index: 2, kind: input, shape index: {}]
  %s3 = inlined_call_operand.vmem [shape: f32[128,128], index: 3, kind: output, shape index: {}]
  %s4 = sld [smem:[#allocation0]]
  $region79: #{video_features_forward.84} parent=0
    _
  %s6 = ssub.s32 1, %s4
  %s7 = scalar_select 0, %s6, %s4
  $region1: #{video_features_forward.84} parent=0
    #allocation3 [shape = 'u8[196608]{0}', space=vmem, size = 0x30000, scoped, tag = 'input window, operand 0']
    loop: start=0, step=1, limit=5
    $region2: #{video_features_forward.84} parent=1 // loop_pre_header
      _
    $region3: #{video_features_forward.84} parent=1 // loop_header
      %s9 = sphi 0, %s13
      %p10 = scmp.ge.s32.totalorder %s9, 5
      %s16 = sphi 0, %s35
      %s17 = sphi 0, %s31
      %s18 = sphi 0, %s27
      %s19 = sphi 0, %s16
      %s20 = sphi 0, %s17
      %s21 = sphi 0, %s18
      %s22 = sphi 0, %s19
      %s23 = sphi 0, %s20
      %s24 = sphi 0, %s21
      %s40 = sphi 0, %s42
      %s43 = sphi 0, %s40
      %s44 = sphi 0, %s43
      %s60 = sphi 0, %s44
      %s68 = sphi 0, %s70
      %s71 = sphi 0, %s68
      %s72 = sphi 0, %s71
      %s88 = sphi 0, %s72
      %s94 = sphi 0, %s96
      %s97 = sphi 0, %s94
      %s98 = sphi 0, %s97
      %s114 = sphi 0, %s98
      %s122 = sphi 0, %s124
      %s125 = sphi 0, %s122
      %s126 = sphi 0, %s125
      %s142 = sphi 0, %s126
    $region4: #{video_features_forward.84} parent=1 // loop_header_branch
      %12 = sbr.rel (%p10) target = $region8
    $region5: #{video_features_forward.84} parent=1 // loop_body
      %s14 = ssub.s32 %s9, 1
      %s15 = ssub.s32 %s9, 2
      %s25 = sadd.s32 1, %s18
      %p26 = scmp.ge.s32.totalorder %s25, 3
      %s27 = scalar_select %p26, 0, %s25
      %s28 = sadd.s32 1, %s17
      %s29 = scalar_select %p26, %s28, %s17
      %p30 = scmp.ge.s32.totalorder %s29, 1
      %s31 = scalar_select %p30, 0, %s29
      %s32 = sadd.s32 1, %s16
      %s33 = scalar_select %p30, %s32, %s16
      %p34 = scmp.ge.s32.totalorder %s33, 1
      %s35 = scalar_select %p34, 0, %s33
      %s36 = ssub.s32 %s16, %s35
      %s37 = ssub.s32 %s18, %s27
      %s38 = sor.u32 %s36, %s37
      %p39 = scmp.eq.s32.totalorder %s38, 0
      %s41 = sadd.s32 %s40, 1
      %s42 = scalar_select %p39, %s40, %s41
      %p45 = pneg %p39
      %p46 = scmp.eq.s32.totalorder %s9, 2
      %p47 = por %p45, %p46
      %p48 = scmp.ne.s32.totalorder %s40, %s43
      %p49 = scmp.eq.s32.totalorder %s9, 0
      %p50 = por %p48, %p49
      %p51 = scmp.ne.s32.totalorder %s40, %s43
      %p52 = scmp.eq.s32.totalorder %s14, 2
      %p53 = por %p51, %p52
      %p54 = scmp.ne.s32.totalorder %s43, %s44
      %p55 = scmp.eq.s32.totalorder %s14, 0
      %p56 = por %p54, %p55
      %p57 = scmp.ne.s32.totalorder %s43, %s44
      %p58 = scmp.eq.s32.totalorder %s15, 2
      %p59 = por %p57, %p58
      %p61 = scmp.ne.s32.totalorder %s44, %s60
      %p62 = scmp.eq.s32.totalorder %s15, 0
      %p63 = por %p61, %p62
      %s64 = ssub.s32 %s18, %s27
      %s65 = ssub.s32 %s17, %s31
      %s66 = sor.u32 %s64, %s65
      %p67 = scmp.eq.s32.totalorder %s66, 0
      %s69 = sadd.s32 %s68, 1
      %s70 = scalar_select %p67, %s68, %s69
      %p73 = pneg %p67
      %p74 = scmp.eq.s32.totalorder %s9, 2
      %p75 = por %p73, %p74
      %p76 = scmp.ne.s32.totalorder %s68, %s71
      %p77 = scmp.eq.s32.totalorder %s9, 0
      %p78 = por %p76, %p77
      %p79 = scmp.ne.s32.totalorder %s68, %s71
      %p80 = scmp.eq.s32.totalorder %s14, 2
      %p81 = por %p79, %p80
      %p82 = scmp.ne.s32.totalorder %s71, %s72
      %p83 = scmp.eq.s32.totalorder %s14, 0
      %p84 = por %p82, %p83
      %p85 = scmp.ne.s32.totalorder %s71, %s72
      %p86 = scmp.eq.s32.totalorder %s15, 2
      %p87 = por %p85, %p86
      %p89 = scmp.ne.s32.totalorder %s72, %s88
      %p90 = scmp.eq.s32.totalorder %s15, 0
      %p91 = por %p89, %p90
      %s92 = ssub.s32 %s17, %s31
      %p93 = scmp.eq.s32.totalorder %s92, 0
      %s95 = sadd.s32 %s94, 1
      %s96 = scalar_select %p93, %s94, %s95
      %p99 = pneg %p93
      %p100 = scmp.eq.s32.totalorder %s9, 2
      %p101 = por %p99, %p100
      %p102 = scmp.ne.s32.totalorder %s94, %s97
      %p103 = scmp.eq.s32.totalorder %s9, 0
      %p104 = por %p102, %p103
      %p105 = scmp.ne.s32.totalorder %s94, %s97
      %p106 = scmp.eq.s32.totalorder %s14, 2
      %p107 = por %p105, %p106
      %p108 = scmp.ne.s32.totalorder %s97, %s98
      %p109 = scmp.eq.s32.totalorder %s14, 0
      %p110 = por %p108, %p109
      %p111 = scmp.ne.s32.totalorder %s97, %s98
      %p112 = scmp.eq.s32.totalorder %s15, 2
      %p113 = por %p111, %p112
      %p115 = scmp.ne.s32.totalorder %s98, %s114
      %p116 = scmp.eq.s32.totalorder %s15, 0
      %p117 = por %p115, %p116
      %s118 = ssub.s32 %s16, %s35
      %s119 = ssub.s32 %s17, %s31
      %s120 = sor.u32 %s118, %s119
      %p121 = scmp.eq.s32.totalorder %s120, 0
      %s123 = sadd.s32 %s122, 1
      %s124 = scalar_select %p121, %s122, %s123
      %p127 = pneg %p121
      %p128 = scmp.eq.s32.totalorder %s9, 2
      %p129 = por %p127, %p128
      %p130 = scmp.ne.s32.totalorder %s122, %s125
      %p131 = scmp.eq.s32.totalorder %s9, 0
      %p132 = por %p130, %p131
      %p133 = scmp.ne.s32.totalorder %s122, %s125
      %p134 = scmp.eq.s32.totalorder %s14, 2
      %p135 = por %p133, %p134
      %p136 = scmp.ne.s32.totalorder %s125, %s126
      %p137 = scmp.eq.s32.totalorder %s14, 0
      %p138 = por %p136, %p137
      %p139 = scmp.ne.s32.totalorder %s125, %s126
      %p140 = scmp.eq.s32.totalorder %s15, 2
      %p141 = por %p139, %p140
      %p143 = scmp.ne.s32.totalorder %s126, %s142
      %p144 = scmp.eq.s32.totalorder %s15, 0
      %p145 = por %p143, %p144
      %p146 = scmp.le.s32.totalorder 1, %s9
      %p147 = scmp.lt.s32.totalorder %s9, 4
      %p148 = pnand %p146, %p147
      %p149 = pneg %p148
      // Predicated region
      $region9: #{video_features_forward.84} parent=5 // pred_check
        _
      $region10: #{video_features_forward.84} parent=5 // pred_check_branch
        %151 = sbr.rel (%p148) target = $region12
      $region11: #{video_features_forward.84} parent=5 // pred_region
        %s152 = ssub.s32 %s9, 1
        // Predicated region
        $region13: #{video_features_forward.84} parent=11 // pred_check
          %p153 = pneg %p110
        $region14: #{video_features_forward.84} parent=11 // pred_check_branch
          %155 = sbr.rel (%p153) target = $region16
        $region15: #{video_features_forward.84} parent=11 // pred_region
          %p156 = scmp.lt.s32.totalorder %s20, 0
          %s157 = scalar_select %p156, %s20, 0
          %s158 = scalar_lea.vmem %s2, %s157
        $region16: #{video_features_forward.84} parent=11 // pred_fallthru
          _
      $region12: #{video_features_forward.84} parent=5 // pred_fallthru
        _
      %p159 = scmp.lt.s32.totalorder %s9, 3
      // Predicated region
      $region17: #{video_features_forward.84} parent=5 // pred_check
        %p160 = pneg %p159
      $region18: #{video_features_forward.84} parent=5 // pred_check_branch
        %162 = sbr.rel (%p160) target = $region20
      $region19: #{video_features_forward.84} parent=5 // pred_region
        // Predicated region
        $region21: #{video_features_forward.84} parent=19 // pred_check
          %p163 = pneg %p50
        $region22: #{video_features_forward.84} parent=19 // pred_check_branch
          %165 = sbr.rel (%p163) target = $region24
        $region23: #{video_features_forward.84} parent=19 // pred_region
          %s166 = sand.u32 %s40, 1
          %s167 = sand.u32 %s40, 1
          %s168 = smul.addr %s167, 192
          %s169 = scalar_lea.vmem [#allocation3], %s168
          %s170 = smul.u32 16, %s16
          %s171 = smul.u32 3, %s18
          %s172 = smul.addr %s170, 9
          %s173 = sadd.s32 %s171, %s172
          %s174 = smul.addr %s173, 4
          %s175 = scalar_lea.vmem %s0, %s174
          // Predicated region
          $region25: #{video_features_forward.84} parent=23 // pred_check
            _
          $region26: #{video_features_forward.84} parent=23 // pred_check_branch
            %177 = sbr.rel (0) target = $region28
          $region27: #{video_features_forward.84} parent=23 // pred_region
            // Predicated region
            $region29: #{video_features_forward.84} parent=27 // pred_check
              _
            $region30: #{video_features_forward.84} parent=27 // pred_check_branch
              %179 = sbr.rel (0) target = $region32
            $region31: #{video_features_forward.84} parent=27 // pred_region
              %s180 = scalar_lea.vmem %s175, 8
              %s181 = scalar_lea.vmem %s169, 8 [#allocation3]
              loop: start=0, step=1, limit=1
              $region33: #{video_features_forward.84} parent=31 // loop_pre_header
                _
              $region34: #{video_features_forward.84} parent=31 // loop_header
                %s183 = sphi 0, %s187
                %p184 = scmp.ge.s32.totalorder %s183, 1
                %s188 = sphi %s175, %s175
                %s189 = sphi %s169, %s169
              $region35: #{video_features_forward.84} parent=31 // loop_header_branch
                %186 = sbr.rel (%p184) target = $region39
              $region36: #{video_features_forward.84} parent=31 // loop_body
                %v190 = vld [vmem:[%s188] sm:$0xff]
                %191 = vst [vmem:[%s189] sm:$0xff] %v190
                %v192 = vld [vmem:[%s188 + $0x24] sm:$0xff]
                %193 = vst [vmem:[%s189 + $0xc] sm:$0xff] %v192
                %v194 = vld [vmem:[%s188 + $0x48] sm:$0xff]
                %195 = vst [vmem:[%s189 + $0x18] sm:$0xff] %v194
                %v196 = vld [vmem:[%s188 + $0x6c] sm:$0xff]
                %197 = vst [vmem:[%s189 + $0x24] sm:$0xff] %v196
                %v198 = vld [vmem:[%s188 + $0x90] sm:$0xff]
                %199 = vst [vmem:[%s189 + $0x30] sm:$0xff] %v198
                %v200 = vld [vmem:[%s188 + $0xb4] sm:$0xff]
                %201 = vst [vmem:[%s189 + $0x3c] sm:$0xff] %v200
                %v202 = vld [vmem:[%s188 + $0xd8] sm:$0xff]
                %203 = vst [vmem:[%s189 + $0x48] sm:$0xff] %v202
                %v204 = vld [vmem:[%s188 + $0xfc] sm:$0xff]
                %205 = vst [vmem:[%s189 + $0x54] sm:$0xff] %v204
                %v206 = vld [vmem:[%s188 + $0x120] sm:$0xff]
                %207 = vst [vmem:[%s189 + $0x60] sm:$0xff] %v206
                %v208 = vld [vmem:[%s188 + $0x144] sm:$0xff]
                %209 = vst [vmem:[%s189 + $0x6c] sm:$0xff] %v208
                %v210 = vld [vmem:[%s188 + $0x168] sm:$0xff]
                %211 = vst [vmem:[%s189 + $0x78] sm:$0xff] %v210
                %v212 = vld [vmem:[%s188 + $0x18c] sm:$0xff]
                %213 = vst [vmem:[%s189 + $0x84] sm:$0xff] %v212
                %v214 = vld [vmem:[%s188 + $0x1b0] sm:$0xff]
                %215 = vst [vmem:[%s189 + $0x90] sm:$0xff] %v214
                %v216 = vld [vmem:[%s188 + $0x1d4] sm:$0xff]
                %217 = vst [vmem:[%s189 + $0x9c] sm:$0xff] %v216
                %v218 = vld [vmem:[%s188 + $0x1f8] sm:$0xff]
                %219 = vst [vmem:[%s189 + $0xa8] sm:$0xff] %v218
                %v220 = vld [vmem:[%s188 + $0x21c] sm:$0xff]
                %221 = vst [vmem:[%s189 + $0xb4] sm:$0xff] %v220
              $region37: #{video_features_forward.84} parent=31 // loop_footer
                %s187 = sadd.s32 1, %s183
              $region38: #{video_features_forward.84} parent=31 // loop_footer_branch
                %182 = sbr.rel target = $region34
              $region39: #{video_features_forward.84} parent=31 // loop_exit
                _
              loop: start=0, step=1, limit=1
              $region40: #{video_features_forward.84} parent=31 // loop_pre_header
                _
              $region41: #{video_features_forward.84} parent=31 // loop_header
                %s224 = sphi 0, %s228
                %p225 = scmp.ge.s32.totalorder %s224, 1
                %s229 = sphi %s180, %s180
                %s230 = sphi %s181, %s181
              $region42: #{video_features_forward.84} parent=31 // loop_header_branch
                %227 = sbr.rel (%p225) target = $region46
              $region43: #{video_features_forward.84} parent=31 // loop_body
                %v231 = vld [vmem:[%s229] sm:$0xf]
                %232 = vst [vmem:[%s230] sm:$0xf] %v231
                %v233 = vld [vmem:[%s229 + $0x24] sm:$0xf]
                %234 = vst [vmem:[%s230 + $0xc] sm:$0xf] %v233
                %v235 = vld [vmem:[%s229 + $0x48] sm:$0xf]
                %236 = vst [vmem:[%s230 + $0x18] sm:$0xf] %v235
                %v237 = vld [vmem:[%s229 + $0x6c] sm:$0xf]
                %238 = vst [vmem:[%s230 + $0x24] sm:$0xf] %v237
                %v239 = vld [vmem:[%s229 + $0x90] sm:$0xf]
                %240 = vst [vmem:[%s230 + $0x30] sm:$0xf] %v239
                %v241 = vld [vmem:[%s229 + $0xb4] sm:$0xf]
                %242 = vst [vmem:[%s230 + $0x3c] sm:$0xf] %v241
                %v243 = vld [vmem:[%s229 + $0xd8] sm:$0xf]
                %244 = vst [vmem:[%s230 + $0x48] sm:$0xf] %v243
                %v245 = vld [vmem:[%s229 + $0xfc] sm:$0xf]
                %246 = vst [vmem:[%s230 + $0x54] sm:$0xf] %v245
                %v247 = vld [vmem:[%s229 + $0x120] sm:$0xf]
                %248 = vst [vmem:[%s230 + $0x60] sm:$0xf] %v247
                %v249 = vld [vmem:[%s229 + $0x144] sm:$0xf]
                %250 = vst [vmem:[%s230 + $0x6c] sm:$0xf] %v249
                %v251 = vld [vmem:[%s229 + $0x168] sm:$0xf]
                %252 = vst [vmem:[%s230 + $0x78] sm:$0xf] %v251
                %v253 = vld [vmem:[%s229 + $0x18c] sm:$0xf]
                %254 = vst [vmem:[%s230 + $0x84] sm:$0xf] %v253
                %v255 = vld [vmem:[%s229 + $0x1b0] sm:$0xf]
                %256 = vst [vmem:[%s230 + $0x90] sm:$0xf] %v255
                %v257 = vld [vmem:[%s229 + $0x1d4] sm:$0xf]
                %258 = vst [vmem:[%s230 + $0x9c] sm:$0xf] %v257
                %v259 = vld [vmem:[%s229 + $0x1f8] sm:$0xf]
                %260 = vst [vmem:[%s230 + $0xa8] sm:$0xf] %v259
                %v261 = vld [vmem:[%s229 + $0x21c] sm:$0xf]
                %262 = vst [vmem:[%s230 + $0xb4] sm:$0xf] %v261
              $region44: #{video_features_forward.84} parent=31 // loop_footer
                %s228 = sadd.s32 1, %s224
              $region45: #{video_features_forward.84} parent=31 // loop_footer_branch
                %223 = sbr.rel target = $region41
              $region46: #{video_features_forward.84} parent=31 // loop_exit
                _
            $region32: #{video_features_forward.84} parent=27 // pred_fallthru
              _
          $region28: #{video_features_forward.84} parent=23 // pred_fallthru
            _
          %263 = vnop
        $region24: #{video_features_forward.84} parent=19 // pred_fallthru
          _
        // Predicated region
        $region47: #{video_features_forward.84} parent=19 // pred_check
          %p264 = pneg %p78
        $region48: #{video_features_forward.84} parent=19 // pred_check_branch
          %266 = sbr.rel (%p264) target = $region50
        $region49: #{video_features_forward.84} parent=19 // pred_region
          %s267 = smul.u32 48, %s18
          %p268 = scmp.lt.s32.totalorder %s267, 143
          %s269 = scalar_select %p268, %s267, 143
          %p270 = scmp.lt.s32.totalorder %s17, 0
          %s271 = scalar_select %p270, %s17, 0
          %s272 = sadd.s32 %s271, %s269
          %s273 = smul.addr %s272, 4
          %s274 = scalar_lea.vmem %s1, %s273
          %s275 = smul.u32 48, %s18
        $region50: #{video_features_forward.84} parent=19 // pred_fallthru
          _
      $region20: #{video_features_forward.84} parent=5 // pred_fallthru
        _
      %p276 = scmp.le.s32.totalorder 1, %s9
      %p277 = scmp.lt.s32.totalorder %s9, 4
      %p278 = pnand %p276, %p277
      %p279 = pneg %p278
      // Predicated region
      $region51: #{video_features_forward.84} parent=5 // pred_check
        _
      $region52: #{video_features_forward.84} parent=5 // pred_check_branch
        %281 = sbr.rel (%p278) target = $region54
      $region53: #{video_features_forward.84} parent=5 // pred_region
        %s282 = ssub.s32 %s9, 1
        %s283 = sand.u32 %s43, 1
        %s284 = sand.u32 %s43, 1
        %s285 = smul.addr %s284, 192
        %s286 = scalar_lea.vmem [#allocation3], %s285
        // Predicated region
        $region55: #{video_features_forward.84} parent=53 // pred_check
          %p287 = pneg %p56
        $region56: #{video_features_forward.84} parent=53 // pred_check_branch
          %289 = sbr.rel (%p287) target = $region58
        $region57: #{video_features_forward.84} parent=53 // pred_region
          _
        $region58: #{video_features_forward.84} parent=53 // pred_fallthru
          _
        %s290 = sand.u32 %s43, 1
        %s291 = sand.u32 %s43, 1
        %s292 = smul.addr %s291, 192
        %s293 = scalar_lea.vmem [#allocation3], %s292
        %p294 = pneg %p56
        %p295 = pneg %p53
        %s296 = smul.u32 48, %s21
        %p297 = scmp.lt.s32.totalorder %s296, 143
        %s298 = scalar_select %p297, %s296, 143
        %p299 = scmp.lt.s32.totalorder %s20, 0
        %s300 = scalar_select %p299, %s20, 0
        %s301 = sadd.s32 %s300, %s298
        %s302 = smul.addr %s301, 4
        %s303 = scalar_lea.vmem %s1, %s302
        %p304 = pneg %p84
        %p305 = pneg %p81
        %p306 = scmp.lt.s32.totalorder %s20, 0
        %s307 = scalar_select %p306, %s20, 0
        %s308 = scalar_lea.vmem %s2, %s307
        %p309 = pneg %p110
        %p310 = pneg %p107
        %p311 = pneg %p138
        %p312 = pneg %p135
        %s313 = smul.u32 16, %s19
        %p314 = scmp.lt.s32.totalorder %s313, 15
        %s315 = scalar_select %p314, %s313, 15
        %p316 = scmp.lt.s32.totalorder %s20, 0
        %s317 = scalar_select %p316, %s20, 0
        %s318 = sadd.s32 %s317, %s315
        %s319 = smul.addr %s318, 8
        %s320 = scalar_lea.vmem %s3, %s319
        %s321 = smul.u32 16, %s19
        %s322 = smul.u32 3, %s21
        %s323 = smul.u32 48, %s21
        %p324 = scmp.lt.s32.totalorder %s323, 143
        %s325 = scalar_select %p324, %s323, 143
        %p326 = scmp.lt.s32.totalorder %s20, 0
        %s327 = scalar_select %p326, %s20, 0
        %s328 = sadd.s32 %s327, %s325
        %s329 = smul.addr %s328, 4
        %s330 = scalar_lea.vmem %s1, %s329
        %s331 = smul.u32 48, %s21
        %p332 = scmp.lt.s32.totalorder %s20, 0
        %s333 = scalar_select %p332, %s20, 0
        %s334 = scalar_lea.vmem %s2, %s333
        %s335 = smul.u32 16, %s19
        %p336 = scmp.lt.s32.totalorder %s335, 15
        %s337 = scalar_select %p336, %s335, 15
        %p338 = scmp.lt.s32.totalorder %s20, 0
        %s339 = scalar_select %p338, %s20, 0
        %s340 = sadd.s32 %s339, %s337
        %s341 = smul.addr %s340, 8
        %s342 = scalar_lea.vmem %s3, %s341
        %s343 = smul.u32 16, %s19
        %p345 = scmp.eq.s32.totalorder %s21, 0
        // Predicated region
        $region59: #{video_features_forward.84} parent=53 // pred_check
          %p346 = pneg %p345
        $region60: #{video_features_forward.84} parent=53 // pred_check_branch
          %348 = sbr.rel (%p346) target = $region62
        $region61: #{video_features_forward.84} parent=53 // pred_region
          %349 = vst [vmem:[#allocation2] sm:$0xff] 0.0
          %350 = vst [vmem:[#allocation2 + $0x8] sm:$0xff] 0.0
          %351 = vst [vmem:[#allocation2 + $0x10] sm:$0xff] 0.0
          %352 = vst [vmem:[#allocation2 + $0x18] sm:$0xff] 0.0
          %353 = vst [vmem:[#allocation2 + $0x20] sm:$0xff] 0.0
          %354 = vst [vmem:[#allocation2 + $0x28] sm:$0xff] 0.0
          %355 = vst [vmem:[#allocation2 + $0x30] sm:$0xff] 0.0
          %356 = vst [vmem:[#allocation2 + $0x38] sm:$0xff] 0.0
          %357 = vst [vmem:[#allocation2 + $0x40] sm:$0xff] 0.0
          %358 = vst [vmem:[#allocation2 + $0x48] sm:$0xff] 0.0
          %359 = vst [vmem:[#allocation2 + $0x50] sm:$0xff] 0.0
          %360 = vst [vmem:[#allocation2 + $0x58] sm:$0xff] 0.0
          %361 = vst [vmem:[#allocation2 + $0x60] sm:$0xff] 0.0
          %362 = vst [vmem:[#allocation2 + $0x68] sm:$0xff] 0.0
          %363 = vst [vmem:[#allocation2 + $0x70] sm:$0xff] 0.0
          %364 = vst [vmem:[#allocation2 + $0x78] sm:$0xff] 0.0
        $region62: #{video_features_forward.84} parent=53 // pred_fallthru
          _
        %v365 = vld [vmem:[#allocation2] sm:$0xff]
        %v366 = vld [vmem:[#allocation2 + $0x8] sm:$0xff]
        %v367 = vld [vmem:[#allocation2 + $0x10] sm:$0xff]
        %v368 = vld [vmem:[#allocation2 + $0x18] sm:$0xff]
        %v369 = vld [vmem:[#allocation2 + $0x20] sm:$0xff]
        %v370 = vld [vmem:[#allocation2 + $0x28] sm:$0xff]
        %v371 = vld [vmem:[#allocation2 + $0x30] sm:$0xff]
        %v372 = vld [vmem:[#allocation2 + $0x38] sm:$0xff]
        %v373 = vld [vmem:[#allocation2 + $0x40] sm:$0xff]
        %v374 = vld [vmem:[#allocation2 + $0x48] sm:$0xff]
        %v375 = vld [vmem:[#allocation2 + $0x50] sm:$0xff]
        %v376 = vld [vmem:[#allocation2 + $0x58] sm:$0xff]
        %v377 = vld [vmem:[#allocation2 + $0x60] sm:$0xff]
        %v378 = vld [vmem:[#allocation2 + $0x68] sm:$0xff]
        %v379 = vld [vmem:[#allocation2 + $0x70] sm:$0xff]
        %v380 = vld [vmem:[#allocation2 + $0x78] sm:$0xff]
        %v381 = vld [vmem:[%s286] sm:$0xff]
        %v382 = vld [vmem:[%s286 + $0x8] sm:$0xf]
        %v383 = vld [vmem:[%s286 + $0xc] sm:$0xff]
        %v384 = vld [vmem:[%s286 + $0x14] sm:$0xf]
        %v385 = vld [vmem:[%s286 + $0x18] sm:$0xff]
        %v386 = vld [vmem:[%s286 + $0x20] sm:$0xf]
        %v387 = vld [vmem:[%s286 + $0x24] sm:$0xff]
        %v388 = vld [vmem:[%s286 + $0x2c] sm:$0xf]
        %v389 = vld [vmem:[%s286 + $0x30] sm:$0xff]
        %v390 = vld [vmem:[%s286 + $0x38] sm:$0xf]
        %v391 = vld [vmem:[%s286 + $0x3c] sm:$0xff]
        %v392 = vld [vmem:[%s286 + $0x44] sm:$0xf]
        %v393 = vld [vmem:[%s286 + $0x48] sm:$0xff]
        %v394 = vld [vmem:[%s286 + $0x50] sm:$0xf]
        %v395 = vld [vmem:[%s286 + $0x54] sm:$0xff]
        %v396 = vld [vmem:[%s286 + $0x5c] sm:$0xf]
        %v397 = vld [vmem:[%s286 + $0x60] sm:$0xff]
        %v398 = vld [vmem:[%s286 + $0x68] sm:$0xf]
        %v399 = vld [vmem:[%s286 + $0x6c] sm:$0xff]
        %v400 = vld [vmem:[%s286 + $0x74] sm:$0xf]
        %v401 = vld [vmem:[%s286 + $0x78] sm:$0xff]
        %v402 = vld [vmem:[%s286 + $0x80] sm:$0xf]
        %v403 = vld [vmem:[%s286 + $0x84] sm:$0xff]
        %v404 = vld [vmem:[%s286 + $0x8c] sm:$0xf]
        %v405 = vld [vmem:[%s286 + $0x90] sm:$0xff]
        %v406 = vld [vmem:[%s286 + $0x98] sm:$0xf]
        %v407 = vld [vmem:[%s286 + $0x9c] sm:$0xff]
        %v408 = vld [vmem:[%s286 + $0xa4] sm:$0xf]
        %v409 = vld [vmem:[%s286 + $0xa8] sm:$0xff]
        %v410 = vld [vmem:[%s286 + $0xb0] sm:$0xf]
        %v411 = vld [vmem:[%s286 + $0xb4] sm:$0xff]
        %v412 = vld [vmem:[%s286 + $0xbc] sm:$0xf]
        %v413 = vld [vmem:[%s330] sm:$0xf]
        %v414 = vld [vmem:[%s330 + $0x4] sm:$0xf]
        %v415 = vld [vmem:[%s330 + $0x8] sm:$0xf]
        %v416 = vld [vmem:[%s330 + $0xc] sm:$0xf]
        %v417 = vld [vmem:[%s330 + $0x10] sm:$0xf]
        %v418 = vld [vmem:[%s330 + $0x14] sm:$0xf]
        %v419 = vld [vmem:[%s330 + $0x18] sm:$0xf]
        %v420 = vld [vmem:[%s330 + $0x1c] sm:$0xf]
        %v421 = vld [vmem:[%s330 + $0x20] sm:$0xf]
        %v422 = vld [vmem:[%s330 + $0x24] sm:$0xf]
        %v423 = vld [vmem:[%s330 + $0x28] sm:$0xf]
        %v424 = vld [vmem:[%s330 + $0x2c] sm:$0xf]
        %v425 = vld [vmem:[%s330 + $0x30] sm:$0xf]
        %v426 = vld [vmem:[%s330 + $0x34] sm:$0xf]
        %v427 = vld [vmem:[%s330 + $0x38] sm:$0xf]
        %v428 = vld [vmem:[%s330 + $0x3c] sm:$0xf]
        %v429 = vld [vmem:[%s330 + $0x40] sm:$0xf]
        %v430 = vld [vmem:[%s330 + $0x44] sm:$0xf]
        %v431 = vld [vmem:[%s330 + $0x48] sm:$0xf]
        %v432 = vld [vmem:[%s330 + $0x4c] sm:$0xf]
        %v433 = vld [vmem:[%s330 + $0x50] sm:$0xf]
        %v434 = vld [vmem:[%s330 + $0x54] sm:$0xf]
        %v435 = vld [vmem:[%s330 + $0x58] sm:$0xf]
        %v436 = vld [vmem:[%s330 + $0x5c] sm:$0xf]
        %v437 = vld [vmem:[%s330 + $0x60] sm:$0xf]
        %v438 = vld [vmem:[%s330 + $0x64] sm:$0xf]
        %v439 = vld [vmem:[%s330 + $0x68] sm:$0xf]
        %v440 = vld [vmem:[%s330 + $0x6c] sm:$0xf]
        %v441 = vld [vmem:[%s330 + $0x70] sm:$0xf]
        %v442 = vld [vmem:[%s330 + $0x74] sm:$0xf]
        %v443 = vld [vmem:[%s330 + $0x78] sm:$0xf]
        %v444 = vld [vmem:[%s330 + $0x7c] sm:$0xf]
        %v445 = vld [vmem:[%s330 + $0x80] sm:$0xf]
        %v446 = vld [vmem:[%s330 + $0x84] sm:$0xf]
        %v447 = vld [vmem:[%s330 + $0x88] sm:$0xf]
        %v448 = vld [vmem:[%s330 + $0x8c] sm:$0xf]
        %v449 = vld [vmem:[%s330 + $0x90] sm:$0xf]
        %v450 = vld [vmem:[%s330 + $0x94] sm:$0xf]
        %v451 = vld [vmem:[%s330 + $0x98] sm:$0xf]
        %v452 = vld [vmem:[%s330 + $0x9c] sm:$0xf]
        %v453 = vld [vmem:[%s330 + $0xa0] sm:$0xf]
        %v454 = vld [vmem:[%s330 + $0xa4] sm:$0xf]
        %v455 = vld [vmem:[%s330 + $0xa8] sm:$0xf]
        %v456 = vld [vmem:[%s330 + $0xac] sm:$0xf]
        %v457 = vld [vmem:[%s330 + $0xb0] sm:$0xf]
        %v458 = vld [vmem:[%s330 + $0xb4] sm:$0xf]
        %v459 = vld [vmem:[%s330 + $0xb8] sm:$0xf]
        %v460 = vld [vmem:[%s330 + $0xbc] sm:$0xf]
        %v493 = vunpack.c.l.b16 %v381
        %v494 = vunpack.c.h.b16 %v381
        %v495 = vunpack.c.l.b16 %v382
        %v496 = vunpack.c.l.b16 %v383
        %v497 = vunpack.c.h.b16 %v383
        %v498 = vunpack.c.l.b16 %v384
        %v499 = vunpack.c.l.b16 %v385
        %v500 = vunpack.c.h.b16 %v385
        %v501 = vunpack.c.l.b16 %v386
        %v502 = vunpack.c.l.b16 %v387
        %v503 = vunpack.c.h.b16 %v387
        %v504 = vunpack.c.l.b16 %v388
        %v505 = vunpack.c.l.b16 %v389
        %v506 = vunpack.c.h.b16 %v389
        %v507 = vunpack.c.l.b16 %v390
        %v508 = vunpack.c.l.b16 %v391
        %v509 = vunpack.c.h.b16 %v391
        %v510 = vunpack.c.l.b16 %v392
        %v511 = vunpack.c.l.b16 %v393
        %v512 = vunpack.c.h.b16 %v393
        %v513 = vunpack.c.l.b16 %v394
        %v514 = vunpack.c.l.b16 %v395
        %v515 = vunpack.c.h.b16 %v395
        %v516 = vunpack.c.l.b16 %v396
        %v517 = vunpack.c.l.b16 %v397
        %v518 = vunpack.c.h.b16 %v397
        %v519 = vunpack.c.l.b16 %v398
        %v520 = vunpack.c.l.b16 %v399
        %v521 = vunpack.c.h.b16 %v399
        %v522 = vunpack.c.l.b16 %v400
        %v523 = vunpack.c.l.b16 %v401
        %v524 = vunpack.c.h.b16 %v401
        %v525 = vunpack.c.l.b16 %v402
        %v526 = vunpack.c.l.b16 %v403
        %v527 = vunpack.c.h.b16 %v403
        %v528 = vunpack.c.l.b16 %v404
        %v529 = vunpack.c.l.b16 %v405
        %v530 = vunpack.c.h.b16 %v405
        %v531 = vunpack.c.l.b16 %v406
        %v532 = vunpack.c.l.b16 %v407
        %v533 = vunpack.c.h.b16 %v407
        %v534 = vunpack.c.l.b16 %v408
        %v535 = vunpack.c.l.b16 %v409
        %v536 = vunpack.c.h.b16 %v409
        %v537 = vunpack.c.l.b16 %v410
        %v538 = vunpack.c.l.b16 %v411
        %v539 = vunpack.c.h.b16 %v411
        %v540 = vunpack.c.l.b16 %v412
        %v541 = vpack.c.b16 %v496, %v493
        %v542 = vpack.c.b16 %v497, %v494
        %v543 = vpack.c.b16 %v498, %v495
        %v544 = vpack.c.b16 %v502, %v499
        %v545 = vpack.c.b16 %v503, %v500
        %v546 = vpack.c.b16 %v504, %v501
        %v547 = vpack.c.b16 %v508, %v505
        %v548 = vpack.c.b16 %v509, %v506
        %v549 = vpack.c.b16 %v510, %v507
        %v550 = vpack.c.b16 %v514, %v511
        %v551 = vpack.c.b16 %v515, %v512
        %v552 = vpack.c.b16 %v516, %v513
        %v553 = vpack.c.b16 %v520, %v517
        %v554 = vpack.c.b16 %v521, %v518
        %v555 = vpack.c.b16 %v522, %v519
        %v556 = vpack.c.b16 %v526, %v523
        %v557 = vpack.c.b16 %v527, %v524
        %v558 = vpack.c.b16 %v528, %v525
        %v559 = vpack.c.b16 %v532, %v529
        %v560 = vpack.c.b16 %v533, %v530
        %v561 = vpack.c.b16 %v534, %v531
        %v562 = vpack.c.b16 %v538, %v535
        %v563 = vpack.c.b16 %v539, %v536
        %v564 = vpack.c.b16 %v540, %v537
        %v637 = vunpack.c.l.b16 %v413
        %v638 = vunpack.c.l.b16 %v414
        %v639 = vunpack.c.l.b16 %v415
        %v640 = vunpack.c.l.b16 %v416
        %v641 = vunpack.c.l.b16 %v417
        %v642 = vunpack.c.l.b16 %v418
        %v643 = vunpack.c.l.b16 %v419
        %v644 = vunpack.c.l.b16 %v420
        %v645 = vunpack.c.l.b16 %v421
        %v646 = vunpack.c.l.b16 %v422
        %v647 = vunpack.c.l.b16 %v423
        %v648 = vunpack.c.l.b16 %v424
        %v649 = vunpack.c.l.b16 %v425
        %v650 = vunpack.c.l.b16 %v426
        %v651 = vunpack.c.l.b16 %v427
        %v652 = vunpack.c.l.b16 %v428
        %v653 = vunpack.c.l.b16 %v429
        %v654 = vunpack.c.l.b16 %v430
        %v655 = vunpack.c.l.b16 %v431
        %v656 = vunpack.c.l.b16 %v432
        %v657 = vunpack.c.l.b16 %v433
        %v658 = vunpack.c.l.b16 %v434
        %v659 = vunpack.c.l.b16 %v435
        %v660 = vunpack.c.l.b16 %v436
        %v661 = vunpack.c.l.b16 %v437
        %v662 = vunpack.c.l.b16 %v438
        %v663 = vunpack.c.l.b16 %v439
        %v664 = vunpack.c.l.b16 %v440
        %v665 = vunpack.c.l.b16 %v441
        %v666 = vunpack.c.l.b16 %v442
        %v667 = vunpack.c.l.b16 %v443
        %v668 = vunpack.c.l.b16 %v444
        %v669 = vunpack.c.l.b16 %v445
        %v670 = vunpack.c.l.b16 %v446
        %v671 = vunpack.c.l.b16 %v447
        %v672 = vunpack.c.l.b16 %v448
        %v673 = vunpack.c.l.b16 %v449
        %v674 = vunpack.c.l.b16 %v450
        %v675 = vunpack.c.l.b16 %v451
        %v676 = vunpack.c.l.b16 %v452
        %v677 = vunpack.c.l.b16 %v453
        %v678 = vunpack.c.l.b16 %v454
        %v679 = vunpack.c.l.b16 %v455
        %v680 = vunpack.c.l.b16 %v456
        %v681 = vunpack.c.l.b16 %v457
        %v682 = vunpack.c.l.b16 %v458
        %v683 = vunpack.c.l.b16 %v459
        %v684 = vunpack.c.l.b16 %v460
        %v685 = vpack.c.b16 %v638, %v637
        %v686 = vpack.c.b16 %v640, %v639
        %v687 = vpack.c.b16 %v642, %v641
        %v688 = vpack.c.b16 %v644, %v643
        %v689 = vpack.c.b16 %v646, %v645
        %v690 = vpack.c.b16 %v648, %v647
        %v691 = vpack.c.b16 %v650, %v649
        %v692 = vpack.c.b16 %v652, %v651
        %v693 = vpack.c.b16 %v654, %v653
        %v694 = vpack.c.b16 %v656, %v655
        %v695 = vpack.c.b16 %v658, %v657
        %v696 = vpack.c.b16 %v660, %v659
        %v697 = vpack.c.b16 %v662, %v661
        %v698 = vpack.c.b16 %v664, %v663
        %v699 = vpack.c.b16 %v666, %v665
        %v700 = vpack.c.b16 %v668, %v667
        %v701 = vpack.c.b16 %v670, %v669
        %v702 = vpack.c.b16 %v672, %v671
        %v703 = vpack.c.b16 %v674, %v673
        %v704 = vpack.c.b16 %v676, %v675
        %v705 = vpack.c.b16 %v678, %v677
        %v706 = vpack.c.b16 %v680, %v679
        %v707 = vpack.c.b16 %v682, %v681
        %v708 = vpack.c.b16 %v684, %v683
        %733 = vmatprep.subr.bf16.mxu0 0
        %734 = vmatpush1.bf16.msra.mxu0 %v685
        %735 = vmatprep.subr.bf16.mxu0 0
        %736 = vmatpush1.bf16.msra.mxu0 %v686
        %737 = vmatprep.subr.bf16.mxu0 0
        %738 = vmatpush1.bf16.msra.mxu0 %v687
        %739 = vmatprep.subr.bf16.mxu0 0
        %740 = vmatpush1.bf16.msra.mxu0 %v688
        %741 = vmatprep.subr.bf16.mxu0 0
        %742 = vmatpush1.bf16.msra.mxu0 %v689
        %743 = vmatprep.subr.bf16.mxu0 0
        %744 = vmatpush1.bf16.msra.mxu0 %v690
        %745 = vmatprep.subr.bf16.mxu0 0
        %746 = vmatpush1.bf16.msra.mxu0 %v691
        %747 = vmatprep.subr.bf16.mxu0 0
        %748 = vmatpush1.bf16.msra.mxu0 %v692
        %749 = vmatprep.subr.bf16.mxu0 0
        %750 = vmatpush1.bf16.msra.mxu0 %v693
        %751 = vmatprep.subr.bf16.mxu0 0
        %752 = vmatpush1.bf16.msra.mxu0 %v694
        %753 = vmatprep.subr.bf16.mxu0 0
        %754 = vmatpush1.bf16.msra.mxu0 %v695
        %755 = vmatprep.subr.bf16.mxu0 0
        %756 = vmatpush1.bf16.msra.mxu0 %v696
        %757 = vmatprep.subr.bf16.mxu0 0
        %758 = vmatpush1.bf16.msra.mxu0 %v697
        %759 = vmatprep.subr.bf16.mxu0 0
        %760 = vmatpush1.bf16.msra.mxu0 %v698
        %761 = vmatprep.subr.bf16.mxu0 0
        %762 = vmatpush1.bf16.msra.mxu0 %v699
        %763 = vmatprep.subr.bf16.mxu0 0
        %764 = vmatpush1.bf16.msra.mxu0 %v700
        %765 = vmatprep.mubr.bf16.mxu0 %v542
        %766 = vmatmul.mubr.bf16.gmra.mrb[0].mxu0 %v541
        %v767 = vpop.f32.mrb[0].mxu0
        %v768 = vadd.f32 0.0, %v767
        %v769 = vpop.f32.mrb[0].mxu0
        %v770 = vpop.f32.mrb[0].mxu0
        %v771 = vadd.f32 0.0, %v770
        %v772 = vpop.f32.mrb[0].mxu0
        %773 = vmatprep.mubr.bf16.mxu0 %v545
        %774 = vmatmul.mubr.bf16.gmra.mrb[0].mxu0 %v544
        %v775 = vpop.f32.mrb[0].mxu0
        %v776 = vadd.f32 0.0, %v775
        %v777 = vpop.f32.mrb[0].mxu0
        %v778 = vpop.f32.mrb[0].mxu0
        %v779 = vadd.f32 0.0, %v778
        %v780 = vpop.f32.mrb[0].mxu0
        %781 = vmatprep.mubr.bf16.mxu0 %v548
        %782 = vmatmul.mubr.bf16.gmra.mrb[0].mxu0 %v547
        %v783 = vpop.f32.mrb[0].mxu0
        %v784 = vadd.f32 0.0, %v783
        %v785 = vpop.f32.mrb[0].mxu0
        %v786 = vpop.f32.mrb[0].mxu0
        %v787 = vadd.f32 0.0, %v786
        %v788 = vpop.f32.mrb[0].mxu0
        %789 = vmatprep.mubr.bf16.mxu0 %v551
        %790 = vmatmul.mubr.bf16.gmra.mrb[0].mxu0 %v550
        %v791 = vpop.f32.mrb[0].mxu0
        %v792 = vadd.f32 0.0, %v791
        %v793 = vpop.f32.mrb[0].mxu0
        %v794 = vpop.f32.mrb[0].mxu0
        %v795 = vadd.f32 0.0, %v794
        %v796 = vpop.f32.mrb[0].mxu0
        %797 = vmatprep.mubr.bf16.mxu0 %v554
        %798 = vmatmul.mubr.bf16.gmra.mrb[0].mxu0 %v553
        %v799 = vpop.f32.mrb[0].mxu0
        %v800 = vadd.f32 0.0, %v799
        %v801 = vpop.f32.mrb[0].mxu0
        %v802 = vpop.f32.mrb[0].mxu0
        %v803 = vadd.f32 0.0, %v802
        %v804 = vpop.f32.mrb[0].mxu0
        %805 = vmatprep.mubr.bf16.mxu0 %v557
        %806 = vmatmul.mubr.bf16.gmra.mrb[0].mxu0 %v556
        %v807 = vpop.f32.mrb[0].mxu0
        %v808 = vadd.f32 0.0, %v807
        %v809 = vpop.f32.mrb[0].mxu0
        %v810 = vpop.f32.mrb[0].mxu0
        %v811 = vadd.f32 0.0, %v810
        %v812 = vpop.f32.mrb[0].mxu0
        %813 = vmatprep.mubr.bf16.mxu0 %v560
        %814 = vmatmul.mubr.bf16.gmra.mrb[0].mxu0 %v559
        %v815 = vpop.f32.mrb[0].mxu0
        %v816 = vadd.f32 0.0, %v815
        %v817 = vpop.f32.mrb[0].mxu0
        %v818 = vpop.f32.mrb[0].mxu0
        %v819 = vadd.f32 0.0, %v818
        %v820 = vpop.f32.mrb[0].mxu0
        %821 = vmatprep.mubr.bf16.mxu0 %v563
        %822 = vmatmul.mubr.bf16.gmra.mrb[0].mxu0 %v562
        %v823 = vpop.f32.mrb[0].mxu0
        %v824 = vadd.f32 0.0, %v823
        %v825 = vpop.f32.mrb[0].mxu0
        %v826 = vpop.f32.mrb[0].mxu0
        %v827 = vadd.f32 0.0, %v826
        %v828 = vpop.f32.mrb[0].mxu0
        %829 = vdwg.mxu0
        %830 = vmatprep.subr.bf16.mxu0 0
        %831 = vmatpush1.bf16.msra.mxu0 %v701
        %832 = vmatprep.subr.bf16.mxu0 0
        %833 = vmatpush1.bf16.msra.mxu0 %v702
        %834 = vmatprep.subr.bf16.mxu0 0
        %835 = vmatpush1.bf16.msra.mxu0 %v703
        %836 = vmatprep.subr.bf16.mxu0 0
        %837 = vmatpush1.bf16.msra.mxu0 %v704
        %838 = vmatprep.subr.bf16.mxu0 0
        %839 = vmatpush1.bf16.msra.mxu0 %v705
        %840 = vmatprep.subr.bf16.mxu0 0
        %841 = vmatpush1.bf16.msra.mxu0 %v706
        %842 = vmatprep.subr.bf16.mxu0 0
        %843 = vmatpush1.bf16.msra.mxu0 %v707
        %844 = vmatprep.subr.bf16.mxu0 0
        %845 = vmatpush1.bf16.msra.mxu0 %v708
        %846 = vmatprep.subr.bf16.mxu0 0
        %847 = vmatpush1.bf16.msra.mxu0 0
        %848 = vmatprep.subr.bf16.mxu0 0
        %849 = vmatpush1.bf16.msra.mxu0 0
        %850 = vmatprep.subr.bf16.mxu0 0
        %851 = vmatpush1.bf16.msra.mxu0 0
        %852 = vmatprep.subr.bf16.mxu0 0
        %853 = vmatpush1.bf16.msra.mxu0 0
        %854 = vmatprep.subr.bf16.mxu0 0
        %855 = vmatpush1.bf16.msra.mxu0 0
        %856 = vmatprep.subr.bf16.mxu0 0
        %857 = vmatpush1.bf16.msra.mxu0 0
        %858 = vmatprep.subr.bf16.mxu0 0
        %859 = vmatpush1.bf16.msra.mxu0 0
        %860 = vmatprep.subr.bf16.mxu0 0
        %861 = vmatpush1.bf16.msra.mxu0 0
        %862 = vmatprep.mubr.bf16.mxu0 0
        %863 = vmatmul.mubr.bf16.gmra.mrb[0].mxu0 %v543
        %v864 = vpop.f32.mrb[0].mxu0
        %v865 = vadd.f32 %v768, %v864
        %v866 = vpop.f32.mrb[0].mxu0
        %v867 = vpop.f32.mrb[0].mxu0
        %v868 = vadd.f32 %v771, %v867
        %v869 = vpop.f32.mrb[0].mxu0
        %870 = vmatprep.mubr.bf16.mxu0 0
        %871 = vmatmul.mubr.bf16.gmra.mrb[0].mxu0 %v546
        %v872 = vpop.f32.mrb[0].mxu0
        %v873 = vadd.f32 %v776, %v872
        %v874 = vpop.f32.mrb[0].mxu0
        %v875 = vpop.f32.mrb[0].mxu0
        %v876 = vadd.f32 %v779, %v875
        %v877 = vpop.f32.mrb[0].mxu0
        %878 = vmatprep.mubr.bf16.mxu0 0
        %879 = vmatmul.mubr.bf16.gmra.mrb[0].mxu0 %v549
        %v880 = vpop.f32.mrb[0].mxu0
        %v881 = vadd.f32 %v784, %v880
        %v882 = vpop.f32.mrb[0].mxu0
        %v883 = vpop.f32.mrb[0].mxu0
        %v884 = vadd.f32 %v787, %v883
        %v885 = vpop.f32.mrb[0].mxu0
        %886 = vmatprep.mubr.bf16.mxu0 0
        %887 = vmatmul.mubr.bf16.gmra.mrb[0].mxu0 %v552
        %v888 = vpop.f32.mrb[0].mxu0
        %v889 = vadd.f32 %v792, %v888
        %v890 = vpop.f32.mrb[0].mxu0
        %v891 = vpop.f32.mrb[0].mxu0
        %v892 = vadd.f32 %v795, %v891
        %v893 = vpop.f32.mrb[0].mxu0
        %894 = vmatprep.mubr.bf16.mxu0 0
        %895 = vmatmul.mubr.bf16.gmra.mrb[0].mxu0 %v555
        %v896 = vpop.f32.mrb[0].mxu0
        %v897 = vadd.f32 %v800, %v896
        %v898 = vpop.f32.mrb[0].mxu0
        %v899 = vpop.f32.mrb[0].mxu0
        %v900 = vadd.f32 %v803, %v899
        %v901 = vpop.f32.mrb[0].mxu0
        %902 = vmatprep.mubr.bf16.mxu0 0
        %903 = vmatmul.mubr.bf16.gmra.mrb[0].mxu0 %v558
        %v904 = vpop.f32.mrb[0].mxu0
        %v905 = vadd.f32 %v808, %v904
        %v906 = vpop.f32.mrb[0].mxu0
        %v907 = vpop.f32.mrb[0].mxu0
        %v908 = vadd.f32 %v811, %v907
        %v909 = vpop.f32.mrb[0].mxu0
        %910 = vmatprep.mubr.bf16.mxu0 0
        %911 = vmatmul.mubr.bf16.gmra.mrb[0].mxu0 %v561
        %v912 = vpop.f32.mrb[0].mxu0
        %v913 = vadd.f32 %v816, %v912
        %v914 = vpop.f32.mrb[0].mxu0
        %v915 = vpop.f32.mrb[0].mxu0
        %v916 = vadd.f32 %v819, %v915
        %v917 = vpop.f32.mrb[0].mxu0
        %918 = vmatprep.mubr.bf16.mxu0 0
        %919 = vmatmul.mubr.bf16.gmra.mrb[0].mxu0 %v564
        %v920 = vpop.f32.mrb[0].mxu0
        %v921 = vadd.f32 %v824, %v920
        %v922 = vpop.f32.mrb[0].mxu0
        %v923 = vpop.f32.mrb[0].mxu0
        %v924 = vadd.f32 %v827, %v923
        %v925 = vpop.f32.mrb[0].mxu0
        %926 = vdwg.mxu0
        %v927 = vadd.f32 %v365, %v865
        %v928 = vadd.f32 %v366, %v868
        %v929 = vadd.f32 %v367, %v873
        %v930 = vadd.f32 %v368, %v876
        %v931 = vadd.f32 %v369, %v881
        %v932 = vadd.f32 %v370, %v884
        %v933 = vadd.f32 %v371, %v889
        %v934 = vadd.f32 %v372, %v892
        %v935 = vadd.f32 %v373, %v897
        %v936 = vadd.f32 %v374, %v900
        %v937 = vadd.f32 %v375, %v905
        %v938 = vadd.f32 %v376, %v908
        %v939 = vadd.f32 %v377, %v913
        %v940 = vadd.f32 %v378, %v916
        %v941 = vadd.f32 %v379, %v921
        %v942 = vadd.f32 %v380, %v924
        %943 = vst [vmem:[#allocation2] sm:$0xff] %v927
        %944 = vst [vmem:[#allocation2 + $0x8] sm:$0xff] %v928
        %945 = vst [vmem:[#allocation2 + $0x10] sm:$0xff] %v929
        %946 = vst [vmem:[#allocation2 + $0x18] sm:$0xff] %v930
        %947 = vst [vmem:[#allocation2 + $0x20] sm:$0xff] %v931
        %948 = vst [vmem:[#allocation2 + $0x28] sm:$0xff] %v932
        %949 = vst [vmem:[#allocation2 + $0x30] sm:$0xff] %v933
        %950 = vst [vmem:[#allocation2 + $0x38] sm:$0xff] %v934
        %951 = vst [vmem:[#allocation2 + $0x40] sm:$0xff] %v935
        %952 = vst [vmem:[#allocation2 + $0x48] sm:$0xff] %v936
        %953 = vst [vmem:[#allocation2 + $0x50] sm:$0xff] %v937
        %954 = vst [vmem:[#allocation2 + $0x58] sm:$0xff] %v938
        %955 = vst [vmem:[#allocation2 + $0x60] sm:$0xff] %v939
        %956 = vst [vmem:[#allocation2 + $0x68] sm:$0xff] %v940
        %957 = vst [vmem:[#allocation2 + $0x70] sm:$0xff] %v941
        %958 = vst [vmem:[#allocation2 + $0x78] sm:$0xff] %v942
        %p959 = scmp.eq.s32.totalorder %s21, 2
        // Predicated region
        $region63: #{video_features_forward.84} parent=53 // pred_check
          %p960 = pneg %p959
        $region64: #{video_features_forward.84} parent=53 // pred_check_branch
          %962 = sbr.rel (%p960) target = $region66
        $region65: #{video_features_forward.84} parent=53 // pred_region
          %v963 = vld [vmem:[#allocation2] sm:$0xff]
          %v964 = vld [vmem:[#allocation2 + $0x8] sm:$0xff]
          %v965 = vld [vmem:[#allocation2 + $0x10] sm:$0xff]
          %v966 = vld [vmem:[#allocation2 + $0x18] sm:$0xff]
          %v967 = vld [vmem:[#allocation2 + $0x20] sm:$0xff]
          %v968 = vld [vmem:[#allocation2 + $0x28] sm:$0xff]
          %v969 = vld [vmem:[#allocation2 + $0x30] sm:$0xff]
          %v970 = vld [vmem:[#allocation2 + $0x38] sm:$0xff]
          %v971 = vld [vmem:[#allocation2 + $0x40] sm:$0xff]
          %v972 = vld [vmem:[#allocation2 + $0x48] sm:$0xff]
          %v973 = vld [vmem:[#allocation2 + $0x50] sm:$0xff]
          %v974 = vld [vmem:[#allocation2 + $0x58] sm:$0xff]
          %v975 = vld [vmem:[#allocation2 + $0x60] sm:$0xff]
          %v976 = vld [vmem:[#allocation2 + $0x68] sm:$0xff]
          %v977 = vld [vmem:[#allocation2 + $0x70] sm:$0xff]
          %v978 = vld [vmem:[#allocation2 + $0x78] sm:$0xff]
          %v979 = vld [vmem:[%s334] sm:$0x1]
          %v981 = vlaneseq
          %v982 = vshrl.u32 %v981, 7
          %v983 = vsub.s32 0, %v982
          %v984 = vrot.slane %v979, %v983
          %v986 = vadd.f32 %v963, %v984
          %v987 = vadd.f32 %v964, %v984
          %v988 = vadd.f32 %v965, %v984
          %v989 = vadd.f32 %v966, %v984
          %v990 = vadd.f32 %v967, %v984
          %v991 = vadd.f32 %v968, %v984
          %v992 = vadd.f32 %v969, %v984
          %v993 = vadd.f32 %v970, %v984
          %v994 = vadd.f32 %v971, %v984
          %v995 = vadd.f32 %v972, %v984
          %v996 = vadd.f32 %v973, %v984
          %v997 = vadd.f32 %v974, %v984
          %v998 = vadd.f32 %v975, %v984
          %v999 = vadd.f32 %v976, %v984
          %v1000 = vadd.f32 %v977, %v984
          %v1001 = vadd.f32 %v978, %v984
          %v1002 = vmax.f32 %v986, 0.0
          %v1003 = vmax.f32 %v987, 0.0
          %v1004 = vmax.f32 %v988, 0.0
          %v1005 = vmax.f32 %v989, 0.0
          %v1006 = vmax.f32 %v990, 0.0
          %v1007 = vmax.f32 %v991, 0.0
          %v1008 = vmax.f32 %v992, 0.0
          %v1009 = vmax.f32 %v993, 0.0
          %v1010 = vmax.f32 %v994, 0.0
          %v1011 = vmax.f32 %v995, 0.0
          %v1012 = vmax.f32 %v996, 0.0
          %v1013 = vmax.f32 %v997, 0.0
          %v1014 = vmax.f32 %v998, 0.0
          %v1015 = vmax.f32 %v999, 0.0
          %v1016 = vmax.f32 %v1000, 0.0
          %v1017 = vmax.f32 %v1001, 0.0
          %1018 = vst [vmem:[%s342] sm:$0xff] %v1002
          %1019 = vst [vmem:[%s342 + $0x8] sm:$0xff] %v1003
          %1020 = vst [vmem:[%s342 + $0x10] sm:$0xff] %v1004
          %1021 = vst [vmem:[%s342 + $0x18] sm:$0xff] %v1005
          %1022 = vst [vmem:[%s342 + $0x20] sm:$0xff] %v1006
          %1023 = vst [vmem:[%s342 + $0x28] sm:$0xff] %v1007
          %1024 = vst [vmem:[%s342 + $0x30] sm:$0xff] %v1008
          %1025 = vst [vmem:[%s342 + $0x38] sm:$0xff] %v1009
          %1026 = vst [vmem:[%s342 + $0x40] sm:$0xff] %v1010
          %1027 = vst [vmem:[%s342 + $0x48] sm:$0xff] %v1011
          %1028 = vst [vmem:[%s342 + $0x50] sm:$0xff] %v1012
          %1029 = vst [vmem:[%s342 + $0x58] sm:$0xff] %v1013
          %1030 = vst [vmem:[%s342 + $0x60] sm:$0xff] %v1014
          %1031 = vst [vmem:[%s342 + $0x68] sm:$0xff] %v1015
          %1032 = vst [vmem:[%s342 + $0x70] sm:$0xff] %v1016
          %1033 = vst [vmem:[%s342 + $0x78] sm:$0xff] %v1017
        $region66: #{video_features_forward.84} parent=53 // pred_fallthru
          _
        %s1034 = smul.u32 16, %s19
        %p1035 = scmp.lt.s32.totalorder %s1034, 15
        %s1036 = scalar_select %p1035, %s1034, 15
        %p1037 = scmp.lt.s32.totalorder %s20, 0
        %s1038 = scalar_select %p1037, %s20, 0
        %s1039 = sadd.s32 %s1038, %s1036
        %s1040 = smul.addr %s1039, 8
        %s1041 = scalar_lea.vmem %s3, %s1040
        // Predicated region
        $region67: #{video_features_forward.84} parent=53 // pred_check
          %p1042 = pneg %p135
        $region68: #{video_features_forward.84} parent=53 // pred_check_branch
          %1044 = sbr.rel (%p1042) target = $region70
        $region69: #{video_features_forward.84} parent=53 // pred_region
          %s1045 = smul.u32 16, %s19
        $region70: #{video_features_forward.84} parent=53 // pred_fallthru
          _
        // Predicated region
        $region71: #{video_features_forward.84} parent=53 // pred_check
          %p1046 = pneg %p135
        $region72: #{video_features_forward.84} parent=53 // pred_check_branch
          %1048 = sbr.rel (%p1046) target = $region74
        $region73: #{video_features_forward.84} parent=53 // pred_region
          %s1049 = smul.u32 16, %s19
          %p1050 = scmp.lt.s32.totalorder %s1049, 15
          %s1051 = scalar_select %p1050, %s1049, 15
          %p1052 = scmp.lt.s32.totalorder %s20, 0
          %s1053 = scalar_select %p1052, %s20, 0
          %s1054 = sadd.s32 %s1053, %s1051
          %s1055 = smul.addr %s1054, 8
          %s1056 = scalar_lea.vmem %s3, %s1055
        $region74: #{video_features_forward.84} parent=53 // pred_fallthru
          _
      $region54: #{video_features_forward.84} parent=5 // pred_fallthru
        _
      %p1057 = scmp.le.s32.totalorder 2, %s9
      // Predicated region
      $region75: #{video_features_forward.84} parent=5 // pred_check
        %p1058 = pneg %p1057
      $region76: #{video_features_forward.84} parent=5 // pred_check_branch
        %1060 = sbr.rel (%p1058) target = $region78
      $region77: #{video_features_forward.84} parent=5 // pred_region
        %s1061 = ssub.s32 %s9, 2
      $region78: #{video_features_forward.84} parent=5 // pred_fallthru
        _
    $region6: #{video_features_forward.84} parent=1 // loop_footer
      %s13 = sadd.s32 1, %s9
    $region7: #{video_features_forward.84} parent=1 // loop_footer_branch
      %8 = sbr.rel target = $region3
    $region8: #{video_features_forward.84} parent=1 // loop_exit
      _

// kernel: video_features_forward.87
$region0: #{video_features_forward.87}
  #allocation0 [shape = 'u32[]', space=smem, size = 0x4, offset = 0x4, fixed_abs, tag = 'smem constant byte address 0x4 - core index']
  #allocation1 [shape = 'u32[144,128]{1,0:T(1,128)}', space=vmem, size = 0x12000, scoped, tag = 'internal scratch']
  %s0 = inlined_call_operand.vmem [shape: f32[128,128], index: 0, kind: input, shape index: {}]
  %s1 = inlined_call_operand.vmem [shape: f32[128,128], index: 1, kind: input, shape index: {}]
  %s2 = inlined_call_operand.vmem [shape: f32[128,128], index: 2, kind: output, shape index: {}]
  %s3 = sld [smem:[#allocation0]]
  $region18: #{video_features_forward.87} parent=0
    _
  %s5 = ssub.s32 1, %s3
  %s6 = scalar_select 0, %s5, %s3
  // Predicated region
  $region2: #{video_features_forward.87} parent=0 // pred_check
    _
  $region3: #{video_features_forward.87} parent=0 // pred_check_branch
    %8 = sbr.rel (0) target = $region5
  $region4: #{video_features_forward.87} parent=0 // pred_region
    _
  $region5: #{video_features_forward.87} parent=0 // pred_fallthru
    _
  // Predicated region
  $region6: #{video_features_forward.87} parent=0 // pred_check
    _
  $region7: #{video_features_forward.87} parent=0 // pred_check_branch
    %10 = sbr.rel (0) target = $region9
  $region8: #{video_features_forward.87} parent=0 // pred_region
    _
  $region9: #{video_features_forward.87} parent=0 // pred_fallthru
    _
  %v11 = vld [vmem:[%s0] sm:$0xff]
  %v12 = vld [vmem:[%s0 + $0x8] sm:$0xff]
  %v13 = vld [vmem:[%s0 + $0x10] sm:$0xff]
  %v14 = vld [vmem:[%s0 + $0x18] sm:$0xff]
  %v15 = vld [vmem:[%s0 + $0x20] sm:$0xff]
  %v16 = vld [vmem:[%s0 + $0x28] sm:$0xff]
  %v17 = vld [vmem:[%s0 + $0x30] sm:$0xff]
  %v18 = vld [vmem:[%s0 + $0x38] sm:$0xff]
  %v19 = vld [vmem:[%s0 + $0x40] sm:$0xff]
  %v20 = vld [vmem:[%s0 + $0x48] sm:$0xff]
  %v21 = vld [vmem:[%s0 + $0x50] sm:$0xff]
  %v22 = vld [vmem:[%s0 + $0x58] sm:$0xff]
  %v23 = vld [vmem:[%s0 + $0x60] sm:$0xff]
  %v24 = vld [vmem:[%s0 + $0x68] sm:$0xff]
  %v25 = vld [vmem:[%s0 + $0x70] sm:$0xff]
  %v26 = vld [vmem:[%s0 + $0x78] sm:$0xff]
  %v27 = vld [vmem:[%s1] sm:$0xff]
  %v28 = vld [vmem:[%s1 + $0x8] sm:$0xff]
  %v29 = vld [vmem:[%s1 + $0x10] sm:$0xff]
  %v30 = vld [vmem:[%s1 + $0x18] sm:$0xff]
  %v31 = vld [vmem:[%s1 + $0x20] sm:$0xff]
  %v32 = vld [vmem:[%s1 + $0x28] sm:$0xff]
  %v33 = vld [vmem:[%s1 + $0x30] sm:$0xff]
  %v34 = vld [vmem:[%s1 + $0x38] sm:$0xff]
  %v35 = vld [vmem:[%s1 + $0x40] sm:$0xff]
  %v36 = vld [vmem:[%s1 + $0x48] sm:$0xff]
  %v37 = vld [vmem:[%s1 + $0x50] sm:$0xff]
  %v38 = vld [vmem:[%s1 + $0x58] sm:$0xff]
  %v39 = vld [vmem:[%s1 + $0x60] sm:$0xff]
  %v40 = vld [vmem:[%s1 + $0x68] sm:$0xff]
  %v41 = vld [vmem:[%s1 + $0x70] sm:$0xff]
  %v42 = vld [vmem:[%s1 + $0x78] sm:$0xff]
  %v43 = vadd.f32 %v11, %v27
  %v44 = vadd.f32 %v12, %v28
  %v45 = vadd.f32 %v13, %v29
  %v46 = vadd.f32 %v14, %v30
  %v47 = vadd.f32 %v15, %v31
  %v48 = vadd.f32 %v16, %v32
  %v49 = vadd.f32 %v17, %v33
  %v50 = vadd.f32 %v18, %v34
  %v51 = vadd.f32 %v19, %v35
  %v52 = vadd.f32 %v20, %v36
  %v53 = vadd.f32 %v21, %v37
  %v54 = vadd.f32 %v22, %v38
  %v55 = vadd.f32 %v23, %v39
  %v56 = vadd.f32 %v24, %v40
  %v57 = vadd.f32 %v25, %v41
  %v58 = vadd.f32 %v26, %v42
  %v59 = vmax.f32 %v43, 0.0
  %v60 = vmax.f32 %v44, 0.0
  %v61 = vmax.f32 %v45, 0.0
  %v62 = vmax.f32 %v46, 0.0
  %v63 = vmax.f32 %v47, 0.0
  %v64 = vmax.f32 %v48, 0.0
  %v65 = vmax.f32 %v49, 0.0
  %v66 = vmax.f32 %v50, 0.0
  %v67 = vmax.f32 %v51, 0.0
  %v68 = vmax.f32 %v52, 0.0
  %v69 = vmax.f32 %v53, 0.0
  %v70 = vmax.f32 %v54, 0.0
  %v71 = vmax.f32 %v55, 0.0
  %v72 = vmax.f32 %v56, 0.0
  %v73 = vmax.f32 %v57, 0.0
  %v74 = vmax.f32 %v58, 0.0
  %75 = vst [vmem:[%s2] sm:$0xff] %v59
  %76 = vst [vmem:[%s2 + $0x8] sm:$0xff] %v60
  %77 = vst [vmem:[%s2 + $0x10] sm:$0xff] %v61
  %78 = vst [vmem:[%s2 + $0x18] sm:$0xff] %v62
  %79 = vst [vmem:[%s2 + $0x20] sm:$0xff] %v63
  %80 = vst [vmem:[%s2 + $0x28] sm:$0xff] %v64
  %81 = vst [vmem:[%s2 + $0x30] sm:$0xff] %v65
  %82 = vst [vmem:[%s2 + $0x38] sm:$0xff] %v66
  %83 = vst [vmem:[%s2 + $0x40] sm:$0xff] %v67
  %84 = vst [vmem:[%s2 + $0x48] sm:$0xff] %v68
  %85 = vst [vmem:[%s2 + $0x50] sm:$0xff] %v69
  %86 = vst [vmem:[%s2 + $0x58] sm:$0xff] %v70
  %87 = vst [vmem:[%s2 + $0x60] sm:$0xff] %v71
  %88 = vst [vmem:[%s2 + $0x68] sm:$0xff] %v72
  %89 = vst [vmem:[%s2 + $0x70] sm:$0xff] %v73
  %90 = vst [vmem:[%s2 + $0x78] sm:$0xff] %v74
  // Predicated region
  $region10: #{video_features_forward.87} parent=0 // pred_check
    _
  $region11: #{video_features_forward.87} parent=0 // pred_check_branch
    %92 = sbr.rel (0) target = $region13
  $region12: #{video_features_forward.87} parent=0 // pred_region
    _
  $region13: #{video_features_forward.87} parent=0 // pred_fallthru
    _
  // Predicated region
  $region14: #{video_features_forward.87} parent=0 // pred_check
    _
  $region15: #{video_features_forward.87} parent=0 // pred_check_branch
    %94 = sbr.rel (0) target = $region17
  $region16: #{video_features_forward.87} parent=0 // pred_region
    _
  $region17: #{video_features_forward.87} parent=0 // pred_fallthru
    _

// kernel: video_features_forward.88
$region0: #{video_features_forward.88}
  #allocation0 [shape = 'u32[]', space=smem, size = 0x4, offset = 0x4, fixed_abs, tag = 'smem constant byte address 0x4 - core index']
  #allocation1 [shape = 'u32[144,128]{1,0:T(1,128)}', space=vmem, size = 0x12000, scoped, tag = 'internal scratch']
  #allocation2 [shape = 'f32[128,128]{1,0:T(8,128)}', space=vmem, size = 0x10000, scoped, tag = 'scratch operand']
  %s0 = inlined_call_operand.vmem [shape: bf16[128,128], index: 0, kind: input, shape index: {}]
  %s1 = inlined_call_operand.vmem [shape: bf16[128,128], index: 1, kind: input, shape index: {}]
  %s2 = inlined_call_operand.vmem [shape: f32[1,128], index: 2, kind: input, shape index: {}]
  %s3 = inlined_call_operand.vmem [shape: f32[128,128], index: 3, kind: output, shape index: {}]
  %s4 = sld [smem:[#allocation0]]
  $region30: #{video_features_forward.88} parent=0
    _
  %s6 = ssub.s32 1, %s4
  %s7 = scalar_select 0, %s6, %s4
  // Predicated region
  $region2: #{video_features_forward.88} parent=0 // pred_check
    _
  $region3: #{video_features_forward.88} parent=0 // pred_check_branch
    %9 = sbr.rel (0) target = $region5
  $region4: #{video_features_forward.88} parent=0 // pred_region
    _
  $region5: #{video_features_forward.88} parent=0 // pred_fallthru
    _
  // Predicated region
  $region6: #{video_features_forward.88} parent=0 // pred_check
    _
  $region7: #{video_features_forward.88} parent=0 // pred_check_branch
    %11 = sbr.rel (0) target = $region9
  $region8: #{video_features_forward.88} parent=0 // pred_region
    _
  $region9: #{video_features_forward.88} parent=0 // pred_fallthru
    _
  // Predicated region
  $region10: #{video_features_forward.88} parent=0 // pred_check
    _
  $region11: #{video_features_forward.88} parent=0 // pred_check_branch
    %13 = sbr.rel (0) target = $region13
  $region12: #{video_features_forward.88} parent=0 // pred_region
    _
  $region13: #{video_features_forward.88} parent=0 // pred_fallthru
    _
  %p15 = scmp.eq.s32.totalorder 0, 0
  // Predicated region
  $region14: #{video_features_forward.88} parent=0 // pred_check
    %p16 = pneg %p15
  $region15: #{video_features_forward.88} parent=0 // pred_check_branch
    %18 = sbr.rel (%p16) target = $region17
  $region16: #{video_features_forward.88} parent=0 // pred_region
    %19 = vst [vmem:[#allocation2] sm:$0xff] 0.0
    %20 = vst [vmem:[#allocation2 + $0x8] sm:$0xff] 0.0
    %21 = vst [vmem:[#allocation2 + $0x10] sm:$0xff] 0.0
    %22 = vst [vmem:[#allocation2 + $0x18] sm:$0xff] 0.0
    %23 = vst [vmem:[#allocation2 + $0x20] sm:$0xff] 0.0
    %24 = vst [vmem:[#allocation2 + $0x28] sm:$0xff] 0.0
    %25 = vst [vmem:[#allocation2 + $0x30] sm:$0xff] 0.0
    %26 = vst [vmem:[#allocation2 + $0x38] sm:$0xff] 0.0
    %27 = vst [vmem:[#allocation2 + $0x40] sm:$0xff] 0.0
    %28 = vst [vmem:[#allocation2 + $0x48] sm:$0xff] 0.0
    %29 = vst [vmem:[#allocation2 + $0x50] sm:$0xff] 0.0
    %30 = vst [vmem:[#allocation2 + $0x58] sm:$0xff] 0.0
    %31 = vst [vmem:[#allocation2 + $0x60] sm:$0xff] 0.0
    %32 = vst [vmem:[#allocation2 + $0x68] sm:$0xff] 0.0
    %33 = vst [vmem:[#allocation2 + $0x70] sm:$0xff] 0.0
    %34 = vst [vmem:[#allocation2 + $0x78] sm:$0xff] 0.0
  $region17: #{video_features_forward.88} parent=0 // pred_fallthru
    _
  %v35 = vld [vmem:[#allocation2] sm:$0xff]
  %v36 = vld [vmem:[#allocation2 + $0x8] sm:$0xff]
  %v37 = vld [vmem:[#allocation2 + $0x10] sm:$0xff]
  %v38 = vld [vmem:[#allocation2 + $0x18] sm:$0xff]
  %v39 = vld [vmem:[#allocation2 + $0x20] sm:$0xff]
  %v40 = vld [vmem:[#allocation2 + $0x28] sm:$0xff]
  %v41 = vld [vmem:[#allocation2 + $0x30] sm:$0xff]
  %v42 = vld [vmem:[#allocation2 + $0x38] sm:$0xff]
  %v43 = vld [vmem:[#allocation2 + $0x40] sm:$0xff]
  %v44 = vld [vmem:[#allocation2 + $0x48] sm:$0xff]
  %v45 = vld [vmem:[#allocation2 + $0x50] sm:$0xff]
  %v46 = vld [vmem:[#allocation2 + $0x58] sm:$0xff]
  %v47 = vld [vmem:[#allocation2 + $0x60] sm:$0xff]
  %v48 = vld [vmem:[#allocation2 + $0x68] sm:$0xff]
  %v49 = vld [vmem:[#allocation2 + $0x70] sm:$0xff]
  %v50 = vld [vmem:[#allocation2 + $0x78] sm:$0xff]
  %v51 = vld [vmem:[%s0] sm:$0xf]
  %v52 = vld [vmem:[%s0 + $0x4] sm:$0xf]
  %v53 = vld [vmem:[%s0 + $0x8] sm:$0xf]
  %v54 = vld [vmem:[%s0 + $0xc] sm:$0xf]
  %v55 = vld [vmem:[%s0 + $0x10] sm:$0xf]
  %v56 = vld [vmem:[%s0 + $0x14] sm:$0xf]
  %v57 = vld [vmem:[%s0 + $0x18] sm:$0xf]
  %v58 = vld [vmem:[%s0 + $0x1c] sm:$0xf]
  %v59 = vld [vmem:[%s0 + $0x20] sm:$0xf]
  %v60 = vld [vmem:[%s0 + $0x24] sm:$0xf]
  %v61 = vld [vmem:[%s0 + $0x28] sm:$0xf]
  %v62 = vld [vmem:[%s0 + $0x2c] sm:$0xf]
  %v63 = vld [vmem:[%s0 + $0x30] sm:$0xf]
  %v64 = vld [vmem:[%s0 + $0x34] sm:$0xf]
  %v65 = vld [vmem:[%s0 + $0x38] sm:$0xf]
  %v66 = vld [vmem:[%s0 + $0x3c] sm:$0xf]
  %v67 = vld [vmem:[%s1] sm:$0xf]
  %v68 = vld [vmem:[%s1 + $0x4] sm:$0xf]
  %v69 = vld [vmem:[%s1 + $0x8] sm:$0xf]
  %v70 = vld [vmem:[%s1 + $0xc] sm:$0xf]
  %v71 = vld [vmem:[%s1 + $0x10] sm:$0xf]
  %v72 = vld [vmem:[%s1 + $0x14] sm:$0xf]
  %v73 = vld [vmem:[%s1 + $0x18] sm:$0xf]
  %v74 = vld [vmem:[%s1 + $0x1c] sm:$0xf]
  %v75 = vld [vmem:[%s1 + $0x20] sm:$0xf]
  %v76 = vld [vmem:[%s1 + $0x24] sm:$0xf]
  %v77 = vld [vmem:[%s1 + $0x28] sm:$0xf]
  %v78 = vld [vmem:[%s1 + $0x2c] sm:$0xf]
  %v79 = vld [vmem:[%s1 + $0x30] sm:$0xf]
  %v80 = vld [vmem:[%s1 + $0x34] sm:$0xf]
  %v81 = vld [vmem:[%s1 + $0x38] sm:$0xf]
  %v82 = vld [vmem:[%s1 + $0x3c] sm:$0xf]
  %v99 = vunpack.c.l.b16 %v51
  %v100 = vunpack.c.l.b16 %v52
  %v101 = vunpack.c.l.b16 %v53
  %v102 = vunpack.c.l.b16 %v54
  %v103 = vunpack.c.l.b16 %v55
  %v104 = vunpack.c.l.b16 %v56
  %v105 = vunpack.c.l.b16 %v57
  %v106 = vunpack.c.l.b16 %v58
  %v107 = vunpack.c.l.b16 %v59
  %v108 = vunpack.c.l.b16 %v60
  %v109 = vunpack.c.l.b16 %v61
  %v110 = vunpack.c.l.b16 %v62
  %v111 = vunpack.c.l.b16 %v63
  %v112 = vunpack.c.l.b16 %v64
  %v113 = vunpack.c.l.b16 %v65
  %v114 = vunpack.c.l.b16 %v66
  %v115 = vpack.c.b16 %v100, %v99
  %v116 = vpack.c.b16 %v102, %v101
  %v117 = vpack.c.b16 %v104, %v103
  %v118 = vpack.c.b16 %v106, %v105
  %v119 = vpack.c.b16 %v108, %v107
  %v120 = vpack.c.b16 %v110, %v109
  %v121 = vpack.c.b16 %v112, %v111
  %v122 = vpack.c.b16 %v114, %v113
  %v147 = vunpack.c.l.b16 %v67
  %v148 = vunpack.c.l.b16 %v68
  %v149 = vunpack.c.l.b16 %v69
  %v150 = vunpack.c.l.b16 %v70
  %v151 = vunpack.c.l.b16 %v71
  %v152 = vunpack.c.l.b16 %v72
  %v153 = vunpack.c.l.b16 %v73
  %v154 = vunpack.c.l.b16 %v74
  %v155 = vunpack.c.l.b16 %v75
  %v156 = vunpack.c.l.b16 %v76
  %v157 = vunpack.c.l.b16 %v77
  %v158 = vunpack.c.l.b16 %v78
  %v159 = vunpack.c.l.b16 %v79
  %v160 = vunpack.c.l.b16 %v80
  %v161 = vunpack.c.l.b16 %v81
  %v162 = vunpack.c.l.b16 %v82
  %v163 = vpack.c.b16 %v148, %v147
  %v164 = vpack.c.b16 %v150, %v149
  %v165 = vpack.c.b16 %v152, %v151
  %v166 = vpack.c.b16 %v154, %v153
  %v167 = vpack.c.b16 %v156, %v155
  %v168 = vpack.c.b16 %v158, %v157
  %v169 = vpack.c.b16 %v160, %v159
  %v170 = vpack.c.b16 %v162, %v161
  %179 = vmatprep.subr.bf16.mxu0 0
  %180 = vmatpush1.bf16.msra.mxu0 %v163
  %181 = vmatprep.subr.bf16.mxu0 0
  %182 = vmatpush1.bf16.msra.mxu0 %v164
  %183 = vmatprep.subr.bf16.mxu0 0
  %184 = vmatpush1.bf16.msra.mxu0 %v165
  %185 = vmatprep.subr.bf16.mxu0 0
  %186 = vmatpush1.bf16.msra.mxu0 %v166
  %187 = vmatprep.subr.bf16.mxu0 0
  %188 = vmatpush1.bf16.msra.mxu0 %v167
  %189 = vmatprep.subr.bf16.mxu0 0
  %190 = vmatpush1.bf16.msra.mxu0 %v168
  %191 = vmatprep.subr.bf16.mxu0 0
  %192 = vmatpush1.bf16.msra.mxu0 %v169
  %193 = vmatprep.subr.bf16.mxu0 0
  %194 = vmatpush1.bf16.msra.mxu0 %v170
  %195 = vmatprep.subr.bf16.mxu0 0
  %196 = vmatpush1.bf16.msra.mxu0 0
  %197 = vmatprep.subr.bf16.mxu0 0
  %198 = vmatpush1.bf16.msra.mxu0 0
  %199 = vmatprep.subr.bf16.mxu0 0
  %200 = vmatpush1.bf16.msra.mxu0 0
  %201 = vmatprep.subr.bf16.mxu0 0
  %202 = vmatpush1.bf16.msra.mxu0 0
  %203 = vmatprep.subr.bf16.mxu0 0
  %204 = vmatpush1.bf16.msra.mxu0 0
  %205 = vmatprep.subr.bf16.mxu0 0
  %206 = vmatpush1.bf16.msra.mxu0 0
  %207 = vmatprep.subr.bf16.mxu0 0
  %208 = vmatpush1.bf16.msra.mxu0 0
  %209 = vmatprep.subr.bf16.mxu0 0
  %210 = vmatpush1.bf16.msra.mxu0 0
  %211 = vmatprep.mubr.bf16.mxu0 0
  %212 = vmatmul.mubr.bf16.gmra.mrb[0].mxu0 %v115
  %v213 = vpop.f32.mrb[0].mxu0
  %v214 = vadd.f32 0.0, %v213
  %v215 = vpop.f32.mrb[0].mxu0
  %v216 = vpop.f32.mrb[0].mxu0
  %v217 = vadd.f32 0.0, %v216
  %v218 = vpop.f32.mrb[0].mxu0
  %219 = vmatprep.mubr.bf16.mxu0 0
  %220 = vmatmul.mubr.bf16.gmra.mrb[0].mxu0 %v116
  %v221 = vpop.f32.mrb[0].mxu0
  %v222 = vadd.f32 0.0, %v221
  %v223 = vpop.f32.mrb[0].mxu0
  %v224 = vpop.f32.mrb[0].mxu0
  %v225 = vadd.f32 0.0, %v224
  %v226 = vpop.f32.mrb[0].mxu0
  %227 = vmatprep.mubr.bf16.mxu0 0
  %228 = vmatmul.mubr.bf16.gmra.mrb[0].mxu0 %v117
  %v229 = vpop.f32.mrb[0].mxu0
  %v230 = vadd.f32 0.0, %v229
  %v231 = vpop.f32.mrb[0].mxu0
  %v232 = vpop.f32.mrb[0].mxu0
  %v233 = vadd.f32 0.0, %v232
  %v234 = vpop.f32.mrb[0].mxu0
  %235 = vmatprep.mubr.bf16.mxu0 0
  %236 = vmatmul.mubr.bf16.gmra.mrb[0].mxu0 %v118
  %v237 = vpop.f32.mrb[0].mxu0
  %v238 = vadd.f32 0.0, %v237
  %v239 = vpop.f32.mrb[0].mxu0
  %v240 = vpop.f32.mrb[0].mxu0
  %v241 = vadd.f32 0.0, %v240
  %v242 = vpop.f32.mrb[0].mxu0
  %243 = vmatprep.mubr.bf16.mxu0 0
  %244 = vmatmul.mubr.bf16.gmra.mrb[0].mxu0 %v119
  %v245 = vpop.f32.mrb[0].mxu0
  %v246 = vadd.f32 0.0, %v245
  %v247 = vpop.f32.mrb[0].mxu0
  %v248 = vpop.f32.mrb[0].mxu0
  %v249 = vadd.f32 0.0, %v248
  %v250 = vpop.f32.mrb[0].mxu0
  %251 = vmatprep.mubr.bf16.mxu0 0
  %252 = vmatmul.mubr.bf16.gmra.mrb[0].mxu0 %v120
  %v253 = vpop.f32.mrb[0].mxu0
  %v254 = vadd.f32 0.0, %v253
  %v255 = vpop.f32.mrb[0].mxu0
  %v256 = vpop.f32.mrb[0].mxu0
  %v257 = vadd.f32 0.0, %v256
  %v258 = vpop.f32.mrb[0].mxu0
  %259 = vmatprep.mubr.bf16.mxu0 0
  %260 = vmatmul.mubr.bf16.gmra.mrb[0].mxu0 %v121
  %v261 = vpop.f32.mrb[0].mxu0
  %v262 = vadd.f32 0.0, %v261
  %v263 = vpop.f32.mrb[0].mxu0
  %v264 = vpop.f32.mrb[0].mxu0
  %v265 = vadd.f32 0.0, %v264
  %v266 = vpop.f32.mrb[0].mxu0
  %267 = vmatprep.mubr.bf16.mxu0 0
  %268 = vmatmul.mubr.bf16.gmra.mrb[0].mxu0 %v122
  %v269 = vpop.f32.mrb[0].mxu0
  %v270 = vadd.f32 0.0, %v269
  %v271 = vpop.f32.mrb[0].mxu0
  %v272 = vpop.f32.mrb[0].mxu0
  %v273 = vadd.f32 0.0, %v272
  %v274 = vpop.f32.mrb[0].mxu0
  %275 = vdwg.mxu0
  %v276 = vadd.f32 %v35, %v214
  %v277 = vadd.f32 %v36, %v217
  %v278 = vadd.f32 %v37, %v222
  %v279 = vadd.f32 %v38, %v225
  %v280 = vadd.f32 %v39, %v230
  %v281 = vadd.f32 %v40, %v233
  %v282 = vadd.f32 %v41, %v238
  %v283 = vadd.f32 %v42, %v241
  %v284 = vadd.f32 %v43, %v246
  %v285 = vadd.f32 %v44, %v249
  %v286 = vadd.f32 %v45, %v254
  %v287 = vadd.f32 %v46, %v257
  %v288 = vadd.f32 %v47, %v262
  %v289 = vadd.f32 %v48, %v265
  %v290 = vadd.f32 %v49, %v270
  %v291 = vadd.f32 %v50, %v273
  %292 = vst [vmem:[#allocation2] sm:$0xff] %v276
  %293 = vst [vmem:[#allocation2 + $0x8] sm:$0xff] %v277
  %294 = vst [vmem:[#allocation2 + $0x10] sm:$0xff] %v278
  %295 = vst [vmem:[#allocation2 + $0x18] sm:$0xff] %v279
  %296 = vst [vmem:[#allocation2 + $0x20] sm:$0xff] %v280
  %297 = vst [vmem:[#allocation2 + $0x28] sm:$0xff] %v281
  %298 = vst [vmem:[#allocation2 + $0x30] sm:$0xff] %v282
  %299 = vst [vmem:[#allocation2 + $0x38] sm:$0xff] %v283
  %300 = vst [vmem:[#allocation2 + $0x40] sm:$0xff] %v284
  %301 = vst [vmem:[#allocation2 + $0x48] sm:$0xff] %v285
  %302 = vst [vmem:[#allocation2 + $0x50] sm:$0xff] %v286
  %303 = vst [vmem:[#allocation2 + $0x58] sm:$0xff] %v287
  %304 = vst [vmem:[#allocation2 + $0x60] sm:$0xff] %v288
  %305 = vst [vmem:[#allocation2 + $0x68] sm:$0xff] %v289
  %306 = vst [vmem:[#allocation2 + $0x70] sm:$0xff] %v290
  %307 = vst [vmem:[#allocation2 + $0x78] sm:$0xff] %v291
  // Predicated region
  $region18: #{video_features_forward.88} parent=0 // pred_check
    %p308 = pneg %p15
  $region19: #{video_features_forward.88} parent=0 // pred_check_branch
    %310 = sbr.rel (%p308) target = $region21
  $region20: #{video_features_forward.88} parent=0 // pred_region
    %v311 = vld [vmem:[#allocation2] sm:$0xff]
    %v312 = vld [vmem:[#allocation2 + $0x8] sm:$0xff]
    %v313 = vld [vmem:[#allocation2 + $0x10] sm:$0xff]
    %v314 = vld [vmem:[#allocation2 + $0x18] sm:$0xff]
    %v315 = vld [vmem:[#allocation2 + $0x20] sm:$0xff]
    %v316 = vld [vmem:[#allocation2 + $0x28] sm:$0xff]
    %v317 = vld [vmem:[#allocation2 + $0x30] sm:$0xff]
    %v318 = vld [vmem:[#allocation2 + $0x38] sm:$0xff]
    %v319 = vld [vmem:[#allocation2 + $0x40] sm:$0xff]
    %v320 = vld [vmem:[#allocation2 + $0x48] sm:$0xff]
    %v321 = vld [vmem:[#allocation2 + $0x50] sm:$0xff]
    %v322 = vld [vmem:[#allocation2 + $0x58] sm:$0xff]
    %v323 = vld [vmem:[#allocation2 + $0x60] sm:$0xff]
    %v324 = vld [vmem:[#allocation2 + $0x68] sm:$0xff]
    %v325 = vld [vmem:[#allocation2 + $0x70] sm:$0xff]
    %v326 = vld [vmem:[#allocation2 + $0x78] sm:$0xff]
    %v327 = vld [vmem:[%s2] sm:$0x1]
    %v329 = vlaneseq
    %v330 = vshrl.u32 %v329, 7
    %v331 = vsub.s32 0, %v330
    %v332 = vrot.slane %v327, %v331
    %v334 = vadd.f32 %v311, %v332
    %v335 = vadd.f32 %v312, %v332
    %v336 = vadd.f32 %v313, %v332
    %v337 = vadd.f32 %v314, %v332
    %v338 = vadd.f32 %v315, %v332
    %v339 = vadd.f32 %v316, %v332
    %v340 = vadd.f32 %v317, %v332
    %v341 = vadd.f32 %v318, %v332
    %v342 = vadd.f32 %v319, %v332
    %v343 = vadd.f32 %v320, %v332
    %v344 = vadd.f32 %v321, %v332
    %v345 = vadd.f32 %v322, %v332
    %v346 = vadd.f32 %v323, %v332
    %v347 = vadd.f32 %v324, %v332
    %v348 = vadd.f32 %v325, %v332
    %v349 = vadd.f32 %v326, %v332
    %v350 = vmax.f32 %v334, 0.0
    %v351 = vmax.f32 %v335, 0.0
    %v352 = vmax.f32 %v336, 0.0
    %v353 = vmax.f32 %v337, 0.0
    %v354 = vmax.f32 %v338, 0.0
    %v355 = vmax.f32 %v339, 0.0
    %v356 = vmax.f32 %v340, 0.0
    %v357 = vmax.f32 %v341, 0.0
    %v358 = vmax.f32 %v342, 0.0
    %v359 = vmax.f32 %v343, 0.0
    %v360 = vmax.f32 %v344, 0.0
    %v361 = vmax.f32 %v345, 0.0
    %v362 = vmax.f32 %v346, 0.0
    %v363 = vmax.f32 %v347, 0.0
    %v364 = vmax.f32 %v348, 0.0
    %v365 = vmax.f32 %v349, 0.0
    %366 = vst [vmem:[%s3] sm:$0xff] %v350
    %367 = vst [vmem:[%s3 + $0x8] sm:$0xff] %v351
    %368 = vst [vmem:[%s3 + $0x10] sm:$0xff] %v352
    %369 = vst [vmem:[%s3 + $0x18] sm:$0xff] %v353
    %370 = vst [vmem:[%s3 + $0x20] sm:$0xff] %v354
    %371 = vst [vmem:[%s3 + $0x28] sm:$0xff] %v355
    %372 = vst [vmem:[%s3 + $0x30] sm:$0xff] %v356
    %373 = vst [vmem:[%s3 + $0x38] sm:$0xff] %v357
    %374 = vst [vmem:[%s3 + $0x40] sm:$0xff] %v358
    %375 = vst [vmem:[%s3 + $0x48] sm:$0xff] %v359
    %376 = vst [vmem:[%s3 + $0x50] sm:$0xff] %v360
    %377 = vst [vmem:[%s3 + $0x58] sm:$0xff] %v361
    %378 = vst [vmem:[%s3 + $0x60] sm:$0xff] %v362
    %379 = vst [vmem:[%s3 + $0x68] sm:$0xff] %v363
    %380 = vst [vmem:[%s3 + $0x70] sm:$0xff] %v364
    %381 = vst [vmem:[%s3 + $0x78] sm:$0xff] %v365
  $region21: #{video_features_forward.88} parent=0 // pred_fallthru
    _
  // Predicated region
  $region22: #{video_features_forward.88} parent=0 // pred_check
    _
  $region23: #{video_features_forward.88} parent=0 // pred_check_branch
    %383 = sbr.rel (0) target = $region25
  $region24: #{video_features_forward.88} parent=0 // pred_region
    _
  $region25: #{video_features_forward.88} parent=0 // pred_fallthru
    _
  // Predicated region
  $region26: #{video_features_forward.88} parent=0 // pred_check
    _
  $region27: #{video_features_forward.88} parent=0 // pred_check_branch
    %385 = sbr.rel (0) target = $region29
  $region28: #{video_features_forward.88} parent=0 // pred_region
    _
  $region29: #{video_features_forward.88} parent=0 // pred_fallthru
    _

// kernel: video_features_forward.101
$region0: #{video_features_forward.101}
  #allocation0 [shape = 'u32[]', space=smem, size = 0x4, offset = 0x4, fixed_abs, tag = 'smem constant byte address 0x4 - core index']
  #allocation1 [shape = 'u32[144,128]{1,0:T(1,128)}', space=vmem, size = 0x12000, scoped, tag = 'internal scratch']
  #allocation2 [shape = 'f32[32,128]{1,0:T(8,128)}', space=vmem, size = 0x4000, scoped, tag = 'scratch operand']
  %s0 = inlined_call_operand.vmem [shape: bf16[32,1152], index: 0, kind: input, shape index: {}]
  %s1 = inlined_call_operand.vmem [shape: bf16[1152,128], index: 1, kind: input, shape index: {}]
  %s2 = inlined_call_operand.vmem [shape: f32[1,128], index: 2, kind: input, shape index: {}]
  %s3 = inlined_call_operand.vmem [shape: f32[32,128], index: 3, kind: output, shape index: {}]
  %s4 = sld [smem:[#allocation0]]
  $region79: #{video_features_forward.101} parent=0
    _
  %s6 = ssub.s32 1, %s4
  %s7 = scalar_select 0, %s6, %s4
  $region1: #{video_features_forward.101} parent=0
    #allocation3 [shape = 'u8[49152]{0}', space=vmem, size = 0xc000, scoped, tag = 'input window, operand 0']
    loop: start=0, step=1, limit=5
    $region2: #{video_features_forward.101} parent=1 // loop_pre_header
      _
    $region3: #{video_features_forward.101} parent=1 // loop_header
      %s9 = sphi 0, %s13
      %p10 = scmp.ge.s32.totalorder %s9, 5
      %s16 = sphi 0, %s35
      %s17 = sphi 0, %s31
      %s18 = sphi 0, %s27
      %s19 = sphi 0, %s16
      %s20 = sphi 0, %s17
      %s21 = sphi 0, %s18
      %s22 = sphi 0, %s19
      %s23 = sphi 0, %s20
      %s24 = sphi 0, %s21
      %s40 = sphi 0, %s42
      %s43 = sphi 0, %s40
      %s44 = sphi 0, %s43
      %s60 = sphi 0, %s44
      %s68 = sphi 0, %s70
      %s71 = sphi 0, %s68
      %s72 = sphi 0, %s71
      %s88 = sphi 0, %s72
      %s94 = sphi 0, %s96
      %s97 = sphi 0, %s94
      %s98 = sphi 0, %s97
      %s114 = sphi 0, %s98
      %s122 = sphi 0, %s124
      %s125 = sphi 0, %s122
      %s126 = sphi 0, %s125
      %s142 = sphi 0, %s126
    $region4: #{video_features_forward.101} parent=1 // loop_header_branch
      %12 = sbr.rel (%p10) target = $region8
    $region5: #{video_features_forward.101} parent=1 // loop_body
      %s14 = ssub.s32 %s9, 1
      %s15 = ssub.s32 %s9, 2
      %s25 = sadd.s32 1, %s18
      %p26 = scmp.ge.s32.totalorder %s25, 3
      %s27 = scalar_select %p26, 0, %s25
      %s28 = sadd.s32 1, %s17
      %s29 = scalar_select %p26, %s28, %s17
      %p30 = scmp.ge.s32.totalorder %s29, 1
      %s31 = scalar_select %p30, 0, %s29
      %s32 = sadd.s32 1, %s16
      %s33 = scalar_select %p30, %s32, %s16
      %p34 = scmp.ge.s32.totalorder %s33, 1
      %s35 = scalar_select %p34, 0, %s33
      %s36 = ssub.s32 %s16, %s35
      %s37 = ssub.s32 %s18, %s27
      %s38 = sor.u32 %s36, %s37
      %p39 = scmp.eq.s32.totalorder %s38, 0
      %s41 = sadd.s32 %s40, 1
      %s42 = scalar_select %p39, %s40, %s41
      %p45 = pneg %p39
      %p46 = scmp.eq.s32.totalorder %s9, 2
      %p47 = por %p45, %p46
      %p48 = scmp.ne.s32.totalorder %s40, %s43
      %p49 = scmp.eq.s32.totalorder %s9, 0
      %p50 = por %p48, %p49
      %p51 = scmp.ne.s32.totalorder %s40, %s43
      %p52 = scmp.eq.s32.totalorder %s14, 2
      %p53 = por %p51, %p52
      %p54 = scmp.ne.s32.totalorder %s43, %s44
      %p55 = scmp.eq.s32.totalorder %s14, 0
      %p56 = por %p54, %p55
      %p57 = scmp.ne.s32.totalorder %s43, %s44
      %p58 = scmp.eq.s32.totalorder %s15, 2
      %p59 = por %p57, %p58
      %p61 = scmp.ne.s32.totalorder %s44, %s60
      %p62 = scmp.eq.s32.totalorder %s15, 0
      %p63 = por %p61, %p62
      %s64 = ssub.s32 %s18, %s27
      %s65 = ssub.s32 %s17, %s31
      %s66 = sor.u32 %s64, %s65
      %p67 = scmp.eq.s32.totalorder %s66, 0
      %s69 = sadd.s32 %s68, 1
      %s70 = scalar_select %p67, %s68, %s69
      %p73 = pneg %p67
      %p74 = scmp.eq.s32.totalorder %s9, 2
      %p75 = por %p73, %p74
      %p76 = scmp.ne.s32.totalorder %s68, %s71
      %p77 = scmp.eq.s32.totalorder %s9, 0
      %p78 = por %p76, %p77
      %p79 = scmp.ne.s32.totalorder %s68, %s71
      %p80 = scmp.eq.s32.totalorder %s14, 2
      %p81 = por %p79, %p80
      %p82 = scmp.ne.s32.totalorder %s71, %s72
      %p83 = scmp.eq.s32.totalorder %s14, 0
      %p84 = por %p82, %p83
      %p85 = scmp.ne.s32.totalorder %s71, %s72
      %p86 = scmp.eq.s32.totalorder %s15, 2
      %p87 = por %p85, %p86
      %p89 = scmp.ne.s32.totalorder %s72, %s88
      %p90 = scmp.eq.s32.totalorder %s15, 0
      %p91 = por %p89, %p90
      %s92 = ssub.s32 %s17, %s31
      %p93 = scmp.eq.s32.totalorder %s92, 0
      %s95 = sadd.s32 %s94, 1
      %s96 = scalar_select %p93, %s94, %s95
      %p99 = pneg %p93
      %p100 = scmp.eq.s32.totalorder %s9, 2
      %p101 = por %p99, %p100
      %p102 = scmp.ne.s32.totalorder %s94, %s97
      %p103 = scmp.eq.s32.totalorder %s9, 0
      %p104 = por %p102, %p103
      %p105 = scmp.ne.s32.totalorder %s94, %s97
      %p106 = scmp.eq.s32.totalorder %s14, 2
      %p107 = por %p105, %p106
      %p108 = scmp.ne.s32.totalorder %s97, %s98
      %p109 = scmp.eq.s32.totalorder %s14, 0
      %p110 = por %p108, %p109
      %p111 = scmp.ne.s32.totalorder %s97, %s98
      %p112 = scmp.eq.s32.totalorder %s15, 2
      %p113 = por %p111, %p112
      %p115 = scmp.ne.s32.totalorder %s98, %s114
      %p116 = scmp.eq.s32.totalorder %s15, 0
      %p117 = por %p115, %p116
      %s118 = ssub.s32 %s16, %s35
      %s119 = ssub.s32 %s17, %s31
      %s120 = sor.u32 %s118, %s119
      %p121 = scmp.eq.s32.totalorder %s120, 0
      %s123 = sadd.s32 %s122, 1
      %s124 = scalar_select %p121, %s122, %s123
      %p127 = pneg %p121
      %p128 = scmp.eq.s32.totalorder %s9, 2
      %p129 = por %p127, %p128
      %p130 = scmp.ne.s32.totalorder %s122, %s125
      %p131 = scmp.eq.s32.totalorder %s9, 0
      %p132 = por %p130, %p131
      %p133 = scmp.ne.s32.totalorder %s122, %s125
      %p134 = scmp.eq.s32.totalorder %s14, 2
      %p135 = por %p133, %p134
      %p136 = scmp.ne.s32.totalorder %s125, %s126
      %p137 = scmp.eq.s32.totalorder %s14, 0
      %p138 = por %p136, %p137
      %p139 = scmp.ne.s32.totalorder %s125, %s126
      %p140 = scmp.eq.s32.totalorder %s15, 2
      %p141 = por %p139, %p140
      %p143 = scmp.ne.s32.totalorder %s126, %s142
      %p144 = scmp.eq.s32.totalorder %s15, 0
      %p145 = por %p143, %p144
      %p146 = scmp.le.s32.totalorder 1, %s9
      %p147 = scmp.lt.s32.totalorder %s9, 4
      %p148 = pnand %p146, %p147
      %p149 = pneg %p148
      // Predicated region
      $region9: #{video_features_forward.101} parent=5 // pred_check
        _
      $region10: #{video_features_forward.101} parent=5 // pred_check_branch
        %151 = sbr.rel (%p148) target = $region12
      $region11: #{video_features_forward.101} parent=5 // pred_region
        %s152 = ssub.s32 %s9, 1
        // Predicated region
        $region13: #{video_features_forward.101} parent=11 // pred_check
          %p153 = pneg %p110
        $region14: #{video_features_forward.101} parent=11 // pred_check_branch
          %155 = sbr.rel (%p153) target = $region16
        $region15: #{video_features_forward.101} parent=11 // pred_region
          %p156 = scmp.lt.s32.totalorder %s20, 0
          %s157 = scalar_select %p156, %s20, 0
          %s158 = scalar_lea.vmem %s2, %s157
        $region16: #{video_features_forward.101} parent=11 // pred_fallthru
          _
      $region12: #{video_features_forward.101} parent=5 // pred_fallthru
        _
      %p159 = scmp.lt.s32.totalorder %s9, 3
      // Predicated region
      $region17: #{video_features_forward.101} parent=5 // pred_check
        %p160 = pneg %p159
      $region18: #{video_features_forward.101} parent=5 // pred_check_branch
        %162 = sbr.rel (%p160) target = $region20
      $region19: #{video_features_forward.101} parent=5 // pred_region
        // Predicated region
        $region21: #{video_features_forward.101} parent=19 // pred_check
          %p163 = pneg %p50
        $region22: #{video_features_forward.101} parent=19 // pred_check_branch
          %165 = sbr.rel (%p163) target = $region24
        $region23: #{video_features_forward.101} parent=19 // pred_region
          %s166 = sand.u32 %s40, 1
          %s167 = sand.u32 %s40, 1
          %s168 = smul.addr %s167, 48
          %s169 = scalar_lea.vmem [#allocation3], %s168
          %s170 = smul.u32 4, %s16
          %s171 = smul.u32 3, %s18
          %s172 = smul.addr %s170, 9
          %s173 = sadd.s32 %s171, %s172
          %s174 = smul.addr %s173, 4
          %s175 = scalar_lea.vmem %s0, %s174
          // Predicated region
          $region25: #{video_features_forward.101} parent=23 // pred_check
            _
          $region26: #{video_features_forward.101} parent=23 // pred_check_branch
            %177 = sbr.rel (0) target = $region28
          $region27: #{video_features_forward.101} parent=23 // pred_region
            // Predicated region
            $region29: #{video_features_forward.101} parent=27 // pred_check
              _
            $region30: #{video_features_forward.101} parent=27 // pred_check_branch
              %179 = sbr.rel (0) target = $region32
            $region31: #{video_features_forward.101} parent=27 // pred_region
              %s180 = scalar_lea.vmem %s175, 8
              %s181 = scalar_lea.vmem %s169, 8 [#allocation3]
              loop: start=0, step=1, limit=1
              $region33: #{video_features_forward.101} parent=31 // loop_pre_header
                _
              $region34: #{video_features_forward.101} parent=31 // loop_header
                %s183 = sphi 0, %s187
                %p184 = scmp.ge.s32.totalorder %s183, 1
                %s188 = sphi %s175, %s175
                %s189 = sphi %s169, %s169
              $region35: #{video_features_forward.101} parent=31 // loop_header_branch
                %186 = sbr.rel (%p184) target = $region39
              $region36: #{video_features_forward.101} parent=31 // loop_body
                %v190 = vld [vmem:[%s188] sm:$0xff]
                %191 = vst [vmem:[%s189] sm:$0xff] %v190
                %v192 = vld [vmem:[%s188 + $0x24] sm:$0xff]
                %193 = vst [vmem:[%s189 + $0xc] sm:$0xff] %v192
                %v194 = vld [vmem:[%s188 + $0x48] sm:$0xff]
                %195 = vst [vmem:[%s189 + $0x18] sm:$0xff] %v194
                %v196 = vld [vmem:[%s188 + $0x6c] sm:$0xff]
                %197 = vst [vmem:[%s189 + $0x24] sm:$0xff] %v196
              $region37: #{video_features_forward.101} parent=31 // loop_footer
                %s187 = sadd.s32 1, %s183
              $region38: #{video_features_forward.101} parent=31 // loop_footer_branch
                %182 = sbr.rel target = $region34
              $region39: #{video_features_forward.101} parent=31 // loop_exit
                _
              loop: start=0, step=1, limit=1
              $region40: #{video_features_forward.101} parent=31 // loop_pre_header
                _
              $region41: #{video_features_forward.101} parent=31 // loop_header
                %s200 = sphi 0, %s204
                %p201 = scmp.ge.s32.totalorder %s200, 1
                %s205 = sphi %s180, %s180
                %s206 = sphi %s181, %s181
              $region42: #{video_features_forward.101} parent=31 // loop_header_branch
                %203 = sbr.rel (%p201) target = $region46
              $region43: #{video_features_forward.101} parent=31 // loop_body
                %v207 = vld [vmem:[%s205] sm:$0xf]
                %208 = vst [vmem:[%s206] sm:$0xf] %v207
                %v209 = vld [vmem:[%s205 + $0x24] sm:$0xf]
                %210 = vst [vmem:[%s206 + $0xc] sm:$0xf] %v209
                %v211 = vld [vmem:[%s205 + $0x48] sm:$0xf]
                %212 = vst [vmem:[%s206 + $0x18] sm:$0xf] %v211
                %v213 = vld [vmem:[%s205 + $0x6c] sm:$0xf]
                %214 = vst [vmem:[%s206 + $0x24] sm:$0xf] %v213
              $region44: #{video_features_forward.101} parent=31 // loop_footer
                %s204 = sadd.s32 1, %s200
              $region45: #{video_features_forward.101} parent=31 // loop_footer_branch
                %199 = sbr.rel target = $region41
              $region46: #{video_features_forward.101} parent=31 // loop_exit
                _
            $region32: #{video_features_forward.101} parent=27 // pred_fallthru
              _
          $region28: #{video_features_forward.101} parent=23 // pred_fallthru
            _
          %215 = vnop
        $region24: #{video_features_forward.101} parent=19 // pred_fallthru
          _
        // Predicated region
        $region47: #{video_features_forward.101} parent=19 // pred_check
          %p216 = pneg %p78
        $region48: #{video_features_forward.101} parent=19 // pred_check_branch
          %218 = sbr.rel (%p216) target = $region50
        $region49: #{video_features_forward.101} parent=19 // pred_region
          %s219 = smul.u32 48, %s18
          %p220 = scmp.lt.s32.totalorder %s219, 143
          %s221 = scalar_select %p220, %s219, 143
          %p222 = scmp.lt.s32.totalorder %s17, 0
          %s223 = scalar_select %p222, %s17, 0
          %s224 = sadd.s32 %s223, %s221
          %s225 = smul.addr %s224, 4
          %s226 = scalar_lea.vmem %s1, %s225
          %s227 = smul.u32 48, %s18
        $region50: #{video_features_forward.101} parent=19 // pred_fallthru
          _
      $region20: #{video_features_forward.101} parent=5 // pred_fallthru
        _
      %p228 = scmp.le.s32.totalorder 1, %s9
      %p229 = scmp.lt.s32.totalorder %s9, 4
      %p230 = pnand %p228, %p229
      %p231 = pneg %p230
      // Predicated region
      $region51: #{video_features_forward.101} parent=5 // pred_check
        _
      $region52: #{video_features_forward.101} parent=5 // pred_check_branch
        %233 = sbr.rel (%p230) target = $region54
      $region53: #{video_features_forward.101} parent=5 // pred_region
        %s234 = ssub.s32 %s9, 1
        %s235 = sand.u32 %s43, 1
        %s236 = sand.u32 %s43, 1
        %s237 = smul.addr %s236, 48
        %s238 = scalar_lea.vmem [#allocation3], %s237
        // Predicated region
        $region55: #{video_features_forward.101} parent=53 // pred_check
          %p239 = pneg %p56
        $region56: #{video_features_forward.101} parent=53 // pred_check_branch
          %241 = sbr.rel (%p239) target = $region58
        $region57: #{video_features_forward.101} parent=53 // pred_region
          _
        $region58: #{video_features_forward.101} parent=53 // pred_fallthru
          _
        %s242 = sand.u32 %s43, 1
        %s243 = sand.u32 %s43, 1
        %s244 = smul.addr %s243, 48
        %s245 = scalar_lea.vmem [#allocation3], %s244
        %p246 = pneg %p56
        %p247 = pneg %p53
        %s248 = smul.u32 48, %s21
        %p249 = scmp.lt.s32.totalorder %s248, 143
        %s250 = scalar_select %p249, %s248, 143
        %p251 = scmp.lt.s32.totalorder %s20, 0
        %s252 = scalar_select %p251, %s20, 0
        %s253 = sadd.s32 %s252, %s250
        %s254 = smul.addr %s253, 4
        %s255 = scalar_lea.vmem %s1, %s254
        %p256 = pneg %p84
        %p257 = pneg %p81
        %p258 = scmp.lt.s32.totalorder %s20, 0
        %s259 = scalar_select %p258, %s20, 0
        %s260 = scalar_lea.vmem %s2, %s259
        %p261 = pneg %p110
        %p262 = pneg %p107
        %p263 = pneg %p138
        %p264 = pneg %p135
        %s265 = smul.u32 4, %s19
        %p266 = scmp.lt.s32.totalorder %s265, 3
        %s267 = scalar_select %p266, %s265, 3
        %p268 = scmp.lt.s32.totalorder %s20, 0
        %s269 = scalar_select %p268, %s20, 0
        %s270 = sadd.s32 %s269, %s267
        %s271 = smul.addr %s270, 8
        %s272 = scalar_lea.vmem %s3, %s271
        %s273 = smul.u32 4, %s19
        %s274 = smul.u32 3, %s21
        %s275 = smul.u32 48, %s21
        %p276 = scmp.lt.s32.totalorder %s275, 143
        %s277 = scalar_select %p276, %s275, 143
        %p278 = scmp.lt.s32.totalorder %s20, 0
        %s279 = scalar_select %p278, %s20, 0
        %s280 = sadd.s32 %s279, %s277
        %s281 = smul.addr %s280, 4
        %s282 = scalar_lea.vmem %s1, %s281
        %s283 = smul.u32 48, %s21
        %p284 = scmp.lt.s32.totalorder %s20, 0
        %s285 = scalar_select %p284, %s20, 0
        %s286 = scalar_lea.vmem %s2, %s285
        %s287 = smul.u32 4, %s19
        %p288 = scmp.lt.s32.totalorder %s287, 3
        %s289 = scalar_select %p288, %s287, 3
        %p290 = scmp.lt.s32.totalorder %s20, 0
        %s291 = scalar_select %p290, %s20, 0
        %s292 = sadd.s32 %s291, %s289
        %s293 = smul.addr %s292, 8
        %s294 = scalar_lea.vmem %s3, %s293
        %s295 = smul.u32 4, %s19
        %p297 = scmp.eq.s32.totalorder %s21, 0
        // Predicated region
        $region59: #{video_features_forward.101} parent=53 // pred_check
          %p298 = pneg %p297
        $region60: #{video_features_forward.101} parent=53 // pred_check_branch
          %300 = sbr.rel (%p298) target = $region62
        $region61: #{video_features_forward.101} parent=53 // pred_region
          %301 = vst [vmem:[#allocation2] sm:$0xff] 0.0
          %302 = vst [vmem:[#allocation2 + $0x8] sm:$0xff] 0.0
          %303 = vst [vmem:[#allocation2 + $0x10] sm:$0xff] 0.0
          %304 = vst [vmem:[#allocation2 + $0x18] sm:$0xff] 0.0
        $region62: #{video_features_forward.101} parent=53 // pred_fallthru
          _
        %v305 = vld [vmem:[#allocation2] sm:$0xff]
        %v306 = vld [vmem:[#allocation2 + $0x8] sm:$0xff]
        %v307 = vld [vmem:[#allocation2 + $0x10] sm:$0xff]
        %v308 = vld [vmem:[#allocation2 + $0x18] sm:$0xff]
        %v309 = vld [vmem:[%s238] sm:$0xff]
        %v310 = vld [vmem:[%s238 + $0x8] sm:$0xf]
        %v311 = vld [vmem:[%s238 + $0xc] sm:$0xff]
        %v312 = vld [vmem:[%s238 + $0x14] sm:$0xf]
        %v313 = vld [vmem:[%s238 + $0x18] sm:$0xff]
        %v314 = vld [vmem:[%s238 + $0x20] sm:$0xf]
        %v315 = vld [vmem:[%s238 + $0x24] sm:$0xff]
        %v316 = vld [vmem:[%s238 + $0x2c] sm:$0xf]
        %v317 = vld [vmem:[%s282] sm:$0xf]
        %v318 = vld [vmem:[%s282 + $0x4] sm:$0xf]
        %v319 = vld [vmem:[%s282 + $0x8] sm:$0xf]
        %v320 = vld [vmem:[%s282 + $0xc] sm:$0xf]
        %v321 = vld [vmem:[%s282 + $0x10] sm:$0xf]
        %v322 = vld [vmem:[%s282 + $0x14] sm:$0xf]
        %v323 = vld [vmem:[%s282 + $0x18] sm:$0xf]
        %v324 = vld [vmem:[%s282 + $0x1c] sm:$0xf]
        %v325 = vld [vmem:[%s282 + $0x20] sm:$0xf]
        %v326 = vld [vmem:[%s282 + $0x24] sm:$0xf]
        %v327 = vld [vmem:[%s282 + $0x28] sm:$0xf]
        %v328 = vld [vmem:[%s282 + $0x2c] sm:$0xf]
        %v329 = vld [vmem:[%s282 + $0x30] sm:$0xf]
        %v330 = vld [vmem:[%s282 + $0x34] sm:$0xf]
        %v331 = vld [vmem:[%s282 + $0x38] sm:$0xf]
        %v332 = vld [vmem:[%s282 + $0x3c] sm:$0xf]
        %v333 = vld [vmem:[%s282 + $0x40] sm:$0xf]
        %v334 = vld [vmem:[%s282 + $0x44] sm:$0xf]
        %v335 = vld [vmem:[%s282 + $0x48] sm:$0xf]
        %v336 = vld [vmem:[%s282 + $0x4c] sm:$0xf]
        %v337 = vld [vmem:[%s282 + $0x50] sm:$0xf]
        %v338 = vld [vmem:[%s282 + $0x54] sm:$0xf]
        %v339 = vld [vmem:[%s282 + $0x58] sm:$0xf]
        %v340 = vld [vmem:[%s282 + $0x5c] sm:$0xf]
        %v341 = vld [vmem:[%s282 + $0x60] sm:$0xf]
        %v342 = vld [vmem:[%s282 + $0x64] sm:$0xf]
        %v343 = vld [vmem:[%s282 + $0x68] sm:$0xf]
        %v344 = vld [vmem:[%s282 + $0x6c] sm:$0xf]
        %v345 = vld [vmem:[%s282 + $0x70] sm:$0xf]
        %v346 = vld [vmem:[%s282 + $0x74] sm:$0xf]
        %v347 = vld [vmem:[%s282 + $0x78] sm:$0xf]
        %v348 = vld [vmem:[%s282 + $0x7c] sm:$0xf]
        %v349 = vld [vmem:[%s282 + $0x80] sm:$0xf]
        %v350 = vld [vmem:[%s282 + $0x84] sm:$0xf]
        %v351 = vld [vmem:[%s282 + $0x88] sm:$0xf]
        %v352 = vld [vmem:[%s282 + $0x8c] sm:$0xf]
        %v353 = vld [vmem:[%s282 + $0x90] sm:$0xf]
        %v354 = vld [vmem:[%s282 + $0x94] sm:$0xf]
        %v355 = vld [vmem:[%s282 + $0x98] sm:$0xf]
        %v356 = vld [vmem:[%s282 + $0x9c] sm:$0xf]
        %v357 = vld [vmem:[%s282 + $0xa0] sm:$0xf]
        %v358 = vld [vmem:[%s282 + $0xa4] sm:$0xf]
        %v359 = vld [vmem:[%s282 + $0xa8] sm:$0xf]
        %v360 = vld [vmem:[%s282 + $0xac] sm:$0xf]
        %v361 = vld [vmem:[%s282 + $0xb0] sm:$0xf]
        %v362 = vld [vmem:[%s282 + $0xb4] sm:$0xf]
        %v363 = vld [vmem:[%s282 + $0xb8] sm:$0xf]
        %v364 = vld [vmem:[%s282 + $0xbc] sm:$0xf]
        %v373 = vunpack.c.l.b16 %v309
        %v374 = vunpack.c.h.b16 %v309
        %v375 = vunpack.c.l.b16 %v310
        %v376 = vunpack.c.l.b16 %v311
        %v377 = vunpack.c.h.b16 %v311
        %v378 = vunpack.c.l.b16 %v312
        %v379 = vunpack.c.l.b16 %v313
        %v380 = vunpack.c.h.b16 %v313
        %v381 = vunpack.c.l.b16 %v314
        %v382 = vunpack.c.l.b16 %v315
        %v383 = vunpack.c.h.b16 %v315
        %v384 = vunpack.c.l.b16 %v316
        %v385 = vpack.c.b16 %v376, %v373
        %v386 = vpack.c.b16 %v377, %v374
        %v387 = vpack.c.b16 %v378, %v375
        %v388 = vpack.c.b16 %v382, %v379
        %v389 = vpack.c.b16 %v383, %v380
        %v390 = vpack.c.b16 %v384, %v381
        %v445 = vunpack.c.l.b16 %v317
        %v446 = vunpack.c.l.b16 %v318
        %v447 = vunpack.c.l.b16 %v319
        %v448 = vunpack.c.l.b16 %v320
        %v449 = vunpack.c.l.b16 %v321
        %v450 = vunpack.c.l.b16 %v322
        %v451 = vunpack.c.l.b16 %v323
        %v452 = vunpack.c.l.b16 %v324
        %v453 = vunpack.c.l.b16 %v325
        %v454 = vunpack.c.l.b16 %v326
        %v455 = vunpack.c.l.b16 %v327
        %v456 = vunpack.c.l.b16 %v328
        %v457 = vunpack.c.l.b16 %v329
        %v458 = vunpack.c.l.b16 %v330
        %v459 = vunpack.c.l.b16 %v331
        %v460 = vunpack.c.l.b16 %v332
        %v461 = vunpack.c.l.b16 %v333
        %v462 = vunpack.c.l.b16 %v334
        %v463 = vunpack.c.l.b16 %v335
        %v464 = vunpack.c.l.b16 %v336
        %v465 = vunpack.c.l.b16 %v337
        %v466 = vunpack.c.l.b16 %v338
        %v467 = vunpack.c.l.b16 %v339
        %v468 = vunpack.c.l.b16 %v340
        %v469 = vunpack.c.l.b16 %v341
        %v470 = vunpack.c.l.b16 %v342
        %v471 = vunpack.c.l.b16 %v343
        %v472 = vunpack.c.l.b16 %v344
        %v473 = vunpack.c.l.b16 %v345
        %v474 = vunpack.c.l.b16 %v346
        %v475 = vunpack.c.l.b16 %v347
        %v476 = vunpack.c.l.b16 %v348
        %v477 = vunpack.c.l.b16 %v349
        %v478 = vunpack.c.l.b16 %v350
        %v479 = vunpack.c.l.b16 %v351
        %v480 = vunpack.c.l.b16 %v352
        %v481 = vunpack.c.l.b16 %v353
        %v482 = vunpack.c.l.b16 %v354
        %v483 = vunpack.c.l.b16 %v355
        %v484 = vunpack.c.l.b16 %v356
        %v485 = vunpack.c.l.b16 %v357
        %v486 = vunpack.c.l.b16 %v358
        %v487 = vunpack.c.l.b16 %v359
        %v488 = vunpack.c.l.b16 %v360
        %v489 = vunpack.c.l.b16 %v361
        %v490 = vunpack.c.l.b16 %v362
        %v491 = vunpack.c.l.b16 %v363
        %v492 = vunpack.c.l.b16 %v364
        %v493 = vpack.c.b16 %v446, %v445
        %v494 = vpack.c.b16 %v448, %v447
        %v495 = vpack.c.b16 %v450, %v449
        %v496 = vpack.c.b16 %v452, %v451
        %v497 = vpack.c.b16 %v454, %v453
        %v498 = vpack.c.b16 %v456, %v455
        %v499 = vpack.c.b16 %v458, %v457
        %v500 = vpack.c.b16 %v460, %v459
        %v501 = vpack.c.b16 %v462, %v461
        %v502 = vpack.c.b16 %v464, %v463
        %v503 = vpack.c.b16 %v466, %v465
        %v504 = vpack.c.b16 %v468, %v467
        %v505 = vpack.c.b16 %v470, %v469
        %v506 = vpack.c.b16 %v472, %v471
        %v507 = vpack.c.b16 %v474, %v473
        %v508 = vpack.c.b16 %v476, %v475
        %v509 = vpack.c.b16 %v478, %v477
        %v510 = vpack.c.b16 %v480, %v479
        %v511 = vpack.c.b16 %v482, %v481
        %v512 = vpack.c.b16 %v484, %v483
        %v513 = vpack.c.b16 %v486, %v485
        %v514 = vpack.c.b16 %v488, %v487
        %v515 = vpack.c.b16 %v490, %v489
        %v516 = vpack.c.b16 %v492, %v491
        %541 = vmatprep.subr.bf16.mxu0 0
        %542 = vmatpush1.bf16.msra.mxu0 %v493
        %543 = vmatprep.subr.bf16.mxu0 0
        %544 = vmatpush1.bf16.msra.mxu0 %v494
        %545 = vmatprep.subr.bf16.mxu0 0
        %546 = vmatpush1.bf16.msra.mxu0 %v495
        %547 = vmatprep.subr.bf16.mxu0 0
        %548 = vmatpush1.bf16.msra.mxu0 %v496
        %549 = vmatprep.subr.bf16.mxu0 0
        %550 = vmatpush1.bf16.msra.mxu0 %v497
        %551 = vmatprep.subr.bf16.mxu0 0
        %552 = vmatpush1.bf16.msra.mxu0 %v498
        %553 = vmatprep.subr.bf16.mxu0 0
        %554 = vmatpush1.bf16.msra.mxu0 %v499
        %555 = vmatprep.subr.bf16.mxu0 0
        %556 = vmatpush1.bf16.msra.mxu0 %v500
        %557 = vmatprep.subr.bf16.mxu0 0
        %558 = vmatpush1.bf16.msra.mxu0 %v501
        %559 = vmatprep.subr.bf16.mxu0 0
        %560 = vmatpush1.bf16.msra.mxu0 %v502
        %561 = vmatprep.subr.bf16.mxu0 0
        %562 = vmatpush1.bf16.msra.mxu0 %v503
        %563 = vmatprep.subr.bf16.mxu0 0
        %564 = vmatpush1.bf16.msra.mxu0 %v504
        %565 = vmatprep.subr.bf16.mxu0 0
        %566 = vmatpush1.bf16.msra.mxu0 %v505
        %567 = vmatprep.subr.bf16.mxu0 0
        %568 = vmatpush1.bf16.msra.mxu0 %v506
        %569 = vmatprep.subr.bf16.mxu0 0
        %570 = vmatpush1.bf16.msra.mxu0 %v507
        %571 = vmatprep.subr.bf16.mxu0 0
        %572 = vmatpush1.bf16.msra.mxu0 %v508
        %573 = vmatprep.mubr.bf16.mxu0 %v386
        %574 = vmatmul.mubr.bf16.gmra.mrb[0].mxu0 %v385
        %v575 = vpop.f32.mrb[0].mxu0
        %v576 = vadd.f32 0.0, %v575
        %v577 = vpop.f32.mrb[0].mxu0
        %v578 = vpop.f32.mrb[0].mxu0
        %v579 = vadd.f32 0.0, %v578
        %v580 = vpop.f32.mrb[0].mxu0
        %581 = vmatprep.mubr.bf16.mxu0 %v389
        %582 = vmatmul.mubr.bf16.gmra.mrb[0].mxu0 %v388
        %v583 = vpop.f32.mrb[0].mxu0
        %v584 = vadd.f32 0.0, %v583
        %v585 = vpop.f32.mrb[0].mxu0
        %v586 = vpop.f32.mrb[0].mxu0
        %v587 = vadd.f32 0.0, %v586
        %v588 = vpop.f32.mrb[0].mxu0
        %589 = vdwg.mxu0
        %590 = vmatprep.subr.bf16.mxu0 0
        %591 = vmatpush1.bf16.msra.mxu0 %v509
        %592 = vmatprep.subr.bf16.mxu0 0
        %593 = vmatpush1.bf16.msra.mxu0 %v510
        %594 = vmatprep.subr.bf16.mxu0 0
        %595 = vmatpush1.bf16.msra.mxu0 %v511
        %596 = vmatprep.subr.bf16.mxu0 0
        %597 = vmatpush1.bf16.msra.mxu0 %v512
        %598 = vmatprep.subr.bf16.mxu0 0
        %599 = vmatpush1.bf16.msra.mxu0 %v513
        %600 = vmatprep.subr.bf16.mxu0 0
        %601 = vmatpush1.bf16.msra.mxu0 %v514
        %602 = vmatprep.subr.bf16.mxu0 0
        %603 = vmatpush1.bf16.msra.mxu0 %v515
        %604 = vmatprep.subr.bf16.mxu0 0
        %605 = vmatpush1.bf16.msra.mxu0 %v516
        %606 = vmatprep.subr.bf16.mxu0 0
        %607 = vmatpush1.bf16.msra.mxu0 0
        %608 = vmatprep.subr.bf16.mxu0 0
        %609 = vmatpush1.bf16.msra.mxu0 0
        %610 = vmatprep.subr.bf16.mxu0 0
        %611 = vmatpush1.bf16.msra.mxu0 0
        %612 = vmatprep.subr.bf16.mxu0 0
        %613 = vmatpush1.bf16.msra.mxu0 0
        %614 = vmatprep.subr.bf16.mxu0 0
        %615 = vmatpush1.bf16.msra.mxu0 0
        %616 = vmatprep.subr.bf16.mxu0 0
        %617 = vmatpush1.bf16.msra.mxu0 0
        %618 = vmatprep.subr.bf16.mxu0 0
        %619 = vmatpush1.bf16.msra.mxu0 0
        %620 = vmatprep.subr.bf16.mxu0 0
        %621 = vmatpush1.bf16.msra.mxu0 0
        %622 = vmatprep.mubr.bf16.mxu0 0
        %623 = vmatmul.mubr.bf16.gmra.mrb[0].mxu0 %v387
        %v624 = vpop.f32.mrb[0].mxu0
        %v625 = vadd.f32 %v576, %v624
        %v626 = vpop.f32.mrb[0].mxu0
        %v627 = vpop.f32.mrb[0].mxu0
        %v628 = vadd.f32 %v579, %v627
        %v629 = vpop.f32.mrb[0].mxu0
        %630 = vmatprep.mubr.bf16.mxu0 0
        %631 = vmatmul.mubr.bf16.gmra.mrb[0].mxu0 %v390
        %v632 = vpop.f32.mrb[0].mxu0
        %v633 = vadd.f32 %v584, %v632
        %v634 = vpop.f32.mrb[0].mxu0
        %v635 = vpop.f32.mrb[0].mxu0
        %v636 = vadd.f32 %v587, %v635
        %v637 = vpop.f32.mrb[0].mxu0
        %638 = vdwg.mxu0
        %v639 = vadd.f32 %v305, %v625
        %v640 = vadd.f32 %v306, %v628
        %v641 = vadd.f32 %v307, %v633
        %v642 = vadd.f32 %v308, %v636
        %643 = vst [vmem:[#allocation2] sm:$0xff] %v639
        %644 = vst [vmem:[#allocation2 + $0x8] sm:$0xff] %v640
        %645 = vst [vmem:[#allocation2 + $0x10] sm:$0xff] %v641
        %646 = vst [vmem:[#allocation2 + $0x18] sm:$0xff] %v642
        %p647 = scmp.eq.s32.totalorder %s21, 2
        // Predicated region
        $region63: #{video_features_forward.101} parent=53 // pred_check
          %p648 = pneg %p647
        $region64: #{video_features_forward.101} parent=53 // pred_check_branch
          %650 = sbr.rel (%p648) target = $region66
        $region65: #{video_features_forward.101} parent=53 // pred_region
          %v651 = vld [vmem:[#allocation2] sm:$0xff]
          %v652 = vld [vmem:[#allocation2 + $0x8] sm:$0xff]
          %v653 = vld [vmem:[#allocation2 + $0x10] sm:$0xff]
          %v654 = vld [vmem:[#allocation2 + $0x18] sm:$0xff]
          %v655 = vld [vmem:[%s286] sm:$0x1]
          %v657 = vlaneseq
          %v658 = vshrl.u32 %v657, 7
          %v659 = vsub.s32 0, %v658
          %v660 = vrot.slane %v655, %v659
          %v662 = vadd.f32 %v651, %v660
          %v663 = vadd.f32 %v652, %v660
          %v664 = vadd.f32 %v653, %v660
          %v665 = vadd.f32 %v654, %v660
          %v666 = vmax.f32 %v662, 0.0
          %v667 = vmax.f32 %v663, 0.0
          %v668 = vmax.f32 %v664, 0.0
          %v669 = vmax.f32 %v665, 0.0
          %670 = vst [vmem:[%s294] sm:$0xff] %v666
          %671 = vst [vmem:[%s294 + $0x8] sm:$0xff] %v667
          %672 = vst [vmem:[%s294 + $0x10] sm:$0xff] %v668
          %673 = vst [vmem:[%s294 + $0x18] sm:$0xff] %v669
        $region66: #{video_features_forward.101} parent=53 // pred_fallthru
          _
        %s674 = smul.u32 4, %s19
        %p675 = scmp.lt.s32.totalorder %s674, 3
        %s676 = scalar_select %p675, %s674, 3
        %p677 = scmp.lt.s32.totalorder %s20, 0
        %s678 = scalar_select %p677, %s20, 0
        %s679 = sadd.s32 %s678, %s676
        %s680 = smul.addr %s679, 8
        %s681 = scalar_lea.vmem %s3, %s680
        // Predicated region
        $region67: #{video_features_forward.101} parent=53 // pred_check
          %p682 = pneg %p135
        $region68: #{video_features_forward.101} parent=53 // pred_check_branch
          %684 = sbr.rel (%p682) target = $region70
        $region69: #{video_features_forward.101} parent=53 // pred_region
          %s685 = smul.u32 4, %s19
        $region70: #{video_features_forward.101} parent=53 // pred_fallthru
          _
        // Predicated region
        $region71: #{video_features_forward.101} parent=53 // pred_check
          %p686 = pneg %p135
        $region72: #{video_features_forward.101} parent=53 // pred_check_branch
          %688 = sbr.rel (%p686) target = $region74
        $region73: #{video_features_forward.101} parent=53 // pred_region
          %s689 = smul.u32 4, %s19
          %p690 = scmp.lt.s32.totalorder %s689, 3
          %s691 = scalar_select %p690, %s689, 3
          %p692 = scmp.lt.s32.totalorder %s20, 0
          %s693 = scalar_select %p692, %s20, 0
          %s694 = sadd.s32 %s693, %s691
          %s695 = smul.addr %s694, 8
          %s696 = scalar_lea.vmem %s3, %s695
        $region74: #{video_features_forward.101} parent=53 // pred_fallthru
          _
      $region54: #{video_features_forward.101} parent=5 // pred_fallthru
        _
      %p697 = scmp.le.s32.totalorder 2, %s9
      // Predicated region
      $region75: #{video_features_forward.101} parent=5 // pred_check
        %p698 = pneg %p697
      $region76: #{video_features_forward.101} parent=5 // pred_check_branch
        %700 = sbr.rel (%p698) target = $region78
      $region77: #{video_features_forward.101} parent=5 // pred_region
        %s701 = ssub.s32 %s9, 2
      $region78: #{video_features_forward.101} parent=5 // pred_fallthru
        _
    $region6: #{video_features_forward.101} parent=1 // loop_footer
      %s13 = sadd.s32 1, %s9
    $region7: #{video_features_forward.101} parent=1 // loop_footer_branch
      %8 = sbr.rel target = $region3
    $region8: #{video_features_forward.101} parent=1 // loop_exit
      _

// kernel: video_features_forward.102
$region0: #{video_features_forward.102}
  #allocation0 [shape = 'u32[]', space=smem, size = 0x4, offset = 0x4, fixed_abs, tag = 'smem constant byte address 0x4 - core index']
  #allocation1 [shape = 'u32[144,128]{1,0:T(1,128)}', space=vmem, size = 0x12000, scoped, tag = 'internal scratch']
  #allocation2 [shape = 'f32[32,128]{1,0:T(8,128)}', space=vmem, size = 0x4000, scoped, tag = 'scratch operand']
  %s0 = inlined_call_operand.vmem [shape: bf16[32,128], index: 0, kind: input, shape index: {}]
  %s1 = inlined_call_operand.vmem [shape: bf16[128,128], index: 1, kind: input, shape index: {}]
  %s2 = inlined_call_operand.vmem [shape: f32[1,128], index: 2, kind: input, shape index: {}]
  %s3 = inlined_call_operand.vmem [shape: f32[32,128], index: 3, kind: output, shape index: {}]
  %s4 = sld [smem:[#allocation0]]
  $region30: #{video_features_forward.102} parent=0
    _
  %s6 = ssub.s32 1, %s4
  %s7 = scalar_select 0, %s6, %s4
  // Predicated region
  $region2: #{video_features_forward.102} parent=0 // pred_check
    _
  $region3: #{video_features_forward.102} parent=0 // pred_check_branch
    %9 = sbr.rel (0) target = $region5
  $region4: #{video_features_forward.102} parent=0 // pred_region
    _
  $region5: #{video_features_forward.102} parent=0 // pred_fallthru
    _
  // Predicated region
  $region6: #{video_features_forward.102} parent=0 // pred_check
    _
  $region7: #{video_features_forward.102} parent=0 // pred_check_branch
    %11 = sbr.rel (0) target = $region9
  $region8: #{video_features_forward.102} parent=0 // pred_region
    _
  $region9: #{video_features_forward.102} parent=0 // pred_fallthru
    _
  // Predicated region
  $region10: #{video_features_forward.102} parent=0 // pred_check
    _
  $region11: #{video_features_forward.102} parent=0 // pred_check_branch
    %13 = sbr.rel (0) target = $region13
  $region12: #{video_features_forward.102} parent=0 // pred_region
    _
  $region13: #{video_features_forward.102} parent=0 // pred_fallthru
    _
  %p15 = scmp.eq.s32.totalorder 0, 0
  // Predicated region
  $region14: #{video_features_forward.102} parent=0 // pred_check
    %p16 = pneg %p15
  $region15: #{video_features_forward.102} parent=0 // pred_check_branch
    %18 = sbr.rel (%p16) target = $region17
  $region16: #{video_features_forward.102} parent=0 // pred_region
    %19 = vst [vmem:[#allocation2] sm:$0xff] 0.0
    %20 = vst [vmem:[#allocation2 + $0x8] sm:$0xff] 0.0
    %21 = vst [vmem:[#allocation2 + $0x10] sm:$0xff] 0.0
    %22 = vst [vmem:[#allocation2 + $0x18] sm:$0xff] 0.0
  $region17: #{video_features_forward.102} parent=0 // pred_fallthru
    _
  %v23 = vld [vmem:[#allocation2] sm:$0xff]
  %v24 = vld [vmem:[#allocation2 + $0x8] sm:$0xff]
  %v25 = vld [vmem:[#allocation2 + $0x10] sm:$0xff]
  %v26 = vld [vmem:[#allocation2 + $0x18] sm:$0xff]
  %v27 = vld [vmem:[%s0] sm:$0xf]
  %v28 = vld [vmem:[%s0 + $0x4] sm:$0xf]
  %v29 = vld [vmem:[%s0 + $0x8] sm:$0xf]
  %v30 = vld [vmem:[%s0 + $0xc] sm:$0xf]
  %v31 = vld [vmem:[%s1] sm:$0xf]
  %v32 = vld [vmem:[%s1 + $0x4] sm:$0xf]
  %v33 = vld [vmem:[%s1 + $0x8] sm:$0xf]
  %v34 = vld [vmem:[%s1 + $0xc] sm:$0xf]
  %v35 = vld [vmem:[%s1 + $0x10] sm:$0xf]
  %v36 = vld [vmem:[%s1 + $0x14] sm:$0xf]
  %v37 = vld [vmem:[%s1 + $0x18] sm:$0xf]
  %v38 = vld [vmem:[%s1 + $0x1c] sm:$0xf]
  %v39 = vld [vmem:[%s1 + $0x20] sm:$0xf]
  %v40 = vld [vmem:[%s1 + $0x24] sm:$0xf]
  %v41 = vld [vmem:[%s1 + $0x28] sm:$0xf]
  %v42 = vld [vmem:[%s1 + $0x2c] sm:$0xf]
  %v43 = vld [vmem:[%s1 + $0x30] sm:$0xf]
  %v44 = vld [vmem:[%s1 + $0x34] sm:$0xf]
  %v45 = vld [vmem:[%s1 + $0x38] sm:$0xf]
  %v46 = vld [vmem:[%s1 + $0x3c] sm:$0xf]
  %v51 = vunpack.c.l.b16 %v27
  %v52 = vunpack.c.l.b16 %v28
  %v53 = vunpack.c.l.b16 %v29
  %v54 = vunpack.c.l.b16 %v30
  %v55 = vpack.c.b16 %v52, %v51
  %v56 = vpack.c.b16 %v54, %v53
  %v75 = vunpack.c.l.b16 %v31
  %v76 = vunpack.c.l.b16 %v32
  %v77 = vunpack.c.l.b16 %v33
  %v78 = vunpack.c.l.b16 %v34
  %v79 = vunpack.c.l.b16 %v35
  %v80 = vunpack.c.l.b16 %v36
  %v81 = vunpack.c.l.b16 %v37
  %v82 = vunpack.c.l.b16 %v38
  %v83 = vunpack.c.l.b16 %v39
  %v84 = vunpack.c.l.b16 %v40
  %v85 = vunpack.c.l.b16 %v41
  %v86 = vunpack.c.l.b16 %v42
  %v87 = vunpack.c.l.b16 %v43
  %v88 = vunpack.c.l.b16 %v44
  %v89 = vunpack.c.l.b16 %v45
  %v90 = vunpack.c.l.b16 %v46
  %v91 = vpack.c.b16 %v76, %v75
  %v92 = vpack.c.b16 %v78, %v77
  %v93 = vpack.c.b16 %v80, %v79
  %v94 = vpack.c.b16 %v82, %v81
  %v95 = vpack.c.b16 %v84, %v83
  %v96 = vpack.c.b16 %v86, %v85
  %v97 = vpack.c.b16 %v88, %v87
  %v98 = vpack.c.b16 %v90, %v89
  %107 = vmatprep.subr.bf16.mxu0 0
  %108 = vmatpush1.bf16.msra.mxu0 %v91
  %109 = vmatprep.subr.bf16.mxu0 0
  %110 = vmatpush1.bf16.msra.mxu0 %v92
  %111 = vmatprep.subr.bf16.mxu0 0
  %112 = vmatpush1.bf16.msra.mxu0 %v93
  %113 = vmatprep.subr.bf16.mxu0 0
  %114 = vmatpush1.bf16.msra.mxu0 %v94
  %115 = vmatprep.subr.bf16.mxu0 0
  %116 = vmatpush1.bf16.msra.mxu0 %v95
  %117 = vmatprep.subr.bf16.mxu0 0
  %118 = vmatpush1.bf16.msra.mxu0 %v96
  %119 = vmatprep.subr.bf16.mxu0 0
  %120 = vmatpush1.bf16.msra.mxu0 %v97
  %121 = vmatprep.subr.bf16.mxu0 0
  %122 = vmatpush1.bf16.msra.mxu0 %v98
  %123 = vmatprep.subr.bf16.mxu0 0
  %124 = vmatpush1.bf16.msra.mxu0 0
  %125 = vmatprep.subr.bf16.mxu0 0
  %126 = vmatpush1.bf16.msra.mxu0 0
  %127 = vmatprep.subr.bf16.mxu0 0
  %128 = vmatpush1.bf16.msra.mxu0 0
  %129 = vmatprep.subr.bf16.mxu0 0
  %130 = vmatpush1.bf16.msra.mxu0 0
  %131 = vmatprep.subr.bf16.mxu0 0
  %132 = vmatpush1.bf16.msra.mxu0 0
  %133 = vmatprep.subr.bf16.mxu0 0
  %134 = vmatpush1.bf16.msra.mxu0 0
  %135 = vmatprep.subr.bf16.mxu0 0
  %136 = vmatpush1.bf16.msra.mxu0 0
  %137 = vmatprep.subr.bf16.mxu0 0
  %138 = vmatpush1.bf16.msra.mxu0 0
  %139 = vmatprep.mubr.bf16.mxu0 0
  %140 = vmatmul.mubr.bf16.gmra.mrb[0].mxu0 %v55
  %v141 = vpop.f32.mrb[0].mxu0
  %v142 = vadd.f32 0.0, %v141
  %v143 = vpop.f32.mrb[0].mxu0
  %v144 = vpop.f32.mrb[0].mxu0
  %v145 = vadd.f32 0.0, %v144
  %v146 = vpop.f32.mrb[0].mxu0
  %147 = vmatprep.mubr.bf16.mxu0 0
  %148 = vmatmul.mubr.bf16.gmra.mrb[0].mxu0 %v56
  %v149 = vpop.f32.mrb[0].mxu0
  %v150 = vadd.f32 0.0, %v149
  %v151 = vpop.f32.mrb[0].mxu0
  %v152 = vpop.f32.mrb[0].mxu0
  %v153 = vadd.f32 0.0, %v152
  %v154 = vpop.f32.mrb[0].mxu0
  %155 = vdwg.mxu0
  %v156 = vadd.f32 %v23, %v142
  %v157 = vadd.f32 %v24, %v145
  %v158 = vadd.f32 %v25, %v150
  %v159 = vadd.f32 %v26, %v153
  %160 = vst [vmem:[#allocation2] sm:$0xff] %v156
  %161 = vst [vmem:[#allocation2 + $0x8] sm:$0xff] %v157
  %162 = vst [vmem:[#allocation2 + $0x10] sm:$0xff] %v158
  %163 = vst [vmem:[#allocation2 + $0x18] sm:$0xff] %v159
  // Predicated region
  $region18: #{video_features_forward.102} parent=0 // pred_check
    %p164 = pneg %p15
  $region19: #{video_features_forward.102} parent=0 // pred_check_branch
    %166 = sbr.rel (%p164) target = $region21
  $region20: #{video_features_forward.102} parent=0 // pred_region
    %v167 = vld [vmem:[#allocation2] sm:$0xff]
    %v168 = vld [vmem:[#allocation2 + $0x8] sm:$0xff]
    %v169 = vld [vmem:[#allocation2 + $0x10] sm:$0xff]
    %v170 = vld [vmem:[#allocation2 + $0x18] sm:$0xff]
    %v171 = vld [vmem:[%s2] sm:$0x1]
    %v173 = vlaneseq
    %v174 = vshrl.u32 %v173, 7
    %v175 = vsub.s32 0, %v174
    %v176 = vrot.slane %v171, %v175
    %v178 = vadd.f32 %v167, %v176
    %v179 = vadd.f32 %v168, %v176
    %v180 = vadd.f32 %v169, %v176
    %v181 = vadd.f32 %v170, %v176
    %182 = vst [vmem:[%s3] sm:$0xff] %v178
    %183 = vst [vmem:[%s3 + $0x8] sm:$0xff] %v179
    %184 = vst [vmem:[%s3 + $0x10] sm:$0xff] %v180
    %185 = vst [vmem:[%s3 + $0x18] sm:$0xff] %v181
  $region21: #{video_features_forward.102} parent=0 // pred_fallthru
    _
  // Predicated region
  $region22: #{video_features_forward.102} parent=0 // pred_check
    _
  $region23: #{video_features_forward.102} parent=0 // pred_check_branch
    %187 = sbr.rel (0) target = $region25
  $region24: #{video_features_forward.102} parent=0 // pred_region
    _
  $region25: #{video_features_forward.102} parent=0 // pred_fallthru
    _
  // Predicated region
  $region26: #{video_features_forward.102} parent=0 // pred_check
    _
  $region27: #{video_features_forward.102} parent=0 // pred_check_branch
    %189 = sbr.rel (0) target = $region29
  $region28: #{video_features_forward.102} parent=0 // pred_region
    _
  $region29: #{video_features_forward.102} parent=0 // pred_fallthru
    _

// kernel: video_features_forward.104
$region0: #{video_features_forward.104}
  #allocation0 [shape = 'u32[]', space=smem, size = 0x4, offset = 0x4, fixed_abs, tag = 'smem constant byte address 0x4 - core index']
  #allocation1 [shape = 'u32[144,128]{1,0:T(1,128)}', space=vmem, size = 0x12000, scoped, tag = 'internal scratch']
  %s0 = inlined_call_operand.vmem [shape: f32[32,128], index: 0, kind: input, shape index: {}]
  %s1 = inlined_call_operand.vmem [shape: f32[32,128], index: 1, kind: input, shape index: {}]
  %s2 = inlined_call_operand.vmem [shape: f32[32,128], index: 2, kind: output, shape index: {}]
  %s3 = sld [smem:[#allocation0]]
  $region18: #{video_features_forward.104} parent=0
    _
  %s5 = ssub.s32 1, %s3
  %s6 = scalar_select 0, %s5, %s3
  // Predicated region
  $region2: #{video_features_forward.104} parent=0 // pred_check
    _
  $region3: #{video_features_forward.104} parent=0 // pred_check_branch
    %8 = sbr.rel (0) target = $region5
  $region4: #{video_features_forward.104} parent=0 // pred_region
    _
  $region5: #{video_features_forward.104} parent=0 // pred_fallthru
    _
  // Predicated region
  $region6: #{video_features_forward.104} parent=0 // pred_check
    _
  $region7: #{video_features_forward.104} parent=0 // pred_check_branch
    %10 = sbr.rel (0) target = $region9
  $region8: #{video_features_forward.104} parent=0 // pred_region
    _
  $region9: #{video_features_forward.104} parent=0 // pred_fallthru
    _
  %v11 = vld [vmem:[%s0] sm:$0xff]
  %v12 = vld [vmem:[%s0 + $0x8] sm:$0xff]
  %v13 = vld [vmem:[%s0 + $0x10] sm:$0xff]
  %v14 = vld [vmem:[%s0 + $0x18] sm:$0xff]
  %v15 = vld [vmem:[%s1] sm:$0xff]
  %v16 = vld [vmem:[%s1 + $0x8] sm:$0xff]
  %v17 = vld [vmem:[%s1 + $0x10] sm:$0xff]
  %v18 = vld [vmem:[%s1 + $0x18] sm:$0xff]
  %v19 = vadd.f32 %v11, %v15
  %v20 = vadd.f32 %v12, %v16
  %v21 = vadd.f32 %v13, %v17
  %v22 = vadd.f32 %v14, %v18
  %v23 = vmax.f32 %v19, 0.0
  %v24 = vmax.f32 %v20, 0.0
  %v25 = vmax.f32 %v21, 0.0
  %v26 = vmax.f32 %v22, 0.0
  %27 = vst [vmem:[%s2] sm:$0xff] %v23
  %28 = vst [vmem:[%s2 + $0x8] sm:$0xff] %v24
  %29 = vst [vmem:[%s2 + $0x10] sm:$0xff] %v25
  %30 = vst [vmem:[%s2 + $0x18] sm:$0xff] %v26
  // Predicated region
  $region10: #{video_features_forward.104} parent=0 // pred_check
    _
  $region11: #{video_features_forward.104} parent=0 // pred_check_branch
    %32 = sbr.rel (0) target = $region13
  $region12: #{video_features_forward.104} parent=0 // pred_region
    _
  $region13: #{video_features_forward.104} parent=0 // pred_fallthru
    _
  // Predicated region
  $region14: #{video_features_forward.104} parent=0 // pred_check
    _
  $region15: #{video_features_forward.104} parent=0 // pred_check_branch
    %34 = sbr.rel (0) target = $region17
  $region16: #{video_features_forward.104} parent=0 // pred_region
    _
  $region17: #{video_features_forward.104} parent=0 // pred_fallthru
    _

// kernel: video_features_forward.105
$region0: #{video_features_forward.105}
  #allocation0 [shape = 'u32[]', space=smem, size = 0x4, offset = 0x4, fixed_abs, tag = 'smem constant byte address 0x4 - core index']
  #allocation1 [shape = 'u32[144,128]{1,0:T(1,128)}', space=vmem, size = 0x12000, scoped, tag = 'internal scratch']
  #allocation2 [shape = 'f32[32,128]{1,0:T(8,128)}', space=vmem, size = 0x4000, scoped, tag = 'scratch operand']
  %s0 = inlined_call_operand.vmem [shape: bf16[32,128], index: 0, kind: input, shape index: {}]
  %s1 = inlined_call_operand.vmem [shape: bf16[128,128], index: 1, kind: input, shape index: {}]
  %s2 = inlined_call_operand.vmem [shape: f32[1,128], index: 2, kind: input, shape index: {}]
  %s3 = inlined_call_operand.vmem [shape: f32[32,128], index: 3, kind: output, shape index: {}]
  %s4 = sld [smem:[#allocation0]]
  $region30: #{video_features_forward.105} parent=0
    _
  %s6 = ssub.s32 1, %s4
  %s7 = scalar_select 0, %s6, %s4
  // Predicated region
  $region2: #{video_features_forward.105} parent=0 // pred_check
    _
  $region3: #{video_features_forward.105} parent=0 // pred_check_branch
    %9 = sbr.rel (0) target = $region5
  $region4: #{video_features_forward.105} parent=0 // pred_region
    _
  $region5: #{video_features_forward.105} parent=0 // pred_fallthru
    _
  // Predicated region
  $region6: #{video_features_forward.105} parent=0 // pred_check
    _
  $region7: #{video_features_forward.105} parent=0 // pred_check_branch
    %11 = sbr.rel (0) target = $region9
  $region8: #{video_features_forward.105} parent=0 // pred_region
    _
  $region9: #{video_features_forward.105} parent=0 // pred_fallthru
    _
  // Predicated region
  $region10: #{video_features_forward.105} parent=0 // pred_check
    _
  $region11: #{video_features_forward.105} parent=0 // pred_check_branch
    %13 = sbr.rel (0) target = $region13
  $region12: #{video_features_forward.105} parent=0 // pred_region
    _
  $region13: #{video_features_forward.105} parent=0 // pred_fallthru
    _
  %p15 = scmp.eq.s32.totalorder 0, 0
  // Predicated region
  $region14: #{video_features_forward.105} parent=0 // pred_check
    %p16 = pneg %p15
  $region15: #{video_features_forward.105} parent=0 // pred_check_branch
    %18 = sbr.rel (%p16) target = $region17
  $region16: #{video_features_forward.105} parent=0 // pred_region
    %19 = vst [vmem:[#allocation2] sm:$0xff] 0.0
    %20 = vst [vmem:[#allocation2 + $0x8] sm:$0xff] 0.0
    %21 = vst [vmem:[#allocation2 + $0x10] sm:$0xff] 0.0
    %22 = vst [vmem:[#allocation2 + $0x18] sm:$0xff] 0.0
  $region17: #{video_features_forward.105} parent=0 // pred_fallthru
    _
  %v23 = vld [vmem:[#allocation2] sm:$0xff]
  %v24 = vld [vmem:[#allocation2 + $0x8] sm:$0xff]
  %v25 = vld [vmem:[#allocation2 + $0x10] sm:$0xff]
  %v26 = vld [vmem:[#allocation2 + $0x18] sm:$0xff]
  %v27 = vld [vmem:[%s0] sm:$0xf]
  %v28 = vld [vmem:[%s0 + $0x4] sm:$0xf]
  %v29 = vld [vmem:[%s0 + $0x8] sm:$0xf]
  %v30 = vld [vmem:[%s0 + $0xc] sm:$0xf]
  %v31 = vld [vmem:[%s1] sm:$0xf]
  %v32 = vld [vmem:[%s1 + $0x4] sm:$0xf]
  %v33 = vld [vmem:[%s1 + $0x8] sm:$0xf]
  %v34 = vld [vmem:[%s1 + $0xc] sm:$0xf]
  %v35 = vld [vmem:[%s1 + $0x10] sm:$0xf]
  %v36 = vld [vmem:[%s1 + $0x14] sm:$0xf]
  %v37 = vld [vmem:[%s1 + $0x18] sm:$0xf]
  %v38 = vld [vmem:[%s1 + $0x1c] sm:$0xf]
  %v39 = vld [vmem:[%s1 + $0x20] sm:$0xf]
  %v40 = vld [vmem:[%s1 + $0x24] sm:$0xf]
  %v41 = vld [vmem:[%s1 + $0x28] sm:$0xf]
  %v42 = vld [vmem:[%s1 + $0x2c] sm:$0xf]
  %v43 = vld [vmem:[%s1 + $0x30] sm:$0xf]
  %v44 = vld [vmem:[%s1 + $0x34] sm:$0xf]
  %v45 = vld [vmem:[%s1 + $0x38] sm:$0xf]
  %v46 = vld [vmem:[%s1 + $0x3c] sm:$0xf]
  %v51 = vunpack.c.l.b16 %v27
  %v52 = vunpack.c.l.b16 %v28
  %v53 = vunpack.c.l.b16 %v29
  %v54 = vunpack.c.l.b16 %v30
  %v55 = vpack.c.b16 %v52, %v51
  %v56 = vpack.c.b16 %v54, %v53
  %v75 = vunpack.c.l.b16 %v31
  %v76 = vunpack.c.l.b16 %v32
  %v77 = vunpack.c.l.b16 %v33
  %v78 = vunpack.c.l.b16 %v34
  %v79 = vunpack.c.l.b16 %v35
  %v80 = vunpack.c.l.b16 %v36
  %v81 = vunpack.c.l.b16 %v37
  %v82 = vunpack.c.l.b16 %v38
  %v83 = vunpack.c.l.b16 %v39
  %v84 = vunpack.c.l.b16 %v40
  %v85 = vunpack.c.l.b16 %v41
  %v86 = vunpack.c.l.b16 %v42
  %v87 = vunpack.c.l.b16 %v43
  %v88 = vunpack.c.l.b16 %v44
  %v89 = vunpack.c.l.b16 %v45
  %v90 = vunpack.c.l.b16 %v46
  %v91 = vpack.c.b16 %v76, %v75
  %v92 = vpack.c.b16 %v78, %v77
  %v93 = vpack.c.b16 %v80, %v79
  %v94 = vpack.c.b16 %v82, %v81
  %v95 = vpack.c.b16 %v84, %v83
  %v96 = vpack.c.b16 %v86, %v85
  %v97 = vpack.c.b16 %v88, %v87
  %v98 = vpack.c.b16 %v90, %v89
  %107 = vmatprep.subr.bf16.mxu0 0
  %108 = vmatpush1.bf16.msra.mxu0 %v91
  %109 = vmatprep.subr.bf16.mxu0 0
  %110 = vmatpush1.bf16.msra.mxu0 %v92
  %111 = vmatprep.subr.bf16.mxu0 0
  %112 = vmatpush1.bf16.msra.mxu0 %v93
  %113 = vmatprep.subr.bf16.mxu0 0
  %114 = vmatpush1.bf16.msra.mxu0 %v94
  %115 = vmatprep.subr.bf16.mxu0 0
  %116 = vmatpush1.bf16.msra.mxu0 %v95
  %117 = vmatprep.subr.bf16.mxu0 0
  %118 = vmatpush1.bf16.msra.mxu0 %v96
  %119 = vmatprep.subr.bf16.mxu0 0
  %120 = vmatpush1.bf16.msra.mxu0 %v97
  %121 = vmatprep.subr.bf16.mxu0 0
  %122 = vmatpush1.bf16.msra.mxu0 %v98
  %123 = vmatprep.subr.bf16.mxu0 0
  %124 = vmatpush1.bf16.msra.mxu0 0
  %125 = vmatprep.subr.bf16.mxu0 0
  %126 = vmatpush1.bf16.msra.mxu0 0
  %127 = vmatprep.subr.bf16.mxu0 0
  %128 = vmatpush1.bf16.msra.mxu0 0
  %129 = vmatprep.subr.bf16.mxu0 0
  %130 = vmatpush1.bf16.msra.mxu0 0
  %131 = vmatprep.subr.bf16.mxu0 0
  %132 = vmatpush1.bf16.msra.mxu0 0
  %133 = vmatprep.subr.bf16.mxu0 0
  %134 = vmatpush1.bf16.msra.mxu0 0
  %135 = vmatprep.subr.bf16.mxu0 0
  %136 = vmatpush1.bf16.msra.mxu0 0
  %137 = vmatprep.subr.bf16.mxu0 0
  %138 = vmatpush1.bf16.msra.mxu0 0
  %139 = vmatprep.mubr.bf16.mxu0 0
  %140 = vmatmul.mubr.bf16.gmra.mrb[0].mxu0 %v55
  %v141 = vpop.f32.mrb[0].mxu0
  %v142 = vadd.f32 0.0, %v141
  %v143 = vpop.f32.mrb[0].mxu0
  %v144 = vpop.f32.mrb[0].mxu0
  %v145 = vadd.f32 0.0, %v144
  %v146 = vpop.f32.mrb[0].mxu0
  %147 = vmatprep.mubr.bf16.mxu0 0
  %148 = vmatmul.mubr.bf16.gmra.mrb[0].mxu0 %v56
  %v149 = vpop.f32.mrb[0].mxu0
  %v150 = vadd.f32 0.0, %v149
  %v151 = vpop.f32.mrb[0].mxu0
  %v152 = vpop.f32.mrb[0].mxu0
  %v153 = vadd.f32 0.0, %v152
  %v154 = vpop.f32.mrb[0].mxu0
  %155 = vdwg.mxu0
  %v156 = vadd.f32 %v23, %v142
  %v157 = vadd.f32 %v24, %v145
  %v158 = vadd.f32 %v25, %v150
  %v159 = vadd.f32 %v26, %v153
  %160 = vst [vmem:[#allocation2] sm:$0xff] %v156
  %161 = vst [vmem:[#allocation2 + $0x8] sm:$0xff] %v157
  %162 = vst [vmem:[#allocation2 + $0x10] sm:$0xff] %v158
  %163 = vst [vmem:[#allocation2 + $0x18] sm:$0xff] %v159
  // Predicated region
  $region18: #{video_features_forward.105} parent=0 // pred_check
    %p164 = pneg %p15
  $region19: #{video_features_forward.105} parent=0 // pred_check_branch
    %166 = sbr.rel (%p164) target = $region21
  $region20: #{video_features_forward.105} parent=0 // pred_region
    %v167 = vld [vmem:[#allocation2] sm:$0xff]
    %v168 = vld [vmem:[#allocation2 + $0x8] sm:$0xff]
    %v169 = vld [vmem:[#allocation2 + $0x10] sm:$0xff]
    %v170 = vld [vmem:[#allocation2 + $0x18] sm:$0xff]
    %v171 = vld [vmem:[%s2] sm:$0x1]
    %v173 = vlaneseq
    %v174 = vshrl.u32 %v173, 7
    %v175 = vsub.s32 0, %v174
    %v176 = vrot.slane %v171, %v175
    %v178 = vadd.f32 %v167, %v176
    %v179 = vadd.f32 %v168, %v176
    %v180 = vadd.f32 %v169, %v176
    %v181 = vadd.f32 %v170, %v176
    %v182 = vmax.f32 %v178, 0.0
    %v183 = vmax.f32 %v179, 0.0
    %v184 = vmax.f32 %v180, 0.0
    %v185 = vmax.f32 %v181, 0.0
    %186 = vst [vmem:[%s3] sm:$0xff] %v182
    %187 = vst [vmem:[%s3 + $0x8] sm:$0xff] %v183
    %188 = vst [vmem:[%s3 + $0x10] sm:$0xff] %v184
    %189 = vst [vmem:[%s3 + $0x18] sm:$0xff] %v185
  $region21: #{video_features_forward.105} parent=0 // pred_fallthru
    _
  // Predicated region
  $region22: #{video_features_forward.105} parent=0 // pred_check
    _
  $region23: #{video_features_forward.105} parent=0 // pred_check_branch
    %191 = sbr.rel (0) target = $region25
  $region24: #{video_features_forward.105} parent=0 // pred_region
    _
  $region25: #{video_features_forward.105} parent=0 // pred_fallthru
    _
  // Predicated region
  $region26: #{video_features_forward.105} parent=0 // pred_check
    _
  $region27: #{video_features_forward.105} parent=0 // pred_check_branch
    %193 = sbr.rel (0) target = $region29
  $region28: #{video_features_forward.105} parent=0 // pred_region
    _
  $region29: #{video_features_forward.105} parent=0 // pred_fallthru
    _

// kernel: video_features_forward.126
$region0: #{video_features_forward.126}
  #allocation0 [shape = 'u32[]', space=smem, size = 0x4, offset = 0x4, fixed_abs, tag = 'smem constant byte address 0x4 - core index']
  #allocation1 [shape = 'u32[144,128]{1,0:T(1,128)}', space=vmem, size = 0x12000, scoped, tag = 'internal scratch']
  #allocation2 [shape = 'f32[8,128]{1,0:T(8,128)}', space=vmem, size = 0x1000, scoped, tag = 'scratch operand']
  %s0 = inlined_call_operand.vmem [shape: bf16[8,1152], index: 0, kind: input, shape index: {}]
  %s1 = inlined_call_operand.vmem [shape: bf16[1152,128], index: 1, kind: input, shape index: {}]
  %s2 = inlined_call_operand.vmem [shape: f32[1,128], index: 2, kind: input, shape index: {}]
  %s3 = inlined_call_operand.vmem [shape: f32[8,128], index: 3, kind: output, shape index: {}]
  %s4 = sld [smem:[#allocation0]]
  $region53: #{video_features_forward.126} parent=0
    _
  %s6 = ssub.s32 1, %s4
  %s7 = scalar_select 0, %s6, %s4
  loop: start=0, step=1, limit=5
  $region2: #{video_features_forward.126} parent=0 // loop_pre_header
    _
  $region3: #{video_features_forward.126} parent=0 // loop_header
    %s9 = sphi 0, %s13
    %p10 = scmp.ge.s32.totalorder %s9, 5
    %s16 = sphi 0, %s35
    %s17 = sphi 0, %s31
    %s18 = sphi 0, %s27
    %s19 = sphi 0, %s16
    %s20 = sphi 0, %s17
    %s21 = sphi 0, %s18
    %s22 = sphi 0, %s19
    %s23 = sphi 0, %s20
    %s24 = sphi 0, %s21
    %s40 = sphi 0, %s42
    %s43 = sphi 0, %s40
    %s44 = sphi 0, %s43
    %s60 = sphi 0, %s44
    %s68 = sphi 0, %s70
    %s71 = sphi 0, %s68
    %s72 = sphi 0, %s71
    %s88 = sphi 0, %s72
    %s94 = sphi 0, %s96
    %s97 = sphi 0, %s94
    %s98 = sphi 0, %s97
    %s114 = sphi 0, %s98
    %s122 = sphi 0, %s124
    %s125 = sphi 0, %s122
    %s126 = sphi 0, %s125
    %s142 = sphi 0, %s126
  $region4: #{video_features_forward.126} parent=0 // loop_header_branch
    %12 = sbr.rel (%p10) target = $region8
  $region5: #{video_features_forward.126} parent=0 // loop_body
    %s14 = ssub.s32 %s9, 1
    %s15 = ssub.s32 %s9, 2
    %s25 = sadd.s32 1, %s18
    %p26 = scmp.ge.s32.totalorder %s25, 3
    %s27 = scalar_select %p26, 0, %s25
    %s28 = sadd.s32 1, %s17
    %s29 = scalar_select %p26, %s28, %s17
    %p30 = scmp.ge.s32.totalorder %s29, 1
    %s31 = scalar_select %p30, 0, %s29
    %s32 = sadd.s32 1, %s16
    %s33 = scalar_select %p30, %s32, %s16
    %p34 = scmp.ge.s32.totalorder %s33, 1
    %s35 = scalar_select %p34, 0, %s33
    %s36 = ssub.s32 %s16, %s35
    %s37 = ssub.s32 %s18, %s27
    %s38 = sor.u32 %s36, %s37
    %p39 = scmp.eq.s32.totalorder %s38, 0
    %s41 = sadd.s32 %s40, 1
    %s42 = scalar_select %p39, %s40, %s41
    %p45 = pneg %p39
    %p46 = scmp.eq.s32.totalorder %s9, 2
    %p47 = por %p45, %p46
    %p48 = scmp.ne.s32.totalorder %s40, %s43
    %p49 = scmp.eq.s32.totalorder %s9, 0
    %p50 = por %p48, %p49
    %p51 = scmp.ne.s32.totalorder %s40, %s43
    %p52 = scmp.eq.s32.totalorder %s14, 2
    %p53 = por %p51, %p52
    %p54 = scmp.ne.s32.totalorder %s43, %s44
    %p55 = scmp.eq.s32.totalorder %s14, 0
    %p56 = por %p54, %p55
    %p57 = scmp.ne.s32.totalorder %s43, %s44
    %p58 = scmp.eq.s32.totalorder %s15, 2
    %p59 = por %p57, %p58
    %p61 = scmp.ne.s32.totalorder %s44, %s60
    %p62 = scmp.eq.s32.totalorder %s15, 0
    %p63 = por %p61, %p62
    %s64 = ssub.s32 %s18, %s27
    %s65 = ssub.s32 %s17, %s31
    %s66 = sor.u32 %s64, %s65
    %p67 = scmp.eq.s32.totalorder %s66, 0
    %s69 = sadd.s32 %s68, 1
    %s70 = scalar_select %p67, %s68, %s69
    %p73 = pneg %p67
    %p74 = scmp.eq.s32.totalorder %s9, 2
    %p75 = por %p73, %p74
    %p76 = scmp.ne.s32.totalorder %s68, %s71
    %p77 = scmp.eq.s32.totalorder %s9, 0
    %p78 = por %p76, %p77
    %p79 = scmp.ne.s32.totalorder %s68, %s71
    %p80 = scmp.eq.s32.totalorder %s14, 2
    %p81 = por %p79, %p80
    %p82 = scmp.ne.s32.totalorder %s71, %s72
    %p83 = scmp.eq.s32.totalorder %s14, 0
    %p84 = por %p82, %p83
    %p85 = scmp.ne.s32.totalorder %s71, %s72
    %p86 = scmp.eq.s32.totalorder %s15, 2
    %p87 = por %p85, %p86
    %p89 = scmp.ne.s32.totalorder %s72, %s88
    %p90 = scmp.eq.s32.totalorder %s15, 0
    %p91 = por %p89, %p90
    %s92 = ssub.s32 %s17, %s31
    %p93 = scmp.eq.s32.totalorder %s92, 0
    %s95 = sadd.s32 %s94, 1
    %s96 = scalar_select %p93, %s94, %s95
    %p99 = pneg %p93
    %p100 = scmp.eq.s32.totalorder %s9, 2
    %p101 = por %p99, %p100
    %p102 = scmp.ne.s32.totalorder %s94, %s97
    %p103 = scmp.eq.s32.totalorder %s9, 0
    %p104 = por %p102, %p103
    %p105 = scmp.ne.s32.totalorder %s94, %s97
    %p106 = scmp.eq.s32.totalorder %s14, 2
    %p107 = por %p105, %p106
    %p108 = scmp.ne.s32.totalorder %s97, %s98
    %p109 = scmp.eq.s32.totalorder %s14, 0
    %p110 = por %p108, %p109
    %p111 = scmp.ne.s32.totalorder %s97, %s98
    %p112 = scmp.eq.s32.totalorder %s15, 2
    %p113 = por %p111, %p112
    %p115 = scmp.ne.s32.totalorder %s98, %s114
    %p116 = scmp.eq.s32.totalorder %s15, 0
    %p117 = por %p115, %p116
    %s118 = ssub.s32 %s16, %s35
    %s119 = ssub.s32 %s17, %s31
    %s120 = sor.u32 %s118, %s119
    %p121 = scmp.eq.s32.totalorder %s120, 0
    %s123 = sadd.s32 %s122, 1
    %s124 = scalar_select %p121, %s122, %s123
    %p127 = pneg %p121
    %p128 = scmp.eq.s32.totalorder %s9, 2
    %p129 = por %p127, %p128
    %p130 = scmp.ne.s32.totalorder %s122, %s125
    %p131 = scmp.eq.s32.totalorder %s9, 0
    %p132 = por %p130, %p131
    %p133 = scmp.ne.s32.totalorder %s122, %s125
    %p134 = scmp.eq.s32.totalorder %s14, 2
    %p135 = por %p133, %p134
    %p136 = scmp.ne.s32.totalorder %s125, %s126
    %p137 = scmp.eq.s32.totalorder %s14, 0
    %p138 = por %p136, %p137
    %p139 = scmp.ne.s32.totalorder %s125, %s126
    %p140 = scmp.eq.s32.totalorder %s15, 2
    %p141 = por %p139, %p140
    %p143 = scmp.ne.s32.totalorder %s126, %s142
    %p144 = scmp.eq.s32.totalorder %s15, 0
    %p145 = por %p143, %p144
    %p146 = scmp.le.s32.totalorder 1, %s9
    %p147 = scmp.lt.s32.totalorder %s9, 4
    %p148 = pnand %p146, %p147
    %p149 = pneg %p148
    // Predicated region
    $region9: #{video_features_forward.126} parent=5 // pred_check
      _
    $region10: #{video_features_forward.126} parent=5 // pred_check_branch
      %151 = sbr.rel (%p148) target = $region12
    $region11: #{video_features_forward.126} parent=5 // pred_region
      %s152 = ssub.s32 %s9, 1
      // Predicated region
      $region13: #{video_features_forward.126} parent=11 // pred_check
        %p153 = pneg %p110
      $region14: #{video_features_forward.126} parent=11 // pred_check_branch
        %155 = sbr.rel (%p153) target = $region16
      $region15: #{video_features_forward.126} parent=11 // pred_region
        %p156 = scmp.lt.s32.totalorder %s20, 0
        %s157 = scalar_select %p156, %s20, 0
        %s158 = scalar_lea.vmem %s2, %s157
      $region16: #{video_features_forward.126} parent=11 // pred_fallthru
        _
    $region12: #{video_features_forward.126} parent=5 // pred_fallthru
      _
    %p159 = scmp.lt.s32.totalorder %s9, 3
    // Predicated region
    $region17: #{video_features_forward.126} parent=5 // pred_check
      %p160 = pneg %p159
    $region18: #{video_features_forward.126} parent=5 // pred_check_branch
      %162 = sbr.rel (%p160) target = $region20
    $region19: #{video_features_forward.126} parent=5 // pred_region
      // Predicated region
      $region21: #{video_features_forward.126} parent=19 // pred_check
        %p163 = pneg %p50
      $region22: #{video_features_forward.126} parent=19 // pred_check_branch
        %165 = sbr.rel (%p163) target = $region24
      $region23: #{video_features_forward.126} parent=19 // pred_region
        %s166 = smul.u32 3, %s18
        %p167 = scmp.lt.s32.totalorder %s16, 0
        %s168 = scalar_select %p167, %s16, 0
        %p169 = scmp.lt.s32.totalorder %s166, 8
        %s170 = scalar_select %p169, %s166, 8
        %s171 = smul.addr %s168, 9
        %s172 = sadd.s32 %s170, %s171
        %s173 = smul.addr %s172, 4
        %s174 = scalar_lea.vmem %s0, %s173
        %s175 = smul.u32 3, %s18
      $region24: #{video_features_forward.126} parent=19 // pred_fallthru
        _
      // Predicated region
      $region25: #{video_features_forward.126} parent=19 // pred_check
        %p176 = pneg %p78
      $region26: #{video_features_forward.126} parent=19 // pred_check_branch
        %178 = sbr.rel (%p176) target = $region28
      $region27: #{video_features_forward.126} parent=19 // pred_region
        %s179 = smul.u32 48, %s18
        %p180 = scmp.lt.s32.totalorder %s179, 143
        %s181 = scalar_select %p180, %s179, 143
        %p182 = scmp.lt.s32.totalorder %s17, 0
        %s183 = scalar_select %p182, %s17, 0
        %s184 = sadd.s32 %s183, %s181
        %s185 = smul.addr %s184, 4
        %s186 = scalar_lea.vmem %s1, %s185
        %s187 = smul.u32 48, %s18
      $region28: #{video_features_forward.126} parent=19 // pred_fallthru
        _
    $region20: #{video_features_forward.126} parent=5 // pred_fallthru
      _
    %p188 = scmp.le.s32.totalorder 1, %s9
    %p189 = scmp.lt.s32.totalorder %s9, 4
    %p190 = pnand %p188, %p189
    %p191 = pneg %p190
    // Predicated region
    $region29: #{video_features_forward.126} parent=5 // pred_check
      _
    $region30: #{video_features_forward.126} parent=5 // pred_check_branch
      %193 = sbr.rel (%p190) target = $region32
    $region31: #{video_features_forward.126} parent=5 // pred_region
      %s194 = ssub.s32 %s9, 1
      %s195 = smul.u32 3, %s21
      %p196 = scmp.lt.s32.totalorder %s19, 0
      %s197 = scalar_select %p196, %s19, 0
      %p198 = scmp.lt.s32.totalorder %s195, 8
      %s199 = scalar_select %p198, %s195, 8
      %s200 = smul.addr %s197, 9
      %s201 = sadd.s32 %s199, %s200
      %s202 = smul.addr %s201, 4
      %s203 = scalar_lea.vmem %s0, %s202
      %p204 = pneg %p56
      %p205 = pneg %p53
      %s206 = smul.u32 48, %s21
      %p207 = scmp.lt.s32.totalorder %s206, 143
      %s208 = scalar_select %p207, %s206, 143
      %p209 = scmp.lt.s32.totalorder %s20, 0
      %s210 = scalar_select %p209, %s20, 0
      %s211 = sadd.s32 %s210, %s208
      %s212 = smul.addr %s211, 4
      %s213 = scalar_lea.vmem %s1, %s212
      %p214 = pneg %p84
      %p215 = pneg %p81
      %p216 = scmp.lt.s32.totalorder %s20, 0
      %s217 = scalar_select %p216, %s20, 0
      %s218 = scalar_lea.vmem %s2, %s217
      %p219 = pneg %p110
      %p220 = pneg %p107
      %p221 = pneg %p138
      %p222 = pneg %p135
      %p223 = scmp.lt.s32.totalorder %s19, 0
      %s224 = scalar_select %p223, %s19, 0
      %p225 = scmp.lt.s32.totalorder %s20, 0
      %s226 = scalar_select %p225, %s20, 0
      %s227 = sadd.s32 %s226, %s224
      %s228 = smul.addr %s227, 8
      %s229 = scalar_lea.vmem %s3, %s228
      %s230 = smul.u32 3, %s21
      %p231 = scmp.lt.s32.totalorder %s19, 0
      %s232 = scalar_select %p231, %s19, 0
      %p233 = scmp.lt.s32.totalorder %s230, 8
      %s234 = scalar_select %p233, %s230, 8
      %s235 = smul.addr %s232, 9
      %s236 = sadd.s32 %s234, %s235
      %s237 = smul.addr %s236, 4
      %s238 = scalar_lea.vmem %s0, %s237
      %s239 = smul.u32 3, %s21
      %s240 = smul.u32 48, %s21
      %p241 = scmp.lt.s32.totalorder %s240, 143
      %s242 = scalar_select %p241, %s240, 143
      %p243 = scmp.lt.s32.totalorder %s20, 0
      %s244 = scalar_select %p243, %s20, 0
      %s245 = sadd.s32 %s244, %s242
      %s246 = smul.addr %s245, 4
      %s247 = scalar_lea.vmem %s1, %s246
      %s248 = smul.u32 48, %s21
      %p249 = scmp.lt.s32.totalorder %s20, 0
      %s250 = scalar_select %p249, %s20, 0
      %s251 = scalar_lea.vmem %s2, %s250
      %p252 = scmp.lt.s32.totalorder %s19, 0
      %s253 = scalar_select %p252, %s19, 0
      %p254 = scmp.lt.s32.totalorder %s20, 0
      %s255 = scalar_select %p254, %s20, 0
      %s256 = sadd.s32 %s255, %s253
      %s257 = smul.addr %s256, 8
      %s258 = scalar_lea.vmem %s3, %s257
      %p260 = scmp.eq.s32.totalorder %s21, 0
      // Predicated region
      $region33: #{video_features_forward.126} parent=31 // pred_check
        %p261 = pneg %p260
      $region34: #{video_features_forward.126} parent=31 // pred_check_branch
        %263 = sbr.rel (%p261) target = $region36
      $region35: #{video_features_forward.126} parent=31 // pred_region
        %264 = vst [vmem:[#allocation2] sm:$0xff] 0.0
      $region36: #{video_features_forward.126} parent=31 // pred_fallthru
        _
      %v265 = vld [vmem:[#allocation2] sm:$0xff]
      %v266 = vld [vmem:[%s238] sm:$0xff]
      %v267 = vld [vmem:[%s238 + $0x8] sm:$0xf]
      %v268 = vld [vmem:[%s247] sm:$0xf]
      %v269 = vld [vmem:[%s247 + $0x4] sm:$0xf]
      %v270 = vld [vmem:[%s247 + $0x8] sm:$0xf]
      %v271 = vld [vmem:[%s247 + $0xc] sm:$0xf]
      %v272 = vld [vmem:[%s247 + $0x10] sm:$0xf]
      %v273 = vld [vmem:[%s247 + $0x14] sm:$0xf]
      %v274 = vld [vmem:[%s247 + $0x18] sm:$0xf]
      %v275 = vld [vmem:[%s247 + $0x1c] sm:$0xf]
      %v276 = vld [vmem:[%s247 + $0x20] sm:$0xf]
      %v277 = vld [vmem:[%s247 + $0x24] sm:$0xf]
      %v278 = vld [vmem:[%s247 + $0x28] sm:$0xf]
      %v279 = vld [vmem:[%s247 + $0x2c] sm:$0xf]
      %v280 = vld [vmem:[%s247 + $0x30] sm:$0xf]
      %v281 = vld [vmem:[%s247 + $0x34] sm:$0xf]
      %v282 = vld [vmem:[%s247 + $0x38] sm:$0xf]
      %v283 = vld [vmem:[%s247 + $0x3c] sm:$0xf]
      %v284 = vld [vmem:[%s247 + $0x40] sm:$0xf]
      %v285 = vld [vmem:[%s247 + $0x44] sm:$0xf]
      %v286 = vld [vmem:[%s247 + $0x48] sm:$0xf]
      %v287 = vld [vmem:[%s247 + $0x4c] sm:$0xf]
      %v288 = vld [vmem:[%s247 + $0x50] sm:$0xf]
      %v289 = vld [vmem:[%s247 + $0x54] sm:$0xf]
      %v290 = vld [vmem:[%s247 + $0x58] sm:$0xf]
      %v291 = vld [vmem:[%s247 + $0x5c] sm:$0xf]
      %v292 = vld [vmem:[%s247 + $0x60] sm:$0xf]
      %v293 = vld [vmem:[%s247 + $0x64] sm:$0xf]
      %v294 = vld [vmem:[%s247 + $0x68] sm:$0xf]
      %v295 = vld [vmem:[%s247 + $0x6c] sm:$0xf]
      %v296 = vld [vmem:[%s247 + $0x70] sm:$0xf]
      %v297 = vld [vmem:[%s247 + $0x74] sm:$0xf]
      %v298 = vld [vmem:[%s247 + $0x78] sm:$0xf]
      %v299 = vld [vmem:[%s247 + $0x7c] sm:$0xf]
      %v300 = vld [vmem:[%s247 + $0x80] sm:$0xf]
      %v301 = vld [vmem:[%s247 + $0x84] sm:$0xf]
      %v302 = vld [vmem:[%s247 + $0x88] sm:$0xf]
      %v303 = vld [vmem:[%s247 + $0x8c] sm:$0xf]
      %v304 = vld [vmem:[%s247 + $0x90] sm:$0xf]
      %v305 = vld [vmem:[%s247 + $0x94] sm:$0xf]
      %v306 = vld [vmem:[%s247 + $0x98] sm:$0xf]
      %v307 = vld [vmem:[%s247 + $0x9c] sm:$0xf]
      %v308 = vld [vmem:[%s247 + $0xa0] sm:$0xf]
      %v309 = vld [vmem:[%s247 + $0xa4] sm:$0xf]
      %v310 = vld [vmem:[%s247 + $0xa8] sm:$0xf]
      %v311 = vld [vmem:[%s247 + $0xac] sm:$0xf]
      %v312 = vld [vmem:[%s247 + $0xb0] sm:$0xf]
      %v313 = vld [vmem:[%s247 + $0xb4] sm:$0xf]
      %v314 = vld [vmem:[%s247 + $0xb8] sm:$0xf]
      %v315 = vld [vmem:[%s247 + $0xbc] sm:$0xf]
      %v318 = vunpack.c.l.b16 %v266
      %v319 = vunpack.c.h.b16 %v266
      %v320 = vunpack.c.l.b16 %v267
      %v321 = vpack.c.b16 %v318, %v318
      %v322 = vpack.c.b16 %v319, %v319
      %v323 = vpack.c.b16 %v320, %v320
      %v375 = vunpack.c.l.b16 %v268
      %v376 = vunpack.c.l.b16 %v269
      %v377 = vunpack.c.l.b16 %v270
      %v378 = vunpack.c.l.b16 %v271
      %v379 = vunpack.c.l.b16 %v272
      %v380 = vunpack.c.l.b16 %v273
      %v381 = vunpack.c.l.b16 %v274
      %v382 = vunpack.c.l.b16 %v275
      %v383 = vunpack.c.l.b16 %v276
      %v384 = vunpack.c.l.b16 %v277
      %v385 = vunpack.c.l.b16 %v278
      %v386 = vunpack.c.l.b16 %v279
      %v387 = vunpack.c.l.b16 %v280
      %v388 = vunpack.c.l.b16 %v281
      %v389 = vunpack.c.l.b16 %v282
      %v390 = vunpack.c.l.b16 %v283
      %v391 = vunpack.c.l.b16 %v284
      %v392 = vunpack.c.l.b16 %v285
      %v393 = vunpack.c.l.b16 %v286
      %v394 = vunpack.c.l.b16 %v287
      %v395 = vunpack.c.l.b16 %v288
      %v396 = vunpack.c.l.b16 %v289
      %v397 = vunpack.c.l.b16 %v290
      %v398 = vunpack.c.l.b16 %v291
      %v399 = vunpack.c.l.b16 %v292
      %v400 = vunpack.c.l.b16 %v293
      %v401 = vunpack.c.l.b16 %v294
      %v402 = vunpack.c.l.b16 %v295
      %v403 = vunpack.c.l.b16 %v296
      %v404 = vunpack.c.l.b16 %v297
      %v405 = vunpack.c.l.b16 %v298
      %v406 = vunpack.c.l.b16 %v299
      %v407 = vunpack.c.l.b16 %v300
      %v408 = vunpack.c.l.b16 %v301
      %v409 = vunpack.c.l.b16 %v302
      %v410 = vunpack.c.l.b16 %v303
      %v411 = vunpack.c.l.b16 %v304
      %v412 = vunpack.c.l.b16 %v305
      %v413 = vunpack.c.l.b16 %v306
      %v414 = vunpack.c.l.b16 %v307
      %v415 = vunpack.c.l.b16 %v308
      %v416 = vunpack.c.l.b16 %v309
      %v417 = vunpack.c.l.b16 %v310
      %v418 = vunpack.c.l.b16 %v311
      %v419 = vunpack.c.l.b16 %v312
      %v420 = vunpack.c.l.b16 %v313
      %v421 = vunpack.c.l.b16 %v314
      %v422 = vunpack.c.l.b16 %v315
      %v423 = vpack.c.b16 %v376, %v375
      %v424 = vpack.c.b16 %v378, %v377
      %v425 = vpack.c.b16 %v380, %v379
      %v426 = vpack.c.b16 %v382, %v381
      %v427 = vpack.c.b16 %v384, %v383
      %v428 = vpack.c.b16 %v386, %v385
      %v429 = vpack.c.b16 %v388, %v387
      %v430 = vpack.c.b16 %v390, %v389
      %v431 = vpack.c.b16 %v392, %v391
      %v432 = vpack.c.b16 %v394, %v393
      %v433 = vpack.c.b16 %v396, %v395
      %v434 = vpack.c.b16 %v398, %v397
      %v435 = vpack.c.b16 %v400, %v399
      %v436 = vpack.c.b16 %v402, %v401
      %v437 = vpack.c.b16 %v404, %v403
      %v438 = vpack.c.b16 %v406, %v405
      %v439 = vpack.c.b16 %v408, %v407
      %v440 = vpack.c.b16 %v410, %v409
      %v441 = vpack.c.b16 %v412, %v411
      %v442 = vpack.c.b16 %v414, %v413
      %v443 = vpack.c.b16 %v416, %v415
      %v444 = vpack.c.b16 %v418, %v417
      %v445 = vpack.c.b16 %v420, %v419
      %v446 = vpack.c.b16 %v422, %v421
      %471 = vmatprep.subr.bf16.mxu0 0
      %472 = vmatpush1.bf16.msra.mxu0 %v423
      %473 = vmatprep.subr.bf16.mxu0 0
      %474 = vmatpush1.bf16.msra.mxu0 %v424
      %475 = vmatprep.subr.bf16.mxu0 0
      %476 = vmatpush1.bf16.msra.mxu0 %v425
      %477 = vmatprep.subr.bf16.mxu0 0
      %478 = vmatpush1.bf16.msra.mxu0 %v426
      %479 = vmatprep.subr.bf16.mxu0 0
      %480 = vmatpush1.bf16.msra.mxu0 %v427
      %481 = vmatprep.subr.bf16.mxu0 0
      %482 = vmatpush1.bf16.msra.mxu0 %v428
      %483 = vmatprep.subr.bf16.mxu0 0
      %484 = vmatpush1.bf16.msra.mxu0 %v429
      %485 = vmatprep.subr.bf16.mxu0 0
      %486 = vmatpush1.bf16.msra.mxu0 %v430
      %487 = vmatprep.subr.bf16.mxu0 0
      %488 = vmatpush1.bf16.msra.mxu0 %v431
      %489 = vmatprep.subr.bf16.mxu0 0
      %490 = vmatpush1.bf16.msra.mxu0 %v432
      %491 = vmatprep.subr.bf16.mxu0 0
      %492 = vmatpush1.bf16.msra.mxu0 %v433
      %493 = vmatprep.subr.bf16.mxu0 0
      %494 = vmatpush1.bf16.msra.mxu0 %v434
      %495 = vmatprep.subr.bf16.mxu0 0
      %496 = vmatpush1.bf16.msra.mxu0 %v435
      %497 = vmatprep.subr.bf16.mxu0 0
      %498 = vmatpush1.bf16.msra.mxu0 %v436
      %499 = vmatprep.subr.bf16.mxu0 0
      %500 = vmatpush1.bf16.msra.mxu0 %v437
      %501 = vmatprep.subr.bf16.mxu0 0
      %502 = vmatpush1.bf16.msra.mxu0 %v438
      %503 = vmatprep.mubr.bf16.mxu0 %v322
      %504 = vmatmul.mubr.bf16.gmra.mrb[0].mxu0 %v321
      %v505 = vpop.f32.mrb[0].mxu0
      %v506 = vadd.f32 0.0, %v505
      %v507 = vpop.f32.mrb[0].mxu0
      %v508 = vpop.f32.mrb[0].mxu0
      %v509 = vpop.f32.mrb[0].mxu0
      %510 = vdwg.mxu0
      %511 = vmatprep.subr.bf16.mxu0 0
      %512 = vmatpush1.bf16.msra.mxu0 %v439
      %513 = vmatprep.subr.bf16.mxu0 0
      %514 = vmatpush1.bf16.msra.mxu0 %v440
      %515 = vmatprep.subr.bf16.mxu0 0
      %516 = vmatpush1.bf16.msra.mxu0 %v441
      %517 = vmatprep.subr.bf16.mxu0 0
      %518 = vmatpush1.bf16.msra.mxu0 %v442
      %519 = vmatprep.subr.bf16.mxu0 0
      %520 = vmatpush1.bf16.msra.mxu0 %v443
      %521 = vmatprep.subr.bf16.mxu0 0
      %522 = vmatpush1.bf16.msra.mxu0 %v444
      %523 = vmatprep.subr.bf16.mxu0 0
      %524 = vmatpush1.bf16.msra.mxu0 %v445
      %525 = vmatprep.subr.bf16.mxu0 0
      %526 = vmatpush1.bf16.msra.mxu0 %v446
      %527 = vmatprep.subr.bf16.mxu0 0
      %528 = vmatpush1.bf16.msra.mxu0 0
      %529 = vmatprep.subr.bf16.mxu0 0
      %530 = vmatpush1.bf16.msra.mxu0 0
      %531 = vmatprep.subr.bf16.mxu0 0
      %532 = vmatpush1.bf16.msra.mxu0 0
      %533 = vmatprep.subr.bf16.mxu0 0
      %534 = vmatpush1.bf16.msra.mxu0 0
      %535 = vmatprep.subr.bf16.mxu0 0
      %536 = vmatpush1.bf16.msra.mxu0 0
      %537 = vmatprep.subr.bf16.mxu0 0
      %538 = vmatpush1.bf16.msra.mxu0 0
      %539 = vmatprep.subr.bf16.mxu0 0
      %540 = vmatpush1.bf16.msra.mxu0 0
      %541 = vmatprep.subr.bf16.mxu0 0
      %542 = vmatpush1.bf16.msra.mxu0 0
      %543 = vmatprep.mubr.bf16.mxu0 0
      %544 = vmatmul.mubr.bf16.gmra.mrb[0].mxu0 %v323
      %v545 = vpop.f32.mrb[0].mxu0
      %v546 = vadd.f32 %v506, %v545
      %v547 = vpop.f32.mrb[0].mxu0
      %v548 = vpop.f32.mrb[0].mxu0
      %v549 = vpop.f32.mrb[0].mxu0
      %550 = vdwg.mxu0
      %v551 = vadd.f32 %v265, %v546
      %552 = vst [vmem:[#allocation2] sm:$0xff] %v551
      %p553 = scmp.eq.s32.totalorder %s21, 2
      // Predicated region
      $region37: #{video_features_forward.126} parent=31 // pred_check
        %p554 = pneg %p553
      $region38: #{video_features_forward.126} parent=31 // pred_check_branch
        %556 = sbr.rel (%p554) target = $region40
      $region39: #{video_features_forward.126} parent=31 // pred_region
        %v557 = vld [vmem:[#allocation2] sm:$0xff]
        %v558 = vld [vmem:[%s251] sm:$0x1]
        %v560 = vlaneseq
        %v561 = vshrl.u32 %v560, 7
        %v562 = vsub.s32 0, %v561
        %v563 = vrot.slane %v558, %v562
        %v565 = vadd.f32 %v557, %v563
        %v566 = vmax.f32 %v565, 0.0
        %567 = vst [vmem:[%s258] sm:$0xff] %v566
      $region40: #{video_features_forward.126} parent=31 // pred_fallthru
        _
      %p568 = scmp.lt.s32.totalorder %s19, 0
      %s569 = scalar_select %p568, %s19, 0
      %p570 = scmp.lt.s32.totalorder %s20, 0
      %s571 = scalar_select %p570, %s20, 0
      %s572 = sadd.s32 %s571, %s569
      %s573 = smul.addr %s572, 8
      %s574 = scalar_lea.vmem %s3, %s573
      // Predicated region
      $region41: #{video_features_forward.126} parent=31 // pred_check
        %p575 = pneg %p135
      $region42: #{video_features_forward.126} parent=31 // pred_check_branch
        %577 = sbr.rel (%p575) target = $region44
      $region43: #{video_features_forward.126} parent=31 // pred_region
        _
      $region44: #{video_features_forward.126} parent=31 // pred_fallthru
        _
      // Predicated region
      $region45: #{video_features_forward.126} parent=31 // pred_check
        %p578 = pneg %p135
      $region46: #{video_features_forward.126} parent=31 // pred_check_branch
        %580 = sbr.rel (%p578) target = $region48
      $region47: #{video_features_forward.126} parent=31 // pred_region
        %p581 = scmp.lt.s32.totalorder %s19, 0
        %s582 = scalar_select %p581, %s19, 0
        %p583 = scmp.lt.s32.totalorder %s20, 0
        %s584 = scalar_select %p583, %s20, 0
        %s585 = sadd.s32 %s584, %s582
        %s586 = smul.addr %s585, 8
        %s587 = scalar_lea.vmem %s3, %s586
      $region48: #{video_features_forward.126} parent=31 // pred_fallthru
        _
    $region32: #{video_features_forward.126} parent=5 // pred_fallthru
      _
    %p588 = scmp.le.s32.totalorder 2, %s9
    // Predicated region
    $region49: #{video_features_forward.126} parent=5 // pred_check
      %p589 = pneg %p588
    $region50: #{video_features_forward.126} parent=5 // pred_check_branch
      %591 = sbr.rel (%p589) target = $region52
    $region51: #{video_features_forward.126} parent=5 // pred_region
      %s592 = ssub.s32 %s9, 2
    $region52: #{video_features_forward.126} parent=5 // pred_fallthru
      _
  $region6: #{video_features_forward.126} parent=0 // loop_footer
    %s13 = sadd.s32 1, %s9
  $region7: #{video_features_forward.126} parent=0 // loop_footer_branch
    %8 = sbr.rel target = $region3
  $region8: #{video_features_forward.126} parent=0 // loop_exit
    _

// kernel: video_features_forward.127
$region0: #{video_features_forward.127}
  #allocation0 [shape = 'u32[]', space=smem, size = 0x4, offset = 0x4, fixed_abs, tag = 'smem constant byte address 0x4 - core index']
  #allocation1 [shape = 'u32[144,128]{1,0:T(1,128)}', space=vmem, size = 0x12000, scoped, tag = 'internal scratch']
  #allocation2 [shape = 'f32[8,256]{1,0:T(8,128)}', space=vmem, size = 0x2000, scoped, tag = 'scratch operand']
  %s0 = inlined_call_operand.vmem [shape: bf16[8,128], index: 0, kind: input, shape index: {}]
  %s1 = inlined_call_operand.vmem [shape: bf16[128,256], index: 1, kind: input, shape index: {}]
  %s2 = inlined_call_operand.vmem [shape: f32[1,256], index: 2, kind: input, shape index: {}]
  %s3 = inlined_call_operand.vmem [shape: f32[8,256], index: 3, kind: output, shape index: {}]
  %s4 = sld [smem:[#allocation0]]
  $region30: #{video_features_forward.127} parent=0
    _
  %s6 = ssub.s32 1, %s4
  %s7 = scalar_select 0, %s6, %s4
  // Predicated region
  $region2: #{video_features_forward.127} parent=0 // pred_check
    _
  $region3: #{video_features_forward.127} parent=0 // pred_check_branch
    %9 = sbr.rel (0) target = $region5
  $region4: #{video_features_forward.127} parent=0 // pred_region
    _
  $region5: #{video_features_forward.127} parent=0 // pred_fallthru
    _
  // Predicated region
  $region6: #{video_features_forward.127} parent=0 // pred_check
    _
  $region7: #{video_features_forward.127} parent=0 // pred_check_branch
    %11 = sbr.rel (0) target = $region9
  $region8: #{video_features_forward.127} parent=0 // pred_region
    _
  $region9: #{video_features_forward.127} parent=0 // pred_fallthru
    _
  // Predicated region
  $region10: #{video_features_forward.127} parent=0 // pred_check
    _
  $region11: #{video_features_forward.127} parent=0 // pred_check_branch
    %13 = sbr.rel (0) target = $region13
  $region12: #{video_features_forward.127} parent=0 // pred_region
    _
  $region13: #{video_features_forward.127} parent=0 // pred_fallthru
    _
  %p15 = scmp.eq.s32.totalorder 0, 0
  // Predicated region
  $region14: #{video_features_forward.127} parent=0 // pred_check
    %p16 = pneg %p15
  $region15: #{video_features_forward.127} parent=0 // pred_check_branch
    %18 = sbr.rel (%p16) target = $region17
  $region16: #{video_features_forward.127} parent=0 // pred_region
    %19 = vst [vmem:[#allocation2] sm:$0xff] 0.0
    %20 = vst [vmem:[#allocation2 + $0x8] sm:$0xff] 0.0
  $region17: #{video_features_forward.127} parent=0 // pred_fallthru
    _
  %v21 = vld [vmem:[#allocation2] sm:$0xff]
  %v22 = vld [vmem:[#allocation2 + $0x8] sm:$0xff]
  %v23 = vld [vmem:[%s0] sm:$0xf]
  %v24 = vld [vmem:[%s1] sm:$0xff]
  %v25 = vld [vmem:[%s1 + $0x8] sm:$0xff]
  %v26 = vld [vmem:[%s1 + $0x10] sm:$0xff]
  %v27 = vld [vmem:[%s1 + $0x18] sm:$0xff]
  %v28 = vld [vmem:[%s1 + $0x20] sm:$0xff]
  %v29 = vld [vmem:[%s1 + $0x28] sm:$0xff]
  %v30 = vld [vmem:[%s1 + $0x30] sm:$0xff]
  %v31 = vld [vmem:[%s1 + $0x38] sm:$0xff]
  %v32 = vld [vmem:[%s1 + $0x40] sm:$0xff]
  %v33 = vld [vmem:[%s1 + $0x48] sm:$0xff]
  %v34 = vld [vmem:[%s1 + $0x50] sm:$0xff]
  %v35 = vld [vmem:[%s1 + $0x58] sm:$0xff]
  %v36 = vld [vmem:[%s1 + $0x60] sm:$0xff]
  %v37 = vld [vmem:[%s1 + $0x68] sm:$0xff]
  %v38 = vld [vmem:[%s1 + $0x70] sm:$0xff]
  %v39 = vld [vmem:[%s1 + $0x78] sm:$0xff]
  %v56 = vunpack.c.l.b16 %v24
  %v57 = vunpack.c.h.b16 %v24
  %v58 = vunpack.c.l.b16 %v25
  %v59 = vunpack.c.h.b16 %v25
  %v60 = vunpack.c.l.b16 %v26
  %v61 = vunpack.c.h.b16 %v26
  %v62 = vunpack.c.l.b16 %v27
  %v63 = vunpack.c.h.b16 %v27
  %v64 = vunpack.c.l.b16 %v28
  %v65 = vunpack.c.h.b16 %v28
  %v66 = vunpack.c.l.b16 %v29
  %v67 = vunpack.c.h.b16 %v29
  %v68 = vunpack.c.l.b16 %v30
  %v69 = vunpack.c.h.b16 %v30
  %v70 = vunpack.c.l.b16 %v31
  %v71 = vunpack.c.h.b16 %v31
  %v72 = vunpack.c.l.b16 %v32
  %v73 = vunpack.c.h.b16 %v32
  %v74 = vunpack.c.l.b16 %v33
  %v75 = vunpack.c.h.b16 %v33
  %v76 = vunpack.c.l.b16 %v34
  %v77 = vunpack.c.h.b16 %v34
  %v78 = vunpack.c.l.b16 %v35
  %v79 = vunpack.c.h.b16 %v35
  %v80 = vunpack.c.l.b16 %v36
  %v81 = vunpack.c.h.b16 %v36
  %v82 = vunpack.c.l.b16 %v37
  %v83 = vunpack.c.h.b16 %v37
  %v84 = vunpack.c.l.b16 %v38
  %v85 = vunpack.c.h.b16 %v38
  %v86 = vunpack.c.l.b16 %v39
  %v87 = vunpack.c.h.b16 %v39
  %v88 = vpack.c.b16 %v58, %v56
  %v89 = vpack.c.b16 %v59, %v57
  %v90 = vpack.c.b16 %v62, %v60
  %v91 = vpack.c.b16 %v63, %v61
  %v92 = vpack.c.b16 %v66, %v64
  %v93 = vpack.c.b16 %v67, %v65
  %v94 = vpack.c.b16 %v70, %v68
  %v95 = vpack.c.b16 %v71, %v69
  %v96 = vpack.c.b16 %v74, %v72
  %v97 = vpack.c.b16 %v75, %v73
  %v98 = vpack.c.b16 %v78, %v76
  %v99 = vpack.c.b16 %v79, %v77
  %v100 = vpack.c.b16 %v82, %v80
  %v101 = vpack.c.b16 %v83, %v81
  %v102 = vpack.c.b16 %v86, %v84
  %v103 = vpack.c.b16 %v87, %v85
  %120 = vmatprep.subr.bf16.mxu0 %v89
  %121 = vmatpush1.bf16.msra.mxu0 %v88
  %122 = vmatprep.subr.bf16.mxu0 %v91
  %123 = vmatpush1.bf16.msra.mxu0 %v90
  %124 = vmatprep.subr.bf16.mxu0 %v93
  %125 = vmatpush1.bf16.msra.mxu0 %v92
  %126 = vmatprep.subr.bf16.mxu0 %v95
  %127 = vmatpush1.bf16.msra.mxu0 %v94
  %128 = vmatprep.subr.bf16.mxu0 %v97
  %129 = vmatpush1.bf16.msra.mxu0 %v96
  %130 = vmatprep.subr.bf16.mxu0 %v99
  %131 = vmatpush1.bf16.msra.mxu0 %v98
  %132 = vmatprep.subr.bf16.mxu0 %v101
  %133 = vmatpush1.bf16.msra.mxu0 %v100
  %134 = vmatprep.subr.bf16.mxu0 %v103
  %135 = vmatpush1.bf16.msra.mxu0 %v102
  %136 = vmatprep.subr.bf16.mxu0 0
  %137 = vmatpush1.bf16.msra.mxu0 0
  %138 = vmatprep.subr.bf16.mxu0 0
  %139 = vmatpush1.bf16.msra.mxu0 0
  %140 = vmatprep.subr.bf16.mxu0 0
  %141 = vmatpush1.bf16.msra.mxu0 0
  %142 = vmatprep.subr.bf16.mxu0 0
  %143 = vmatpush1.bf16.msra.mxu0 0
  %144 = vmatprep.subr.bf16.mxu0 0
  %145 = vmatpush1.bf16.msra.mxu0 0
  %146 = vmatprep.subr.bf16.mxu0 0
  %147 = vmatpush1.bf16.msra.mxu0 0
  %148 = vmatprep.subr.bf16.mxu0 0
  %149 = vmatpush1.bf16.msra.mxu0 0
  %150 = vmatprep.subr.bf16.mxu0 0
  %151 = vmatpush1.bf16.msra.mxu0 0
  %152 = vmatprep.mubr.bf16.mxu0 0
  %153 = vmatmul.mubr.bf16.gmra.mrb[0].mxu0 %v23
  %v154 = vpop.f32.mrb[0].mxu0
  %v155 = vadd.f32 0.0, %v154
  %v156 = vpop.f32.mrb[0].mxu0
  %v157 = vadd.f32 0.0, %v156
  %v158 = vpop.f32.mrb[0].mxu0
  %v159 = vpop.f32.mrb[0].mxu0
  %160 = vdwg.mxu0
  %v161 = vadd.f32 %v21, %v155
  %v162 = vadd.f32 %v22, %v157
  %163 = vst [vmem:[#allocation2] sm:$0xff] %v161
  %164 = vst [vmem:[#allocation2 + $0x8] sm:$0xff] %v162
  // Predicated region
  $region18: #{video_features_forward.127} parent=0 // pred_check
    %p165 = pneg %p15
  $region19: #{video_features_forward.127} parent=0 // pred_check_branch
    %167 = sbr.rel (%p165) target = $region21
  $region20: #{video_features_forward.127} parent=0 // pred_region
    %v168 = vld [vmem:[#allocation2] sm:$0xff]
    %v169 = vld [vmem:[#allocation2 + $0x8] sm:$0xff]
    %v170 = vld [vmem:[%s2] sm:$0x3]
    %v172 = vlaneseq
    %v173 = vshrl.u32 %v172, 7
    %v174 = vsub.s32 0, %v173
    %v175 = vrot.slane %v170, %v174
    %v176 = vlaneseq
    %v177 = vshrl.u32 %v176, 7
    %v178 = vsub.s32 1, %v177
    %v179 = vrot.slane %v170, %v178
    %v182 = vadd.f32 %v168, %v175
    %v183 = vadd.f32 %v169, %v179
    %184 = vst [vmem:[%s3] sm:$0xff] %v182
    %185 = vst [vmem:[%s3 + $0x8] sm:$0xff] %v183
  $region21: #{video_features_forward.127} parent=0 // pred_fallthru
    _
  // Predicated region
  $region22: #{video_features_forward.127} parent=0 // pred_check
    _
  $region23: #{video_features_forward.127} parent=0 // pred_check_branch
    %187 = sbr.rel (0) target = $region25
  $region24: #{video_features_forward.127} parent=0 // pred_region
    _
  $region25: #{video_features_forward.127} parent=0 // pred_fallthru
    _
  // Predicated region
  $region26: #{video_features_forward.127} parent=0 // pred_check
    _
  $region27: #{video_features_forward.127} parent=0 // pred_check_branch
    %189 = sbr.rel (0) target = $region29
  $region28: #{video_features_forward.127} parent=0 // pred_region
    _
  $region29: #{video_features_forward.127} parent=0 // pred_fallthru
    _

// kernel: video_features_forward.129
$region0: #{video_features_forward.129}
  #allocation0 [shape = 'u32[]', space=smem, size = 0x4, offset = 0x4, fixed_abs, tag = 'smem constant byte address 0x4 - core index']
  #allocation1 [shape = 'u32[144,128]{1,0:T(1,128)}', space=vmem, size = 0x12000, scoped, tag = 'internal scratch']
  %s0 = inlined_call_operand.vmem [shape: f32[8,256], index: 0, kind: input, shape index: {}]
  %s1 = inlined_call_operand.vmem [shape: f32[8,256], index: 1, kind: input, shape index: {}]
  %s2 = inlined_call_operand.vmem [shape: f32[8,256], index: 2, kind: output, shape index: {}]
  %s3 = sld [smem:[#allocation0]]
  $region18: #{video_features_forward.129} parent=0
    _
  %s5 = ssub.s32 1, %s3
  %s6 = scalar_select 0, %s5, %s3
  // Predicated region
  $region2: #{video_features_forward.129} parent=0 // pred_check
    _
  $region3: #{video_features_forward.129} parent=0 // pred_check_branch
    %8 = sbr.rel (0) target = $region5
  $region4: #{video_features_forward.129} parent=0 // pred_region
    _
  $region5: #{video_features_forward.129} parent=0 // pred_fallthru
    _
  // Predicated region
  $region6: #{video_features_forward.129} parent=0 // pred_check
    _
  $region7: #{video_features_forward.129} parent=0 // pred_check_branch
    %10 = sbr.rel (0) target = $region9
  $region8: #{video_features_forward.129} parent=0 // pred_region
    _
  $region9: #{video_features_forward.129} parent=0 // pred_fallthru
    _
  %v11 = vld [vmem:[%s0] sm:$0xff]
  %v12 = vld [vmem:[%s0 + $0x8] sm:$0xff]
  %v13 = vld [vmem:[%s1] sm:$0xff]
  %v14 = vld [vmem:[%s1 + $0x8] sm:$0xff]
  %v15 = vadd.f32 %v11, %v13
  %v16 = vadd.f32 %v12, %v14
  %v17 = vmax.f32 %v15, 0.0
  %v18 = vmax.f32 %v16, 0.0
  %19 = vst [vmem:[%s2] sm:$0xff] %v17
  %20 = vst [vmem:[%s2 + $0x8] sm:$0xff] %v18
  // Predicated region
  $region10: #{video_features_forward.129} parent=0 // pred_check
    _
  $region11: #{video_features_forward.129} parent=0 // pred_check_branch
    %22 = sbr.rel (0) target = $region13
  $region12: #{video_features_forward.129} parent=0 // pred_region
    _
  $region13: #{video_features_forward.129} parent=0 // pred_fallthru
    _
  // Predicated region
  $region14: #{video_features_forward.129} parent=0 // pred_check
    _
  $region15: #{video_features_forward.129} parent=0 // pred_check_branch
    %24 = sbr.rel (0) target = $region17
  $region16: #{video_features_forward.129} parent=0 // pred_region
    _
  $region17: #{video_features_forward.129} parent=0 // pred_fallthru
    _

// kernel: video_features_forward.130
$region0: #{video_features_forward.130}
  #allocation0 [shape = 'u32[]', space=smem, size = 0x4, offset = 0x4, fixed_abs, tag = 'smem constant byte address 0x4 - core index']
  #allocation1 [shape = 'u32[144,128]{1,0:T(1,128)}', space=vmem, size = 0x12000, scoped, tag = 'internal scratch']
  #allocation2 [shape = 'f32[8,128]{1,0:T(8,128)}', space=vmem, size = 0x1000, scoped, tag = 'scratch operand']
  %s0 = inlined_call_operand.vmem [shape: bf16[8,256], index: 0, kind: input, shape index: {}]
  %s1 = inlined_call_operand.vmem [shape: bf16[256,128], index: 1, kind: input, shape index: {}]
  %s2 = inlined_call_operand.vmem [shape: f32[1,128], index: 2, kind: input, shape index: {}]
  %s3 = inlined_call_operand.vmem [shape: f32[8,128], index: 3, kind: output, shape index: {}]
  %s4 = sld [smem:[#allocation0]]
  $region30: #{video_features_forward.130} parent=0
    _
  %s6 = ssub.s32 1, %s4
  %s7 = scalar_select 0, %s6, %s4
  // Predicated region
  $region2: #{video_features_forward.130} parent=0 // pred_check
    _
  $region3: #{video_features_forward.130} parent=0 // pred_check_branch
    %9 = sbr.rel (0) target = $region5
  $region4: #{video_features_forward.130} parent=0 // pred_region
    _
  $region5: #{video_features_forward.130} parent=0 // pred_fallthru
    _
  // Predicated region
  $region6: #{video_features_forward.130} parent=0 // pred_check
    _
  $region7: #{video_features_forward.130} parent=0 // pred_check_branch
    %11 = sbr.rel (0) target = $region9
  $region8: #{video_features_forward.130} parent=0 // pred_region
    _
  $region9: #{video_features_forward.130} parent=0 // pred_fallthru
    _
  // Predicated region
  $region10: #{video_features_forward.130} parent=0 // pred_check
    _
  $region11: #{video_features_forward.130} parent=0 // pred_check_branch
    %13 = sbr.rel (0) target = $region13
  $region12: #{video_features_forward.130} parent=0 // pred_region
    _
  $region13: #{video_features_forward.130} parent=0 // pred_fallthru
    _
  %p15 = scmp.eq.s32.totalorder 0, 0
  // Predicated region
  $region14: #{video_features_forward.130} parent=0 // pred_check
    %p16 = pneg %p15
  $region15: #{video_features_forward.130} parent=0 // pred_check_branch
    %18 = sbr.rel (%p16) target = $region17
  $region16: #{video_features_forward.130} parent=0 // pred_region
    %19 = vst [vmem:[#allocation2] sm:$0xff] 0.0
  $region17: #{video_features_forward.130} parent=0 // pred_fallthru
    _
  %v20 = vld [vmem:[#allocation2] sm:$0xff]
  %v21 = vld [vmem:[%s0] sm:$0xff]
  %v22 = vld [vmem:[%s1] sm:$0xf]
  %v23 = vld [vmem:[%s1 + $0x4] sm:$0xf]
  %v24 = vld [vmem:[%s1 + $0x8] sm:$0xf]
  %v25 = vld [vmem:[%s1 + $0xc] sm:$0xf]
  %v26 = vld [vmem:[%s1 + $0x10] sm:$0xf]
  %v27 = vld [vmem:[%s1 + $0x14] sm:$0xf]
  %v28 = vld [vmem:[%s1 + $0x18] sm:$0xf]
  %v29 = vld [vmem:[%s1 + $0x1c] sm:$0xf]
  %v30 = vld [vmem:[%s1 + $0x20] sm:$0xf]
  %v31 = vld [vmem:[%s1 + $0x24] sm:$0xf]
  %v32 = vld [vmem:[%s1 + $0x28] sm:$0xf]
  %v33 = vld [vmem:[%s1 + $0x2c] sm:$0xf]
  %v34 = vld [vmem:[%s1 + $0x30] sm:$0xf]
  %v35 = vld [vmem:[%s1 + $0x34] sm:$0xf]
  %v36 = vld [vmem:[%s1 + $0x38] sm:$0xf]
  %v37 = vld [vmem:[%s1 + $0x3c] sm:$0xf]
  %v38 = vld [vmem:[%s1 + $0x40] sm:$0xf]
  %v39 = vld [vmem:[%s1 + $0x44] sm:$0xf]
  %v40 = vld [vmem:[%s1 + $0x48] sm:$0xf]
  %v41 = vld [vmem:[%s1 + $0x4c] sm:$0xf]
  %v42 = vld [vmem:[%s1 + $0x50] sm:$0xf]
  %v43 = vld [vmem:[%s1 + $0x54] sm:$0xf]
  %v44 = vld [vmem:[%s1 + $0x58] sm:$0xf]
  %v45 = vld [vmem:[%s1 + $0x5c] sm:$0xf]
  %v46 = vld [vmem:[%s1 + $0x60] sm:$0xf]
  %v47 = vld [vmem:[%s1 + $0x64] sm:$0xf]
  %v48 = vld [vmem:[%s1 + $0x68] sm:$0xf]
  %v49 = vld [vmem:[%s1 + $0x6c] sm:$0xf]
  %v50 = vld [vmem:[%s1 + $0x70] sm:$0xf]
  %v51 = vld [vmem:[%s1 + $0x74] sm:$0xf]
  %v52 = vld [vmem:[%s1 + $0x78] sm:$0xf]
  %v53 = vld [vmem:[%s1 + $0x7c] sm:$0xf]
  %v55 = vunpack.c.l.b16 %v21
  %v56 = vunpack.c.h.b16 %v21
  %v57 = vpack.c.b16 %v55, %v55
  %v58 = vpack.c.b16 %v56, %v56
  %v93 = vunpack.c.l.b16 %v22
  %v94 = vunpack.c.l.b16 %v23
  %v95 = vunpack.c.l.b16 %v24
  %v96 = vunpack.c.l.b16 %v25
  %v97 = vunpack.c.l.b16 %v26
  %v98 = vunpack.c.l.b16 %v27
  %v99 = vunpack.c.l.b16 %v28
  %v100 = vunpack.c.l.b16 %v29
  %v101 = vunpack.c.l.b16 %v30
  %v102 = vunpack.c.l.b16 %v31
  %v103 = vunpack.c.l.b16 %v32
  %v104 = vunpack.c.l.b16 %v33
  %v105 = vunpack.c.l.b16 %v34
  %v106 = vunpack.c.l.b16 %v35
  %v107 = vunpack.c.l.b16 %v36
  %v108 = vunpack.c.l.b16 %v37
  %v109 = vunpack.c.l.b16 %v38
  %v110 = vunpack.c.l.b16 %v39
  %v111 = vunpack.c.l.b16 %v40
  %v112 = vunpack.c.l.b16 %v41
  %v113 = vunpack.c.l.b16 %v42
  %v114 = vunpack.c.l.b16 %v43
  %v115 = vunpack.c.l.b16 %v44
  %v116 = vunpack.c.l.b16 %v45
  %v117 = vunpack.c.l.b16 %v46
  %v118 = vunpack.c.l.b16 %v47
  %v119 = vunpack.c.l.b16 %v48
  %v120 = vunpack.c.l.b16 %v49
  %v121 = vunpack.c.l.b16 %v50
  %v122 = vunpack.c.l.b16 %v51
  %v123 = vunpack.c.l.b16 %v52
  %v124 = vunpack.c.l.b16 %v53
  %v125 = vpack.c.b16 %v94, %v93
  %v126 = vpack.c.b16 %v96, %v95
  %v127 = vpack.c.b16 %v98, %v97
  %v128 = vpack.c.b16 %v100, %v99
  %v129 = vpack.c.b16 %v102, %v101
  %v130 = vpack.c.b16 %v104, %v103
  %v131 = vpack.c.b16 %v106, %v105
  %v132 = vpack.c.b16 %v108, %v107
  %v133 = vpack.c.b16 %v110, %v109
  %v134 = vpack.c.b16 %v112, %v111
  %v135 = vpack.c.b16 %v114, %v113
  %v136 = vpack.c.b16 %v116, %v115
  %v137 = vpack.c.b16 %v118, %v117
  %v138 = vpack.c.b16 %v120, %v119
  %v139 = vpack.c.b16 %v122, %v121
  %v140 = vpack.c.b16 %v124, %v123
  %157 = vmatprep.subr.bf16.mxu0 0
  %158 = vmatpush1.bf16.msra.mxu0 %v125
  %159 = vmatprep.subr.bf16.mxu0 0
  %160 = vmatpush1.bf16.msra.mxu0 %v126
  %161 = vmatprep.subr.bf16.mxu0 0
  %162 = vmatpush1.bf16.msra.mxu0 %v127
  %163 = vmatprep.subr.bf16.mxu0 0
  %164 = vmatpush1.bf16.msra.mxu0 %v128
  %165 = vmatprep.subr.bf16.mxu0 0
  %166 = vmatpush1.bf16.msra.mxu0 %v129
  %167 = vmatprep.subr.bf16.mxu0 0
  %168 = vmatpush1.bf16.msra.mxu0 %v130
  %169 = vmatprep.subr.bf16.mxu0 0
  %170 = vmatpush1.bf16.msra.mxu0 %v131
  %171 = vmatprep.subr.bf16.mxu0 0
  %172 = vmatpush1.bf16.msra.mxu0 %v132
  %173 = vmatprep.subr.bf16.mxu0 0
  %174 = vmatpush1.bf16.msra.mxu0 %v133
  %175 = vmatprep.subr.bf16.mxu0 0
  %176 = vmatpush1.bf16.msra.mxu0 %v134
  %177 = vmatprep.subr.bf16.mxu0 0
  %178 = vmatpush1.bf16.msra.mxu0 %v135
  %179 = vmatprep.subr.bf16.mxu0 0
  %180 = vmatpush1.bf16.msra.mxu0 %v136
  %181 = vmatprep.subr.bf16.mxu0 0
  %182 = vmatpush1.bf16.msra.mxu0 %v137
  %183 = vmatprep.subr.bf16.mxu0 0
  %184 = vmatpush1.bf16.msra.mxu0 %v138
  %185 = vmatprep.subr.bf16.mxu0 0
  %186 = vmatpush1.bf16.msra.mxu0 %v139
  %187 = vmatprep.subr.bf16.mxu0 0
  %188 = vmatpush1.bf16.msra.mxu0 %v140
  %189 = vmatprep.mubr.bf16.mxu0 %v58
  %190 = vmatmul.mubr.bf16.gmra.mrb[0].mxu0 %v57
  %v191 = vpop.f32.mrb[0].mxu0
  %v192 = vadd.f32 0.0, %v191
  %v193 = vpop.f32.mrb[0].mxu0
  %v194 = vpop.f32.mrb[0].mxu0
  %v195 = vpop.f32.mrb[0].mxu0
  %196 = vdwg.mxu0
  %v197 = vadd.f32 %v20, %v192
  %198 = vst [vmem:[#allocation2] sm:$0xff] %v197
  // Predicated region
  $region18: #{video_features_forward.130} parent=0 // pred_check
    %p199 = pneg %p15
  $region19: #{video_features_forward.130} parent=0 // pred_check_branch
    %201 = sbr.rel (%p199) target = $region21
  $region20: #{video_features_forward.130} parent=0 // pred_region
    %v202 = vld [vmem:[#allocation2] sm:$0xff]
    %v203 = vld [vmem:[%s2] sm:$0x1]
    %v205 = vlaneseq
    %v206 = vshrl.u32 %v205, 7
    %v207 = vsub.s32 0, %v206
    %v208 = vrot.slane %v203, %v207
    %v210 = vadd.f32 %v202, %v208
    %v211 = vmax.f32 %v210, 0.0
    %212 = vst [vmem:[%s3] sm:$0xff] %v211
  $region21: #{video_features_forward.130} parent=0 // pred_fallthru
    _
  // Predicated region
  $region22: #{video_features_forward.130} parent=0 // pred_check
    _
  $region23: #{video_features_forward.130} parent=0 // pred_check_branch
    %214 = sbr.rel (0) target = $region25
  $region24: #{video_features_forward.130} parent=0 // pred_region
    _
  $region25: #{video_features_forward.130} parent=0 // pred_fallthru
    _
  // Predicated region
  $region26: #{video_features_forward.130} parent=0 // pred_check
    _
  $region27: #{video_features_forward.130} parent=0 // pred_check_branch
    %216 = sbr.rel (0) target = $region29
  $region28: #{video_features_forward.130} parent=0 // pred_region
    _
  $region29: #{video_features_forward.130} parent=0 // pred_fallthru
    _

// kernel: squeeze.1
$region0: #{squeeze.1}
  %s0 = inlined_call_operand.vmem [shape: f32[8], index: 0, kind: input, shape index: {}]
  %s1 = inlined_call_operand.hbm [shape: f32[2,2,2], index: 1, kind: output, shape index: {}]
  $region1: #{squeeze.1} parent=0
    #allocation0 [shape = 'u8[2048]{0}', space=vmem, size = 0x800, scoped, tag = 'operand span for operand 1']
    #allocation1 [shape = 's32[1]{0}', space=sflag, size = 0x4, scoped, tag = 'scoped memory for squeeze.1']
    #allocation2 [shape = 'u8[8192]{0}', space=vmem, size = 0x2000, scoped, tag = 'scoped mem for output reshape']
    #allocation3 [shape = 'u8[4096]{0}', space=vmem, size = 0x1000, scoped, tag = 'scoped mem for input reshape']
    %2 = vsyncpa [#allocation1], 0
    %s4 = sshllo.u32 0, 1
    %v5 = vld [vmem:[%s0] sm:%s4]
    %6 = vst [vmem:[#allocation3] sm:%s4] %v5
    %v7 = vld [vmem:[#allocation3] sm:$0x1]
    %vm8 = vcmask 15360
    %9 = vst.msk [vmem:[#allocation2] sm:$0x1] %vm8, %v7
    %v10 = vld [vmem:[#allocation3] sm:$0x1]
    %11 = vrot.lane.b32.xlu0 %v10, 126
    %v12 = vpop.permute.xlu0 %11
    %vm13 = vcmask 15360
    %s14 = scalar_lea.vmem [#allocation2], 1
    %15 = vst.msk [vmem:[%s14] sm:$0x1] %vm13, %v12
    %v16 = vld [vmem:[#allocation3] sm:$0x1]
    %17 = vrot.lane.b32.xlu0 %v16, 124
    %v18 = vpop.permute.xlu0 %17
    %vm19 = vcmask 15360
    %s20 = scalar_lea.vmem [#allocation2], 8
    %21 = vst.msk [vmem:[%s20] sm:$0x1] %vm19, %v18
    %v22 = vld [vmem:[#allocation3] sm:$0x1]
    %23 = vrot.lane.b32.xlu0 %v22, 122
    %v24 = vpop.permute.xlu0 %23
    %vm25 = vcmask 15360
    %s26 = scalar_lea.vmem [#allocation2], 9
    %27 = vst.msk [vmem:[%s26] sm:$0x1] %vm25, %v24
    %s29 = sshllo.u32 0, 2
    %v31 = vld [vmem:[#allocation2] sm:%s29]
    %s32 = sshllo.u32 0, 2
    %33 = vst [vmem:[#allocation0] sm:%s32] %v31
    %s34 = scalar_lea.vmem [#allocation2], 8
    %v35 = vld [vmem:[%s34] sm:%s29]
    %s36 = sshllo.u32 0, 2
    %s37 = scalar_lea.vmem [#allocation0], 2
    %38 = vst [vmem:[%s37] sm:%s36] %v35
    %s40 = ssub.s32 64, 64
    %41 = vsyncadd [#allocation1], %s40
    %s43 = sshll.u32 [#allocation0], 4
    %s44 = int_to_ptr.vmem [resolvable:$true] %s43
    %46 = dma.vmem_to_hbm [thread:$0]  %s44, 64, %s1, [#allocation1]
    %47 = dma.done [#allocation1], 64
    %48 = vsyncpa [#allocation1], 1

// kernel: video_features_forward.137
$region0: #{video_features_forward.137}
  #allocation0 [shape = 'u32[]', space=smem, size = 0x4, offset = 0x4, fixed_abs, tag = 'smem constant byte address 0x4 - core index']
  #allocation1 [shape = 'u32[144,128]{1,0:T(1,128)}', space=vmem, size = 0x12000, scoped, tag = 'internal scratch']
  %s0 = inlined_call_operand.vmem [shape: f32[8,256], index: 0, kind: input, shape index: {}]
  %s1 = inlined_call_operand.vmem [shape: f32[8,256], index: 1, kind: input, shape index: {}]
  %s2 = inlined_call_operand.vmem [shape: f32[8,1], index: 2, kind: output, shape index: {}]
  %s3 = sld [smem:[#allocation0]]
  $region18: #{video_features_forward.137} parent=0
    _
  %s5 = ssub.s32 1, %s3
  %s6 = scalar_select 0, %s5, %s3
  // Predicated region
  $region2: #{video_features_forward.137} parent=0 // pred_check
    _
  $region3: #{video_features_forward.137} parent=0 // pred_check_branch
    %8 = sbr.rel (0) target = $region5
  $region4: #{video_features_forward.137} parent=0 // pred_region
    _
  $region5: #{video_features_forward.137} parent=0 // pred_fallthru
    _
  // Predicated region
  $region6: #{video_features_forward.137} parent=0 // pred_check
    _
  $region7: #{video_features_forward.137} parent=0 // pred_check_branch
    %10 = sbr.rel (0) target = $region9
  $region8: #{video_features_forward.137} parent=0 // pred_region
    _
  $region9: #{video_features_forward.137} parent=0 // pred_fallthru
    _
  %v11 = vld [vmem:[%s0] sm:$0xff]
  %v12 = vld [vmem:[%s0 + $0x8] sm:$0xff]
  %v13 = vld [vmem:[%s1] sm:$0xff]
  %v14 = vld [vmem:[%s1 + $0x8] sm:$0xff]
  %v15 = vadd.f32 %v11, %v13
  %v16 = vadd.f32 %v12, %v14
  %v17 = vmax.f32 %v15, 0.0
  %v18 = vmax.f32 %v16, 0.0
  %v19 = vadd.f32 %v17, %v18
  %20 = vadd.xlane.f32.xlu0 %v19
  %v21 = vpop.xlane.xlu0 %20
  %v22 = vmul.f32 %v21, 0.00390625
  %vm23 = vcmask 7168
  %24 = vst.msk [vmem:[%s2] sm:$0xff] %vm23, %v22
  // Predicated region
  $region10: #{video_features_forward.137} parent=0 // pred_check
    _
  $region11: #{video_features_forward.137} parent=0 // pred_check_branch
    %26 = sbr.rel (0) target = $region13
  $region12: #{video_features_forward.137} parent=0 // pred_region
    _
  $region13: #{video_features_forward.137} parent=0 // pred_fallthru
    _
  // Predicated region
  $region14: #{video_features_forward.137} parent=0 // pred_check
    _
  $region15: #{video_features_forward.137} parent=0 // pred_check_branch
    %28 = sbr.rel (0) target = $region17
  $region16: #{video_features_forward.137} parent=0 // pred_region
    _
  $region17: #{video_features_forward.137} parent=0 // pred_fallthru
    _

</llo_original>
